<compile_context>
chip_gen: v7x
topology: tpu7x:2x2x1
jax: 0.10.0
libtpu: 0.0.40
codegen_flags: <defaults>
</compile_context>

<pallas_src>
import math
import jax
import jax.numpy as jnp
from jax.experimental import pallas as pl
from jax.experimental.pallas import tpu as pltpu

# ----------------------------- configuration --------------------------------
SEQ = 8          # seq_size
BATCH = 2        # batch
BASE_SIZE = 4    # LSTM input feature size (undefined global in the source)
HIDDEN = 10      # params.hidden_dim
LATENT = 2       # latent_dims
N_LAYERS = 2     # params.n_layers
FC = 512         # hidden width of linear1 in encoder / decoder
GP = 128         # per-gate / per-feature lane padding (lane-dense layout)


# ------------------------------ gate helper ----------------------------------
def _apply_gates(gates, c_prev):
    """Gate layout is [i | f | o | g], each in its own 128-lane block.

    One sigmoid over the contiguous (B, 3*GP) slice, one tanh on the last block.
    Padded lanes: gates are exactly 0 there (zero-padded weights/bias), so
    i=f=o=0.5, g=0  ->  c stays 0 (starts at 0) and h stays 0."""
    sg = jax.nn.sigmoid(gates[:, 0:3 * GP])
    i_g = sg[:, 0 * GP:1 * GP]
    f_g = sg[:, 1 * GP:2 * GP]
    o_g = sg[:, 2 * GP:3 * GP]
    g_g = jnp.tanh(gates[:, 3 * GP:4 * GP])
    c_new = f_g * c_prev + i_g * g_g
    h_new = o_g * jnp.tanh(c_new)
    return h_new, c_new


# ------------------------------ fused kernel ---------------------------------
def _fused_kernel(x_ref, eps_ref,
                  e_wih0_ref, e_b0_ref, e_whh0_ref, e_w1stk_ref, e_b1_ref,
                  enc_w1_ref, enc_b1_ref, head_w_ref, head_b_ref,
                  dec_w1_ref, dec_b1_ref, dec_w2_ref, dec_b2_ref,
                  d_wih0_ref, d_b0_ref, d_whh0_ref, d_w1stk_ref, d_b1_ref,
                  xhat_ref, muvar_ref):
    f32 = jnp.float32
    B = BATCH
    zeros_h = jnp.zeros((B, GP), f32)

    # ------- encoder: hoisted layer-0 input-side gate preactivations (one matmul) -------
    e_pre = (jnp.dot(x_ref[...], e_wih0_ref[...], preferred_element_type=f32)
             + e_b0_ref[...])                                        # (SEQ*B, 4*GP)
    e_b1b = jnp.broadcast_to(e_b1_ref[...], (B, 4 * GP))             # hoisted bias broadcast

    # ------- encoder: 2-layer LSTM, time loop fully unrolled (h/c carried as values) -------
    h0 = c0 = h1 = c1 = zeros_h
    enc_hs = []
    for t in range(SEQ):
        g0 = e_pre[t * B:(t + 1) * B, :] + jnp.dot(
            h0, e_whh0_ref[...], preferred_element_type=f32)
        h0, c0 = _apply_gates(g0, c0)
        # K-stacked layer-1 cell: [h0_t | h1_prev] @ [Wih1; Whh1] in one K=256 matmul.
        g1 = jnp.dot(jnp.concatenate([h0, h1], axis=1), e_w1stk_ref[...],
                     preferred_element_type=f32) + e_b1b
        h1, c1 = _apply_gates(g1, c1)
        enc_hs.append(h1)
    enc_out = jnp.concatenate(enc_hs, axis=0)                        # (SEQ*B, GP), in vregs
    enc_final_h = h1                                                 # last layer final hidden

    # ------- encoder head (linear1 + fused mu/log_var heads, lane-block separated) -------
    e1 = jnp.maximum(
        jnp.dot(enc_out, enc_w1_ref[...], preferred_element_type=f32) + enc_b1_ref[...],
        0.0)                                                         # (SEQ*B, FC)
    heads = (jnp.dot(e1, head_w_ref[...], preferred_element_type=f32)
             + head_b_ref[...])                                      # (SEQ*B, 2*GP)
    muvar_ref[...] = heads                # single lane-dense store; mu block 0, log_var block 1
    mu = heads[:, 0:GP]
    log_var = heads[:, GP:2 * GP]

    # ------- reparameterize (full-vreg ops; padded lanes of mu/log_var/eps are 0 -> z padded 0) ------
    z = mu + eps_ref[...] * jnp.exp(log_var * 0.5)                   # (SEQ*B, GP)

    # ------- decoder linears -------
    d1 = jnp.maximum(
        jnp.dot(z, dec_w1_ref[...], preferred_element_type=f32) + dec_b1_ref[...], 0.0)
    d2 = jax.nn.sigmoid(
        jnp.dot(d1, dec_w2_ref[...], preferred_element_type=f32) + dec_b2_ref[...])  # (SEQ*B, GP)

    # ------- decoder: hoisted layer-0 input-side gate preactivations -------
    # NOTE: padded lanes of d2 are sigmoid(0)=0.5, but rows HIDDEN..GP-1 of d_wih0 are
    # exactly zero by construction (_init_lstm_layer), so their contribution is zero.
    d_pre = (jnp.dot(d2, d_wih0_ref[...], preferred_element_type=f32)
             + d_b0_ref[...])                                        # (SEQ*B, 4*GP)
    d_b1b = jnp.broadcast_to(d_b1_ref[...], (B, 4 * GP))

    # ------- decoder: 2-layer LSTM, time loop fully unrolled -------
    h0 = h1 = enc_final_h        # encoder last-layer final h broadcast to both layers
    c0 = c1 = zeros_h
    dec_hs = []
    for t in range(SEQ):
        g0 = d_pre[t * B:(t + 1) * B, :] + jnp.dot(
            h0, d_whh0_ref[...], preferred_element_type=f32)
        h0, c0 = _apply_gates(g0, c0)
        g1 = jnp.dot(jnp.concatenate([h0, h1], axis=1), d_w1stk_ref[...],
                     preferred_element_type=f32) + d_b1b
        h1, c1 = _apply_gates(g1, c1)
        dec_hs.append(h1)

    # single sublane- and lane-dense (SEQ*B, GP) store
    xhat_ref[...] = jnp.concatenate(dec_hs, axis=0)


# ------------------------------ parameter init -------------------------------
def _init_lstm_layer(key, in_valid):
    """Fused-gate, lane-padded LSTM layer weights.

    wih: (GP, 4*GP), whh: (GP, 4*GP), b: (1, 4*GP); gate g (order [i,f,o,g]) lives in
    lanes [g*GP, g*GP+HIDDEN). All rows >= in_valid (wih) / >= HIDDEN (whh) and all
    lanes outside the valid gate columns are exactly zero by construction — the kernel
    relies on this to keep padded lanes of h/c at zero and to cancel the 0.5 padded
    lanes of the decoder input d2."""
    k = 1.0 / math.sqrt(HIDDEN)
    kw, ku, kb1, kb2 = jax.random.split(key, 4)
    wih_v = jax.random.uniform(kw, (4, in_valid, HIDDEN), jnp.float32, -k, k)
    whh_v = jax.random.uniform(ku, (4, HIDDEN, HIDDEN), jnp.float32, -k, k)
    b_v = (jax.random.uniform(kb1, (4, HIDDEN), jnp.float32, -k, k)
           + jax.random.uniform(kb2, (4, HIDDEN), jnp.float32, -k, k))  # b_ih + b_hh
    wih = jnp.zeros((GP, 4 * GP), jnp.float32)
    whh = jnp.zeros((GP, 4 * GP), jnp.float32)
    b = jnp.zeros((1, 4 * GP), jnp.float32)
    for g in range(4):
        wih = wih.at[:in_valid, g * GP:g * GP + HIDDEN].set(wih_v[g])
        whh = whh.at[:HIDDEN, g * GP:g * GP + HIDDEN].set(whh_v[g])
        b = b.at[0, g * GP:g * GP + HIDDEN].set(b_v[g])
    return wih, whh, b


def _init_linear(key, in_valid, out_valid, in_pad=None, out_pad=None):
    in_pad = in_valid if in_pad is None else in_pad
    out_pad = out_valid if out_pad is None else out_pad
    k = 1.0 / math.sqrt(in_valid)
    kw, kb = jax.random.split(key)
    w_v = jax.random.uniform(kw, (in_valid, out_valid), jnp.float32, -k, k)
    b_v = jax.random.uniform(kb, (1, out_valid), jnp.float32, -k, k)
    w = jnp.zeros((in_pad, out_pad), jnp.float32).at[:in_valid, :out_valid].set(w_v)
    b = jnp.zeros((1, out_pad), jnp.float32).at[:, :out_valid].set(b_v)
    return w, b


def init_params(key):
    keys = jax.random.split(key, 9)
    p = {}
    # encoder LSTM: layer 0 plain, layer 1 K-stacked [Wih1; Whh1]
    p["e_wih0"], p["e_whh0"], p["e_b0"] = _init_lstm_layer(keys[0], BASE_SIZE)
    e_wih1, e_whh1, e_b1 = _init_lstm_layer(keys[1], HIDDEN)
    p["e_w1stk"] = jnp.concatenate([e_wih1, e_whh1], axis=0)          # (2*GP, 4*GP)
    p["e_b1"] = e_b1
    # encoder linears (linear1 + mu/log_var heads in separate 128-lane blocks)
    p["enc_w1"], p["enc_b1"] = _init_linear(keys[2], HIDDEN, FC, in_pad=GP)
    mu_w, mu_b = _init_linear(keys[3], FC, LATENT)
    lv_w, lv_b = _init_linear(keys[4], FC, LATENT)
    head_w = jnp.zeros((FC, 2 * GP), jnp.float32)
    head_w = head_w.at[:, 0:LATENT].set(mu_w).at[:, GP:GP + LATENT].set(lv_w)
    head_b = jnp.zeros((1, 2 * GP), jnp.float32)
    head_b = head_b.at[:, 0:LATENT].set(mu_b).at[:, GP:GP + LATENT].set(lv_b)
    p["head_w"], p["head_b"] = head_w, head_b
    # decoder linears (dec_w1 padded to a full 128-lane K block)
    p["dec_w1"], p["dec_b1"] = _init_linear(keys[5], LATENT, FC, in_pad=GP)
    p["dec_w2"], p["dec_b2"] = _init_linear(keys[6], FC, HIDDEN, out_pad=GP)
    # decoder LSTM (input width = hidden_dim, lane-padded); layer 1 K-stacked
    p["d_wih0"], p["d_whh0"], p["d_b0"] = _init_lstm_layer(keys[7], HIDDEN)
    d_wih1, d_whh1, d_b1 = _init_lstm_layer(keys[8], HIDDEN)
    p["d_w1stk"] = jnp.concatenate([d_wih1, d_whh1], axis=0)          # (2*GP, 4*GP)
    p["d_b1"] = d_b1
    return p


# ------------------------------- forward pass --------------------------------
@jax.jit
def rnn_autoencoder_forward(x, eps, params):
    # Lane-pad x (time-major flattened) and eps to full 128-lane blocks in the wrapper.
    x_flat = x.reshape(SEQ * BATCH, BASE_SIZE)
    x_pad = jnp.zeros((SEQ * BATCH, GP), jnp.float32).at[:, :BASE_SIZE].set(x_flat)
    eps_pad = jnp.zeros((SEQ * BATCH, GP), jnp.float32).at[:, :LATENT].set(eps)

    flat = (
        params["e_wih0"], params["e_b0"], params["e_whh0"], params["e_w1stk"], params["e_b1"],
        params["enc_w1"], params["enc_b1"], params["head_w"], params["head_b"],
        params["dec_w1"], params["dec_b1"], params["dec_w2"], params["dec_b2"],
        params["d_wih0"], params["d_b0"], params["d_whh0"], params["d_w1stk"], params["d_b1"],
    )
    xhat_pad, heads = pl.pallas_call(
        _fused_kernel,
        out_shape=(
            jax.ShapeDtypeStruct((SEQ * BATCH, GP), jnp.float32),       # x_hat, lane/sublane-dense
            jax.ShapeDtypeStruct((SEQ * BATCH, 2 * GP), jnp.float32),   # [mu block | log_var block]
        ),
        compiler_params=pltpu.CompilerParams(vmem_limit_bytes=32 * 1024 * 1024),
    )(x_pad, eps_pad, *flat)

    x_hat = xhat_pad.reshape(SEQ, BATCH, GP)[:, :, :HIDDEN]
    mu = heads[:, :LATENT]
    log_var = heads[:, GP:GP + LATENT]
    return x_hat, mu, log_var


# ----------------------------------- main ------------------------------------
if __name__ == "__main__":
    key = jax.random.PRNGKey(0)
    x_key, eps_key, p_key = jax.random.split(key, 3)

    x = jax.random.uniform(x_key, (SEQ, BATCH, BASE_SIZE), jnp.float32)
    eps = jax.random.normal(eps_key, (SEQ * BATCH, LATENT), jnp.float32)
    params = init_params(p_key)

    x_hat, mu, log_var = rnn_autoencoder_forward(x, eps, params)
    jax.block_until_ready((x_hat, mu, log_var))

    assert x_hat.shape == (SEQ, BATCH, HIDDEN)
    assert mu.shape == (SEQ * BATCH, LATENT)
    assert log_var.shape == (SEQ * BATCH, LATENT)
    assert bool(jnp.all(jnp.isfinite(x_hat)))
    assert bool(jnp.all(jnp.isfinite(mu)))
    assert bool(jnp.all(jnp.isfinite(log_var)))

    print("KERNEL_OK")
</pallas_src>

<mosaic_0001>
module attributes {stable_mosaic.version = 11 : i64} {
  func.func @_fused_kernel(%arg0: memref<16x128xf32, #tpu.memory_space<vmem>>, %arg1: memref<16x128xf32, #tpu.memory_space<vmem>>, %arg2: memref<128x512xf32, #tpu.memory_space<vmem>>, %arg3: memref<1x512xf32, #tpu.memory_space<vmem>>, %arg4: memref<128x512xf32, #tpu.memory_space<vmem>>, %arg5: memref<256x512xf32, #tpu.memory_space<vmem>>, %arg6: memref<1x512xf32, #tpu.memory_space<vmem>>, %arg7: memref<128x512xf32, #tpu.memory_space<vmem>>, %arg8: memref<1x512xf32, #tpu.memory_space<vmem>>, %arg9: memref<512x256xf32, #tpu.memory_space<vmem>>, %arg10: memref<1x256xf32, #tpu.memory_space<vmem>>, %arg11: memref<128x512xf32, #tpu.memory_space<vmem>>, %arg12: memref<1x512xf32, #tpu.memory_space<vmem>>, %arg13: memref<512x128xf32, #tpu.memory_space<vmem>>, %arg14: memref<1x128xf32, #tpu.memory_space<vmem>>, %arg15: memref<128x512xf32, #tpu.memory_space<vmem>>, %arg16: memref<1x512xf32, #tpu.memory_space<vmem>>, %arg17: memref<128x512xf32, #tpu.memory_space<vmem>>, %arg18: memref<256x512xf32, #tpu.memory_space<vmem>>, %arg19: memref<1x512xf32, #tpu.memory_space<vmem>>, %arg20: memref<16x128xf32, #tpu.memory_space<vmem>>, %arg21: memref<16x256xf32, #tpu.memory_space<vmem>>) attributes {dimension_semantics = [], scalar_prefetch = 0 : i64, scratch_operands = 0 : i64, tpu.core_type = #tpu.core_type<tc>} {
    %cst = arith.constant 0.000000e+00 : f32
    %0 = vector.broadcast %cst : f32 to vector<2x128xf32>
    %c0 = arith.constant 0 : index
    %c0_0 = arith.constant 0 : index
    %1 = vector.load %arg0[%c0, %c0_0] : memref<16x128xf32, #tpu.memory_space<vmem>>, vector<16x128xf32>
    %c0_1 = arith.constant 0 : index
    %c0_2 = arith.constant 0 : index
    %2 = vector.load %arg2[%c0_1, %c0_2] : memref<128x512xf32, #tpu.memory_space<vmem>>, vector<128x512xf32>
    %cst_3 = arith.constant dense<0.000000e+00> : vector<16x512xf32>
    %3 = tpu.matmul %1, %2, %cst_3 {dimension_numbers = #tpu.dot_dimension_numbers<[1], [0], [0], [1], [0, 0, 1, 1], [], []>} : vector<16x128xf32>, vector<128x512xf32>, vector<16x512xf32> -> vector<16x512xf32>
    %c0_4 = arith.constant 0 : index
    %c0_5 = arith.constant 0 : index
    %4 = vector.load %arg3[%c0_4, %c0_5] : memref<1x512xf32, #tpu.memory_space<vmem>>, vector<1x512xf32>
    %5 = vector.broadcast %4 : vector<1x512xf32> to vector<16x512xf32>
    %6 = arith.addf %3, %5 : vector<16x512xf32>
    %c0_6 = arith.constant 0 : index
    %c0_7 = arith.constant 0 : index
    %7 = vector.load %arg6[%c0_6, %c0_7] : memref<1x512xf32, #tpu.memory_space<vmem>>, vector<1x512xf32>
    %8 = vector.shape_cast %7 : vector<1x512xf32> to vector<1x512xf32>
    %9 = vector.broadcast %8 : vector<1x512xf32> to vector<2x512xf32>
    %10 = vector.extract_strided_slice %6 {offsets = [0, 0], sizes = [2, 512], strides = [1, 1]} : vector<16x512xf32> to vector<2x512xf32>
    %c0_8 = arith.constant 0 : index
    %c0_9 = arith.constant 0 : index
    %11 = vector.load %arg4[%c0_8, %c0_9] : memref<128x512xf32, #tpu.memory_space<vmem>>, vector<128x512xf32>
    %cst_10 = arith.constant dense<0.000000e+00> : vector<2x512xf32>
    %12 = tpu.matmul %0, %11, %cst_10 {dimension_numbers = #tpu.dot_dimension_numbers<[1], [0], [0], [1], [0, 0, 1, 1], [], []>} : vector<2x128xf32>, vector<128x512xf32>, vector<2x512xf32> -> vector<2x512xf32>
    %13 = arith.addf %10, %12 : vector<2x512xf32>
    %14 = vector.extract_strided_slice %13 {offsets = [0, 0], sizes = [2, 384], strides = [1, 1]} : vector<2x512xf32> to vector<2x384xf32>
    %15 = arith.negf %14 : vector<2x384xf32>
    %16 = math.exp %15 : vector<2x384xf32>
    %cst_11 = arith.constant 1.000000e+00 : f32
    %17 = vector.broadcast %cst_11 : f32 to vector<2x384xf32>
    %18 = arith.addf %17, %16 : vector<2x384xf32>
    %19 = arith.divf %17, %18 : vector<2x384xf32>
    %20 = vector.extract_strided_slice %19 {offsets = [0, 0], sizes = [2, 128], strides = [1, 1]} : vector<2x384xf32> to vector<2x128xf32>
    %21 = vector.extract_strided_slice %19 {offsets = [0, 128], sizes = [2, 128], strides = [1, 1]} : vector<2x384xf32> to vector<2x128xf32>
    %22 = vector.extract_strided_slice %19 {offsets = [0, 256], sizes = [2, 128], strides = [1, 1]} : vector<2x384xf32> to vector<2x128xf32>
    %23 = vector.extract_strided_slice %13 {offsets = [0, 384], sizes = [2, 128], strides = [1, 1]} : vector<2x512xf32> to vector<2x128xf32>
    %24 = math.tanh %23 : vector<2x128xf32>
    %25 = arith.mulf %21, %0 : vector<2x128xf32>
    %26 = arith.mulf %20, %24 : vector<2x128xf32>
    %27 = arith.addf %25, %26 : vector<2x128xf32>
    %28 = math.tanh %27 : vector<2x128xf32>
    %29 = arith.mulf %22, %28 : vector<2x128xf32>
    %30 = tpu.concatenate %29, %0 in 1 : vector<2x128xf32>, vector<2x128xf32> -> vector<2x256xf32>
    %c0_12 = arith.constant 0 : index
    %c0_13 = arith.constant 0 : index
    %31 = vector.load %arg5[%c0_12, %c0_13] : memref<256x512xf32, #tpu.memory_space<vmem>>, vector<256x512xf32>
    %cst_14 = arith.constant dense<0.000000e+00> : vector<2x512xf32>
    %32 = tpu.matmul %30, %31, %cst_14 {dimension_numbers = #tpu.dot_dimension_numbers<[1], [0], [0], [1], [0, 0, 1, 1], [], []>} : vector<2x256xf32>, vector<256x512xf32>, vector<2x512xf32> -> vector<2x512xf32>
    %33 = arith.addf %32, %9 : vector<2x512xf32>
    %34 = vector.extract_strided_slice %33 {offsets = [0, 0], sizes = [2, 384], strides = [1, 1]} : vector<2x512xf32> to vector<2x384xf32>
    %35 = arith.negf %34 : vector<2x384xf32>
    %36 = math.exp %35 : vector<2x384xf32>
    %cst_15 = arith.constant 1.000000e+00 : f32
    %37 = vector.broadcast %cst_15 : f32 to vector<2x384xf32>
    %38 = arith.addf %37, %36 : vector<2x384xf32>
    %39 = arith.divf %37, %38 : vector<2x384xf32>
    %40 = vector.extract_strided_slice %39 {offsets = [0, 0], sizes = [2, 128], strides = [1, 1]} : vector<2x384xf32> to vector<2x128xf32>
    %41 = vector.extract_strided_slice %39 {offsets = [0, 128], sizes = [2, 128], strides = [1, 1]} : vector<2x384xf32> to vector<2x128xf32>
    %42 = vector.extract_strided_slice %39 {offsets = [0, 256], sizes = [2, 128], strides = [1, 1]} : vector<2x384xf32> to vector<2x128xf32>
    %43 = vector.extract_strided_slice %33 {offsets = [0, 384], sizes = [2, 128], strides = [1, 1]} : vector<2x512xf32> to vector<2x128xf32>
    %44 = math.tanh %43 : vector<2x128xf32>
    %45 = arith.mulf %41, %0 : vector<2x128xf32>
    %46 = arith.mulf %40, %44 : vector<2x128xf32>
    %47 = arith.addf %45, %46 : vector<2x128xf32>
    %48 = math.tanh %47 : vector<2x128xf32>
    %49 = arith.mulf %42, %48 : vector<2x128xf32>
    %50 = vector.extract_strided_slice %6 {offsets = [2, 0], sizes = [2, 512], strides = [1, 1]} : vector<16x512xf32> to vector<2x512xf32>
    %c0_16 = arith.constant 0 : index
    %c0_17 = arith.constant 0 : index
    %51 = vector.load %arg4[%c0_16, %c0_17] : memref<128x512xf32, #tpu.memory_space<vmem>>, vector<128x512xf32>
    %cst_18 = arith.constant dense<0.000000e+00> : vector<2x512xf32>
    %52 = tpu.matmul %29, %51, %cst_18 {dimension_numbers = #tpu.dot_dimension_numbers<[1], [0], [0], [1], [0, 0, 1, 1], [], []>} : vector<2x128xf32>, vector<128x512xf32>, vector<2x512xf32> -> vector<2x512xf32>
    %53 = arith.addf %50, %52 : vector<2x512xf32>
    %54 = vector.extract_strided_slice %53 {offsets = [0, 0], sizes = [2, 384], strides = [1, 1]} : vector<2x512xf32> to vector<2x384xf32>
    %55 = arith.negf %54 : vector<2x384xf32>
    %56 = math.exp %55 : vector<2x384xf32>
    %cst_19 = arith.constant 1.000000e+00 : f32
    %57 = vector.broadcast %cst_19 : f32 to vector<2x384xf32>
    %58 = arith.addf %57, %56 : vector<2x384xf32>
    %59 = arith.divf %57, %58 : vector<2x384xf32>
    %60 = vector.extract_strided_slice %59 {offsets = [0, 0], sizes = [2, 128], strides = [1, 1]} : vector<2x384xf32> to vector<2x128xf32>
    %61 = vector.extract_strided_slice %59 {offsets = [0, 128], sizes = [2, 128], strides = [1, 1]} : vector<2x384xf32> to vector<2x128xf32>
    %62 = vector.extract_strided_slice %59 {offsets = [0, 256], sizes = [2, 128], strides = [1, 1]} : vector<2x384xf32> to vector<2x128xf32>
    %63 = vector.extract_strided_slice %53 {offsets = [0, 384], sizes = [2, 128], strides = [1, 1]} : vector<2x512xf32> to vector<2x128xf32>
    %64 = math.tanh %63 : vector<2x128xf32>
    %65 = arith.mulf %61, %27 : vector<2x128xf32>
    %66 = arith.mulf %60, %64 : vector<2x128xf32>
    %67 = arith.addf %65, %66 : vector<2x128xf32>
    %68 = math.tanh %67 : vector<2x128xf32>
    %69 = arith.mulf %62, %68 : vector<2x128xf32>
    %70 = tpu.concatenate %69, %49 in 1 : vector<2x128xf32>, vector<2x128xf32> -> vector<2x256xf32>
    %c0_20 = arith.constant 0 : index
    %c0_21 = arith.constant 0 : index
    %71 = vector.load %arg5[%c0_20, %c0_21] : memref<256x512xf32, #tpu.memory_space<vmem>>, vector<256x512xf32>
    %cst_22 = arith.constant dense<0.000000e+00> : vector<2x512xf32>
    %72 = tpu.matmul %70, %71, %cst_22 {dimension_numbers = #tpu.dot_dimension_numbers<[1], [0], [0], [1], [0, 0, 1, 1], [], []>} : vector<2x256xf32>, vector<256x512xf32>, vector<2x512xf32> -> vector<2x512xf32>
    %73 = arith.addf %72, %9 : vector<2x512xf32>
    %74 = vector.extract_strided_slice %73 {offsets = [0, 0], sizes = [2, 384], strides = [1, 1]} : vector<2x512xf32> to vector<2x384xf32>
    %75 = arith.negf %74 : vector<2x384xf32>
    %76 = math.exp %75 : vector<2x384xf32>
    %cst_23 = arith.constant 1.000000e+00 : f32
    %77 = vector.broadcast %cst_23 : f32 to vector<2x384xf32>
    %78 = arith.addf %77, %76 : vector<2x384xf32>
    %79 = arith.divf %77, %78 : vector<2x384xf32>
    %80 = vector.extract_strided_slice %79 {offsets = [0, 0], sizes = [2, 128], strides = [1, 1]} : vector<2x384xf32> to vector<2x128xf32>
    %81 = vector.extract_strided_slice %79 {offsets = [0, 128], sizes = [2, 128], strides = [1, 1]} : vector<2x384xf32> to vector<2x128xf32>
    %82 = vector.extract_strided_slice %79 {offsets = [0, 256], sizes = [2, 128], strides = [1, 1]} : vector<2x384xf32> to vector<2x128xf32>
    %83 = vector.extract_strided_slice %73 {offsets = [0, 384], sizes = [2, 128], strides = [1, 1]} : vector<2x512xf32> to vector<2x128xf32>
    %84 = math.tanh %83 : vector<2x128xf32>
    %85 = arith.mulf %81, %47 : vector<2x128xf32>
    %86 = arith.mulf %80, %84 : vector<2x128xf32>
    %87 = arith.addf %85, %86 : vector<2x128xf32>
    %88 = math.tanh %87 : vector<2x128xf32>
    %89 = arith.mulf %82, %88 : vector<2x128xf32>
    %90 = vector.extract_strided_slice %6 {offsets = [4, 0], sizes = [2, 512], strides = [1, 1]} : vector<16x512xf32> to vector<2x512xf32>
    %c0_24 = arith.constant 0 : index
    %c0_25 = arith.constant 0 : index
    %91 = vector.load %arg4[%c0_24, %c0_25] : memref<128x512xf32, #tpu.memory_space<vmem>>, vector<128x512xf32>
    %cst_26 = arith.constant dense<0.000000e+00> : vector<2x512xf32>
    %92 = tpu.matmul %69, %91, %cst_26 {dimension_numbers = #tpu.dot_dimension_numbers<[1], [0], [0], [1], [0, 0, 1, 1], [], []>} : vector<2x128xf32>, vector<128x512xf32>, vector<2x512xf32> -> vector<2x512xf32>
    %93 = arith.addf %90, %92 : vector<2x512xf32>
    %94 = vector.extract_strided_slice %93 {offsets = [0, 0], sizes = [2, 384], strides = [1, 1]} : vector<2x512xf32> to vector<2x384xf32>
    %95 = arith.negf %94 : vector<2x384xf32>
    %96 = math.exp %95 : vector<2x384xf32>
    %cst_27 = arith.constant 1.000000e+00 : f32
    %97 = vector.broadcast %cst_27 : f32 to vector<2x384xf32>
    %98 = arith.addf %97, %96 : vector<2x384xf32>
    %99 = arith.divf %97, %98 : vector<2x384xf32>
    %100 = vector.extract_strided_slice %99 {offsets = [0, 0], sizes = [2, 128], strides = [1, 1]} : vector<2x384xf32> to vector<2x128xf32>
    %101 = vector.extract_strided_slice %99 {offsets = [0, 128], sizes = [2, 128], strides = [1, 1]} : vector<2x384xf32> to vector<2x128xf32>
    %102 = vector.extract_strided_slice %99 {offsets = [0, 256], sizes = [2, 128], strides = [1, 1]} : vector<2x384xf32> to vector<2x128xf32>
    %103 = vector.extract_strided_slice %93 {offsets = [0, 384], sizes = [2, 128], strides = [1, 1]} : vector<2x512xf32> to vector<2x128xf32>
    %104 = math.tanh %103 : vector<2x128xf32>
    %105 = arith.mulf %101, %67 : vector<2x128xf32>
    %106 = arith.mulf %100, %104 : vector<2x128xf32>
    %107 = arith.addf %105, %106 : vector<2x128xf32>
    %108 = math.tanh %107 : vector<2x128xf32>
    %109 = arith.mulf %102, %108 : vector<2x128xf32>
    %110 = tpu.concatenate %109, %89 in 1 : vector<2x128xf32>, vector<2x128xf32> -> vector<2x256xf32>
    %c0_28 = arith.constant 0 : index
    %c0_29 = arith.constant 0 : index
    %111 = vector.load %arg5[%c0_28, %c0_29] : memref<256x512xf32, #tpu.memory_space<vmem>>, vector<256x512xf32>
    %cst_30 = arith.constant dense<0.000000e+00> : vector<2x512xf32>
    %112 = tpu.matmul %110, %111, %cst_30 {dimension_numbers = #tpu.dot_dimension_numbers<[1], [0], [0], [1], [0, 0, 1, 1], [], []>} : vector<2x256xf32>, vector<256x512xf32>, vector<2x512xf32> -> vector<2x512xf32>
    %113 = arith.addf %112, %9 : vector<2x512xf32>
    %114 = vector.extract_strided_slice %113 {offsets = [0, 0], sizes = [2, 384], strides = [1, 1]} : vector<2x512xf32> to vector<2x384xf32>
    %115 = arith.negf %114 : vector<2x384xf32>
    %116 = math.exp %115 : vector<2x384xf32>
    %cst_31 = arith.constant 1.000000e+00 : f32
    %117 = vector.broadcast %cst_31 : f32 to vector<2x384xf32>
    %118 = arith.addf %117, %116 : vector<2x384xf32>
    %119 = arith.divf %117, %118 : vector<2x384xf32>
    %120 = vector.extract_strided_slice %119 {offsets = [0, 0], sizes = [2, 128], strides = [1, 1]} : vector<2x384xf32> to vector<2x128xf32>
    %121 = vector.extract_strided_slice %119 {offsets = [0, 128], sizes = [2, 128], strides = [1, 1]} : vector<2x384xf32> to vector<2x128xf32>
    %122 = vector.extract_strided_slice %119 {offsets = [0, 256], sizes = [2, 128], strides = [1, 1]} : vector<2x384xf32> to vector<2x128xf32>
    %123 = vector.extract_strided_slice %113 {offsets = [0, 384], sizes = [2, 128], strides = [1, 1]} : vector<2x512xf32> to vector<2x128xf32>
    %124 = math.tanh %123 : vector<2x128xf32>
    %125 = arith.mulf %121, %87 : vector<2x128xf32>
    %126 = arith.mulf %120, %124 : vector<2x128xf32>
    %127 = arith.addf %125, %126 : vector<2x128xf32>
    %128 = math.tanh %127 : vector<2x128xf32>
    %129 = arith.mulf %122, %128 : vector<2x128xf32>
    %130 = vector.extract_strided_slice %6 {offsets = [6, 0], sizes = [2, 512], strides = [1, 1]} : vector<16x512xf32> to vector<2x512xf32>
    %c0_32 = arith.constant 0 : index
    %c0_33 = arith.constant 0 : index
    %131 = vector.load %arg4[%c0_32, %c0_33] : memref<128x512xf32, #tpu.memory_space<vmem>>, vector<128x512xf32>
    %cst_34 = arith.constant dense<0.000000e+00> : vector<2x512xf32>
    %132 = tpu.matmul %109, %131, %cst_34 {dimension_numbers = #tpu.dot_dimension_numbers<[1], [0], [0], [1], [0, 0, 1, 1], [], []>} : vector<2x128xf32>, vector<128x512xf32>, vector<2x512xf32> -> vector<2x512xf32>
    %133 = arith.addf %130, %132 : vector<2x512xf32>
    %134 = vector.extract_strided_slice %133 {offsets = [0, 0], sizes = [2, 384], strides = [1, 1]} : vector<2x512xf32> to vector<2x384xf32>
    %135 = arith.negf %134 : vector<2x384xf32>
    %136 = math.exp %135 : vector<2x384xf32>
    %cst_35 = arith.constant 1.000000e+00 : f32
    %137 = vector.broadcast %cst_35 : f32 to vector<2x384xf32>
    %138 = arith.addf %137, %136 : vector<2x384xf32>
    %139 = arith.divf %137, %138 : vector<2x384xf32>
    %140 = vector.extract_strided_slice %139 {offsets = [0, 0], sizes = [2, 128], strides = [1, 1]} : vector<2x384xf32> to vector<2x128xf32>
    %141 = vector.extract_strided_slice %139 {offsets = [0, 128], sizes = [2, 128], strides = [1, 1]} : vector<2x384xf32> to vector<2x128xf32>
    %142 = vector.extract_strided_slice %139 {offsets = [0, 256], sizes = [2, 128], strides = [1, 1]} : vector<2x384xf32> to vector<2x128xf32>
    %143 = vector.extract_strided_slice %133 {offsets = [0, 384], sizes = [2, 128], strides = [1, 1]} : vector<2x512xf32> to vector<2x128xf32>
    %144 = math.tanh %143 : vector<2x128xf32>
    %145 = arith.mulf %141, %107 : vector<2x128xf32>
    %146 = arith.mulf %140, %144 : vector<2x128xf32>
    %147 = arith.addf %145, %146 : vector<2x128xf32>
    %148 = math.tanh %147 : vector<2x128xf32>
    %149 = arith.mulf %142, %148 : vector<2x128xf32>
    %150 = tpu.concatenate %149, %129 in 1 : vector<2x128xf32>, vector<2x128xf32> -> vector<2x256xf32>
    %c0_36 = arith.constant 0 : index
    %c0_37 = arith.constant 0 : index
    %151 = vector.load %arg5[%c0_36, %c0_37] : memref<256x512xf32, #tpu.memory_space<vmem>>, vector<256x512xf32>
    %cst_38 = arith.constant dense<0.000000e+00> : vector<2x512xf32>
    %152 = tpu.matmul %150, %151, %cst_38 {dimension_numbers = #tpu.dot_dimension_numbers<[1], [0], [0], [1], [0, 0, 1, 1], [], []>} : vector<2x256xf32>, vector<256x512xf32>, vector<2x512xf32> -> vector<2x512xf32>
    %153 = arith.addf %152, %9 : vector<2x512xf32>
    %154 = vector.extract_strided_slice %153 {offsets = [0, 0], sizes = [2, 384], strides = [1, 1]} : vector<2x512xf32> to vector<2x384xf32>
    %155 = arith.negf %154 : vector<2x384xf32>
    %156 = math.exp %155 : vector<2x384xf32>
    %cst_39 = arith.constant 1.000000e+00 : f32
    %157 = vector.broadcast %cst_39 : f32 to vector<2x384xf32>
    %158 = arith.addf %157, %156 : vector<2x384xf32>
    %159 = arith.divf %157, %158 : vector<2x384xf32>
    %160 = vector.extract_strided_slice %159 {offsets = [0, 0], sizes = [2, 128], strides = [1, 1]} : vector<2x384xf32> to vector<2x128xf32>
    %161 = vector.extract_strided_slice %159 {offsets = [0, 128], sizes = [2, 128], strides = [1, 1]} : vector<2x384xf32> to vector<2x128xf32>
    %162 = vector.extract_strided_slice %159 {offsets = [0, 256], sizes = [2, 128], strides = [1, 1]} : vector<2x384xf32> to vector<2x128xf32>
    %163 = vector.extract_strided_slice %153 {offsets = [0, 384], sizes = [2, 128], strides = [1, 1]} : vector<2x512xf32> to vector<2x128xf32>
    %164 = math.tanh %163 : vector<2x128xf32>
    %165 = arith.mulf %161, %127 : vector<2x128xf32>
    %166 = arith.mulf %160, %164 : vector<2x128xf32>
    %167 = arith.addf %165, %166 : vector<2x128xf32>
    %168 = math.tanh %167 : vector<2x128xf32>
    %169 = arith.mulf %162, %168 : vector<2x128xf32>
    %170 = vector.extract_strided_slice %6 {offsets = [8, 0], sizes = [2, 512], strides = [1, 1]} : vector<16x512xf32> to vector<2x512xf32>
    %c0_40 = arith.constant 0 : index
    %c0_41 = arith.constant 0 : index
    %171 = vector.load %arg4[%c0_40, %c0_41] : memref<128x512xf32, #tpu.memory_space<vmem>>, vector<128x512xf32>
    %cst_42 = arith.constant dense<0.000000e+00> : vector<2x512xf32>
    %172 = tpu.matmul %149, %171, %cst_42 {dimension_numbers = #tpu.dot_dimension_numbers<[1], [0], [0], [1], [0, 0, 1, 1], [], []>} : vector<2x128xf32>, vector<128x512xf32>, vector<2x512xf32> -> vector<2x512xf32>
    %173 = arith.addf %170, %172 : vector<2x512xf32>
    %174 = vector.extract_strided_slice %173 {offsets = [0, 0], sizes = [2, 384], strides = [1, 1]} : vector<2x512xf32> to vector<2x384xf32>
    %175 = arith.negf %174 : vector<2x384xf32>
    %176 = math.exp %175 : vector<2x384xf32>
    %cst_43 = arith.constant 1.000000e+00 : f32
    %177 = vector.broadcast %cst_43 : f32 to vector<2x384xf32>
    %178 = arith.addf %177, %176 : vector<2x384xf32>
    %179 = arith.divf %177, %178 : vector<2x384xf32>
    %180 = vector.extract_strided_slice %179 {offsets = [0, 0], sizes = [2, 128], strides = [1, 1]} : vector<2x384xf32> to vector<2x128xf32>
    %181 = vector.extract_strided_slice %179 {offsets = [0, 128], sizes = [2, 128], strides = [1, 1]} : vector<2x384xf32> to vector<2x128xf32>
    %182 = vector.extract_strided_slice %179 {offsets = [0, 256], sizes = [2, 128], strides = [1, 1]} : vector<2x384xf32> to vector<2x128xf32>
    %183 = vector.extract_strided_slice %173 {offsets = [0, 384], sizes = [2, 128], strides = [1, 1]} : vector<2x512xf32> to vector<2x128xf32>
    %184 = math.tanh %183 : vector<2x128xf32>
    %185 = arith.mulf %181, %147 : vector<2x128xf32>
    %186 = arith.mulf %180, %184 : vector<2x128xf32>
    %187 = arith.addf %185, %186 : vector<2x128xf32>
    %188 = math.tanh %187 : vector<2x128xf32>
    %189 = arith.mulf %182, %188 : vector<2x128xf32>
    %190 = tpu.concatenate %189, %169 in 1 : vector<2x128xf32>, vector<2x128xf32> -> vector<2x256xf32>
    %c0_44 = arith.constant 0 : index
    %c0_45 = arith.constant 0 : index
    %191 = vector.load %arg5[%c0_44, %c0_45] : memref<256x512xf32, #tpu.memory_space<vmem>>, vector<256x512xf32>
    %cst_46 = arith.constant dense<0.000000e+00> : vector<2x512xf32>
    %192 = tpu.matmul %190, %191, %cst_46 {dimension_numbers = #tpu.dot_dimension_numbers<[1], [0], [0], [1], [0, 0, 1, 1], [], []>} : vector<2x256xf32>, vector<256x512xf32>, vector<2x512xf32> -> vector<2x512xf32>
    %193 = arith.addf %192, %9 : vector<2x512xf32>
    %194 = vector.extract_strided_slice %193 {offsets = [0, 0], sizes = [2, 384], strides = [1, 1]} : vector<2x512xf32> to vector<2x384xf32>
    %195 = arith.negf %194 : vector<2x384xf32>
    %196 = math.exp %195 : vector<2x384xf32>
    %cst_47 = arith.constant 1.000000e+00 : f32
    %197 = vector.broadcast %cst_47 : f32 to vector<2x384xf32>
    %198 = arith.addf %197, %196 : vector<2x384xf32>
    %199 = arith.divf %197, %198 : vector<2x384xf32>
    %200 = vector.extract_strided_slice %199 {offsets = [0, 0], sizes = [2, 128], strides = [1, 1]} : vector<2x384xf32> to vector<2x128xf32>
    %201 = vector.extract_strided_slice %199 {offsets = [0, 128], sizes = [2, 128], strides = [1, 1]} : vector<2x384xf32> to vector<2x128xf32>
    %202 = vector.extract_strided_slice %199 {offsets = [0, 256], sizes = [2, 128], strides = [1, 1]} : vector<2x384xf32> to vector<2x128xf32>
    %203 = vector.extract_strided_slice %193 {offsets = [0, 384], sizes = [2, 128], strides = [1, 1]} : vector<2x512xf32> to vector<2x128xf32>
    %204 = math.tanh %203 : vector<2x128xf32>
    %205 = arith.mulf %201, %167 : vector<2x128xf32>
    %206 = arith.mulf %200, %204 : vector<2x128xf32>
    %207 = arith.addf %205, %206 : vector<2x128xf32>
    %208 = math.tanh %207 : vector<2x128xf32>
    %209 = arith.mulf %202, %208 : vector<2x128xf32>
    %210 = vector.extract_strided_slice %6 {offsets = [10, 0], sizes = [2, 512], strides = [1, 1]} : vector<16x512xf32> to vector<2x512xf32>
    %c0_48 = arith.constant 0 : index
    %c0_49 = arith.constant 0 : index
    %211 = vector.load %arg4[%c0_48, %c0_49] : memref<128x512xf32, #tpu.memory_space<vmem>>, vector<128x512xf32>
    %cst_50 = arith.constant dense<0.000000e+00> : vector<2x512xf32>
    %212 = tpu.matmul %189, %211, %cst_50 {dimension_numbers = #tpu.dot_dimension_numbers<[1], [0], [0], [1], [0, 0, 1, 1], [], []>} : vector<2x128xf32>, vector<128x512xf32>, vector<2x512xf32> -> vector<2x512xf32>
    %213 = arith.addf %210, %212 : vector<2x512xf32>
    %214 = vector.extract_strided_slice %213 {offsets = [0, 0], sizes = [2, 384], strides = [1, 1]} : vector<2x512xf32> to vector<2x384xf32>
    %215 = arith.negf %214 : vector<2x384xf32>
    %216 = math.exp %215 : vector<2x384xf32>
    %cst_51 = arith.constant 1.000000e+00 : f32
    %217 = vector.broadcast %cst_51 : f32 to vector<2x384xf32>
    %218 = arith.addf %217, %216 : vector<2x384xf32>
    %219 = arith.divf %217, %218 : vector<2x384xf32>
    %220 = vector.extract_strided_slice %219 {offsets = [0, 0], sizes = [2, 128], strides = [1, 1]} : vector<2x384xf32> to vector<2x128xf32>
    %221 = vector.extract_strided_slice %219 {offsets = [0, 128], sizes = [2, 128], strides = [1, 1]} : vector<2x384xf32> to vector<2x128xf32>
    %222 = vector.extract_strided_slice %219 {offsets = [0, 256], sizes = [2, 128], strides = [1, 1]} : vector<2x384xf32> to vector<2x128xf32>
    %223 = vector.extract_strided_slice %213 {offsets = [0, 384], sizes = [2, 128], strides = [1, 1]} : vector<2x512xf32> to vector<2x128xf32>
    %224 = math.tanh %223 : vector<2x128xf32>
    %225 = arith.mulf %221, %187 : vector<2x128xf32>
    %226 = arith.mulf %220, %224 : vector<2x128xf32>
    %227 = arith.addf %225, %226 : vector<2x128xf32>
    %228 = math.tanh %227 : vector<2x128xf32>
    %229 = arith.mulf %222, %228 : vector<2x128xf32>
    %230 = tpu.concatenate %229, %209 in 1 : vector<2x128xf32>, vector<2x128xf32> -> vector<2x256xf32>
    %c0_52 = arith.constant 0 : index
    %c0_53 = arith.constant 0 : index
    %231 = vector.load %arg5[%c0_52, %c0_53] : memref<256x512xf32, #tpu.memory_space<vmem>>, vector<256x512xf32>
    %cst_54 = arith.constant dense<0.000000e+00> : vector<2x512xf32>
    %232 = tpu.matmul %230, %231, %cst_54 {dimension_numbers = #tpu.dot_dimension_numbers<[1], [0], [0], [1], [0, 0, 1, 1], [], []>} : vector<2x256xf32>, vector<256x512xf32>, vector<2x512xf32> -> vector<2x512xf32>
    %233 = arith.addf %232, %9 : vector<2x512xf32>
    %234 = vector.extract_strided_slice %233 {offsets = [0, 0], sizes = [2, 384], strides = [1, 1]} : vector<2x512xf32> to vector<2x384xf32>
    %235 = arith.negf %234 : vector<2x384xf32>
    %236 = math.exp %235 : vector<2x384xf32>
    %cst_55 = arith.constant 1.000000e+00 : f32
    %237 = vector.broadcast %cst_55 : f32 to vector<2x384xf32>
    %238 = arith.addf %237, %236 : vector<2x384xf32>
    %239 = arith.divf %237, %238 : vector<2x384xf32>
    %240 = vector.extract_strided_slice %239 {offsets = [0, 0], sizes = [2, 128], strides = [1, 1]} : vector<2x384xf32> to vector<2x128xf32>
    %241 = vector.extract_strided_slice %239 {offsets = [0, 128], sizes = [2, 128], strides = [1, 1]} : vector<2x384xf32> to vector<2x128xf32>
    %242 = vector.extract_strided_slice %239 {offsets = [0, 256], sizes = [2, 128], strides = [1, 1]} : vector<2x384xf32> to vector<2x128xf32>
    %243 = vector.extract_strided_slice %233 {offsets = [0, 384], sizes = [2, 128], strides = [1, 1]} : vector<2x512xf32> to vector<2x128xf32>
    %244 = math.tanh %243 : vector<2x128xf32>
    %245 = arith.mulf %241, %207 : vector<2x128xf32>
    %246 = arith.mulf %240, %244 : vector<2x128xf32>
    %247 = arith.addf %245, %246 : vector<2x128xf32>
    %248 = math.tanh %247 : vector<2x128xf32>
    %249 = arith.mulf %242, %248 : vector<2x128xf32>
    %250 = vector.extract_strided_slice %6 {offsets = [12, 0], sizes = [2, 512], strides = [1, 1]} : vector<16x512xf32> to vector<2x512xf32>
    %c0_56 = arith.constant 0 : index
    %c0_57 = arith.constant 0 : index
    %251 = vector.load %arg4[%c0_56, %c0_57] : memref<128x512xf32, #tpu.memory_space<vmem>>, vector<128x512xf32>
    %cst_58 = arith.constant dense<0.000000e+00> : vector<2x512xf32>
    %252 = tpu.matmul %229, %251, %cst_58 {dimension_numbers = #tpu.dot_dimension_numbers<[1], [0], [0], [1], [0, 0, 1, 1], [], []>} : vector<2x128xf32>, vector<128x512xf32>, vector<2x512xf32> -> vector<2x512xf32>
    %253 = arith.addf %250, %252 : vector<2x512xf32>
    %254 = vector.extract_strided_slice %253 {offsets = [0, 0], sizes = [2, 384], strides = [1, 1]} : vector<2x512xf32> to vector<2x384xf32>
    %255 = arith.negf %254 : vector<2x384xf32>
    %256 = math.exp %255 : vector<2x384xf32>
    %cst_59 = arith.constant 1.000000e+00 : f32
    %257 = vector.broadcast %cst_59 : f32 to vector<2x384xf32>
    %258 = arith.addf %257, %256 : vector<2x384xf32>
    %259 = arith.divf %257, %258 : vector<2x384xf32>
    %260 = vector.extract_strided_slice %259 {offsets = [0, 0], sizes = [2, 128], strides = [1, 1]} : vector<2x384xf32> to vector<2x128xf32>
    %261 = vector.extract_strided_slice %259 {offsets = [0, 128], sizes = [2, 128], strides = [1, 1]} : vector<2x384xf32> to vector<2x128xf32>
    %262 = vector.extract_strided_slice %259 {offsets = [0, 256], sizes = [2, 128], strides = [1, 1]} : vector<2x384xf32> to vector<2x128xf32>
    %263 = vector.extract_strided_slice %253 {offsets = [0, 384], sizes = [2, 128], strides = [1, 1]} : vector<2x512xf32> to vector<2x128xf32>
    %264 = math.tanh %263 : vector<2x128xf32>
    %265 = arith.mulf %261, %227 : vector<2x128xf32>
    %266 = arith.mulf %260, %264 : vector<2x128xf32>
    %267 = arith.addf %265, %266 : vector<2x128xf32>
    %268 = math.tanh %267 : vector<2x128xf32>
    %269 = arith.mulf %262, %268 : vector<2x128xf32>
    %270 = tpu.concatenate %269, %249 in 1 : vector<2x128xf32>, vector<2x128xf32> -> vector<2x256xf32>
    %c0_60 = arith.constant 0 : index
    %c0_61 = arith.constant 0 : index
    %271 = vector.load %arg5[%c0_60, %c0_61] : memref<256x512xf32, #tpu.memory_space<vmem>>, vector<256x512xf32>
    %cst_62 = arith.constant dense<0.000000e+00> : vector<2x512xf32>
    %272 = tpu.matmul %270, %271, %cst_62 {dimension_numbers = #tpu.dot_dimension_numbers<[1], [0], [0], [1], [0, 0, 1, 1], [], []>} : vector<2x256xf32>, vector<256x512xf32>, vector<2x512xf32> -> vector<2x512xf32>
    %273 = arith.addf %272, %9 : vector<2x512xf32>
    %274 = vector.extract_strided_slice %273 {offsets = [0, 0], sizes = [2, 384], strides = [1, 1]} : vector<2x512xf32> to vector<2x384xf32>
    %275 = arith.negf %274 : vector<2x384xf32>
    %276 = math.exp %275 : vector<2x384xf32>
    %cst_63 = arith.constant 1.000000e+00 : f32
    %277 = vector.broadcast %cst_63 : f32 to vector<2x384xf32>
    %278 = arith.addf %277, %276 : vector<2x384xf32>
    %279 = arith.divf %277, %278 : vector<2x384xf32>
    %280 = vector.extract_strided_slice %279 {offsets = [0, 0], sizes = [2, 128], strides = [1, 1]} : vector<2x384xf32> to vector<2x128xf32>
    %281 = vector.extract_strided_slice %279 {offsets = [0, 128], sizes = [2, 128], strides = [1, 1]} : vector<2x384xf32> to vector<2x128xf32>
    %282 = vector.extract_strided_slice %279 {offsets = [0, 256], sizes = [2, 128], strides = [1, 1]} : vector<2x384xf32> to vector<2x128xf32>
    %283 = vector.extract_strided_slice %273 {offsets = [0, 384], sizes = [2, 128], strides = [1, 1]} : vector<2x512xf32> to vector<2x128xf32>
    %284 = math.tanh %283 : vector<2x128xf32>
    %285 = arith.mulf %281, %247 : vector<2x128xf32>
    %286 = arith.mulf %280, %284 : vector<2x128xf32>
    %287 = arith.addf %285, %286 : vector<2x128xf32>
    %288 = math.tanh %287 : vector<2x128xf32>
    %289 = arith.mulf %282, %288 : vector<2x128xf32>
    %290 = vector.extract_strided_slice %6 {offsets = [14, 0], sizes = [2, 512], strides = [1, 1]} : vector<16x512xf32> to vector<2x512xf32>
    %c0_64 = arith.constant 0 : index
    %c0_65 = arith.constant 0 : index
    %291 = vector.load %arg4[%c0_64, %c0_65] : memref<128x512xf32, #tpu.memory_space<vmem>>, vector<128x512xf32>
    %cst_66 = arith.constant dense<0.000000e+00> : vector<2x512xf32>
    %292 = tpu.matmul %269, %291, %cst_66 {dimension_numbers = #tpu.dot_dimension_numbers<[1], [0], [0], [1], [0, 0, 1, 1], [], []>} : vector<2x128xf32>, vector<128x512xf32>, vector<2x512xf32> -> vector<2x512xf32>
    %293 = arith.addf %290, %292 : vector<2x512xf32>
    %294 = vector.extract_strided_slice %293 {offsets = [0, 0], sizes = [2, 384], strides = [1, 1]} : vector<2x512xf32> to vector<2x384xf32>
    %295 = arith.negf %294 : vector<2x384xf32>
    %296 = math.exp %295 : vector<2x384xf32>
    %cst_67 = arith.constant 1.000000e+00 : f32
    %297 = vector.broadcast %cst_67 : f32 to vector<2x384xf32>
    %298 = arith.addf %297, %296 : vector<2x384xf32>
    %299 = arith.divf %297, %298 : vector<2x384xf32>
    %300 = vector.extract_strided_slice %299 {offsets = [0, 0], sizes = [2, 128], strides = [1, 1]} : vector<2x384xf32> to vector<2x128xf32>
    %301 = vector.extract_strided_slice %299 {offsets = [0, 128], sizes = [2, 128], strides = [1, 1]} : vector<2x384xf32> to vector<2x128xf32>
    %302 = vector.extract_strided_slice %299 {offsets = [0, 256], sizes = [2, 128], strides = [1, 1]} : vector<2x384xf32> to vector<2x128xf32>
    %303 = vector.extract_strided_slice %293 {offsets = [0, 384], sizes = [2, 128], strides = [1, 1]} : vector<2x512xf32> to vector<2x128xf32>
    %304 = math.tanh %303 : vector<2x128xf32>
    %305 = arith.mulf %301, %267 : vector<2x128xf32>
    %306 = arith.mulf %300, %304 : vector<2x128xf32>
    %307 = arith.addf %305, %306 : vector<2x128xf32>
    %308 = math.tanh %307 : vector<2x128xf32>
    %309 = arith.mulf %302, %308 : vector<2x128xf32>
    %310 = tpu.concatenate %309, %289 in 1 : vector<2x128xf32>, vector<2x128xf32> -> vector<2x256xf32>
    %c0_68 = arith.constant 0 : index
    %c0_69 = arith.constant 0 : index
    %311 = vector.load %arg5[%c0_68, %c0_69] : memref<256x512xf32, #tpu.memory_space<vmem>>, vector<256x512xf32>
    %cst_70 = arith.constant dense<0.000000e+00> : vector<2x512xf32>
    %312 = tpu.matmul %310, %311, %cst_70 {dimension_numbers = #tpu.dot_dimension_numbers<[1], [0], [0], [1], [0, 0, 1, 1], [], []>} : vector<2x256xf32>, vector<256x512xf32>, vector<2x512xf32> -> vector<2x512xf32>
    %313 = arith.addf %312, %9 : vector<2x512xf32>
    %314 = vector.extract_strided_slice %313 {offsets = [0, 0], sizes = [2, 384], strides = [1, 1]} : vector<2x512xf32> to vector<2x384xf32>
    %315 = arith.negf %314 : vector<2x384xf32>
    %316 = math.exp %315 : vector<2x384xf32>
    %cst_71 = arith.constant 1.000000e+00 : f32
    %317 = vector.broadcast %cst_71 : f32 to vector<2x384xf32>
    %318 = arith.addf %317, %316 : vector<2x384xf32>
    %319 = arith.divf %317, %318 : vector<2x384xf32>
    %320 = vector.extract_strided_slice %319 {offsets = [0, 0], sizes = [2, 128], strides = [1, 1]} : vector<2x384xf32> to vector<2x128xf32>
    %321 = vector.extract_strided_slice %319 {offsets = [0, 128], sizes = [2, 128], strides = [1, 1]} : vector<2x384xf32> to vector<2x128xf32>
    %322 = vector.extract_strided_slice %319 {offsets = [0, 256], sizes = [2, 128], strides = [1, 1]} : vector<2x384xf32> to vector<2x128xf32>
    %323 = vector.extract_strided_slice %313 {offsets = [0, 384], sizes = [2, 128], strides = [1, 1]} : vector<2x512xf32> to vector<2x128xf32>
    %324 = math.tanh %323 : vector<2x128xf32>
    %325 = arith.mulf %321, %287 : vector<2x128xf32>
    %326 = arith.mulf %320, %324 : vector<2x128xf32>
    %327 = arith.addf %325, %326 : vector<2x128xf32>
    %328 = math.tanh %327 : vector<2x128xf32>
    %329 = arith.mulf %322, %328 : vector<2x128xf32>
    %330 = tpu.concatenate %49, %89, %129, %169, %209, %249, %289, %329 in 0 : vector<2x128xf32>, vector<2x128xf32>, vector<2x128xf32>, vector<2x128xf32>, vector<2x128xf32>, vector<2x128xf32>, vector<2x128xf32>, vector<2x128xf32> -> vector<16x128xf32>
    %c0_72 = arith.constant 0 : index
    %c0_73 = arith.constant 0 : index
    %331 = vector.load %arg7[%c0_72, %c0_73] : memref<128x512xf32, #tpu.memory_space<vmem>>, vector<128x512xf32>
    %cst_74 = arith.constant dense<0.000000e+00> : vector<16x512xf32>
    %332 = tpu.matmul %330, %331, %cst_74 {dimension_numbers = #tpu.dot_dimension_numbers<[1], [0], [0], [1], [0, 0, 1, 1], [], []>} : vector<16x128xf32>, vector<128x512xf32>, vector<16x512xf32> -> vector<16x512xf32>
    %c0_75 = arith.constant 0 : index
    %c0_76 = arith.constant 0 : index
    %333 = vector.load %arg8[%c0_75, %c0_76] : memref<1x512xf32, #tpu.memory_space<vmem>>, vector<1x512xf32>
    %334 = vector.broadcast %333 : vector<1x512xf32> to vector<16x512xf32>
    %335 = arith.addf %332, %334 : vector<16x512xf32>
    %cst_77 = arith.constant 0.000000e+00 : f32
    %336 = vector.broadcast %cst_77 : f32 to vector<16x512xf32>
    %337 = arith.maximumf %335, %336 : vector<16x512xf32>
    %c0_78 = arith.constant 0 : index
    %c0_79 = arith.constant 0 : index
    %338 = vector.load %arg9[%c0_78, %c0_79] : memref<512x256xf32, #tpu.memory_space<vmem>>, vector<512x256xf32>
    %cst_80 = arith.constant dense<0.000000e+00> : vector<16x256xf32>
    %339 = tpu.matmul %337, %338, %cst_80 {dimension_numbers = #tpu.dot_dimension_numbers<[1], [0], [0], [1], [0, 0, 1, 1], [], []>} : vector<16x512xf32>, vector<512x256xf32>, vector<16x256xf32> -> vector<16x256xf32>
    %c0_81 = arith.constant 0 : index
    %c0_82 = arith.constant 0 : index
    %340 = vector.load %arg10[%c0_81, %c0_82] : memref<1x256xf32, #tpu.memory_space<vmem>>, vector<1x256xf32>
    %341 = vector.broadcast %340 : vector<1x256xf32> to vector<16x256xf32>
    %342 = arith.addf %339, %341 : vector<16x256xf32>
    %c0_83 = arith.constant 0 : index
    %c0_84 = arith.constant 0 : index
    %343 = vector.load %arg21[%c0_83, %c0_84] : memref<16x256xf32, #tpu.memory_space<vmem>>, vector<16x256xf32>
    tpu.vector_store %arg21[%c0_83, %c0_84], %342 {strides = array<i32>} : memref<16x256xf32, #tpu.memory_space<vmem>>, vector<16x256xf32>,
    %344 = vector.extract_strided_slice %342 {offsets = [0, 0], sizes = [16, 128], strides = [1, 1]} : vector<16x256xf32> to vector<16x128xf32>
    %345 = vector.extract_strided_slice %342 {offsets = [0, 128], sizes = [16, 128], strides = [1, 1]} : vector<16x256xf32> to vector<16x128xf32>
    %c0_85 = arith.constant 0 : index
    %c0_86 = arith.constant 0 : index
    %346 = vector.load %arg1[%c0_85, %c0_86] : memref<16x128xf32, #tpu.memory_space<vmem>>, vector<16x128xf32>
    %cst_87 = arith.constant 5.000000e-01 : f32
    %347 = vector.broadcast %cst_87 : f32 to vector<16x128xf32>
    %348 = arith.mulf %345, %347 : vector<16x128xf32>
    %349 = math.exp %348 : vector<16x128xf32>
    %350 = arith.mulf %346, %349 : vector<16x128xf32>
    %351 = arith.addf %344, %350 : vector<16x128xf32>
    %c0_88 = arith.constant 0 : index
    %c0_89 = arith.constant 0 : index
    %352 = vector.load %arg11[%c0_88, %c0_89] : memref<128x512xf32, #tpu.memory_space<vmem>>, vector<128x512xf32>
    %cst_90 = arith.constant dense<0.000000e+00> : vector<16x512xf32>
    %353 = tpu.matmul %351, %352, %cst_90 {dimension_numbers = #tpu.dot_dimension_numbers<[1], [0], [0], [1], [0, 0, 1, 1], [], []>} : vector<16x128xf32>, vector<128x512xf32>, vector<16x512xf32> -> vector<16x512xf32>
    %c0_91 = arith.constant 0 : index
    %c0_92 = arith.constant 0 : index
    %354 = vector.load %arg12[%c0_91, %c0_92] : memref<1x512xf32, #tpu.memory_space<vmem>>, vector<1x512xf32>
    %355 = vector.broadcast %354 : vector<1x512xf32> to vector<16x512xf32>
    %356 = arith.addf %353, %355 : vector<16x512xf32>
    %cst_93 = arith.constant 0.000000e+00 : f32
    %357 = vector.broadcast %cst_93 : f32 to vector<16x512xf32>
    %358 = arith.maximumf %356, %357 : vector<16x512xf32>
    %c0_94 = arith.constant 0 : index
    %c0_95 = arith.constant 0 : index
    %359 = vector.load %arg13[%c0_94, %c0_95] : memref<512x128xf32, #tpu.memory_space<vmem>>, vector<512x128xf32>
    %cst_96 = arith.constant dense<0.000000e+00> : vector<16x128xf32>
    %360 = tpu.matmul %358, %359, %cst_96 {dimension_numbers = #tpu.dot_dimension_numbers<[1], [0], [0], [1], [0, 0, 1, 1], [], []>} : vector<16x512xf32>, vector<512x128xf32>, vector<16x128xf32> -> vector<16x128xf32>
    %c0_97 = arith.constant 0 : index
    %c0_98 = arith.constant 0 : index
    %361 = vector.load %arg14[%c0_97, %c0_98] : memref<1x128xf32, #tpu.memory_space<vmem>>, vector<1x128xf32>
    %362 = vector.broadcast %361 : vector<1x128xf32> to vector<16x128xf32>
    %363 = arith.addf %360, %362 : vector<16x128xf32>
    %364 = arith.negf %363 : vector<16x128xf32>
    %365 = math.exp %364 : vector<16x128xf32>
    %cst_99 = arith.constant 1.000000e+00 : f32
    %366 = vector.broadcast %cst_99 : f32 to vector<16x128xf32>
    %367 = arith.addf %366, %365 : vector<16x128xf32>
    %368 = arith.divf %366, %367 : vector<16x128xf32>
    %c0_100 = arith.constant 0 : index
    %c0_101 = arith.constant 0 : index
    %369 = vector.load %arg15[%c0_100, %c0_101] : memref<128x512xf32, #tpu.memory_space<vmem>>, vector<128x512xf32>
    %cst_102 = arith.constant dense<0.000000e+00> : vector<16x512xf32>
    %370 = tpu.matmul %368, %369, %cst_102 {dimension_numbers = #tpu.dot_dimension_numbers<[1], [0], [0], [1], [0, 0, 1, 1], [], []>} : vector<16x128xf32>, vector<128x512xf32>, vector<16x512xf32> -> vector<16x512xf32>
    %c0_103 = arith.constant 0 : index
    %c0_104 = arith.constant 0 : index
    %371 = vector.load %arg16[%c0_103, %c0_104] : memref<1x512xf32, #tpu.memory_space<vmem>>, vector<1x512xf32>
    %372 = vector.broadcast %371 : vector<1x512xf32> to vector<16x512xf32>
    %373 = arith.addf %370, %372 : vector<16x512xf32>
    %c0_105 = arith.constant 0 : index
    %c0_106 = arith.constant 0 : index
    %374 = vector.load %arg19[%c0_105, %c0_106] : memref<1x512xf32, #tpu.memory_space<vmem>>, vector<1x512xf32>
    %375 = vector.shape_cast %374 : vector<1x512xf32> to vector<1x512xf32>
    %376 = vector.broadcast %375 : vector<1x512xf32> to vector<2x512xf32>
    %377 = vector.extract_strided_slice %373 {offsets = [0, 0], sizes = [2, 512], strides = [1, 1]} : vector<16x512xf32> to vector<2x512xf32>
    %c0_107 = arith.constant 0 : index
    %c0_108 = arith.constant 0 : index
    %378 = vector.load %arg17[%c0_107, %c0_108] : memref<128x512xf32, #tpu.memory_space<vmem>>, vector<128x512xf32>
    %cst_109 = arith.constant dense<0.000000e+00> : vector<2x512xf32>
    %379 = tpu.matmul %329, %378, %cst_109 {dimension_numbers = #tpu.dot_dimension_numbers<[1], [0], [0], [1], [0, 0, 1, 1], [], []>} : vector<2x128xf32>, vector<128x512xf32>, vector<2x512xf32> -> vector<2x512xf32>
    %380 = arith.addf %377, %379 : vector<2x512xf32>
    %381 = vector.extract_strided_slice %380 {offsets = [0, 0], sizes = [2, 384], strides = [1, 1]} : vector<2x512xf32> to vector<2x384xf32>
    %382 = arith.negf %381 : vector<2x384xf32>
    %383 = math.exp %382 : vector<2x384xf32>
    %cst_110 = arith.constant 1.000000e+00 : f32
    %384 = vector.broadcast %cst_110 : f32 to vector<2x384xf32>
    %385 = arith.addf %384, %383 : vector<2x384xf32>
    %386 = arith.divf %384, %385 : vector<2x384xf32>
    %387 = vector.extract_strided_slice %386 {offsets = [0, 0], sizes = [2, 128], strides = [1, 1]} : vector<2x384xf32> to vector<2x128xf32>
    %388 = vector.extract_strided_slice %386 {offsets = [0, 128], sizes = [2, 128], strides = [1, 1]} : vector<2x384xf32> to vector<2x128xf32>
    %389 = vector.extract_strided_slice %386 {offsets = [0, 256], sizes = [2, 128], strides = [1, 1]} : vector<2x384xf32> to vector<2x128xf32>
    %390 = vector.extract_strided_slice %380 {offsets = [0, 384], sizes = [2, 128], strides = [1, 1]} : vector<2x512xf32> to vector<2x128xf32>
    %391 = math.tanh %390 : vector<2x128xf32>
    %392 = arith.mulf %388, %0 : vector<2x128xf32>
    %393 = arith.mulf %387, %391 : vector<2x128xf32>
    %394 = arith.addf %392, %393 : vector<2x128xf32>
    %395 = math.tanh %394 : vector<2x128xf32>
    %396 = arith.mulf %389, %395 : vector<2x128xf32>
    %397 = tpu.concatenate %396, %329 in 1 : vector<2x128xf32>, vector<2x128xf32> -> vector<2x256xf32>
    %c0_111 = arith.constant 0 : index
    %c0_112 = arith.constant 0 : index
    %398 = vector.load %arg18[%c0_111, %c0_112] : memref<256x512xf32, #tpu.memory_space<vmem>>, vector<256x512xf32>
    %cst_113 = arith.constant dense<0.000000e+00> : vector<2x512xf32>
    %399 = tpu.matmul %397, %398, %cst_113 {dimension_numbers = #tpu.dot_dimension_numbers<[1], [0], [0], [1], [0, 0, 1, 1], [], []>} : vector<2x256xf32>, vector<256x512xf32>, vector<2x512xf32> -> vector<2x512xf32>
    %400 = arith.addf %399, %376 : vector<2x512xf32>
    %401 = vector.extract_strided_slice %400 {offsets = [0, 0], sizes = [2, 384], strides = [1, 1]} : vector<2x512xf32> to vector<2x384xf32>
    %402 = arith.negf %401 : vector<2x384xf32>
    %403 = math.exp %402 : vector<2x384xf32>
    %cst_114 = arith.constant 1.000000e+00 : f32
    %404 = vector.broadcast %cst_114 : f32 to vector<2x384xf32>
    %405 = arith.addf %404, %403 : vector<2x384xf32>
    %406 = arith.divf %404, %405 : vector<2x384xf32>
    %407 = vector.extract_strided_slice %406 {offsets = [0, 0], sizes = [2, 128], strides = [1, 1]} : vector<2x384xf32> to vector<2x128xf32>
    %408 = vector.extract_strided_slice %406 {offsets = [0, 128], sizes = [2, 128], strides = [1, 1]} : vector<2x384xf32> to vector<2x128xf32>
    %409 = vector.extract_strided_slice %406 {offsets = [0, 256], sizes = [2, 128], strides = [1, 1]} : vector<2x384xf32> to vector<2x128xf32>
    %410 = vector.extract_strided_slice %400 {offsets = [0, 384], sizes = [2, 128], strides = [1, 1]} : vector<2x512xf32> to vector<2x128xf32>
    %411 = math.tanh %410 : vector<2x128xf32>
    %412 = arith.mulf %408, %0 : vector<2x128xf32>
    %413 = arith.mulf %407, %411 : vector<2x128xf32>
    %414 = arith.addf %412, %413 : vector<2x128xf32>
    %415 = math.tanh %414 : vector<2x128xf32>
    %416 = arith.mulf %409, %415 : vector<2x128xf32>
    %417 = vector.extract_strided_slice %373 {offsets = [2, 0], sizes = [2, 512], strides = [1, 1]} : vector<16x512xf32> to vector<2x512xf32>
    %c0_115 = arith.constant 0 : index
    %c0_116 = arith.constant 0 : index
    %418 = vector.load %arg17[%c0_115, %c0_116] : memref<128x512xf32, #tpu.memory_space<vmem>>, vector<128x512xf32>
    %cst_117 = arith.constant dense<0.000000e+00> : vector<2x512xf32>
    %419 = tpu.matmul %396, %418, %cst_117 {dimension_numbers = #tpu.dot_dimension_numbers<[1], [0], [0], [1], [0, 0, 1, 1], [], []>} : vector<2x128xf32>, vector<128x512xf32>, vector<2x512xf32> -> vector<2x512xf32>
    %420 = arith.addf %417, %419 : vector<2x512xf32>
    %421 = vector.extract_strided_slice %420 {offsets = [0, 0], sizes = [2, 384], strides = [1, 1]} : vector<2x512xf32> to vector<2x384xf32>
    %422 = arith.negf %421 : vector<2x384xf32>
    %423 = math.exp %422 : vector<2x384xf32>
    %cst_118 = arith.constant 1.000000e+00 : f32
    %424 = vector.broadcast %cst_118 : f32 to vector<2x384xf32>
    %425 = arith.addf %424, %423 : vector<2x384xf32>
    %426 = arith.divf %424, %425 : vector<2x384xf32>
    %427 = vector.extract_strided_slice %426 {offsets = [0, 0], sizes = [2, 128], strides = [1, 1]} : vector<2x384xf32> to vector<2x128xf32>
    %428 = vector.extract_strided_slice %426 {offsets = [0, 128], sizes = [2, 128], strides = [1, 1]} : vector<2x384xf32> to vector<2x128xf32>
    %429 = vector.extract_strided_slice %426 {offsets = [0, 256], sizes = [2, 128], strides = [1, 1]} : vector<2x384xf32> to vector<2x128xf32>
    %430 = vector.extract_strided_slice %420 {offsets = [0, 384], sizes = [2, 128], strides = [1, 1]} : vector<2x512xf32> to vector<2x128xf32>
    %431 = math.tanh %430 : vector<2x128xf32>
    %432 = arith.mulf %428, %394 : vector<2x128xf32>
    %433 = arith.mulf %427, %431 : vector<2x128xf32>
    %434 = arith.addf %432, %433 : vector<2x128xf32>
    %435 = math.tanh %434 : vector<2x128xf32>
    %436 = arith.mulf %429, %435 : vector<2x128xf32>
    %437 = tpu.concatenate %436, %416 in 1 : vector<2x128xf32>, vector<2x128xf32> -> vector<2x256xf32>
    %c0_119 = arith.constant 0 : index
    %c0_120 = arith.constant 0 : index
    %438 = vector.load %arg18[%c0_119, %c0_120] : memref<256x512xf32, #tpu.memory_space<vmem>>, vector<256x512xf32>
    %cst_121 = arith.constant dense<0.000000e+00> : vector<2x512xf32>
    %439 = tpu.matmul %437, %438, %cst_121 {dimension_numbers = #tpu.dot_dimension_numbers<[1], [0], [0], [1], [0, 0, 1, 1], [], []>} : vector<2x256xf32>, vector<256x512xf32>, vector<2x512xf32> -> vector<2x512xf32>
    %440 = arith.addf %439, %376 : vector<2x512xf32>
    %441 = vector.extract_strided_slice %440 {offsets = [0, 0], sizes = [2, 384], strides = [1, 1]} : vector<2x512xf32> to vector<2x384xf32>
    %442 = arith.negf %441 : vector<2x384xf32>
    %443 = math.exp %442 : vector<2x384xf32>
    %cst_122 = arith.constant 1.000000e+00 : f32
    %444 = vector.broadcast %cst_122 : f32 to vector<2x384xf32>
    %445 = arith.addf %444, %443 : vector<2x384xf32>
    %446 = arith.divf %444, %445 : vector<2x384xf32>
    %447 = vector.extract_strided_slice %446 {offsets = [0, 0], sizes = [2, 128], strides = [1, 1]} : vector<2x384xf32> to vector<2x128xf32>
    %448 = vector.extract_strided_slice %446 {offsets = [0, 128], sizes = [2, 128], strides = [1, 1]} : vector<2x384xf32> to vector<2x128xf32>
    %449 = vector.extract_strided_slice %446 {offsets = [0, 256], sizes = [2, 128], strides = [1, 1]} : vector<2x384xf32> to vector<2x128xf32>
    %450 = vector.extract_strided_slice %440 {offsets = [0, 384], sizes = [2, 128], strides = [1, 1]} : vector<2x512xf32> to vector<2x128xf32>
    %451 = math.tanh %450 : vector<2x128xf32>
    %452 = arith.mulf %448, %414 : vector<2x128xf32>
    %453 = arith.mulf %447, %451 : vector<2x128xf32>
    %454 = arith.addf %452, %453 : vector<2x128xf32>
    %455 = math.tanh %454 : vector<2x128xf32>
    %456 = arith.mulf %449, %455 : vector<2x128xf32>
    %457 = vector.extract_strided_slice %373 {offsets = [4, 0], sizes = [2, 512], strides = [1, 1]} : vector<16x512xf32> to vector<2x512xf32>
    %c0_123 = arith.constant 0 : index
    %c0_124 = arith.constant 0 : index
    %458 = vector.load %arg17[%c0_123, %c0_124] : memref<128x512xf32, #tpu.memory_space<vmem>>, vector<128x512xf32>
    %cst_125 = arith.constant dense<0.000000e+00> : vector<2x512xf32>
    %459 = tpu.matmul %436, %458, %cst_125 {dimension_numbers = #tpu.dot_dimension_numbers<[1], [0], [0], [1], [0, 0, 1, 1], [], []>} : vector<2x128xf32>, vector<128x512xf32>, vector<2x512xf32> -> vector<2x512xf32>
    %460 = arith.addf %457, %459 : vector<2x512xf32>
    %461 = vector.extract_strided_slice %460 {offsets = [0, 0], sizes = [2, 384], strides = [1, 1]} : vector<2x512xf32> to vector<2x384xf32>
    %462 = arith.negf %461 : vector<2x384xf32>
    %463 = math.exp %462 : vector<2x384xf32>
    %cst_126 = arith.constant 1.000000e+00 : f32
    %464 = vector.broadcast %cst_126 : f32 to vector<2x384xf32>
    %465 = arith.addf %464, %463 : vector<2x384xf32>
    %466 = arith.divf %464, %465 : vector<2x384xf32>
    %467 = vector.extract_strided_slice %466 {offsets = [0, 0], sizes = [2, 128], strides = [1, 1]} : vector<2x384xf32> to vector<2x128xf32>
    %468 = vector.extract_strided_slice %466 {offsets = [0, 128], sizes = [2, 128], strides = [1, 1]} : vector<2x384xf32> to vector<2x128xf32>
    %469 = vector.extract_strided_slice %466 {offsets = [0, 256], sizes = [2, 128], strides = [1, 1]} : vector<2x384xf32> to vector<2x128xf32>
    %470 = vector.extract_strided_slice %460 {offsets = [0, 384], sizes = [2, 128], strides = [1, 1]} : vector<2x512xf32> to vector<2x128xf32>
    %471 = math.tanh %470 : vector<2x128xf32>
    %472 = arith.mulf %468, %434 : vector<2x128xf32>
    %473 = arith.mulf %467, %471 : vector<2x128xf32>
    %474 = arith.addf %472, %473 : vector<2x128xf32>
    %475 = math.tanh %474 : vector<2x128xf32>
    %476 = arith.mulf %469, %475 : vector<2x128xf32>
    %477 = tpu.concatenate %476, %456 in 1 : vector<2x128xf32>, vector<2x128xf32> -> vector<2x256xf32>
    %c0_127 = arith.constant 0 : index
    %c0_128 = arith.constant 0 : index
    %478 = vector.load %arg18[%c0_127, %c0_128] : memref<256x512xf32, #tpu.memory_space<vmem>>, vector<256x512xf32>
    %cst_129 = arith.constant dense<0.000000e+00> : vector<2x512xf32>
    %479 = tpu.matmul %477, %478, %cst_129 {dimension_numbers = #tpu.dot_dimension_numbers<[1], [0], [0], [1], [0, 0, 1, 1], [], []>} : vector<2x256xf32>, vector<256x512xf32>, vector<2x512xf32> -> vector<2x512xf32>
    %480 = arith.addf %479, %376 : vector<2x512xf32>
    %481 = vector.extract_strided_slice %480 {offsets = [0, 0], sizes = [2, 384], strides = [1, 1]} : vector<2x512xf32> to vector<2x384xf32>
    %482 = arith.negf %481 : vector<2x384xf32>
    %483 = math.exp %482 : vector<2x384xf32>
    %cst_130 = arith.constant 1.000000e+00 : f32
    %484 = vector.broadcast %cst_130 : f32 to vector<2x384xf32>
    %485 = arith.addf %484, %483 : vector<2x384xf32>
    %486 = arith.divf %484, %485 : vector<2x384xf32>
    %487 = vector.extract_strided_slice %486 {offsets = [0, 0], sizes = [2, 128], strides = [1, 1]} : vector<2x384xf32> to vector<2x128xf32>
    %488 = vector.extract_strided_slice %486 {offsets = [0, 128], sizes = [2, 128], strides = [1, 1]} : vector<2x384xf32> to vector<2x128xf32>
    %489 = vector.extract_strided_slice %486 {offsets = [0, 256], sizes = [2, 128], strides = [1, 1]} : vector<2x384xf32> to vector<2x128xf32>
    %490 = vector.extract_strided_slice %480 {offsets = [0, 384], sizes = [2, 128], strides = [1, 1]} : vector<2x512xf32> to vector<2x128xf32>
    %491 = math.tanh %490 : vector<2x128xf32>
    %492 = arith.mulf %488, %454 : vector<2x128xf32>
    %493 = arith.mulf %487, %491 : vector<2x128xf32>
    %494 = arith.addf %492, %493 : vector<2x128xf32>
    %495 = math.tanh %494 : vector<2x128xf32>
    %496 = arith.mulf %489, %495 : vector<2x128xf32>
    %497 = vector.extract_strided_slice %373 {offsets = [6, 0], sizes = [2, 512], strides = [1, 1]} : vector<16x512xf32> to vector<2x512xf32>
    %c0_131 = arith.constant 0 : index
    %c0_132 = arith.constant 0 : index
    %498 = vector.load %arg17[%c0_131, %c0_132] : memref<128x512xf32, #tpu.memory_space<vmem>>, vector<128x512xf32>
    %cst_133 = arith.constant dense<0.000000e+00> : vector<2x512xf32>
    %499 = tpu.matmul %476, %498, %cst_133 {dimension_numbers = #tpu.dot_dimension_numbers<[1], [0], [0], [1], [0, 0, 1, 1], [], []>} : vector<2x128xf32>, vector<128x512xf32>, vector<2x512xf32> -> vector<2x512xf32>
    %500 = arith.addf %497, %499 : vector<2x512xf32>
    %501 = vector.extract_strided_slice %500 {offsets = [0, 0], sizes = [2, 384], strides = [1, 1]} : vector<2x512xf32> to vector<2x384xf32>
    %502 = arith.negf %501 : vector<2x384xf32>
    %503 = math.exp %502 : vector<2x384xf32>
    %cst_134 = arith.constant 1.000000e+00 : f32
    %504 = vector.broadcast %cst_134 : f32 to vector<2x384xf32>
    %505 = arith.addf %504, %503 : vector<2x384xf32>
    %506 = arith.divf %504, %505 : vector<2x384xf32>
    %507 = vector.extract_strided_slice %506 {offsets = [0, 0], sizes = [2, 128], strides = [1, 1]} : vector<2x384xf32> to vector<2x128xf32>
    %508 = vector.extract_strided_slice %506 {offsets = [0, 128], sizes = [2, 128], strides = [1, 1]} : vector<2x384xf32> to vector<2x128xf32>
    %509 = vector.extract_strided_slice %506 {offsets = [0, 256], sizes = [2, 128], strides = [1, 1]} : vector<2x384xf32> to vector<2x128xf32>
    %510 = vector.extract_strided_slice %500 {offsets = [0, 384], sizes = [2, 128], strides = [1, 1]} : vector<2x512xf32> to vector<2x128xf32>
    %511 = math.tanh %510 : vector<2x128xf32>
    %512 = arith.mulf %508, %474 : vector<2x128xf32>
    %513 = arith.mulf %507, %511 : vector<2x128xf32>
    %514 = arith.addf %512, %513 : vector<2x128xf32>
    %515 = math.tanh %514 : vector<2x128xf32>
    %516 = arith.mulf %509, %515 : vector<2x128xf32>
    %517 = tpu.concatenate %516, %496 in 1 : vector<2x128xf32>, vector<2x128xf32> -> vector<2x256xf32>
    %c0_135 = arith.constant 0 : index
    %c0_136 = arith.constant 0 : index
    %518 = vector.load %arg18[%c0_135, %c0_136] : memref<256x512xf32, #tpu.memory_space<vmem>>, vector<256x512xf32>
    %cst_137 = arith.constant dense<0.000000e+00> : vector<2x512xf32>
    %519 = tpu.matmul %517, %518, %cst_137 {dimension_numbers = #tpu.dot_dimension_numbers<[1], [0], [0], [1], [0, 0, 1, 1], [], []>} : vector<2x256xf32>, vector<256x512xf32>, vector<2x512xf32> -> vector<2x512xf32>
    %520 = arith.addf %519, %376 : vector<2x512xf32>
    %521 = vector.extract_strided_slice %520 {offsets = [0, 0], sizes = [2, 384], strides = [1, 1]} : vector<2x512xf32> to vector<2x384xf32>
    %522 = arith.negf %521 : vector<2x384xf32>
    %523 = math.exp %522 : vector<2x384xf32>
    %cst_138 = arith.constant 1.000000e+00 : f32
    %524 = vector.broadcast %cst_138 : f32 to vector<2x384xf32>
    %525 = arith.addf %524, %523 : vector<2x384xf32>
    %526 = arith.divf %524, %525 : vector<2x384xf32>
    %527 = vector.extract_strided_slice %526 {offsets = [0, 0], sizes = [2, 128], strides = [1, 1]} : vector<2x384xf32> to vector<2x128xf32>
    %528 = vector.extract_strided_slice %526 {offsets = [0, 128], sizes = [2, 128], strides = [1, 1]} : vector<2x384xf32> to vector<2x128xf32>
    %529 = vector.extract_strided_slice %526 {offsets = [0, 256], sizes = [2, 128], strides = [1, 1]} : vector<2x384xf32> to vector<2x128xf32>
    %530 = vector.extract_strided_slice %520 {offsets = [0, 384], sizes = [2, 128], strides = [1, 1]} : vector<2x512xf32> to vector<2x128xf32>
    %531 = math.tanh %530 : vector<2x128xf32>
    %532 = arith.mulf %528, %494 : vector<2x128xf32>
    %533 = arith.mulf %527, %531 : vector<2x128xf32>
    %534 = arith.addf %532, %533 : vector<2x128xf32>
    %535 = math.tanh %534 : vector<2x128xf32>
    %536 = arith.mulf %529, %535 : vector<2x128xf32>
    %537 = vector.extract_strided_slice %373 {offsets = [8, 0], sizes = [2, 512], strides = [1, 1]} : vector<16x512xf32> to vector<2x512xf32>
    %c0_139 = arith.constant 0 : index
    %c0_140 = arith.constant 0 : index
    %538 = vector.load %arg17[%c0_139, %c0_140] : memref<128x512xf32, #tpu.memory_space<vmem>>, vector<128x512xf32>
    %cst_141 = arith.constant dense<0.000000e+00> : vector<2x512xf32>
    %539 = tpu.matmul %516, %538, %cst_141 {dimension_numbers = #tpu.dot_dimension_numbers<[1], [0], [0], [1], [0, 0, 1, 1], [], []>} : vector<2x128xf32>, vector<128x512xf32>, vector<2x512xf32> -> vector<2x512xf32>
    %540 = arith.addf %537, %539 : vector<2x512xf32>
    %541 = vector.extract_strided_slice %540 {offsets = [0, 0], sizes = [2, 384], strides = [1, 1]} : vector<2x512xf32> to vector<2x384xf32>
    %542 = arith.negf %541 : vector<2x384xf32>
    %543 = math.exp %542 : vector<2x384xf32>
    %cst_142 = arith.constant 1.000000e+00 : f32
    %544 = vector.broadcast %cst_142 : f32 to vector<2x384xf32>
    %545 = arith.addf %544, %543 : vector<2x384xf32>
    %546 = arith.divf %544, %545 : vector<2x384xf32>
    %547 = vector.extract_strided_slice %546 {offsets = [0, 0], sizes = [2, 128], strides = [1, 1]} : vector<2x384xf32> to vector<2x128xf32>
    %548 = vector.extract_strided_slice %546 {offsets = [0, 128], sizes = [2, 128], strides = [1, 1]} : vector<2x384xf32> to vector<2x128xf32>
    %549 = vector.extract_strided_slice %546 {offsets = [0, 256], sizes = [2, 128], strides = [1, 1]} : vector<2x384xf32> to vector<2x128xf32>
    %550 = vector.extract_strided_slice %540 {offsets = [0, 384], sizes = [2, 128], strides = [1, 1]} : vector<2x512xf32> to vector<2x128xf32>
    %551 = math.tanh %550 : vector<2x128xf32>
    %552 = arith.mulf %548, %514 : vector<2x128xf32>
    %553 = arith.mulf %547, %551 : vector<2x128xf32>
    %554 = arith.addf %552, %553 : vector<2x128xf32>
    %555 = math.tanh %554 : vector<2x128xf32>
    %556 = arith.mulf %549, %555 : vector<2x128xf32>
    %557 = tpu.concatenate %556, %536 in 1 : vector<2x128xf32>, vector<2x128xf32> -> vector<2x256xf32>
    %c0_143 = arith.constant 0 : index
    %c0_144 = arith.constant 0 : index
    %558 = vector.load %arg18[%c0_143, %c0_144] : memref<256x512xf32, #tpu.memory_space<vmem>>, vector<256x512xf32>
    %cst_145 = arith.constant dense<0.000000e+00> : vector<2x512xf32>
    %559 = tpu.matmul %557, %558, %cst_145 {dimension_numbers = #tpu.dot_dimension_numbers<[1], [0], [0], [1], [0, 0, 1, 1], [], []>} : vector<2x256xf32>, vector<256x512xf32>, vector<2x512xf32> -> vector<2x512xf32>
    %560 = arith.addf %559, %376 : vector<2x512xf32>
    %561 = vector.extract_strided_slice %560 {offsets = [0, 0], sizes = [2, 384], strides = [1, 1]} : vector<2x512xf32> to vector<2x384xf32>
    %562 = arith.negf %561 : vector<2x384xf32>
    %563 = math.exp %562 : vector<2x384xf32>
    %cst_146 = arith.constant 1.000000e+00 : f32
    %564 = vector.broadcast %cst_146 : f32 to vector<2x384xf32>
    %565 = arith.addf %564, %563 : vector<2x384xf32>
    %566 = arith.divf %564, %565 : vector<2x384xf32>
    %567 = vector.extract_strided_slice %566 {offsets = [0, 0], sizes = [2, 128], strides = [1, 1]} : vector<2x384xf32> to vector<2x128xf32>
    %568 = vector.extract_strided_slice %566 {offsets = [0, 128], sizes = [2, 128], strides = [1, 1]} : vector<2x384xf32> to vector<2x128xf32>
    %569 = vector.extract_strided_slice %566 {offsets = [0, 256], sizes = [2, 128], strides = [1, 1]} : vector<2x384xf32> to vector<2x128xf32>
    %570 = vector.extract_strided_slice %560 {offsets = [0, 384], sizes = [2, 128], strides = [1, 1]} : vector<2x512xf32> to vector<2x128xf32>
    %571 = math.tanh %570 : vector<2x128xf32>
    %572 = arith.mulf %568, %534 : vector<2x128xf32>
    %573 = arith.mulf %567, %571 : vector<2x128xf32>
    %574 = arith.addf %572, %573 : vector<2x128xf32>
    %575 = math.tanh %574 : vector<2x128xf32>
    %576 = arith.mulf %569, %575 : vector<2x128xf32>
    %577 = vector.extract_strided_slice %373 {offsets = [10, 0], sizes = [2, 512], strides = [1, 1]} : vector<16x512xf32> to vector<2x512xf32>
    %c0_147 = arith.constant 0 : index
    %c0_148 = arith.constant 0 : index
    %578 = vector.load %arg17[%c0_147, %c0_148] : memref<128x512xf32, #tpu.memory_space<vmem>>, vector<128x512xf32>
    %cst_149 = arith.constant dense<0.000000e+00> : vector<2x512xf32>
    %579 = tpu.matmul %556, %578, %cst_149 {dimension_numbers = #tpu.dot_dimension_numbers<[1], [0], [0], [1], [0, 0, 1, 1], [], []>} : vector<2x128xf32>, vector<128x512xf32>, vector<2x512xf32> -> vector<2x512xf32>
    %580 = arith.addf %577, %579 : vector<2x512xf32>
    %581 = vector.extract_strided_slice %580 {offsets = [0, 0], sizes = [2, 384], strides = [1, 1]} : vector<2x512xf32> to vector<2x384xf32>
    %582 = arith.negf %581 : vector<2x384xf32>
    %583 = math.exp %582 : vector<2x384xf32>
    %cst_150 = arith.constant 1.000000e+00 : f32
    %584 = vector.broadcast %cst_150 : f32 to vector<2x384xf32>
    %585 = arith.addf %584, %583 : vector<2x384xf32>
    %586 = arith.divf %584, %585 : vector<2x384xf32>
    %587 = vector.extract_strided_slice %586 {offsets = [0, 0], sizes = [2, 128], strides = [1, 1]} : vector<2x384xf32> to vector<2x128xf32>
    %588 = vector.extract_strided_slice %586 {offsets = [0, 128], sizes = [2, 128], strides = [1, 1]} : vector<2x384xf32> to vector<2x128xf32>
    %589 = vector.extract_strided_slice %586 {offsets = [0, 256], sizes = [2, 128], strides = [1, 1]} : vector<2x384xf32> to vector<2x128xf32>
    %590 = vector.extract_strided_slice %580 {offsets = [0, 384], sizes = [2, 128], strides = [1, 1]} : vector<2x512xf32> to vector<2x128xf32>
    %591 = math.tanh %590 : vector<2x128xf32>
    %592 = arith.mulf %588, %554 : vector<2x128xf32>
    %593 = arith.mulf %587, %591 : vector<2x128xf32>
    %594 = arith.addf %592, %593 : vector<2x128xf32>
    %595 = math.tanh %594 : vector<2x128xf32>
    %596 = arith.mulf %589, %595 : vector<2x128xf32>
    %597 = tpu.concatenate %596, %576 in 1 : vector<2x128xf32>, vector<2x128xf32> -> vector<2x256xf32>
    %c0_151 = arith.constant 0 : index
    %c0_152 = arith.constant 0 : index
    %598 = vector.load %arg18[%c0_151, %c0_152] : memref<256x512xf32, #tpu.memory_space<vmem>>, vector<256x512xf32>
    %cst_153 = arith.constant dense<0.000000e+00> : vector<2x512xf32>
    %599 = tpu.matmul %597, %598, %cst_153 {dimension_numbers = #tpu.dot_dimension_numbers<[1], [0], [0], [1], [0, 0, 1, 1], [], []>} : vector<2x256xf32>, vector<256x512xf32>, vector<2x512xf32> -> vector<2x512xf32>
    %600 = arith.addf %599, %376 : vector<2x512xf32>
    %601 = vector.extract_strided_slice %600 {offsets = [0, 0], sizes = [2, 384], strides = [1, 1]} : vector<2x512xf32> to vector<2x384xf32>
    %602 = arith.negf %601 : vector<2x384xf32>
    %603 = math.exp %602 : vector<2x384xf32>
    %cst_154 = arith.constant 1.000000e+00 : f32
    %604 = vector.broadcast %cst_154 : f32 to vector<2x384xf32>
    %605 = arith.addf %604, %603 : vector<2x384xf32>
    %606 = arith.divf %604, %605 : vector<2x384xf32>
    %607 = vector.extract_strided_slice %606 {offsets = [0, 0], sizes = [2, 128], strides = [1, 1]} : vector<2x384xf32> to vector<2x128xf32>
    %608 = vector.extract_strided_slice %606 {offsets = [0, 128], sizes = [2, 128], strides = [1, 1]} : vector<2x384xf32> to vector<2x128xf32>
    %609 = vector.extract_strided_slice %606 {offsets = [0, 256], sizes = [2, 128], strides = [1, 1]} : vector<2x384xf32> to vector<2x128xf32>
    %610 = vector.extract_strided_slice %600 {offsets = [0, 384], sizes = [2, 128], strides = [1, 1]} : vector<2x512xf32> to vector<2x128xf32>
    %611 = math.tanh %610 : vector<2x128xf32>
    %612 = arith.mulf %608, %574 : vector<2x128xf32>
    %613 = arith.mulf %607, %611 : vector<2x128xf32>
    %614 = arith.addf %612, %613 : vector<2x128xf32>
    %615 = math.tanh %614 : vector<2x128xf32>
    %616 = arith.mulf %609, %615 : vector<2x128xf32>
    %617 = vector.extract_strided_slice %373 {offsets = [12, 0], sizes = [2, 512], strides = [1, 1]} : vector<16x512xf32> to vector<2x512xf32>
    %c0_155 = arith.constant 0 : index
    %c0_156 = arith.constant 0 : index
    %618 = vector.load %arg17[%c0_155, %c0_156] : memref<128x512xf32, #tpu.memory_space<vmem>>, vector<128x512xf32>
    %cst_157 = arith.constant dense<0.000000e+00> : vector<2x512xf32>
    %619 = tpu.matmul %596, %618, %cst_157 {dimension_numbers = #tpu.dot_dimension_numbers<[1], [0], [0], [1], [0, 0, 1, 1], [], []>} : vector<2x128xf32>, vector<128x512xf32>, vector<2x512xf32> -> vector<2x512xf32>
    %620 = arith.addf %617, %619 : vector<2x512xf32>
    %621 = vector.extract_strided_slice %620 {offsets = [0, 0], sizes = [2, 384], strides = [1, 1]} : vector<2x512xf32> to vector<2x384xf32>
    %622 = arith.negf %621 : vector<2x384xf32>
    %623 = math.exp %622 : vector<2x384xf32>
    %cst_158 = arith.constant 1.000000e+00 : f32
    %624 = vector.broadcast %cst_158 : f32 to vector<2x384xf32>
    %625 = arith.addf %624, %623 : vector<2x384xf32>
    %626 = arith.divf %624, %625 : vector<2x384xf32>
    %627 = vector.extract_strided_slice %626 {offsets = [0, 0], sizes = [2, 128], strides = [1, 1]} : vector<2x384xf32> to vector<2x128xf32>
    %628 = vector.extract_strided_slice %626 {offsets = [0, 128], sizes = [2, 128], strides = [1, 1]} : vector<2x384xf32> to vector<2x128xf32>
    %629 = vector.extract_strided_slice %626 {offsets = [0, 256], sizes = [2, 128], strides = [1, 1]} : vector<2x384xf32> to vector<2x128xf32>
    %630 = vector.extract_strided_slice %620 {offsets = [0, 384], sizes = [2, 128], strides = [1, 1]} : vector<2x512xf32> to vector<2x128xf32>
    %631 = math.tanh %630 : vector<2x128xf32>
    %632 = arith.mulf %628, %594 : vector<2x128xf32>
    %633 = arith.mulf %627, %631 : vector<2x128xf32>
    %634 = arith.addf %632, %633 : vector<2x128xf32>
    %635 = math.tanh %634 : vector<2x128xf32>
    %636 = arith.mulf %629, %635 : vector<2x128xf32>
    %637 = tpu.concatenate %636, %616 in 1 : vector<2x128xf32>, vector<2x128xf32> -> vector<2x256xf32>
    %c0_159 = arith.constant 0 : index
    %c0_160 = arith.constant 0 : index
    %638 = vector.load %arg18[%c0_159, %c0_160] : memref<256x512xf32, #tpu.memory_space<vmem>>, vector<256x512xf32>
    %cst_161 = arith.constant dense<0.000000e+00> : vector<2x512xf32>
    %639 = tpu.matmul %637, %638, %cst_161 {dimension_numbers = #tpu.dot_dimension_numbers<[1], [0], [0], [1], [0, 0, 1, 1], [], []>} : vector<2x256xf32>, vector<256x512xf32>, vector<2x512xf32> -> vector<2x512xf32>
    %640 = arith.addf %639, %376 : vector<2x512xf32>
    %641 = vector.extract_strided_slice %640 {offsets = [0, 0], sizes = [2, 384], strides = [1, 1]} : vector<2x512xf32> to vector<2x384xf32>
    %642 = arith.negf %641 : vector<2x384xf32>
    %643 = math.exp %642 : vector<2x384xf32>
    %cst_162 = arith.constant 1.000000e+00 : f32
    %644 = vector.broadcast %cst_162 : f32 to vector<2x384xf32>
    %645 = arith.addf %644, %643 : vector<2x384xf32>
    %646 = arith.divf %644, %645 : vector<2x384xf32>
    %647 = vector.extract_strided_slice %646 {offsets = [0, 0], sizes = [2, 128], strides = [1, 1]} : vector<2x384xf32> to vector<2x128xf32>
    %648 = vector.extract_strided_slice %646 {offsets = [0, 128], sizes = [2, 128], strides = [1, 1]} : vector<2x384xf32> to vector<2x128xf32>
    %649 = vector.extract_strided_slice %646 {offsets = [0, 256], sizes = [2, 128], strides = [1, 1]} : vector<2x384xf32> to vector<2x128xf32>
    %650 = vector.extract_strided_slice %640 {offsets = [0, 384], sizes = [2, 128], strides = [1, 1]} : vector<2x512xf32> to vector<2x128xf32>
    %651 = math.tanh %650 : vector<2x128xf32>
    %652 = arith.mulf %648, %614 : vector<2x128xf32>
    %653 = arith.mulf %647, %651 : vector<2x128xf32>
    %654 = arith.addf %652, %653 : vector<2x128xf32>
    %655 = math.tanh %654 : vector<2x128xf32>
    %656 = arith.mulf %649, %655 : vector<2x128xf32>
    %657 = vector.extract_strided_slice %373 {offsets = [14, 0], sizes = [2, 512], strides = [1, 1]} : vector<16x512xf32> to vector<2x512xf32>
    %c0_163 = arith.constant 0 : index
    %c0_164 = arith.constant 0 : index
    %658 = vector.load %arg17[%c0_163, %c0_164] : memref<128x512xf32, #tpu.memory_space<vmem>>, vector<128x512xf32>
    %cst_165 = arith.constant dense<0.000000e+00> : vector<2x512xf32>
    %659 = tpu.matmul %636, %658, %cst_165 {dimension_numbers = #tpu.dot_dimension_numbers<[1], [0], [0], [1], [0, 0, 1, 1], [], []>} : vector<2x128xf32>, vector<128x512xf32>, vector<2x512xf32> -> vector<2x512xf32>
    %660 = arith.addf %657, %659 : vector<2x512xf32>
    %661 = vector.extract_strided_slice %660 {offsets = [0, 0], sizes = [2, 384], strides = [1, 1]} : vector<2x512xf32> to vector<2x384xf32>
    %662 = arith.negf %661 : vector<2x384xf32>
    %663 = math.exp %662 : vector<2x384xf32>
    %cst_166 = arith.constant 1.000000e+00 : f32
    %664 = vector.broadcast %cst_166 : f32 to vector<2x384xf32>
    %665 = arith.addf %664, %663 : vector<2x384xf32>
    %666 = arith.divf %664, %665 : vector<2x384xf32>
    %667 = vector.extract_strided_slice %666 {offsets = [0, 0], sizes = [2, 128], strides = [1, 1]} : vector<2x384xf32> to vector<2x128xf32>
    %668 = vector.extract_strided_slice %666 {offsets = [0, 128], sizes = [2, 128], strides = [1, 1]} : vector<2x384xf32> to vector<2x128xf32>
    %669 = vector.extract_strided_slice %666 {offsets = [0, 256], sizes = [2, 128], strides = [1, 1]} : vector<2x384xf32> to vector<2x128xf32>
    %670 = vector.extract_strided_slice %660 {offsets = [0, 384], sizes = [2, 128], strides = [1, 1]} : vector<2x512xf32> to vector<2x128xf32>
    %671 = math.tanh %670 : vector<2x128xf32>
    %672 = arith.mulf %668, %634 : vector<2x128xf32>
    %673 = arith.mulf %667, %671 : vector<2x128xf32>
    %674 = arith.addf %672, %673 : vector<2x128xf32>
    %675 = math.tanh %674 : vector<2x128xf32>
    %676 = arith.mulf %669, %675 : vector<2x128xf32>
    %677 = tpu.concatenate %676, %656 in 1 : vector<2x128xf32>, vector<2x128xf32> -> vector<2x256xf32>
    %c0_167 = arith.constant 0 : index
    %c0_168 = arith.constant 0 : index
    %678 = vector.load %arg18[%c0_167, %c0_168] : memref<256x512xf32, #tpu.memory_space<vmem>>, vector<256x512xf32>
    %cst_169 = arith.constant dense<0.000000e+00> : vector<2x512xf32>
    %679 = tpu.matmul %677, %678, %cst_169 {dimension_numbers = #tpu.dot_dimension_numbers<[1], [0], [0], [1], [0, 0, 1, 1], [], []>} : vector<2x256xf32>, vector<256x512xf32>, vector<2x512xf32> -> vector<2x512xf32>
    %680 = arith.addf %679, %376 : vector<2x512xf32>
    %681 = vector.extract_strided_slice %680 {offsets = [0, 0], sizes = [2, 384], strides = [1, 1]} : vector<2x512xf32> to vector<2x384xf32>
    %682 = arith.negf %681 : vector<2x384xf32>
    %683 = math.exp %682 : vector<2x384xf32>
    %cst_170 = arith.constant 1.000000e+00 : f32
    %684 = vector.broadcast %cst_170 : f32 to vector<2x384xf32>
    %685 = arith.addf %684, %683 : vector<2x384xf32>
    %686 = arith.divf %684, %685 : vector<2x384xf32>
    %687 = vector.extract_strided_slice %686 {offsets = [0, 0], sizes = [2, 128], strides = [1, 1]} : vector<2x384xf32> to vector<2x128xf32>
    %688 = vector.extract_strided_slice %686 {offsets = [0, 128], sizes = [2, 128], strides = [1, 1]} : vector<2x384xf32> to vector<2x128xf32>
    %689 = vector.extract_strided_slice %686 {offsets = [0, 256], sizes = [2, 128], strides = [1, 1]} : vector<2x384xf32> to vector<2x128xf32>
    %690 = vector.extract_strided_slice %680 {offsets = [0, 384], sizes = [2, 128], strides = [1, 1]} : vector<2x512xf32> to vector<2x128xf32>
    %691 = math.tanh %690 : vector<2x128xf32>
    %692 = arith.mulf %688, %654 : vector<2x128xf32>
    %693 = arith.mulf %687, %691 : vector<2x128xf32>
    %694 = arith.addf %692, %693 : vector<2x128xf32>
    %695 = math.tanh %694 : vector<2x128xf32>
    %696 = arith.mulf %689, %695 : vector<2x128xf32>
    %697 = tpu.concatenate %416, %456, %496, %536, %576, %616, %656, %696 in 0 : vector<2x128xf32>, vector<2x128xf32>, vector<2x128xf32>, vector<2x128xf32>, vector<2x128xf32>, vector<2x128xf32>, vector<2x128xf32>, vector<2x128xf32> -> vector<16x128xf32>
    %c0_171 = arith.constant 0 : index
    %c0_172 = arith.constant 0 : index
    %698 = vector.load %arg20[%c0_171, %c0_172] : memref<16x128xf32, #tpu.memory_space<vmem>>, vector<16x128xf32>
    tpu.vector_store %arg20[%c0_171, %c0_172], %697 {strides = array<i32>} : memref<16x128xf32, #tpu.memory_space<vmem>>, vector<16x128xf32>,
    return
  }
}

</mosaic_0001>

<llo_original>
// kernel: rnn_autoencoder_forward.1
$region0: #{rnn_autoencoder_forward.1}
  #allocation0 [shape = 'u32[]', space=smem, size = 0x4, offset = 0x4, fixed_abs, tag = 'smem constant byte address 0x4 - core index']
  #allocation1 [shape = 'u32[144,128]{1,0:T(1,128)}', space=vmem, size = 0x12000, scoped, tag = 'internal scratch']
  %s0 = inlined_call_operand.vmem [shape: f32[16,128], index: 0, kind: input, shape index: {}]
  %s1 = inlined_call_operand.vmem [shape: f32[16,128], index: 1, kind: input, shape index: {}]
  %s2 = inlined_call_operand.hbm [shape: f32[128,512], index: 2, kind: input, shape index: {}]
  %s3 = inlined_call_operand.vmem [shape: f32[1,512], index: 3, kind: input, shape index: {}]
  %s4 = inlined_call_operand.hbm [shape: f32[128,512], index: 4, kind: input, shape index: {}]
  %s5 = inlined_call_operand.hbm [shape: f32[256,512], index: 5, kind: input, shape index: {}]
  %s6 = inlined_call_operand.vmem [shape: f32[1,512], index: 6, kind: input, shape index: {}]
  %s7 = inlined_call_operand.hbm [shape: f32[128,512], index: 7, kind: input, shape index: {}]
  %s8 = inlined_call_operand.vmem [shape: f32[1,512], index: 8, kind: input, shape index: {}]
  %s9 = inlined_call_operand.hbm [shape: f32[512,256], index: 9, kind: input, shape index: {}]
  %s10 = inlined_call_operand.vmem [shape: f32[1,256], index: 10, kind: input, shape index: {}]
  %s11 = inlined_call_operand.hbm [shape: f32[128,512], index: 11, kind: input, shape index: {}]
  %s12 = inlined_call_operand.vmem [shape: f32[1,512], index: 12, kind: input, shape index: {}]
  %s13 = inlined_call_operand.hbm [shape: f32[512,128], index: 13, kind: input, shape index: {}]
  %s14 = inlined_call_operand.vmem [shape: f32[1,128], index: 14, kind: input, shape index: {}]
  %s15 = inlined_call_operand.hbm [shape: f32[128,512], index: 15, kind: input, shape index: {}]
  %s16 = inlined_call_operand.vmem [shape: f32[1,512], index: 16, kind: input, shape index: {}]
  %s17 = inlined_call_operand.hbm [shape: f32[128,512], index: 17, kind: input, shape index: {}]
  %s18 = inlined_call_operand.hbm [shape: f32[256,512], index: 18, kind: input, shape index: {}]
  %s19 = inlined_call_operand.vmem [shape: f32[1,512], index: 19, kind: input, shape index: {}]
  %s20 = inlined_call_operand.hbm [shape: f32[16,128], index: 20, kind: output, shape index: {0}]
  %s21 = inlined_call_operand.vmem [shape: f32[16,256], index: 21, kind: output, shape index: {1}]
  %22 = xla_tuple %s20, %s21
  %s23 = sld [smem:[#allocation0]]
  $region138: #{rnn_autoencoder_forward.1} parent=0
    _
  %s25 = ssub.s32 1, %s23
  %s26 = scalar_select 0, %s25, %s23
  $region1: #{rnn_autoencoder_forward.1} parent=0
    #allocation2 [shape = 'u8[262144]{0}', space=vmem, size = 0x40000, scoped, tag = 'input window, operand 2, single buffered']
    #allocation3 [shape = 's32[1]{0}', space=sflag, size = 0x4, scoped, tag = 'scoped memory for rnn_autoencoder_forward.1']
    #allocation4 [shape = 's32[1]{0}', space=sflag, size = 0x4, scoped, tag = 'scoped memory for rnn_autoencoder_forward.1']
    #allocation5 [shape = 'u8[262144]{0}', space=vmem, size = 0x40000, scoped, tag = 'input window, operand 4, single buffered']
    #allocation6 [shape = 's32[1]{0}', space=sflag, size = 0x4, scoped, tag = 'scoped memory for rnn_autoencoder_forward.1']
    #allocation7 [shape = 'u8[524288]{0}', space=vmem, size = 0x80000, scoped, tag = 'input window, operand 5, single buffered']
    #allocation8 [shape = 'u8[262144]{0}', space=vmem, size = 0x40000, scoped, tag = 'input window, operand 7, single buffered']
    #allocation9 [shape = 's32[1]{0}', space=sflag, size = 0x4, scoped, tag = 'scoped memory for rnn_autoencoder_forward.1']
    #allocation10 [shape = 'u8[524288]{0}', space=vmem, size = 0x80000, scoped, tag = 'input window, operand 9, single buffered']
    #allocation11 [shape = 'u8[262144]{0}', space=vmem, size = 0x40000, scoped, tag = 'input window, operand 11, single buffered']
    #allocation12 [shape = 's32[1]{0}', space=sflag, size = 0x4, scoped, tag = 'scoped memory for rnn_autoencoder_forward.1']
    #allocation13 [shape = 'u8[262144]{0}', space=vmem, size = 0x40000, scoped, tag = 'input window, operand 13, single buffered']
    #allocation14 [shape = 'u8[262144]{0}', space=vmem, size = 0x40000, scoped, tag = 'input window, operand 15, single buffered']
    #allocation15 [shape = 's32[1]{0}', space=sflag, size = 0x4, scoped, tag = 'scoped memory for rnn_autoencoder_forward.1']
    #allocation16 [shape = 'u8[262144]{0}', space=vmem, size = 0x40000, scoped, tag = 'input window, operand 17, single buffered']
    #allocation17 [shape = 'u8[524288]{0}', space=vmem, size = 0x80000, scoped, tag = 'input window, operand 18, single buffered']
    #allocation18 [shape = 's32[1]{0}', space=sflag, size = 0x4, scoped, tag = 'scoped memory for rnn_autoencoder_forward.1']
    #allocation19 [shape = 'u8[8192]{0}', space=vmem, size = 0x2000, scoped, tag = 'output window, operand 0, single buffered']
    %27 = vsyncpa [#allocation3], 0
    %28 = vsyncpa [#allocation6], 0
    %29 = vsyncpa [#allocation9], 0
    %30 = vsyncpa [#allocation12], 0
    %31 = vsyncpa [#allocation15], 0
    %32 = vsyncpa [#allocation18], 0
    %33 = vsyncpa [#allocation4], 0
    // Predicated region
    $region2: #{rnn_autoencoder_forward.1} parent=1 // pred_check
      _
    $region3: #{rnn_autoencoder_forward.1} parent=1 // pred_check_branch
      %35 = sbr.rel (0) target = $region5
    $region4: #{rnn_autoencoder_forward.1} parent=1 // pred_region
      _
    $region5: #{rnn_autoencoder_forward.1} parent=1 // pred_fallthru
      _
    // Predicated region
    $region6: #{rnn_autoencoder_forward.1} parent=1 // pred_check
      _
    $region7: #{rnn_autoencoder_forward.1} parent=1 // pred_check_branch
      %37 = sbr.rel (0) target = $region9
    $region8: #{rnn_autoencoder_forward.1} parent=1 // pred_region
      _
    $region9: #{rnn_autoencoder_forward.1} parent=1 // pred_fallthru
      _
    // Predicated region
    $region10: #{rnn_autoencoder_forward.1} parent=1 // pred_check
      _
    $region11: #{rnn_autoencoder_forward.1} parent=1 // pred_check_branch
      %39 = sbr.rel (0) target = $region13
    $region12: #{rnn_autoencoder_forward.1} parent=1 // pred_region
      %s41 = ssub.s32 8192, 8192
      %42 = vsyncadd [#allocation3], %s41
      %s43 = sshll.u32 [#allocation2], 4
      %s44 = int_to_ptr.vmem [resolvable:$true] %s43
      %49 = dma.hbm_to_vmem [thread:$0]  %s2, 8192, %s44, [#allocation3], 512, 512, 32
    $region13: #{rnn_autoencoder_forward.1} parent=1 // pred_fallthru
      _
    // Predicated region
    $region14: #{rnn_autoencoder_forward.1} parent=1 // pred_check
      _
    $region15: #{rnn_autoencoder_forward.1} parent=1 // pred_check_branch
      %51 = sbr.rel (0) target = $region17
    $region16: #{rnn_autoencoder_forward.1} parent=1 // pred_region
      _
    $region17: #{rnn_autoencoder_forward.1} parent=1 // pred_fallthru
      _
    // Predicated region
    $region18: #{rnn_autoencoder_forward.1} parent=1 // pred_check
      _
    $region19: #{rnn_autoencoder_forward.1} parent=1 // pred_check_branch
      %53 = sbr.rel (0) target = $region21
    $region20: #{rnn_autoencoder_forward.1} parent=1 // pred_region
      %s55 = ssub.s32 8192, 8192
      %56 = vsyncadd [#allocation6], %s55
      %s57 = sshll.u32 [#allocation5], 4
      %s58 = int_to_ptr.vmem [resolvable:$true] %s57
      %63 = dma.hbm_to_vmem [thread:$0]  %s4, 8192, %s58, [#allocation6], 512, 512, 32
    $region21: #{rnn_autoencoder_forward.1} parent=1 // pred_fallthru
      _
    // Predicated region
    $region22: #{rnn_autoencoder_forward.1} parent=1 // pred_check
      _
    $region23: #{rnn_autoencoder_forward.1} parent=1 // pred_check_branch
      %65 = sbr.rel (0) target = $region25
    $region24: #{rnn_autoencoder_forward.1} parent=1 // pred_region
      %s67 = ssub.s32 16384, 16384
      %68 = vsyncadd [#allocation6], %s67
      %s69 = sshll.u32 [#allocation7], 4
      %s70 = int_to_ptr.vmem [resolvable:$true] %s69
      %75 = dma.hbm_to_vmem [thread:$0]  %s5, 16384, %s70, [#allocation6], 512, 512, 32
    $region25: #{rnn_autoencoder_forward.1} parent=1 // pred_fallthru
      _
    // Predicated region
    $region26: #{rnn_autoencoder_forward.1} parent=1 // pred_check
      _
    $region27: #{rnn_autoencoder_forward.1} parent=1 // pred_check_branch
      %77 = sbr.rel (0) target = $region29
    $region28: #{rnn_autoencoder_forward.1} parent=1 // pred_region
      _
    $region29: #{rnn_autoencoder_forward.1} parent=1 // pred_fallthru
      _
    // Predicated region
    $region30: #{rnn_autoencoder_forward.1} parent=1 // pred_check
      _
    $region31: #{rnn_autoencoder_forward.1} parent=1 // pred_check_branch
      %79 = sbr.rel (0) target = $region33
    $region32: #{rnn_autoencoder_forward.1} parent=1 // pred_region
      %s81 = ssub.s32 8192, 8192
      %82 = vsyncadd [#allocation9], %s81
      %s83 = sshll.u32 [#allocation8], 4
      %s84 = int_to_ptr.vmem [resolvable:$true] %s83
      %89 = dma.hbm_to_vmem [thread:$0]  %s7, 8192, %s84, [#allocation9], 512, 512, 32
    $region33: #{rnn_autoencoder_forward.1} parent=1 // pred_fallthru
      _
    // Predicated region
    $region34: #{rnn_autoencoder_forward.1} parent=1 // pred_check
      _
    $region35: #{rnn_autoencoder_forward.1} parent=1 // pred_check_branch
      %91 = sbr.rel (0) target = $region37
    $region36: #{rnn_autoencoder_forward.1} parent=1 // pred_region
      _
    $region37: #{rnn_autoencoder_forward.1} parent=1 // pred_fallthru
      _
    // Predicated region
    $region38: #{rnn_autoencoder_forward.1} parent=1 // pred_check
      _
    $region39: #{rnn_autoencoder_forward.1} parent=1 // pred_check_branch
      %93 = sbr.rel (0) target = $region41
    $region40: #{rnn_autoencoder_forward.1} parent=1 // pred_region
      %s95 = ssub.s32 16384, 16384
      %96 = vsyncadd [#allocation9], %s95
      %s97 = sshll.u32 [#allocation10], 4
      %s98 = int_to_ptr.vmem [resolvable:$true] %s97
      %103 = dma.hbm_to_vmem [thread:$0]  %s9, 16384, %s98, [#allocation9], 256, 256, 16
    $region41: #{rnn_autoencoder_forward.1} parent=1 // pred_fallthru
      _
    // Predicated region
    $region42: #{rnn_autoencoder_forward.1} parent=1 // pred_check
      _
    $region43: #{rnn_autoencoder_forward.1} parent=1 // pred_check_branch
      %105 = sbr.rel (0) target = $region45
    $region44: #{rnn_autoencoder_forward.1} parent=1 // pred_region
      _
    $region45: #{rnn_autoencoder_forward.1} parent=1 // pred_fallthru
      _
    // Predicated region
    $region46: #{rnn_autoencoder_forward.1} parent=1 // pred_check
      _
    $region47: #{rnn_autoencoder_forward.1} parent=1 // pred_check_branch
      %107 = sbr.rel (0) target = $region49
    $region48: #{rnn_autoencoder_forward.1} parent=1 // pred_region
      %s109 = ssub.s32 8192, 8192
      %110 = vsyncadd [#allocation12], %s109
      %s111 = sshll.u32 [#allocation11], 4
      %s112 = int_to_ptr.vmem [resolvable:$true] %s111
      %117 = dma.hbm_to_vmem [thread:$0]  %s11, 8192, %s112, [#allocation12], 512, 512, 32
    $region49: #{rnn_autoencoder_forward.1} parent=1 // pred_fallthru
      _
    // Predicated region
    $region50: #{rnn_autoencoder_forward.1} parent=1 // pred_check
      _
    $region51: #{rnn_autoencoder_forward.1} parent=1 // pred_check_branch
      %119 = sbr.rel (0) target = $region53
    $region52: #{rnn_autoencoder_forward.1} parent=1 // pred_region
      _
    $region53: #{rnn_autoencoder_forward.1} parent=1 // pred_fallthru
      _
    // Predicated region
    $region54: #{rnn_autoencoder_forward.1} parent=1 // pred_check
      _
    $region55: #{rnn_autoencoder_forward.1} parent=1 // pred_check_branch
      %121 = sbr.rel (0) target = $region57
    $region56: #{rnn_autoencoder_forward.1} parent=1 // pred_region
      %s123 = ssub.s32 8192, 8192
      %124 = vsyncadd [#allocation12], %s123
      %s125 = sshll.u32 [#allocation13], 4
      %s126 = int_to_ptr.vmem [resolvable:$true] %s125
      %131 = dma.hbm_to_vmem [thread:$0]  %s13, 8192, %s126, [#allocation12], 128, 128, 8
    $region57: #{rnn_autoencoder_forward.1} parent=1 // pred_fallthru
      _
    // Predicated region
    $region58: #{rnn_autoencoder_forward.1} parent=1 // pred_check
      _
    $region59: #{rnn_autoencoder_forward.1} parent=1 // pred_check_branch
      %133 = sbr.rel (0) target = $region61
    $region60: #{rnn_autoencoder_forward.1} parent=1 // pred_region
      _
    $region61: #{rnn_autoencoder_forward.1} parent=1 // pred_fallthru
      _
    // Predicated region
    $region62: #{rnn_autoencoder_forward.1} parent=1 // pred_check
      _
    $region63: #{rnn_autoencoder_forward.1} parent=1 // pred_check_branch
      %135 = sbr.rel (0) target = $region65
    $region64: #{rnn_autoencoder_forward.1} parent=1 // pred_region
      %s137 = ssub.s32 8192, 8192
      %138 = vsyncadd [#allocation15], %s137
      %s139 = sshll.u32 [#allocation14], 4
      %s140 = int_to_ptr.vmem [resolvable:$true] %s139
      %145 = dma.hbm_to_vmem [thread:$0]  %s15, 8192, %s140, [#allocation15], 512, 512, 32
    $region65: #{rnn_autoencoder_forward.1} parent=1 // pred_fallthru
      _
    // Predicated region
    $region66: #{rnn_autoencoder_forward.1} parent=1 // pred_check
      _
    $region67: #{rnn_autoencoder_forward.1} parent=1 // pred_check_branch
      %147 = sbr.rel (0) target = $region69
    $region68: #{rnn_autoencoder_forward.1} parent=1 // pred_region
      _
    $region69: #{rnn_autoencoder_forward.1} parent=1 // pred_fallthru
      _
    // Predicated region
    $region70: #{rnn_autoencoder_forward.1} parent=1 // pred_check
      _
    $region71: #{rnn_autoencoder_forward.1} parent=1 // pred_check_branch
      %149 = sbr.rel (0) target = $region73
    $region72: #{rnn_autoencoder_forward.1} parent=1 // pred_region
      %s151 = ssub.s32 8192, 8192
      %152 = vsyncadd [#allocation15], %s151
      %s153 = sshll.u32 [#allocation16], 4
      %s154 = int_to_ptr.vmem [resolvable:$true] %s153
      %159 = dma.hbm_to_vmem [thread:$0]  %s17, 8192, %s154, [#allocation15], 512, 512, 32
    $region73: #{rnn_autoencoder_forward.1} parent=1 // pred_fallthru
      _
    // Predicated region
    $region74: #{rnn_autoencoder_forward.1} parent=1 // pred_check
      _
    $region75: #{rnn_autoencoder_forward.1} parent=1 // pred_check_branch
      %161 = sbr.rel (0) target = $region77
    $region76: #{rnn_autoencoder_forward.1} parent=1 // pred_region
      %s163 = ssub.s32 16384, 16384
      %164 = vsyncadd [#allocation18], %s163
      %s165 = sshll.u32 [#allocation17], 4
      %s166 = int_to_ptr.vmem [resolvable:$true] %s165
      %171 = dma.hbm_to_vmem [thread:$0]  %s18, 16384, %s166, [#allocation18], 512, 512, 32
    $region77: #{rnn_autoencoder_forward.1} parent=1 // pred_fallthru
      _
    // Predicated region
    $region78: #{rnn_autoencoder_forward.1} parent=1 // pred_check
      _
    $region79: #{rnn_autoencoder_forward.1} parent=1 // pred_check_branch
      %173 = sbr.rel (0) target = $region81
    $region80: #{rnn_autoencoder_forward.1} parent=1 // pred_region
      _
    $region81: #{rnn_autoencoder_forward.1} parent=1 // pred_fallthru
      _
    // Predicated region
    $region82: #{rnn_autoencoder_forward.1} parent=1 // pred_check
      _
    $region83: #{rnn_autoencoder_forward.1} parent=1 // pred_check_branch
      %175 = sbr.rel (0) target = $region85
    $region84: #{rnn_autoencoder_forward.1} parent=1 // pred_region
      %176 = dma.done [#allocation3], 8192
    $region85: #{rnn_autoencoder_forward.1} parent=1 // pred_fallthru
      _
    // Predicated region
    $region86: #{rnn_autoencoder_forward.1} parent=1 // pred_check
      _
    $region87: #{rnn_autoencoder_forward.1} parent=1 // pred_check_branch
      %178 = sbr.rel (0) target = $region89
    $region88: #{rnn_autoencoder_forward.1} parent=1 // pred_region
      %179 = dma.done [#allocation6], 8192
    $region89: #{rnn_autoencoder_forward.1} parent=1 // pred_fallthru
      _
    // Predicated region
    $region90: #{rnn_autoencoder_forward.1} parent=1 // pred_check
      _
    $region91: #{rnn_autoencoder_forward.1} parent=1 // pred_check_branch
      %181 = sbr.rel (0) target = $region93
    $region92: #{rnn_autoencoder_forward.1} parent=1 // pred_region
      %182 = dma.done [#allocation6], 16384
    $region93: #{rnn_autoencoder_forward.1} parent=1 // pred_fallthru
      _
    // Predicated region
    $region94: #{rnn_autoencoder_forward.1} parent=1 // pred_check
      _
    $region95: #{rnn_autoencoder_forward.1} parent=1 // pred_check_branch
      %184 = sbr.rel (0) target = $region97
    $region96: #{rnn_autoencoder_forward.1} parent=1 // pred_region
      %185 = dma.done [#allocation9], 8192
    $region97: #{rnn_autoencoder_forward.1} parent=1 // pred_fallthru
      _
    // Predicated region
    $region98: #{rnn_autoencoder_forward.1} parent=1 // pred_check
      _
    $region99: #{rnn_autoencoder_forward.1} parent=1 // pred_check_branch
      %187 = sbr.rel (0) target = $region101
    $region100: #{rnn_autoencoder_forward.1} parent=1 // pred_region
      %188 = dma.done [#allocation9], 16384
    $region101: #{rnn_autoencoder_forward.1} parent=1 // pred_fallthru
      _
    // Predicated region
    $region102: #{rnn_autoencoder_forward.1} parent=1 // pred_check
      _
    $region103: #{rnn_autoencoder_forward.1} parent=1 // pred_check_branch
      %190 = sbr.rel (0) target = $region105
    $region104: #{rnn_autoencoder_forward.1} parent=1 // pred_region
      %191 = dma.done [#allocation12], 8192
    $region105: #{rnn_autoencoder_forward.1} parent=1 // pred_fallthru
      _
    // Predicated region
    $region106: #{rnn_autoencoder_forward.1} parent=1 // pred_check
      _
    $region107: #{rnn_autoencoder_forward.1} parent=1 // pred_check_branch
      %193 = sbr.rel (0) target = $region109
    $region108: #{rnn_autoencoder_forward.1} parent=1 // pred_region
      %194 = dma.done [#allocation12], 8192
    $region109: #{rnn_autoencoder_forward.1} parent=1 // pred_fallthru
      _
    // Predicated region
    $region110: #{rnn_autoencoder_forward.1} parent=1 // pred_check
      _
    $region111: #{rnn_autoencoder_forward.1} parent=1 // pred_check_branch
      %196 = sbr.rel (0) target = $region113
    $region112: #{rnn_autoencoder_forward.1} parent=1 // pred_region
      %197 = dma.done [#allocation15], 8192
    $region113: #{rnn_autoencoder_forward.1} parent=1 // pred_fallthru
      _
    // Predicated region
    $region114: #{rnn_autoencoder_forward.1} parent=1 // pred_check
      _
    $region115: #{rnn_autoencoder_forward.1} parent=1 // pred_check_branch
      %199 = sbr.rel (0) target = $region117
    $region116: #{rnn_autoencoder_forward.1} parent=1 // pred_region
      %200 = dma.done [#allocation15], 8192
    $region117: #{rnn_autoencoder_forward.1} parent=1 // pred_fallthru
      _
    // Predicated region
    $region118: #{rnn_autoencoder_forward.1} parent=1 // pred_check
      _
    $region119: #{rnn_autoencoder_forward.1} parent=1 // pred_check_branch
      %202 = sbr.rel (0) target = $region121
    $region120: #{rnn_autoencoder_forward.1} parent=1 // pred_region
      %203 = dma.done [#allocation18], 16384
    $region121: #{rnn_autoencoder_forward.1} parent=1 // pred_fallthru
      _
    %v204 = vld [vmem:[%s0] sm:$0xff]
    %v205 = vld [vmem:[%s0 + $0x8] sm:$0xff]
    %v206 = vld [vmem:[#allocation2] sm:$0xff]
    %v207 = vld [vmem:[#allocation2 + $0x8] sm:$0xff]
    %v208 = vld [vmem:[#allocation2 + $0x10] sm:$0xff]
    %v209 = vld [vmem:[#allocation2 + $0x18] sm:$0xff]
    %v210 = vld [vmem:[#allocation2 + $0x20] sm:$0xff]
    %v211 = vld [vmem:[#allocation2 + $0x28] sm:$0xff]
    %v212 = vld [vmem:[#allocation2 + $0x30] sm:$0xff]
    %v213 = vld [vmem:[#allocation2 + $0x38] sm:$0xff]
    %v214 = vld [vmem:[#allocation2 + $0x40] sm:$0xff]
    %v215 = vld [vmem:[#allocation2 + $0x48] sm:$0xff]
    %v216 = vld [vmem:[#allocation2 + $0x50] sm:$0xff]
    %v217 = vld [vmem:[#allocation2 + $0x58] sm:$0xff]
    %v218 = vld [vmem:[#allocation2 + $0x60] sm:$0xff]
    %v219 = vld [vmem:[#allocation2 + $0x68] sm:$0xff]
    %v220 = vld [vmem:[#allocation2 + $0x70] sm:$0xff]
    %v221 = vld [vmem:[#allocation2 + $0x78] sm:$0xff]
    %v222 = vld [vmem:[#allocation2 + $0x80] sm:$0xff]
    %v223 = vld [vmem:[#allocation2 + $0x88] sm:$0xff]
    %v224 = vld [vmem:[#allocation2 + $0x90] sm:$0xff]
    %v225 = vld [vmem:[#allocation2 + $0x98] sm:$0xff]
    %v226 = vld [vmem:[#allocation2 + $0xa0] sm:$0xff]
    %v227 = vld [vmem:[#allocation2 + $0xa8] sm:$0xff]
    %v228 = vld [vmem:[#allocation2 + $0xb0] sm:$0xff]
    %v229 = vld [vmem:[#allocation2 + $0xb8] sm:$0xff]
    %v230 = vld [vmem:[#allocation2 + $0xc0] sm:$0xff]
    %v231 = vld [vmem:[#allocation2 + $0xc8] sm:$0xff]
    %v232 = vld [vmem:[#allocation2 + $0xd0] sm:$0xff]
    %v233 = vld [vmem:[#allocation2 + $0xd8] sm:$0xff]
    %v234 = vld [vmem:[#allocation2 + $0xe0] sm:$0xff]
    %v235 = vld [vmem:[#allocation2 + $0xe8] sm:$0xff]
    %v236 = vld [vmem:[#allocation2 + $0xf0] sm:$0xff]
    %v237 = vld [vmem:[#allocation2 + $0xf8] sm:$0xff]
    %v238 = vld [vmem:[#allocation2 + $0x100] sm:$0xff]
    %v239 = vld [vmem:[#allocation2 + $0x108] sm:$0xff]
    %v240 = vld [vmem:[#allocation2 + $0x110] sm:$0xff]
    %v241 = vld [vmem:[#allocation2 + $0x118] sm:$0xff]
    %v242 = vld [vmem:[#allocation2 + $0x120] sm:$0xff]
    %v243 = vld [vmem:[#allocation2 + $0x128] sm:$0xff]
    %v244 = vld [vmem:[#allocation2 + $0x130] sm:$0xff]
    %v245 = vld [vmem:[#allocation2 + $0x138] sm:$0xff]
    %v246 = vld [vmem:[#allocation2 + $0x140] sm:$0xff]
    %v247 = vld [vmem:[#allocation2 + $0x148] sm:$0xff]
    %v248 = vld [vmem:[#allocation2 + $0x150] sm:$0xff]
    %v249 = vld [vmem:[#allocation2 + $0x158] sm:$0xff]
    %v250 = vld [vmem:[#allocation2 + $0x160] sm:$0xff]
    %v251 = vld [vmem:[#allocation2 + $0x168] sm:$0xff]
    %v252 = vld [vmem:[#allocation2 + $0x170] sm:$0xff]
    %v253 = vld [vmem:[#allocation2 + $0x178] sm:$0xff]
    %v254 = vld [vmem:[#allocation2 + $0x180] sm:$0xff]
    %v255 = vld [vmem:[#allocation2 + $0x188] sm:$0xff]
    %v256 = vld [vmem:[#allocation2 + $0x190] sm:$0xff]
    %v257 = vld [vmem:[#allocation2 + $0x198] sm:$0xff]
    %v258 = vld [vmem:[#allocation2 + $0x1a0] sm:$0xff]
    %v259 = vld [vmem:[#allocation2 + $0x1a8] sm:$0xff]
    %v260 = vld [vmem:[#allocation2 + $0x1b0] sm:$0xff]
    %v261 = vld [vmem:[#allocation2 + $0x1b8] sm:$0xff]
    %v262 = vld [vmem:[#allocation2 + $0x1c0] sm:$0xff]
    %v263 = vld [vmem:[#allocation2 + $0x1c8] sm:$0xff]
    %v264 = vld [vmem:[#allocation2 + $0x1d0] sm:$0xff]
    %v265 = vld [vmem:[#allocation2 + $0x1d8] sm:$0xff]
    %v266 = vld [vmem:[#allocation2 + $0x1e0] sm:$0xff]
    %v267 = vld [vmem:[#allocation2 + $0x1e8] sm:$0xff]
    %v268 = vld [vmem:[#allocation2 + $0x1f0] sm:$0xff]
    %v269 = vld [vmem:[#allocation2 + $0x1f8] sm:$0xff]
    %v270 = vld [vmem:[%s3] sm:$0xf]
    %v272 = vlaneseq
    %v273 = vshrl.u32 %v272, 7
    %v274 = vsub.s32 0, %v273
    %v275 = vrot.slane %v270, %v274
    %v276 = vlaneseq
    %v277 = vshrl.u32 %v276, 7
    %v278 = vsub.s32 1, %v277
    %v279 = vrot.slane %v270, %v278
    %v280 = vlaneseq
    %v281 = vshrl.u32 %v280, 7
    %v282 = vsub.s32 2, %v281
    %v283 = vrot.slane %v270, %v282
    %v284 = vlaneseq
    %v285 = vshrl.u32 %v284, 7
    %v286 = vsub.s32 3, %v285
    %v287 = vrot.slane %v270, %v286
    %292 = vmatprep.subr.mxu0 %v207
    %293 = vmatpush1.msra.mxu0 %v206
    %294 = vmatprep.subr.mxu0 %v211
    %295 = vmatpush1.msra.mxu0 %v210
    %296 = vmatprep.subr.mxu0 %v215
    %297 = vmatpush1.msra.mxu0 %v214
    %298 = vmatprep.subr.mxu0 %v219
    %299 = vmatpush1.msra.mxu0 %v218
    %300 = vmatprep.subr.mxu0 %v223
    %301 = vmatpush1.msra.mxu0 %v222
    %302 = vmatprep.subr.mxu0 %v227
    %303 = vmatpush1.msra.mxu0 %v226
    %304 = vmatprep.subr.mxu0 %v231
    %305 = vmatpush1.msra.mxu0 %v230
    %306 = vmatprep.subr.mxu0 %v235
    %307 = vmatpush1.msra.mxu0 %v234
    %308 = vmatprep.subr.mxu0 %v239
    %309 = vmatpush1.msra.mxu0 %v238
    %310 = vmatprep.subr.mxu0 %v243
    %311 = vmatpush1.msra.mxu0 %v242
    %312 = vmatprep.subr.mxu0 %v247
    %313 = vmatpush1.msra.mxu0 %v246
    %314 = vmatprep.subr.mxu0 %v251
    %315 = vmatpush1.msra.mxu0 %v250
    %316 = vmatprep.subr.mxu0 %v255
    %317 = vmatpush1.msra.mxu0 %v254
    %318 = vmatprep.subr.mxu0 %v259
    %319 = vmatpush1.msra.mxu0 %v258
    %320 = vmatprep.subr.mxu0 %v263
    %321 = vmatpush1.msra.mxu0 %v262
    %322 = vmatprep.subr.mxu0 %v267
    %323 = vmatpush1.msra.mxu0 %v266
    %324 = vmatprep.subr.mxu0 0.0
    %325 = vmatpush1.msra.mxu0 0.0
    %326 = vmatprep.subr.mxu0 0.0
    %327 = vmatpush1.msra.mxu0 0.0
    %328 = vmatprep.subr.mxu0 0.0
    %329 = vmatpush1.msra.mxu0 0.0
    %330 = vmatprep.subr.mxu0 0.0
    %331 = vmatpush1.msra.mxu0 0.0
    %332 = vmatprep.subr.mxu0 0.0
    %333 = vmatpush1.msra.mxu0 0.0
    %334 = vmatprep.subr.mxu0 0.0
    %335 = vmatpush1.msra.mxu0 0.0
    %336 = vmatprep.subr.mxu0 0.0
    %337 = vmatpush1.msra.mxu0 0.0
    %338 = vmatprep.subr.mxu0 0.0
    %339 = vmatpush1.msra.mxu0 0.0
    %340 = vmatprep.subr.mxu0 0.0
    %341 = vmatpush1.msra.mxu0 0.0
    %342 = vmatprep.subr.mxu0 0.0
    %343 = vmatpush1.msra.mxu0 0.0
    %344 = vmatprep.subr.mxu0 0.0
    %345 = vmatpush1.msra.mxu0 0.0
    %346 = vmatprep.subr.mxu0 0.0
    %347 = vmatpush1.msra.mxu0 0.0
    %348 = vmatprep.subr.mxu0 0.0
    %349 = vmatpush1.msra.mxu0 0.0
    %350 = vmatprep.subr.mxu0 0.0
    %351 = vmatpush1.msra.mxu0 0.0
    %352 = vmatprep.subr.mxu0 0.0
    %353 = vmatpush1.msra.mxu0 0.0
    %354 = vmatprep.subr.mxu0 0.0
    %355 = vmatpush1.msra.mxu0 0.0
    %356 = vmatprep.mubr.f32.mxu0 0.0
    %357 = vmatmul.mubr.f32.gmra.mrb[0].mxu0 %v204
    %v358 = vpop.f32.mrb[0].mxu0
    %v359 = vadd.f32 %v275, %v358
    %v360 = vpop.f32.mrb[0].mxu0
    %v361 = vadd.f32 %v279, %v360
    %362 = vmatprep.mubr.f32.mxu0 0.0
    %363 = vmatmul.mubr.f32.gmra.mrb[0].mxu0 %v205
    %v364 = vpop.f32.mrb[0].mxu0
    %v365 = vadd.f32 %v275, %v364
    %v366 = vpop.f32.mrb[0].mxu0
    %v367 = vadd.f32 %v279, %v366
    %368 = vdwg.mxu0
    %369 = vmatprep.subr.mxu0 %v209
    %370 = vmatpush1.msra.mxu0 %v208
    %371 = vmatprep.subr.mxu0 %v213
    %372 = vmatpush1.msra.mxu0 %v212
    %373 = vmatprep.subr.mxu0 %v217
    %374 = vmatpush1.msra.mxu0 %v216
    %375 = vmatprep.subr.mxu0 %v221
    %376 = vmatpush1.msra.mxu0 %v220
    %377 = vmatprep.subr.mxu0 %v225
    %378 = vmatpush1.msra.mxu0 %v224
    %379 = vmatprep.subr.mxu0 %v229
    %380 = vmatpush1.msra.mxu0 %v228
    %381 = vmatprep.subr.mxu0 %v233
    %382 = vmatpush1.msra.mxu0 %v232
    %383 = vmatprep.subr.mxu0 %v237
    %384 = vmatpush1.msra.mxu0 %v236
    %385 = vmatprep.subr.mxu0 %v241
    %386 = vmatpush1.msra.mxu0 %v240
    %387 = vmatprep.subr.mxu0 %v245
    %388 = vmatpush1.msra.mxu0 %v244
    %389 = vmatprep.subr.mxu0 %v249
    %390 = vmatpush1.msra.mxu0 %v248
    %391 = vmatprep.subr.mxu0 %v253
    %392 = vmatpush1.msra.mxu0 %v252
    %393 = vmatprep.subr.mxu0 %v257
    %394 = vmatpush1.msra.mxu0 %v256
    %395 = vmatprep.subr.mxu0 %v261
    %396 = vmatpush1.msra.mxu0 %v260
    %397 = vmatprep.subr.mxu0 %v265
    %398 = vmatpush1.msra.mxu0 %v264
    %399 = vmatprep.subr.mxu0 %v269
    %400 = vmatpush1.msra.mxu0 %v268
    %401 = vmatprep.subr.mxu0 0.0
    %402 = vmatpush1.msra.mxu0 0.0
    %403 = vmatprep.subr.mxu0 0.0
    %404 = vmatpush1.msra.mxu0 0.0
    %405 = vmatprep.subr.mxu0 0.0
    %406 = vmatpush1.msra.mxu0 0.0
    %407 = vmatprep.subr.mxu0 0.0
    %408 = vmatpush1.msra.mxu0 0.0
    %409 = vmatprep.subr.mxu0 0.0
    %410 = vmatpush1.msra.mxu0 0.0
    %411 = vmatprep.subr.mxu0 0.0
    %412 = vmatpush1.msra.mxu0 0.0
    %413 = vmatprep.subr.mxu0 0.0
    %414 = vmatpush1.msra.mxu0 0.0
    %415 = vmatprep.subr.mxu0 0.0
    %416 = vmatpush1.msra.mxu0 0.0
    %417 = vmatprep.subr.mxu0 0.0
    %418 = vmatpush1.msra.mxu0 0.0
    %419 = vmatprep.subr.mxu0 0.0
    %420 = vmatpush1.msra.mxu0 0.0
    %421 = vmatprep.subr.mxu0 0.0
    %422 = vmatpush1.msra.mxu0 0.0
    %423 = vmatprep.subr.mxu0 0.0
    %424 = vmatpush1.msra.mxu0 0.0
    %425 = vmatprep.subr.mxu0 0.0
    %426 = vmatpush1.msra.mxu0 0.0
    %427 = vmatprep.subr.mxu0 0.0
    %428 = vmatpush1.msra.mxu0 0.0
    %429 = vmatprep.subr.mxu0 0.0
    %430 = vmatpush1.msra.mxu0 0.0
    %431 = vmatprep.subr.mxu0 0.0
    %432 = vmatpush1.msra.mxu0 0.0
    %433 = vmatprep.mubr.f32.mxu0 0.0
    %434 = vmatmul.mubr.f32.gmra.mrb[0].mxu0 %v204
    %v435 = vpop.f32.mrb[0].mxu0
    %v436 = vadd.f32 %v283, %v435
    %v437 = vpop.f32.mrb[0].mxu0
    %v438 = vadd.f32 %v287, %v437
    %439 = vmatprep.mubr.f32.mxu0 0.0
    %440 = vmatmul.mubr.f32.gmra.mrb[0].mxu0 %v205
    %v441 = vpop.f32.mrb[0].mxu0
    %v442 = vadd.f32 %v283, %v441
    %v443 = vpop.f32.mrb[0].mxu0
    %v444 = vadd.f32 %v287, %v443
    %445 = vdwg.mxu0
    %v446 = vld [vmem:[%s6] sm:$0xf]
    %v448 = vlaneseq
    %v449 = vshrl.u32 %v448, 7
    %v450 = vsub.s32 0, %v449
    %v451 = vrot.slane %v446, %v450
    %v452 = vlaneseq
    %v453 = vshrl.u32 %v452, 7
    %v454 = vsub.s32 1, %v453
    %v455 = vrot.slane %v446, %v454
    %v456 = vlaneseq
    %v457 = vshrl.u32 %v456, 7
    %v458 = vsub.s32 2, %v457
    %v459 = vrot.slane %v446, %v458
    %v460 = vlaneseq
    %v461 = vshrl.u32 %v460, 7
    %v462 = vsub.s32 3, %v461
    %v463 = vrot.slane %v446, %v462
    %v468 = vld [vmem:[#allocation5] sm:$0xff]
    %v469 = vld [vmem:[#allocation5 + $0x8] sm:$0xff]
    %v470 = vld [vmem:[#allocation5 + $0x10] sm:$0xff]
    %v471 = vld [vmem:[#allocation5 + $0x18] sm:$0xff]
    %v472 = vld [vmem:[#allocation5 + $0x20] sm:$0xff]
    %v473 = vld [vmem:[#allocation5 + $0x28] sm:$0xff]
    %v474 = vld [vmem:[#allocation5 + $0x30] sm:$0xff]
    %v475 = vld [vmem:[#allocation5 + $0x38] sm:$0xff]
    %v476 = vld [vmem:[#allocation5 + $0x40] sm:$0xff]
    %v477 = vld [vmem:[#allocation5 + $0x48] sm:$0xff]
    %v478 = vld [vmem:[#allocation5 + $0x50] sm:$0xff]
    %v479 = vld [vmem:[#allocation5 + $0x58] sm:$0xff]
    %v480 = vld [vmem:[#allocation5 + $0x60] sm:$0xff]
    %v481 = vld [vmem:[#allocation5 + $0x68] sm:$0xff]
    %v482 = vld [vmem:[#allocation5 + $0x70] sm:$0xff]
    %v483 = vld [vmem:[#allocation5 + $0x78] sm:$0xff]
    %v484 = vld [vmem:[#allocation5 + $0x80] sm:$0xff]
    %v485 = vld [vmem:[#allocation5 + $0x88] sm:$0xff]
    %v486 = vld [vmem:[#allocation5 + $0x90] sm:$0xff]
    %v487 = vld [vmem:[#allocation5 + $0x98] sm:$0xff]
    %v488 = vld [vmem:[#allocation5 + $0xa0] sm:$0xff]
    %v489 = vld [vmem:[#allocation5 + $0xa8] sm:$0xff]
    %v490 = vld [vmem:[#allocation5 + $0xb0] sm:$0xff]
    %v491 = vld [vmem:[#allocation5 + $0xb8] sm:$0xff]
    %v492 = vld [vmem:[#allocation5 + $0xc0] sm:$0xff]
    %v493 = vld [vmem:[#allocation5 + $0xc8] sm:$0xff]
    %v494 = vld [vmem:[#allocation5 + $0xd0] sm:$0xff]
    %v495 = vld [vmem:[#allocation5 + $0xd8] sm:$0xff]
    %v496 = vld [vmem:[#allocation5 + $0xe0] sm:$0xff]
    %v497 = vld [vmem:[#allocation5 + $0xe8] sm:$0xff]
    %v498 = vld [vmem:[#allocation5 + $0xf0] sm:$0xff]
    %v499 = vld [vmem:[#allocation5 + $0xf8] sm:$0xff]
    %v500 = vld [vmem:[#allocation5 + $0x100] sm:$0xff]
    %v501 = vld [vmem:[#allocation5 + $0x108] sm:$0xff]
    %v502 = vld [vmem:[#allocation5 + $0x110] sm:$0xff]
    %v503 = vld [vmem:[#allocation5 + $0x118] sm:$0xff]
    %v504 = vld [vmem:[#allocation5 + $0x120] sm:$0xff]
    %v505 = vld [vmem:[#allocation5 + $0x128] sm:$0xff]
    %v506 = vld [vmem:[#allocation5 + $0x130] sm:$0xff]
    %v507 = vld [vmem:[#allocation5 + $0x138] sm:$0xff]
    %v508 = vld [vmem:[#allocation5 + $0x140] sm:$0xff]
    %v509 = vld [vmem:[#allocation5 + $0x148] sm:$0xff]
    %v510 = vld [vmem:[#allocation5 + $0x150] sm:$0xff]
    %v511 = vld [vmem:[#allocation5 + $0x158] sm:$0xff]
    %v512 = vld [vmem:[#allocation5 + $0x160] sm:$0xff]
    %v513 = vld [vmem:[#allocation5 + $0x168] sm:$0xff]
    %v514 = vld [vmem:[#allocation5 + $0x170] sm:$0xff]
    %v515 = vld [vmem:[#allocation5 + $0x178] sm:$0xff]
    %v516 = vld [vmem:[#allocation5 + $0x180] sm:$0xff]
    %v517 = vld [vmem:[#allocation5 + $0x188] sm:$0xff]
    %v518 = vld [vmem:[#allocation5 + $0x190] sm:$0xff]
    %v519 = vld [vmem:[#allocation5 + $0x198] sm:$0xff]
    %v520 = vld [vmem:[#allocation5 + $0x1a0] sm:$0xff]
    %v521 = vld [vmem:[#allocation5 + $0x1a8] sm:$0xff]
    %v522 = vld [vmem:[#allocation5 + $0x1b0] sm:$0xff]
    %v523 = vld [vmem:[#allocation5 + $0x1b8] sm:$0xff]
    %v524 = vld [vmem:[#allocation5 + $0x1c0] sm:$0xff]
    %v525 = vld [vmem:[#allocation5 + $0x1c8] sm:$0xff]
    %v526 = vld [vmem:[#allocation5 + $0x1d0] sm:$0xff]
    %v527 = vld [vmem:[#allocation5 + $0x1d8] sm:$0xff]
    %v528 = vld [vmem:[#allocation5 + $0x1e0] sm:$0xff]
    %v529 = vld [vmem:[#allocation5 + $0x1e8] sm:$0xff]
    %v530 = vld [vmem:[#allocation5 + $0x1f0] sm:$0xff]
    %v531 = vld [vmem:[#allocation5 + $0x1f8] sm:$0xff]
    %532 = vmatprep.subr.mxu0 %v469
    %533 = vmatpush1.msra.mxu0 %v468
    %534 = vmatprep.subr.mxu0 %v473
    %535 = vmatpush1.msra.mxu0 %v472
    %536 = vmatprep.subr.mxu0 %v477
    %537 = vmatpush1.msra.mxu0 %v476
    %538 = vmatprep.subr.mxu0 %v481
    %539 = vmatpush1.msra.mxu0 %v480
    %540 = vmatprep.subr.mxu0 %v485
    %541 = vmatpush1.msra.mxu0 %v484
    %542 = vmatprep.subr.mxu0 %v489
    %543 = vmatpush1.msra.mxu0 %v488
    %544 = vmatprep.subr.mxu0 %v493
    %545 = vmatpush1.msra.mxu0 %v492
    %546 = vmatprep.subr.mxu0 %v497
    %547 = vmatpush1.msra.mxu0 %v496
    %548 = vmatprep.subr.mxu0 %v501
    %549 = vmatpush1.msra.mxu0 %v500
    %550 = vmatprep.subr.mxu0 %v505
    %551 = vmatpush1.msra.mxu0 %v504
    %552 = vmatprep.subr.mxu0 %v509
    %553 = vmatpush1.msra.mxu0 %v508
    %554 = vmatprep.subr.mxu0 %v513
    %555 = vmatpush1.msra.mxu0 %v512
    %556 = vmatprep.subr.mxu0 %v517
    %557 = vmatpush1.msra.mxu0 %v516
    %558 = vmatprep.subr.mxu0 %v521
    %559 = vmatpush1.msra.mxu0 %v520
    %560 = vmatprep.subr.mxu0 %v525
    %561 = vmatpush1.msra.mxu0 %v524
    %562 = vmatprep.subr.mxu0 %v529
    %563 = vmatpush1.msra.mxu0 %v528
    %564 = vmatprep.subr.mxu0 0.0
    %565 = vmatpush1.msra.mxu0 0.0
    %566 = vmatprep.subr.mxu0 0.0
    %567 = vmatpush1.msra.mxu0 0.0
    %568 = vmatprep.subr.mxu0 0.0
    %569 = vmatpush1.msra.mxu0 0.0
    %570 = vmatprep.subr.mxu0 0.0
    %571 = vmatpush1.msra.mxu0 0.0
    %572 = vmatprep.subr.mxu0 0.0
    %573 = vmatpush1.msra.mxu0 0.0
    %574 = vmatprep.subr.mxu0 0.0
    %575 = vmatpush1.msra.mxu0 0.0
    %576 = vmatprep.subr.mxu0 0.0
    %577 = vmatpush1.msra.mxu0 0.0
    %578 = vmatprep.subr.mxu0 0.0
    %579 = vmatpush1.msra.mxu0 0.0
    %580 = vmatprep.subr.mxu0 0.0
    %581 = vmatpush1.msra.mxu0 0.0
    %582 = vmatprep.subr.mxu0 0.0
    %583 = vmatpush1.msra.mxu0 0.0
    %584 = vmatprep.subr.mxu0 0.0
    %585 = vmatpush1.msra.mxu0 0.0
    %586 = vmatprep.subr.mxu0 0.0
    %587 = vmatpush1.msra.mxu0 0.0
    %588 = vmatprep.subr.mxu0 0.0
    %589 = vmatpush1.msra.mxu0 0.0
    %590 = vmatprep.subr.mxu0 0.0
    %591 = vmatpush1.msra.mxu0 0.0
    %592 = vmatprep.subr.mxu0 0.0
    %593 = vmatpush1.msra.mxu0 0.0
    %594 = vmatprep.subr.mxu0 0.0
    %595 = vmatpush1.msra.mxu0 0.0
    %596 = vmatprep.mubr.f32.mxu0 0.0
    %597 = vmatmul.mubr.f32.gmra.mrb[0].mxu0 0.0
    %v598 = vpop.f32.mrb[0].mxu0
    %v599 = vadd.f32 0.0, %v598
    %v600 = vpop.f32.mrb[0].mxu0
    %v601 = vadd.f32 0.0, %v600
    %602 = vdwg.mxu0
    %603 = vmatprep.subr.mxu0 %v471
    %604 = vmatpush1.msra.mxu0 %v470
    %605 = vmatprep.subr.mxu0 %v475
    %606 = vmatpush1.msra.mxu0 %v474
    %607 = vmatprep.subr.mxu0 %v479
    %608 = vmatpush1.msra.mxu0 %v478
    %609 = vmatprep.subr.mxu0 %v483
    %610 = vmatpush1.msra.mxu0 %v482
    %611 = vmatprep.subr.mxu0 %v487
    %612 = vmatpush1.msra.mxu0 %v486
    %613 = vmatprep.subr.mxu0 %v491
    %614 = vmatpush1.msra.mxu0 %v490
    %615 = vmatprep.subr.mxu0 %v495
    %616 = vmatpush1.msra.mxu0 %v494
    %617 = vmatprep.subr.mxu0 %v499
    %618 = vmatpush1.msra.mxu0 %v498
    %619 = vmatprep.subr.mxu0 %v503
    %620 = vmatpush1.msra.mxu0 %v502
    %621 = vmatprep.subr.mxu0 %v507
    %622 = vmatpush1.msra.mxu0 %v506
    %623 = vmatprep.subr.mxu0 %v511
    %624 = vmatpush1.msra.mxu0 %v510
    %625 = vmatprep.subr.mxu0 %v515
    %626 = vmatpush1.msra.mxu0 %v514
    %627 = vmatprep.subr.mxu0 %v519
    %628 = vmatpush1.msra.mxu0 %v518
    %629 = vmatprep.subr.mxu0 %v523
    %630 = vmatpush1.msra.mxu0 %v522
    %631 = vmatprep.subr.mxu0 %v527
    %632 = vmatpush1.msra.mxu0 %v526
    %633 = vmatprep.subr.mxu0 %v531
    %634 = vmatpush1.msra.mxu0 %v530
    %635 = vmatprep.subr.mxu0 0.0
    %636 = vmatpush1.msra.mxu0 0.0
    %637 = vmatprep.subr.mxu0 0.0
    %638 = vmatpush1.msra.mxu0 0.0
    %639 = vmatprep.subr.mxu0 0.0
    %640 = vmatpush1.msra.mxu0 0.0
    %641 = vmatprep.subr.mxu0 0.0
    %642 = vmatpush1.msra.mxu0 0.0
    %643 = vmatprep.subr.mxu0 0.0
    %644 = vmatpush1.msra.mxu0 0.0
    %645 = vmatprep.subr.mxu0 0.0
    %646 = vmatpush1.msra.mxu0 0.0
    %647 = vmatprep.subr.mxu0 0.0
    %648 = vmatpush1.msra.mxu0 0.0
    %649 = vmatprep.subr.mxu0 0.0
    %650 = vmatpush1.msra.mxu0 0.0
    %651 = vmatprep.subr.mxu0 0.0
    %652 = vmatpush1.msra.mxu0 0.0
    %653 = vmatprep.subr.mxu0 0.0
    %654 = vmatpush1.msra.mxu0 0.0
    %655 = vmatprep.subr.mxu0 0.0
    %656 = vmatpush1.msra.mxu0 0.0
    %657 = vmatprep.subr.mxu0 0.0
    %658 = vmatpush1.msra.mxu0 0.0
    %659 = vmatprep.subr.mxu0 0.0
    %660 = vmatpush1.msra.mxu0 0.0
    %661 = vmatprep.subr.mxu0 0.0
    %662 = vmatpush1.msra.mxu0 0.0
    %663 = vmatprep.subr.mxu0 0.0
    %664 = vmatpush1.msra.mxu0 0.0
    %665 = vmatprep.subr.mxu0 0.0
    %666 = vmatpush1.msra.mxu0 0.0
    %667 = vmatprep.mubr.f32.mxu0 0.0
    %668 = vmatmul.mubr.f32.gmra.mrb[0].mxu0 0.0
    %v669 = vpop.f32.mrb[0].mxu0
    %v670 = vadd.f32 0.0, %v669
    %v671 = vpop.f32.mrb[0].mxu0
    %v672 = vadd.f32 0.0, %v671
    %673 = vdwg.mxu0
    %v674 = vadd.f32 %v359, %v599
    %v675 = vadd.f32 %v361, %v601
    %v676 = vadd.f32 %v436, %v670
    %v677 = vadd.f32 %v438, %v672
    %v678 = vxor.u32 %v674, 2147483648
    %v679 = vxor.u32 %v675, 2147483648
    %v680 = vxor.u32 %v676, 2147483648
    %v681 = vmul.f32 %v678, 1.442695
    %v682 = vpow.pop %v681
    %v683 = vmul.f32 %v679, 1.442695
    %v684 = vpow.pop %v683
    %v685 = vmul.f32 %v680, 1.442695
    %v686 = vpow.pop %v685
    %v687 = vadd.f32 %v682, 1.0
    %v688 = vadd.f32 %v684, 1.0
    %v689 = vadd.f32 %v686, 1.0
    %v690 = vrcp.pop %v687
    %v691 = vmul.f32 1.0, %v690
    %v692 = vrcp.pop %v688
    %v693 = vmul.f32 1.0, %v692
    %v694 = vrcp.pop %v689
    %v695 = vmul.f32 1.0, %v694
    %v696 = vtanh.pop %v677
    %v697 = vmul.f32 %v693, 0.0
    %v698 = vmul.f32 %v691, %v696
    %v699 = vadd.f32 %v697, %v698
    %v700 = vtanh.pop %v699
    %v701 = vmul.f32 %v695, %v700
    %v702 = vld [vmem:[#allocation7] sm:$0xff]
    %v703 = vld [vmem:[#allocation7 + $0x8] sm:$0xff]
    %v704 = vld [vmem:[#allocation7 + $0x10] sm:$0xff]
    %v705 = vld [vmem:[#allocation7 + $0x18] sm:$0xff]
    %v706 = vld [vmem:[#allocation7 + $0x20] sm:$0xff]
    %v707 = vld [vmem:[#allocation7 + $0x28] sm:$0xff]
    %v708 = vld [vmem:[#allocation7 + $0x30] sm:$0xff]
    %v709 = vld [vmem:[#allocation7 + $0x38] sm:$0xff]
    %v710 = vld [vmem:[#allocation7 + $0x40] sm:$0xff]
    %v711 = vld [vmem:[#allocation7 + $0x48] sm:$0xff]
    %v712 = vld [vmem:[#allocation7 + $0x50] sm:$0xff]
    %v713 = vld [vmem:[#allocation7 + $0x58] sm:$0xff]
    %v714 = vld [vmem:[#allocation7 + $0x60] sm:$0xff]
    %v715 = vld [vmem:[#allocation7 + $0x68] sm:$0xff]
    %v716 = vld [vmem:[#allocation7 + $0x70] sm:$0xff]
    %v717 = vld [vmem:[#allocation7 + $0x78] sm:$0xff]
    %v718 = vld [vmem:[#allocation7 + $0x80] sm:$0xff]
    %v719 = vld [vmem:[#allocation7 + $0x88] sm:$0xff]
    %v720 = vld [vmem:[#allocation7 + $0x90] sm:$0xff]
    %v721 = vld [vmem:[#allocation7 + $0x98] sm:$0xff]
    %v722 = vld [vmem:[#allocation7 + $0xa0] sm:$0xff]
    %v723 = vld [vmem:[#allocation7 + $0xa8] sm:$0xff]
    %v724 = vld [vmem:[#allocation7 + $0xb0] sm:$0xff]
    %v725 = vld [vmem:[#allocation7 + $0xb8] sm:$0xff]
    %v726 = vld [vmem:[#allocation7 + $0xc0] sm:$0xff]
    %v727 = vld [vmem:[#allocation7 + $0xc8] sm:$0xff]
    %v728 = vld [vmem:[#allocation7 + $0xd0] sm:$0xff]
    %v729 = vld [vmem:[#allocation7 + $0xd8] sm:$0xff]
    %v730 = vld [vmem:[#allocation7 + $0xe0] sm:$0xff]
    %v731 = vld [vmem:[#allocation7 + $0xe8] sm:$0xff]
    %v732 = vld [vmem:[#allocation7 + $0xf0] sm:$0xff]
    %v733 = vld [vmem:[#allocation7 + $0xf8] sm:$0xff]
    %v734 = vld [vmem:[#allocation7 + $0x100] sm:$0xff]
    %v735 = vld [vmem:[#allocation7 + $0x108] sm:$0xff]
    %v736 = vld [vmem:[#allocation7 + $0x110] sm:$0xff]
    %v737 = vld [vmem:[#allocation7 + $0x118] sm:$0xff]
    %v738 = vld [vmem:[#allocation7 + $0x120] sm:$0xff]
    %v739 = vld [vmem:[#allocation7 + $0x128] sm:$0xff]
    %v740 = vld [vmem:[#allocation7 + $0x130] sm:$0xff]
    %v741 = vld [vmem:[#allocation7 + $0x138] sm:$0xff]
    %v742 = vld [vmem:[#allocation7 + $0x140] sm:$0xff]
    %v743 = vld [vmem:[#allocation7 + $0x148] sm:$0xff]
    %v744 = vld [vmem:[#allocation7 + $0x150] sm:$0xff]
    %v745 = vld [vmem:[#allocation7 + $0x158] sm:$0xff]
    %v746 = vld [vmem:[#allocation7 + $0x160] sm:$0xff]
    %v747 = vld [vmem:[#allocation7 + $0x168] sm:$0xff]
    %v748 = vld [vmem:[#allocation7 + $0x170] sm:$0xff]
    %v749 = vld [vmem:[#allocation7 + $0x178] sm:$0xff]
    %v750 = vld [vmem:[#allocation7 + $0x180] sm:$0xff]
    %v751 = vld [vmem:[#allocation7 + $0x188] sm:$0xff]
    %v752 = vld [vmem:[#allocation7 + $0x190] sm:$0xff]
    %v753 = vld [vmem:[#allocation7 + $0x198] sm:$0xff]
    %v754 = vld [vmem:[#allocation7 + $0x1a0] sm:$0xff]
    %v755 = vld [vmem:[#allocation7 + $0x1a8] sm:$0xff]
    %v756 = vld [vmem:[#allocation7 + $0x1b0] sm:$0xff]
    %v757 = vld [vmem:[#allocation7 + $0x1b8] sm:$0xff]
    %v758 = vld [vmem:[#allocation7 + $0x1c0] sm:$0xff]
    %v759 = vld [vmem:[#allocation7 + $0x1c8] sm:$0xff]
    %v760 = vld [vmem:[#allocation7 + $0x1d0] sm:$0xff]
    %v761 = vld [vmem:[#allocation7 + $0x1d8] sm:$0xff]
    %v762 = vld [vmem:[#allocation7 + $0x1e0] sm:$0xff]
    %v763 = vld [vmem:[#allocation7 + $0x1e8] sm:$0xff]
    %v764 = vld [vmem:[#allocation7 + $0x1f0] sm:$0xff]
    %v765 = vld [vmem:[#allocation7 + $0x1f8] sm:$0xff]
    %v766 = vld [vmem:[#allocation7 + $0x200] sm:$0xff]
    %v767 = vld [vmem:[#allocation7 + $0x208] sm:$0xff]
    %v768 = vld [vmem:[#allocation7 + $0x210] sm:$0xff]
    %v769 = vld [vmem:[#allocation7 + $0x218] sm:$0xff]
    %v770 = vld [vmem:[#allocation7 + $0x220] sm:$0xff]
    %v771 = vld [vmem:[#allocation7 + $0x228] sm:$0xff]
    %v772 = vld [vmem:[#allocation7 + $0x230] sm:$0xff]
    %v773 = vld [vmem:[#allocation7 + $0x238] sm:$0xff]
    %v774 = vld [vmem:[#allocation7 + $0x240] sm:$0xff]
    %v775 = vld [vmem:[#allocation7 + $0x248] sm:$0xff]
    %v776 = vld [vmem:[#allocation7 + $0x250] sm:$0xff]
    %v777 = vld [vmem:[#allocation7 + $0x258] sm:$0xff]
    %v778 = vld [vmem:[#allocation7 + $0x260] sm:$0xff]
    %v779 = vld [vmem:[#allocation7 + $0x268] sm:$0xff]
    %v780 = vld [vmem:[#allocation7 + $0x270] sm:$0xff]
    %v781 = vld [vmem:[#allocation7 + $0x278] sm:$0xff]
    %v782 = vld [vmem:[#allocation7 + $0x280] sm:$0xff]
    %v783 = vld [vmem:[#allocation7 + $0x288] sm:$0xff]
    %v784 = vld [vmem:[#allocation7 + $0x290] sm:$0xff]
    %v785 = vld [vmem:[#allocation7 + $0x298] sm:$0xff]
    %v786 = vld [vmem:[#allocation7 + $0x2a0] sm:$0xff]
    %v787 = vld [vmem:[#allocation7 + $0x2a8] sm:$0xff]
    %v788 = vld [vmem:[#allocation7 + $0x2b0] sm:$0xff]
    %v789 = vld [vmem:[#allocation7 + $0x2b8] sm:$0xff]
    %v790 = vld [vmem:[#allocation7 + $0x2c0] sm:$0xff]
    %v791 = vld [vmem:[#allocation7 + $0x2c8] sm:$0xff]
    %v792 = vld [vmem:[#allocation7 + $0x2d0] sm:$0xff]
    %v793 = vld [vmem:[#allocation7 + $0x2d8] sm:$0xff]
    %v794 = vld [vmem:[#allocation7 + $0x2e0] sm:$0xff]
    %v795 = vld [vmem:[#allocation7 + $0x2e8] sm:$0xff]
    %v796 = vld [vmem:[#allocation7 + $0x2f0] sm:$0xff]
    %v797 = vld [vmem:[#allocation7 + $0x2f8] sm:$0xff]
    %v798 = vld [vmem:[#allocation7 + $0x300] sm:$0xff]
    %v799 = vld [vmem:[#allocation7 + $0x308] sm:$0xff]
    %v800 = vld [vmem:[#allocation7 + $0x310] sm:$0xff]
    %v801 = vld [vmem:[#allocation7 + $0x318] sm:$0xff]
    %v802 = vld [vmem:[#allocation7 + $0x320] sm:$0xff]
    %v803 = vld [vmem:[#allocation7 + $0x328] sm:$0xff]
    %v804 = vld [vmem:[#allocation7 + $0x330] sm:$0xff]
    %v805 = vld [vmem:[#allocation7 + $0x338] sm:$0xff]
    %v806 = vld [vmem:[#allocation7 + $0x340] sm:$0xff]
    %v807 = vld [vmem:[#allocation7 + $0x348] sm:$0xff]
    %v808 = vld [vmem:[#allocation7 + $0x350] sm:$0xff]
    %v809 = vld [vmem:[#allocation7 + $0x358] sm:$0xff]
    %v810 = vld [vmem:[#allocation7 + $0x360] sm:$0xff]
    %v811 = vld [vmem:[#allocation7 + $0x368] sm:$0xff]
    %v812 = vld [vmem:[#allocation7 + $0x370] sm:$0xff]
    %v813 = vld [vmem:[#allocation7 + $0x378] sm:$0xff]
    %v814 = vld [vmem:[#allocation7 + $0x380] sm:$0xff]
    %v815 = vld [vmem:[#allocation7 + $0x388] sm:$0xff]
    %v816 = vld [vmem:[#allocation7 + $0x390] sm:$0xff]
    %v817 = vld [vmem:[#allocation7 + $0x398] sm:$0xff]
    %v818 = vld [vmem:[#allocation7 + $0x3a0] sm:$0xff]
    %v819 = vld [vmem:[#allocation7 + $0x3a8] sm:$0xff]
    %v820 = vld [vmem:[#allocation7 + $0x3b0] sm:$0xff]
    %v821 = vld [vmem:[#allocation7 + $0x3b8] sm:$0xff]
    %v822 = vld [vmem:[#allocation7 + $0x3c0] sm:$0xff]
    %v823 = vld [vmem:[#allocation7 + $0x3c8] sm:$0xff]
    %v824 = vld [vmem:[#allocation7 + $0x3d0] sm:$0xff]
    %v825 = vld [vmem:[#allocation7 + $0x3d8] sm:$0xff]
    %v826 = vld [vmem:[#allocation7 + $0x3e0] sm:$0xff]
    %v827 = vld [vmem:[#allocation7 + $0x3e8] sm:$0xff]
    %v828 = vld [vmem:[#allocation7 + $0x3f0] sm:$0xff]
    %v829 = vld [vmem:[#allocation7 + $0x3f8] sm:$0xff]
    %830 = vmatprep.subr.mxu0 %v703
    %831 = vmatpush1.msra.mxu0 %v702
    %832 = vmatprep.subr.mxu0 %v707
    %833 = vmatpush1.msra.mxu0 %v706
    %834 = vmatprep.subr.mxu0 %v711
    %835 = vmatpush1.msra.mxu0 %v710
    %836 = vmatprep.subr.mxu0 %v715
    %837 = vmatpush1.msra.mxu0 %v714
    %838 = vmatprep.subr.mxu0 %v719
    %839 = vmatpush1.msra.mxu0 %v718
    %840 = vmatprep.subr.mxu0 %v723
    %841 = vmatpush1.msra.mxu0 %v722
    %842 = vmatprep.subr.mxu0 %v727
    %843 = vmatpush1.msra.mxu0 %v726
    %844 = vmatprep.subr.mxu0 %v731
    %845 = vmatpush1.msra.mxu0 %v730
    %846 = vmatprep.subr.mxu0 %v735
    %847 = vmatpush1.msra.mxu0 %v734
    %848 = vmatprep.subr.mxu0 %v739
    %849 = vmatpush1.msra.mxu0 %v738
    %850 = vmatprep.subr.mxu0 %v743
    %851 = vmatpush1.msra.mxu0 %v742
    %852 = vmatprep.subr.mxu0 %v747
    %853 = vmatpush1.msra.mxu0 %v746
    %854 = vmatprep.subr.mxu0 %v751
    %855 = vmatpush1.msra.mxu0 %v750
    %856 = vmatprep.subr.mxu0 %v755
    %857 = vmatpush1.msra.mxu0 %v754
    %858 = vmatprep.subr.mxu0 %v759
    %859 = vmatpush1.msra.mxu0 %v758
    %860 = vmatprep.subr.mxu0 %v763
    %861 = vmatpush1.msra.mxu0 %v762
    %862 = vmatprep.subr.mxu0 %v767
    %863 = vmatpush1.msra.mxu0 %v766
    %864 = vmatprep.subr.mxu0 %v771
    %865 = vmatpush1.msra.mxu0 %v770
    %866 = vmatprep.subr.mxu0 %v775
    %867 = vmatpush1.msra.mxu0 %v774
    %868 = vmatprep.subr.mxu0 %v779
    %869 = vmatpush1.msra.mxu0 %v778
    %870 = vmatprep.subr.mxu0 %v783
    %871 = vmatpush1.msra.mxu0 %v782
    %872 = vmatprep.subr.mxu0 %v787
    %873 = vmatpush1.msra.mxu0 %v786
    %874 = vmatprep.subr.mxu0 %v791
    %875 = vmatpush1.msra.mxu0 %v790
    %876 = vmatprep.subr.mxu0 %v795
    %877 = vmatpush1.msra.mxu0 %v794
    %878 = vmatprep.subr.mxu0 %v799
    %879 = vmatpush1.msra.mxu0 %v798
    %880 = vmatprep.subr.mxu0 %v803
    %881 = vmatpush1.msra.mxu0 %v802
    %882 = vmatprep.subr.mxu0 %v807
    %883 = vmatpush1.msra.mxu0 %v806
    %884 = vmatprep.subr.mxu0 %v811
    %885 = vmatpush1.msra.mxu0 %v810
    %886 = vmatprep.subr.mxu0 %v815
    %887 = vmatpush1.msra.mxu0 %v814
    %888 = vmatprep.subr.mxu0 %v819
    %889 = vmatpush1.msra.mxu0 %v818
    %890 = vmatprep.subr.mxu0 %v823
    %891 = vmatpush1.msra.mxu0 %v822
    %892 = vmatprep.subr.mxu0 %v827
    %893 = vmatpush1.msra.mxu0 %v826
    %894 = vmatprep.mubr.f32.mxu0 0.0
    %895 = vmatmul.mubr.f32.gmra.mrb[0].mxu0 %v701
    %v896 = vpop.f32.mrb[0].mxu0
    %v897 = vadd.f32 %v451, %v896
    %v898 = vpop.f32.mrb[0].mxu0
    %v899 = vadd.f32 %v455, %v898
    %900 = vdwg.mxu0
    %901 = vmatprep.subr.mxu0 %v705
    %902 = vmatpush1.msra.mxu0 %v704
    %903 = vmatprep.subr.mxu0 %v709
    %904 = vmatpush1.msra.mxu0 %v708
    %905 = vmatprep.subr.mxu0 %v713
    %906 = vmatpush1.msra.mxu0 %v712
    %907 = vmatprep.subr.mxu0 %v717
    %908 = vmatpush1.msra.mxu0 %v716
    %909 = vmatprep.subr.mxu0 %v721
    %910 = vmatpush1.msra.mxu0 %v720
    %911 = vmatprep.subr.mxu0 %v725
    %912 = vmatpush1.msra.mxu0 %v724
    %913 = vmatprep.subr.mxu0 %v729
    %914 = vmatpush1.msra.mxu0 %v728
    %915 = vmatprep.subr.mxu0 %v733
    %916 = vmatpush1.msra.mxu0 %v732
    %917 = vmatprep.subr.mxu0 %v737
    %918 = vmatpush1.msra.mxu0 %v736
    %919 = vmatprep.subr.mxu0 %v741
    %920 = vmatpush1.msra.mxu0 %v740
    %921 = vmatprep.subr.mxu0 %v745
    %922 = vmatpush1.msra.mxu0 %v744
    %923 = vmatprep.subr.mxu0 %v749
    %924 = vmatpush1.msra.mxu0 %v748
    %925 = vmatprep.subr.mxu0 %v753
    %926 = vmatpush1.msra.mxu0 %v752
    %927 = vmatprep.subr.mxu0 %v757
    %928 = vmatpush1.msra.mxu0 %v756
    %929 = vmatprep.subr.mxu0 %v761
    %930 = vmatpush1.msra.mxu0 %v760
    %931 = vmatprep.subr.mxu0 %v765
    %932 = vmatpush1.msra.mxu0 %v764
    %933 = vmatprep.subr.mxu0 %v769
    %934 = vmatpush1.msra.mxu0 %v768
    %935 = vmatprep.subr.mxu0 %v773
    %936 = vmatpush1.msra.mxu0 %v772
    %937 = vmatprep.subr.mxu0 %v777
    %938 = vmatpush1.msra.mxu0 %v776
    %939 = vmatprep.subr.mxu0 %v781
    %940 = vmatpush1.msra.mxu0 %v780
    %941 = vmatprep.subr.mxu0 %v785
    %942 = vmatpush1.msra.mxu0 %v784
    %943 = vmatprep.subr.mxu0 %v789
    %944 = vmatpush1.msra.mxu0 %v788
    %945 = vmatprep.subr.mxu0 %v793
    %946 = vmatpush1.msra.mxu0 %v792
    %947 = vmatprep.subr.mxu0 %v797
    %948 = vmatpush1.msra.mxu0 %v796
    %949 = vmatprep.subr.mxu0 %v801
    %950 = vmatpush1.msra.mxu0 %v800
    %951 = vmatprep.subr.mxu0 %v805
    %952 = vmatpush1.msra.mxu0 %v804
    %953 = vmatprep.subr.mxu0 %v809
    %954 = vmatpush1.msra.mxu0 %v808
    %955 = vmatprep.subr.mxu0 %v813
    %956 = vmatpush1.msra.mxu0 %v812
    %957 = vmatprep.subr.mxu0 %v817
    %958 = vmatpush1.msra.mxu0 %v816
    %959 = vmatprep.subr.mxu0 %v821
    %960 = vmatpush1.msra.mxu0 %v820
    %961 = vmatprep.subr.mxu0 %v825
    %962 = vmatpush1.msra.mxu0 %v824
    %963 = vmatprep.subr.mxu0 %v829
    %964 = vmatpush1.msra.mxu0 %v828
    %965 = vmatprep.mubr.f32.mxu0 0.0
    %966 = vmatmul.mubr.f32.gmra.mrb[0].mxu0 %v701
    %v967 = vpop.f32.mrb[0].mxu0
    %v968 = vadd.f32 %v459, %v967
    %v969 = vpop.f32.mrb[0].mxu0
    %v970 = vadd.f32 %v463, %v969
    %971 = vdwg.mxu0
    %v972 = vxor.u32 %v897, 2147483648
    %v973 = vxor.u32 %v899, 2147483648
    %v974 = vxor.u32 %v968, 2147483648
    %v975 = vmul.f32 %v972, 1.442695
    %v976 = vpow.pop %v975
    %v977 = vmul.f32 %v973, 1.442695
    %v978 = vpow.pop %v977
    %v979 = vmul.f32 %v974, 1.442695
    %v980 = vpow.pop %v979
    %v981 = vadd.f32 %v976, 1.0
    %v982 = vadd.f32 %v978, 1.0
    %v983 = vadd.f32 %v980, 1.0
    %v984 = vrcp.pop %v981
    %v985 = vmul.f32 1.0, %v984
    %v986 = vrcp.pop %v982
    %v987 = vmul.f32 1.0, %v986
    %v988 = vrcp.pop %v983
    %v989 = vmul.f32 1.0, %v988
    %v990 = vtanh.pop %v970
    %v991 = vmul.f32 %v987, 0.0
    %v992 = vmul.f32 %v985, %v990
    %v993 = vadd.f32 %v991, %v992
    %v994 = vtanh.pop %v993
    %v995 = vmul.f32 %v989, %v994
    %996 = vmatprep.subr.mxu0 %v469
    %997 = vmatpush1.msra.mxu0 %v468
    %998 = vmatprep.subr.mxu0 %v473
    %999 = vmatpush1.msra.mxu0 %v472
    %1000 = vmatprep.subr.mxu0 %v477
    %1001 = vmatpush1.msra.mxu0 %v476
    %1002 = vmatprep.subr.mxu0 %v481
    %1003 = vmatpush1.msra.mxu0 %v480
    %1004 = vmatprep.subr.mxu0 %v485
    %1005 = vmatpush1.msra.mxu0 %v484
    %1006 = vmatprep.subr.mxu0 %v489
    %1007 = vmatpush1.msra.mxu0 %v488
    %1008 = vmatprep.subr.mxu0 %v493
    %1009 = vmatpush1.msra.mxu0 %v492
    %1010 = vmatprep.subr.mxu0 %v497
    %1011 = vmatpush1.msra.mxu0 %v496
    %1012 = vmatprep.subr.mxu0 %v501
    %1013 = vmatpush1.msra.mxu0 %v500
    %1014 = vmatprep.subr.mxu0 %v505
    %1015 = vmatpush1.msra.mxu0 %v504
    %1016 = vmatprep.subr.mxu0 %v509
    %1017 = vmatpush1.msra.mxu0 %v508
    %1018 = vmatprep.subr.mxu0 %v513
    %1019 = vmatpush1.msra.mxu0 %v512
    %1020 = vmatprep.subr.mxu0 %v517
    %1021 = vmatpush1.msra.mxu0 %v516
    %1022 = vmatprep.subr.mxu0 %v521
    %1023 = vmatpush1.msra.mxu0 %v520
    %1024 = vmatprep.subr.mxu0 %v525
    %1025 = vmatpush1.msra.mxu0 %v524
    %1026 = vmatprep.subr.mxu0 %v529
    %1027 = vmatpush1.msra.mxu0 %v528
    %1028 = vmatprep.subr.mxu0 0.0
    %1029 = vmatpush1.msra.mxu0 0.0
    %1030 = vmatprep.subr.mxu0 0.0
    %1031 = vmatpush1.msra.mxu0 0.0
    %1032 = vmatprep.subr.mxu0 0.0
    %1033 = vmatpush1.msra.mxu0 0.0
    %1034 = vmatprep.subr.mxu0 0.0
    %1035 = vmatpush1.msra.mxu0 0.0
    %1036 = vmatprep.subr.mxu0 0.0
    %1037 = vmatpush1.msra.mxu0 0.0
    %1038 = vmatprep.subr.mxu0 0.0
    %1039 = vmatpush1.msra.mxu0 0.0
    %1040 = vmatprep.subr.mxu0 0.0
    %1041 = vmatpush1.msra.mxu0 0.0
    %1042 = vmatprep.subr.mxu0 0.0
    %1043 = vmatpush1.msra.mxu0 0.0
    %1044 = vmatprep.subr.mxu0 0.0
    %1045 = vmatpush1.msra.mxu0 0.0
    %1046 = vmatprep.subr.mxu0 0.0
    %1047 = vmatpush1.msra.mxu0 0.0
    %1048 = vmatprep.subr.mxu0 0.0
    %1049 = vmatpush1.msra.mxu0 0.0
    %1050 = vmatprep.subr.mxu0 0.0
    %1051 = vmatpush1.msra.mxu0 0.0
    %1052 = vmatprep.subr.mxu0 0.0
    %1053 = vmatpush1.msra.mxu0 0.0
    %1054 = vmatprep.subr.mxu0 0.0
    %1055 = vmatpush1.msra.mxu0 0.0
    %1056 = vmatprep.subr.mxu0 0.0
    %1057 = vmatpush1.msra.mxu0 0.0
    %1058 = vmatprep.subr.mxu0 0.0
    %1059 = vmatpush1.msra.mxu0 0.0
    %1060 = vmatprep.mubr.f32.mxu0 0.0
    %1061 = vmatmul.mubr.f32.gmra.mrb[0].mxu0 %v701
    %v1062 = vpop.f32.mrb[0].mxu0
    %v1063 = vadd.f32 0.0, %v1062
    %v1064 = vpop.f32.mrb[0].mxu0
    %v1065 = vadd.f32 0.0, %v1064
    %1066 = vdwg.mxu0
    %1067 = vmatprep.subr.mxu0 %v471
    %1068 = vmatpush1.msra.mxu0 %v470
    %1069 = vmatprep.subr.mxu0 %v475
    %1070 = vmatpush1.msra.mxu0 %v474
    %1071 = vmatprep.subr.mxu0 %v479
    %1072 = vmatpush1.msra.mxu0 %v478
    %1073 = vmatprep.subr.mxu0 %v483
    %1074 = vmatpush1.msra.mxu0 %v482
    %1075 = vmatprep.subr.mxu0 %v487
    %1076 = vmatpush1.msra.mxu0 %v486
    %1077 = vmatprep.subr.mxu0 %v491
    %1078 = vmatpush1.msra.mxu0 %v490
    %1079 = vmatprep.subr.mxu0 %v495
    %1080 = vmatpush1.msra.mxu0 %v494
    %1081 = vmatprep.subr.mxu0 %v499
    %1082 = vmatpush1.msra.mxu0 %v498
    %1083 = vmatprep.subr.mxu0 %v503
    %1084 = vmatpush1.msra.mxu0 %v502
    %1085 = vmatprep.subr.mxu0 %v507
    %1086 = vmatpush1.msra.mxu0 %v506
    %1087 = vmatprep.subr.mxu0 %v511
    %1088 = vmatpush1.msra.mxu0 %v510
    %1089 = vmatprep.subr.mxu0 %v515
    %1090 = vmatpush1.msra.mxu0 %v514
    %1091 = vmatprep.subr.mxu0 %v519
    %1092 = vmatpush1.msra.mxu0 %v518
    %1093 = vmatprep.subr.mxu0 %v523
    %1094 = vmatpush1.msra.mxu0 %v522
    %1095 = vmatprep.subr.mxu0 %v527
    %1096 = vmatpush1.msra.mxu0 %v526
    %1097 = vmatprep.subr.mxu0 %v531
    %1098 = vmatpush1.msra.mxu0 %v530
    %1099 = vmatprep.subr.mxu0 0.0
    %1100 = vmatpush1.msra.mxu0 0.0
    %1101 = vmatprep.subr.mxu0 0.0
    %1102 = vmatpush1.msra.mxu0 0.0
    %1103 = vmatprep.subr.mxu0 0.0
    %1104 = vmatpush1.msra.mxu0 0.0
    %1105 = vmatprep.subr.mxu0 0.0
    %1106 = vmatpush1.msra.mxu0 0.0
    %1107 = vmatprep.subr.mxu0 0.0
    %1108 = vmatpush1.msra.mxu0 0.0
    %1109 = vmatprep.subr.mxu0 0.0
    %1110 = vmatpush1.msra.mxu0 0.0
    %1111 = vmatprep.subr.mxu0 0.0
    %1112 = vmatpush1.msra.mxu0 0.0
    %1113 = vmatprep.subr.mxu0 0.0
    %1114 = vmatpush1.msra.mxu0 0.0
    %1115 = vmatprep.subr.mxu0 0.0
    %1116 = vmatpush1.msra.mxu0 0.0
    %1117 = vmatprep.subr.mxu0 0.0
    %1118 = vmatpush1.msra.mxu0 0.0
    %1119 = vmatprep.subr.mxu0 0.0
    %1120 = vmatpush1.msra.mxu0 0.0
    %1121 = vmatprep.subr.mxu0 0.0
    %1122 = vmatpush1.msra.mxu0 0.0
    %1123 = vmatprep.subr.mxu0 0.0
    %1124 = vmatpush1.msra.mxu0 0.0
    %1125 = vmatprep.subr.mxu0 0.0
    %1126 = vmatpush1.msra.mxu0 0.0
    %1127 = vmatprep.subr.mxu0 0.0
    %1128 = vmatpush1.msra.mxu0 0.0
    %1129 = vmatprep.subr.mxu0 0.0
    %1130 = vmatpush1.msra.mxu0 0.0
    %1131 = vmatprep.mubr.f32.mxu0 0.0
    %1132 = vmatmul.mubr.f32.gmra.mrb[0].mxu0 %v701
    %v1133 = vpop.f32.mrb[0].mxu0
    %v1134 = vadd.f32 0.0, %v1133
    %v1135 = vpop.f32.mrb[0].mxu0
    %v1136 = vadd.f32 0.0, %v1135
    %1137 = vdwg.mxu0
    %v1142 = vrot.slane %v1063, 6
    %v1143 = vrot.slane %v1065, 6
    %v1144 = vrot.slane %v1134, 6
    %v1145 = vrot.slane %v1136, 6
    %v1150 = vadd.f32 %v359, %v1142
    %v1151 = vadd.f32 %v361, %v1143
    %v1152 = vadd.f32 %v436, %v1144
    %v1153 = vadd.f32 %v438, %v1145
    %v1154 = vxor.u32 %v1150, 2147483648
    %v1155 = vxor.u32 %v1151, 2147483648
    %v1156 = vxor.u32 %v1152, 2147483648
    %v1157 = vmul.f32 %v1154, 1.442695
    %v1158 = vpow.pop %v1157
    %v1159 = vmul.f32 %v1155, 1.442695
    %v1160 = vpow.pop %v1159
    %v1161 = vmul.f32 %v1156, 1.442695
    %v1162 = vpow.pop %v1161
    %v1163 = vadd.f32 %v1158, 1.0
    %v1164 = vadd.f32 %v1160, 1.0
    %v1165 = vadd.f32 %v1162, 1.0
    %v1166 = vrcp.pop %v1163
    %v1167 = vmul.f32 1.0, %v1166
    %v1168 = vrcp.pop %v1164
    %v1169 = vmul.f32 1.0, %v1168
    %v1170 = vrcp.pop %v1165
    %v1171 = vmul.f32 1.0, %v1170
    %v1172 = vtanh.pop %v1153
    %v1174 = vrot.slane %v699, 6
    %v1176 = vmul.f32 %v1169, %v1174
    %v1177 = vmul.f32 %v1167, %v1172
    %v1178 = vadd.f32 %v1176, %v1177
    %v1179 = vtanh.pop %v1178
    %v1180 = vmul.f32 %v1171, %v1179
    %v1182 = vrot.slane %v995, 6
    %v1184 = vrot.slane %v1180, 2
    %v1185 = vrot.slane %v1182, 2
    %1188 = vmatprep.subr.mxu0 %v703
    %1189 = vmatpush1.msra.mxu0 %v702
    %1190 = vmatprep.subr.mxu0 %v707
    %1191 = vmatpush1.msra.mxu0 %v706
    %1192 = vmatprep.subr.mxu0 %v711
    %1193 = vmatpush1.msra.mxu0 %v710
    %1194 = vmatprep.subr.mxu0 %v715
    %1195 = vmatpush1.msra.mxu0 %v714
    %1196 = vmatprep.subr.mxu0 %v719
    %1197 = vmatpush1.msra.mxu0 %v718
    %1198 = vmatprep.subr.mxu0 %v723
    %1199 = vmatpush1.msra.mxu0 %v722
    %1200 = vmatprep.subr.mxu0 %v727
    %1201 = vmatpush1.msra.mxu0 %v726
    %1202 = vmatprep.subr.mxu0 %v731
    %1203 = vmatpush1.msra.mxu0 %v730
    %1204 = vmatprep.subr.mxu0 %v735
    %1205 = vmatpush1.msra.mxu0 %v734
    %1206 = vmatprep.subr.mxu0 %v739
    %1207 = vmatpush1.msra.mxu0 %v738
    %1208 = vmatprep.subr.mxu0 %v743
    %1209 = vmatpush1.msra.mxu0 %v742
    %1210 = vmatprep.subr.mxu0 %v747
    %1211 = vmatpush1.msra.mxu0 %v746
    %1212 = vmatprep.subr.mxu0 %v751
    %1213 = vmatpush1.msra.mxu0 %v750
    %1214 = vmatprep.subr.mxu0 %v755
    %1215 = vmatpush1.msra.mxu0 %v754
    %1216 = vmatprep.subr.mxu0 %v759
    %1217 = vmatpush1.msra.mxu0 %v758
    %1218 = vmatprep.subr.mxu0 %v763
    %1219 = vmatpush1.msra.mxu0 %v762
    %1220 = vmatprep.subr.mxu0 %v767
    %1221 = vmatpush1.msra.mxu0 %v766
    %1222 = vmatprep.subr.mxu0 %v771
    %1223 = vmatpush1.msra.mxu0 %v770
    %1224 = vmatprep.subr.mxu0 %v775
    %1225 = vmatpush1.msra.mxu0 %v774
    %1226 = vmatprep.subr.mxu0 %v779
    %1227 = vmatpush1.msra.mxu0 %v778
    %1228 = vmatprep.subr.mxu0 %v783
    %1229 = vmatpush1.msra.mxu0 %v782
    %1230 = vmatprep.subr.mxu0 %v787
    %1231 = vmatpush1.msra.mxu0 %v786
    %1232 = vmatprep.subr.mxu0 %v791
    %1233 = vmatpush1.msra.mxu0 %v790
    %1234 = vmatprep.subr.mxu0 %v795
    %1235 = vmatpush1.msra.mxu0 %v794
    %1236 = vmatprep.subr.mxu0 %v799
    %1237 = vmatpush1.msra.mxu0 %v798
    %1238 = vmatprep.subr.mxu0 %v803
    %1239 = vmatpush1.msra.mxu0 %v802
    %1240 = vmatprep.subr.mxu0 %v807
    %1241 = vmatpush1.msra.mxu0 %v806
    %1242 = vmatprep.subr.mxu0 %v811
    %1243 = vmatpush1.msra.mxu0 %v810
    %1244 = vmatprep.subr.mxu0 %v815
    %1245 = vmatpush1.msra.mxu0 %v814
    %1246 = vmatprep.subr.mxu0 %v819
    %1247 = vmatpush1.msra.mxu0 %v818
    %1248 = vmatprep.subr.mxu0 %v823
    %1249 = vmatpush1.msra.mxu0 %v822
    %1250 = vmatprep.subr.mxu0 %v827
    %1251 = vmatpush1.msra.mxu0 %v826
    %1252 = vmatprep.mubr.f32.mxu0 %v1185
    %1253 = vmatmul.mubr.f32.gmra.mrb[0].mxu0 %v1184
    %v1254 = vpop.f32.mrb[0].mxu0
    %v1255 = vadd.f32 %v451, %v1254
    %v1256 = vpop.f32.mrb[0].mxu0
    %v1257 = vadd.f32 %v455, %v1256
    %1258 = vdwg.mxu0
    %1259 = vmatprep.subr.mxu0 %v705
    %1260 = vmatpush1.msra.mxu0 %v704
    %1261 = vmatprep.subr.mxu0 %v709
    %1262 = vmatpush1.msra.mxu0 %v708
    %1263 = vmatprep.subr.mxu0 %v713
    %1264 = vmatpush1.msra.mxu0 %v712
    %1265 = vmatprep.subr.mxu0 %v717
    %1266 = vmatpush1.msra.mxu0 %v716
    %1267 = vmatprep.subr.mxu0 %v721
    %1268 = vmatpush1.msra.mxu0 %v720
    %1269 = vmatprep.subr.mxu0 %v725
    %1270 = vmatpush1.msra.mxu0 %v724
    %1271 = vmatprep.subr.mxu0 %v729
    %1272 = vmatpush1.msra.mxu0 %v728
    %1273 = vmatprep.subr.mxu0 %v733
    %1274 = vmatpush1.msra.mxu0 %v732
    %1275 = vmatprep.subr.mxu0 %v737
    %1276 = vmatpush1.msra.mxu0 %v736
    %1277 = vmatprep.subr.mxu0 %v741
    %1278 = vmatpush1.msra.mxu0 %v740
    %1279 = vmatprep.subr.mxu0 %v745
    %1280 = vmatpush1.msra.mxu0 %v744
    %1281 = vmatprep.subr.mxu0 %v749
    %1282 = vmatpush1.msra.mxu0 %v748
    %1283 = vmatprep.subr.mxu0 %v753
    %1284 = vmatpush1.msra.mxu0 %v752
    %1285 = vmatprep.subr.mxu0 %v757
    %1286 = vmatpush1.msra.mxu0 %v756
    %1287 = vmatprep.subr.mxu0 %v761
    %1288 = vmatpush1.msra.mxu0 %v760
    %1289 = vmatprep.subr.mxu0 %v765
    %1290 = vmatpush1.msra.mxu0 %v764
    %1291 = vmatprep.subr.mxu0 %v769
    %1292 = vmatpush1.msra.mxu0 %v768
    %1293 = vmatprep.subr.mxu0 %v773
    %1294 = vmatpush1.msra.mxu0 %v772
    %1295 = vmatprep.subr.mxu0 %v777
    %1296 = vmatpush1.msra.mxu0 %v776
    %1297 = vmatprep.subr.mxu0 %v781
    %1298 = vmatpush1.msra.mxu0 %v780
    %1299 = vmatprep.subr.mxu0 %v785
    %1300 = vmatpush1.msra.mxu0 %v784
    %1301 = vmatprep.subr.mxu0 %v789
    %1302 = vmatpush1.msra.mxu0 %v788
    %1303 = vmatprep.subr.mxu0 %v793
    %1304 = vmatpush1.msra.mxu0 %v792
    %1305 = vmatprep.subr.mxu0 %v797
    %1306 = vmatpush1.msra.mxu0 %v796
    %1307 = vmatprep.subr.mxu0 %v801
    %1308 = vmatpush1.msra.mxu0 %v800
    %1309 = vmatprep.subr.mxu0 %v805
    %1310 = vmatpush1.msra.mxu0 %v804
    %1311 = vmatprep.subr.mxu0 %v809
    %1312 = vmatpush1.msra.mxu0 %v808
    %1313 = vmatprep.subr.mxu0 %v813
    %1314 = vmatpush1.msra.mxu0 %v812
    %1315 = vmatprep.subr.mxu0 %v817
    %1316 = vmatpush1.msra.mxu0 %v816
    %1317 = vmatprep.subr.mxu0 %v821
    %1318 = vmatpush1.msra.mxu0 %v820
    %1319 = vmatprep.subr.mxu0 %v825
    %1320 = vmatpush1.msra.mxu0 %v824
    %1321 = vmatprep.subr.mxu0 %v829
    %1322 = vmatpush1.msra.mxu0 %v828
    %1323 = vmatprep.mubr.f32.mxu0 %v1185
    %1324 = vmatmul.mubr.f32.gmra.mrb[0].mxu0 %v1184
    %v1325 = vpop.f32.mrb[0].mxu0
    %v1326 = vadd.f32 %v459, %v1325
    %v1327 = vpop.f32.mrb[0].mxu0
    %v1328 = vadd.f32 %v463, %v1327
    %1329 = vdwg.mxu0
    %v1330 = vxor.u32 %v1255, 2147483648
    %v1331 = vxor.u32 %v1257, 2147483648
    %v1332 = vxor.u32 %v1326, 2147483648
    %v1333 = vmul.f32 %v1330, 1.442695
    %v1334 = vpow.pop %v1333
    %v1335 = vmul.f32 %v1331, 1.442695
    %v1336 = vpow.pop %v1335
    %v1337 = vmul.f32 %v1332, 1.442695
    %v1338 = vpow.pop %v1337
    %v1339 = vadd.f32 %v1334, 1.0
    %v1340 = vadd.f32 %v1336, 1.0
    %v1341 = vadd.f32 %v1338, 1.0
    %v1342 = vrcp.pop %v1339
    %v1343 = vmul.f32 1.0, %v1342
    %v1344 = vrcp.pop %v1340
    %v1345 = vmul.f32 1.0, %v1344
    %v1346 = vrcp.pop %v1341
    %v1347 = vmul.f32 1.0, %v1346
    %v1348 = vtanh.pop %v1328
    %v1349 = vmul.f32 %v1345, %v993
    %v1350 = vmul.f32 %v1343, %v1348
    %v1351 = vadd.f32 %v1349, %v1350
    %v1352 = vtanh.pop %v1351
    %v1353 = vmul.f32 %v1347, %v1352
    %1354 = vmatprep.subr.mxu0 %v469
    %1355 = vmatpush1.msra.mxu0 %v468
    %1356 = vmatprep.subr.mxu0 %v473
    %1357 = vmatpush1.msra.mxu0 %v472
    %1358 = vmatprep.subr.mxu0 %v477
    %1359 = vmatpush1.msra.mxu0 %v476
    %1360 = vmatprep.subr.mxu0 %v481
    %1361 = vmatpush1.msra.mxu0 %v480
    %1362 = vmatprep.subr.mxu0 %v485
    %1363 = vmatpush1.msra.mxu0 %v484
    %1364 = vmatprep.subr.mxu0 %v489
    %1365 = vmatpush1.msra.mxu0 %v488
    %1366 = vmatprep.subr.mxu0 %v493
    %1367 = vmatpush1.msra.mxu0 %v492
    %1368 = vmatprep.subr.mxu0 %v497
    %1369 = vmatpush1.msra.mxu0 %v496
    %1370 = vmatprep.subr.mxu0 %v501
    %1371 = vmatpush1.msra.mxu0 %v500
    %1372 = vmatprep.subr.mxu0 %v505
    %1373 = vmatpush1.msra.mxu0 %v504
    %1374 = vmatprep.subr.mxu0 %v509
    %1375 = vmatpush1.msra.mxu0 %v508
    %1376 = vmatprep.subr.mxu0 %v513
    %1377 = vmatpush1.msra.mxu0 %v512
    %1378 = vmatprep.subr.mxu0 %v517
    %1379 = vmatpush1.msra.mxu0 %v516
    %1380 = vmatprep.subr.mxu0 %v521
    %1381 = vmatpush1.msra.mxu0 %v520
    %1382 = vmatprep.subr.mxu0 %v525
    %1383 = vmatpush1.msra.mxu0 %v524
    %1384 = vmatprep.subr.mxu0 %v529
    %1385 = vmatpush1.msra.mxu0 %v528
    %1386 = vmatprep.subr.mxu0 0.0
    %1387 = vmatpush1.msra.mxu0 0.0
    %1388 = vmatprep.subr.mxu0 0.0
    %1389 = vmatpush1.msra.mxu0 0.0
    %1390 = vmatprep.subr.mxu0 0.0
    %1391 = vmatpush1.msra.mxu0 0.0
    %1392 = vmatprep.subr.mxu0 0.0
    %1393 = vmatpush1.msra.mxu0 0.0
    %1394 = vmatprep.subr.mxu0 0.0
    %1395 = vmatpush1.msra.mxu0 0.0
    %1396 = vmatprep.subr.mxu0 0.0
    %1397 = vmatpush1.msra.mxu0 0.0
    %1398 = vmatprep.subr.mxu0 0.0
    %1399 = vmatpush1.msra.mxu0 0.0
    %1400 = vmatprep.subr.mxu0 0.0
    %1401 = vmatpush1.msra.mxu0 0.0
    %1402 = vmatprep.subr.mxu0 0.0
    %1403 = vmatpush1.msra.mxu0 0.0
    %1404 = vmatprep.subr.mxu0 0.0
    %1405 = vmatpush1.msra.mxu0 0.0
    %1406 = vmatprep.subr.mxu0 0.0
    %1407 = vmatpush1.msra.mxu0 0.0
    %1408 = vmatprep.subr.mxu0 0.0
    %1409 = vmatpush1.msra.mxu0 0.0
    %1410 = vmatprep.subr.mxu0 0.0
    %1411 = vmatpush1.msra.mxu0 0.0
    %1412 = vmatprep.subr.mxu0 0.0
    %1413 = vmatpush1.msra.mxu0 0.0
    %1414 = vmatprep.subr.mxu0 0.0
    %1415 = vmatpush1.msra.mxu0 0.0
    %1416 = vmatprep.subr.mxu0 0.0
    %1417 = vmatpush1.msra.mxu0 0.0
    %1418 = vmatprep.mubr.f32.mxu0 0.0
    %1419 = vmatmul.mubr.f32.gmra.mrb[0].mxu0 %v1184
    %v1420 = vpop.f32.mrb[0].mxu0
    %v1421 = vadd.f32 0.0, %v1420
    %v1422 = vpop.f32.mrb[0].mxu0
    %v1423 = vadd.f32 0.0, %v1422
    %1424 = vdwg.mxu0
    %1425 = vmatprep.subr.mxu0 %v471
    %1426 = vmatpush1.msra.mxu0 %v470
    %1427 = vmatprep.subr.mxu0 %v475
    %1428 = vmatpush1.msra.mxu0 %v474
    %1429 = vmatprep.subr.mxu0 %v479
    %1430 = vmatpush1.msra.mxu0 %v478
    %1431 = vmatprep.subr.mxu0 %v483
    %1432 = vmatpush1.msra.mxu0 %v482
    %1433 = vmatprep.subr.mxu0 %v487
    %1434 = vmatpush1.msra.mxu0 %v486
    %1435 = vmatprep.subr.mxu0 %v491
    %1436 = vmatpush1.msra.mxu0 %v490
    %1437 = vmatprep.subr.mxu0 %v495
    %1438 = vmatpush1.msra.mxu0 %v494
    %1439 = vmatprep.subr.mxu0 %v499
    %1440 = vmatpush1.msra.mxu0 %v498
    %1441 = vmatprep.subr.mxu0 %v503
    %1442 = vmatpush1.msra.mxu0 %v502
    %1443 = vmatprep.subr.mxu0 %v507
    %1444 = vmatpush1.msra.mxu0 %v506
    %1445 = vmatprep.subr.mxu0 %v511
    %1446 = vmatpush1.msra.mxu0 %v510
    %1447 = vmatprep.subr.mxu0 %v515
    %1448 = vmatpush1.msra.mxu0 %v514
    %1449 = vmatprep.subr.mxu0 %v519
    %1450 = vmatpush1.msra.mxu0 %v518
    %1451 = vmatprep.subr.mxu0 %v523
    %1452 = vmatpush1.msra.mxu0 %v522
    %1453 = vmatprep.subr.mxu0 %v527
    %1454 = vmatpush1.msra.mxu0 %v526
    %1455 = vmatprep.subr.mxu0 %v531
    %1456 = vmatpush1.msra.mxu0 %v530
    %1457 = vmatprep.subr.mxu0 0.0
    %1458 = vmatpush1.msra.mxu0 0.0
    %1459 = vmatprep.subr.mxu0 0.0
    %1460 = vmatpush1.msra.mxu0 0.0
    %1461 = vmatprep.subr.mxu0 0.0
    %1462 = vmatpush1.msra.mxu0 0.0
    %1463 = vmatprep.subr.mxu0 0.0
    %1464 = vmatpush1.msra.mxu0 0.0
    %1465 = vmatprep.subr.mxu0 0.0
    %1466 = vmatpush1.msra.mxu0 0.0
    %1467 = vmatprep.subr.mxu0 0.0
    %1468 = vmatpush1.msra.mxu0 0.0
    %1469 = vmatprep.subr.mxu0 0.0
    %1470 = vmatpush1.msra.mxu0 0.0
    %1471 = vmatprep.subr.mxu0 0.0
    %1472 = vmatpush1.msra.mxu0 0.0
    %1473 = vmatprep.subr.mxu0 0.0
    %1474 = vmatpush1.msra.mxu0 0.0
    %1475 = vmatprep.subr.mxu0 0.0
    %1476 = vmatpush1.msra.mxu0 0.0
    %1477 = vmatprep.subr.mxu0 0.0
    %1478 = vmatpush1.msra.mxu0 0.0
    %1479 = vmatprep.subr.mxu0 0.0
    %1480 = vmatpush1.msra.mxu0 0.0
    %1481 = vmatprep.subr.mxu0 0.0
    %1482 = vmatpush1.msra.mxu0 0.0
    %1483 = vmatprep.subr.mxu0 0.0
    %1484 = vmatpush1.msra.mxu0 0.0
    %1485 = vmatprep.subr.mxu0 0.0
    %1486 = vmatpush1.msra.mxu0 0.0
    %1487 = vmatprep.subr.mxu0 0.0
    %1488 = vmatpush1.msra.mxu0 0.0
    %1489 = vmatprep.mubr.f32.mxu0 0.0
    %1490 = vmatmul.mubr.f32.gmra.mrb[0].mxu0 %v1184
    %v1491 = vpop.f32.mrb[0].mxu0
    %v1492 = vadd.f32 0.0, %v1491
    %v1493 = vpop.f32.mrb[0].mxu0
    %v1494 = vadd.f32 0.0, %v1493
    %1495 = vdwg.mxu0
    %v1500 = vrot.slane %v1421, 4
    %v1501 = vrot.slane %v1423, 4
    %v1502 = vrot.slane %v1492, 4
    %v1503 = vrot.slane %v1494, 4
    %v1508 = vadd.f32 %v359, %v1500
    %v1509 = vadd.f32 %v361, %v1501
    %v1510 = vadd.f32 %v436, %v1502
    %v1511 = vadd.f32 %v438, %v1503
    %v1512 = vxor.u32 %v1508, 2147483648
    %v1513 = vxor.u32 %v1509, 2147483648
    %v1514 = vxor.u32 %v1510, 2147483648
    %v1515 = vmul.f32 %v1512, 1.442695
    %v1516 = vpow.pop %v1515
    %v1517 = vmul.f32 %v1513, 1.442695
    %v1518 = vpow.pop %v1517
    %v1519 = vmul.f32 %v1514, 1.442695
    %v1520 = vpow.pop %v1519
    %v1521 = vadd.f32 %v1516, 1.0
    %v1522 = vadd.f32 %v1518, 1.0
    %v1523 = vadd.f32 %v1520, 1.0
    %v1524 = vrcp.pop %v1521
    %v1525 = vmul.f32 1.0, %v1524
    %v1526 = vrcp.pop %v1522
    %v1527 = vmul.f32 1.0, %v1526
    %v1528 = vrcp.pop %v1523
    %v1529 = vmul.f32 1.0, %v1528
    %v1530 = vtanh.pop %v1511
    %v1532 = vrot.slane %v1178, 6
    %v1534 = vmul.f32 %v1527, %v1532
    %v1535 = vmul.f32 %v1525, %v1530
    %v1536 = vadd.f32 %v1534, %v1535
    %v1537 = vtanh.pop %v1536
    %v1538 = vmul.f32 %v1529, %v1537
    %v1540 = vrot.slane %v1353, 4
    %v1542 = vrot.slane %v1538, 4
    %v1543 = vrot.slane %v1540, 4
    %1546 = vmatprep.subr.mxu0 %v703
    %1547 = vmatpush1.msra.mxu0 %v702
    %1548 = vmatprep.subr.mxu0 %v707
    %1549 = vmatpush1.msra.mxu0 %v706
    %1550 = vmatprep.subr.mxu0 %v711
    %1551 = vmatpush1.msra.mxu0 %v710
    %1552 = vmatprep.subr.mxu0 %v715
    %1553 = vmatpush1.msra.mxu0 %v714
    %1554 = vmatprep.subr.mxu0 %v719
    %1555 = vmatpush1.msra.mxu0 %v718
    %1556 = vmatprep.subr.mxu0 %v723
    %1557 = vmatpush1.msra.mxu0 %v722
    %1558 = vmatprep.subr.mxu0 %v727
    %1559 = vmatpush1.msra.mxu0 %v726
    %1560 = vmatprep.subr.mxu0 %v731
    %1561 = vmatpush1.msra.mxu0 %v730
    %1562 = vmatprep.subr.mxu0 %v735
    %1563 = vmatpush1.msra.mxu0 %v734
    %1564 = vmatprep.subr.mxu0 %v739
    %1565 = vmatpush1.msra.mxu0 %v738
    %1566 = vmatprep.subr.mxu0 %v743
    %1567 = vmatpush1.msra.mxu0 %v742
    %1568 = vmatprep.subr.mxu0 %v747
    %1569 = vmatpush1.msra.mxu0 %v746
    %1570 = vmatprep.subr.mxu0 %v751
    %1571 = vmatpush1.msra.mxu0 %v750
    %1572 = vmatprep.subr.mxu0 %v755
    %1573 = vmatpush1.msra.mxu0 %v754
    %1574 = vmatprep.subr.mxu0 %v759
    %1575 = vmatpush1.msra.mxu0 %v758
    %1576 = vmatprep.subr.mxu0 %v763
    %1577 = vmatpush1.msra.mxu0 %v762
    %1578 = vmatprep.subr.mxu0 %v767
    %1579 = vmatpush1.msra.mxu0 %v766
    %1580 = vmatprep.subr.mxu0 %v771
    %1581 = vmatpush1.msra.mxu0 %v770
    %1582 = vmatprep.subr.mxu0 %v775
    %1583 = vmatpush1.msra.mxu0 %v774
    %1584 = vmatprep.subr.mxu0 %v779
    %1585 = vmatpush1.msra.mxu0 %v778
    %1586 = vmatprep.subr.mxu0 %v783
    %1587 = vmatpush1.msra.mxu0 %v782
    %1588 = vmatprep.subr.mxu0 %v787
    %1589 = vmatpush1.msra.mxu0 %v786
    %1590 = vmatprep.subr.mxu0 %v791
    %1591 = vmatpush1.msra.mxu0 %v790
    %1592 = vmatprep.subr.mxu0 %v795
    %1593 = vmatpush1.msra.mxu0 %v794
    %1594 = vmatprep.subr.mxu0 %v799
    %1595 = vmatpush1.msra.mxu0 %v798
    %1596 = vmatprep.subr.mxu0 %v803
    %1597 = vmatpush1.msra.mxu0 %v802
    %1598 = vmatprep.subr.mxu0 %v807
    %1599 = vmatpush1.msra.mxu0 %v806
    %1600 = vmatprep.subr.mxu0 %v811
    %1601 = vmatpush1.msra.mxu0 %v810
    %1602 = vmatprep.subr.mxu0 %v815
    %1603 = vmatpush1.msra.mxu0 %v814
    %1604 = vmatprep.subr.mxu0 %v819
    %1605 = vmatpush1.msra.mxu0 %v818
    %1606 = vmatprep.subr.mxu0 %v823
    %1607 = vmatpush1.msra.mxu0 %v822
    %1608 = vmatprep.subr.mxu0 %v827
    %1609 = vmatpush1.msra.mxu0 %v826
    %1610 = vmatprep.mubr.f32.mxu0 %v1543
    %1611 = vmatmul.mubr.f32.gmra.mrb[0].mxu0 %v1542
    %v1612 = vpop.f32.mrb[0].mxu0
    %v1613 = vadd.f32 %v451, %v1612
    %v1614 = vpop.f32.mrb[0].mxu0
    %v1615 = vadd.f32 %v455, %v1614
    %1616 = vdwg.mxu0
    %1617 = vmatprep.subr.mxu0 %v705
    %1618 = vmatpush1.msra.mxu0 %v704
    %1619 = vmatprep.subr.mxu0 %v709
    %1620 = vmatpush1.msra.mxu0 %v708
    %1621 = vmatprep.subr.mxu0 %v713
    %1622 = vmatpush1.msra.mxu0 %v712
    %1623 = vmatprep.subr.mxu0 %v717
    %1624 = vmatpush1.msra.mxu0 %v716
    %1625 = vmatprep.subr.mxu0 %v721
    %1626 = vmatpush1.msra.mxu0 %v720
    %1627 = vmatprep.subr.mxu0 %v725
    %1628 = vmatpush1.msra.mxu0 %v724
    %1629 = vmatprep.subr.mxu0 %v729
    %1630 = vmatpush1.msra.mxu0 %v728
    %1631 = vmatprep.subr.mxu0 %v733
    %1632 = vmatpush1.msra.mxu0 %v732
    %1633 = vmatprep.subr.mxu0 %v737
    %1634 = vmatpush1.msra.mxu0 %v736
    %1635 = vmatprep.subr.mxu0 %v741
    %1636 = vmatpush1.msra.mxu0 %v740
    %1637 = vmatprep.subr.mxu0 %v745
    %1638 = vmatpush1.msra.mxu0 %v744
    %1639 = vmatprep.subr.mxu0 %v749
    %1640 = vmatpush1.msra.mxu0 %v748
    %1641 = vmatprep.subr.mxu0 %v753
    %1642 = vmatpush1.msra.mxu0 %v752
    %1643 = vmatprep.subr.mxu0 %v757
    %1644 = vmatpush1.msra.mxu0 %v756
    %1645 = vmatprep.subr.mxu0 %v761
    %1646 = vmatpush1.msra.mxu0 %v760
    %1647 = vmatprep.subr.mxu0 %v765
    %1648 = vmatpush1.msra.mxu0 %v764
    %1649 = vmatprep.subr.mxu0 %v769
    %1650 = vmatpush1.msra.mxu0 %v768
    %1651 = vmatprep.subr.mxu0 %v773
    %1652 = vmatpush1.msra.mxu0 %v772
    %1653 = vmatprep.subr.mxu0 %v777
    %1654 = vmatpush1.msra.mxu0 %v776
    %1655 = vmatprep.subr.mxu0 %v781
    %1656 = vmatpush1.msra.mxu0 %v780
    %1657 = vmatprep.subr.mxu0 %v785
    %1658 = vmatpush1.msra.mxu0 %v784
    %1659 = vmatprep.subr.mxu0 %v789
    %1660 = vmatpush1.msra.mxu0 %v788
    %1661 = vmatprep.subr.mxu0 %v793
    %1662 = vmatpush1.msra.mxu0 %v792
    %1663 = vmatprep.subr.mxu0 %v797
    %1664 = vmatpush1.msra.mxu0 %v796
    %1665 = vmatprep.subr.mxu0 %v801
    %1666 = vmatpush1.msra.mxu0 %v800
    %1667 = vmatprep.subr.mxu0 %v805
    %1668 = vmatpush1.msra.mxu0 %v804
    %1669 = vmatprep.subr.mxu0 %v809
    %1670 = vmatpush1.msra.mxu0 %v808
    %1671 = vmatprep.subr.mxu0 %v813
    %1672 = vmatpush1.msra.mxu0 %v812
    %1673 = vmatprep.subr.mxu0 %v817
    %1674 = vmatpush1.msra.mxu0 %v816
    %1675 = vmatprep.subr.mxu0 %v821
    %1676 = vmatpush1.msra.mxu0 %v820
    %1677 = vmatprep.subr.mxu0 %v825
    %1678 = vmatpush1.msra.mxu0 %v824
    %1679 = vmatprep.subr.mxu0 %v829
    %1680 = vmatpush1.msra.mxu0 %v828
    %1681 = vmatprep.mubr.f32.mxu0 %v1543
    %1682 = vmatmul.mubr.f32.gmra.mrb[0].mxu0 %v1542
    %v1683 = vpop.f32.mrb[0].mxu0
    %v1684 = vadd.f32 %v459, %v1683
    %v1685 = vpop.f32.mrb[0].mxu0
    %v1686 = vadd.f32 %v463, %v1685
    %1687 = vdwg.mxu0
    %v1688 = vxor.u32 %v1613, 2147483648
    %v1689 = vxor.u32 %v1615, 2147483648
    %v1690 = vxor.u32 %v1684, 2147483648
    %v1691 = vmul.f32 %v1688, 1.442695
    %v1692 = vpow.pop %v1691
    %v1693 = vmul.f32 %v1689, 1.442695
    %v1694 = vpow.pop %v1693
    %v1695 = vmul.f32 %v1690, 1.442695
    %v1696 = vpow.pop %v1695
    %v1697 = vadd.f32 %v1692, 1.0
    %v1698 = vadd.f32 %v1694, 1.0
    %v1699 = vadd.f32 %v1696, 1.0
    %v1700 = vrcp.pop %v1697
    %v1701 = vmul.f32 1.0, %v1700
    %v1702 = vrcp.pop %v1698
    %v1703 = vmul.f32 1.0, %v1702
    %v1704 = vrcp.pop %v1699
    %v1705 = vmul.f32 1.0, %v1704
    %v1706 = vtanh.pop %v1686
    %v1707 = vmul.f32 %v1703, %v1351
    %v1708 = vmul.f32 %v1701, %v1706
    %v1709 = vadd.f32 %v1707, %v1708
    %v1710 = vtanh.pop %v1709
    %v1711 = vmul.f32 %v1705, %v1710
    %1712 = vmatprep.subr.mxu0 %v469
    %1713 = vmatpush1.msra.mxu0 %v468
    %1714 = vmatprep.subr.mxu0 %v473
    %1715 = vmatpush1.msra.mxu0 %v472
    %1716 = vmatprep.subr.mxu0 %v477
    %1717 = vmatpush1.msra.mxu0 %v476
    %1718 = vmatprep.subr.mxu0 %v481
    %1719 = vmatpush1.msra.mxu0 %v480
    %1720 = vmatprep.subr.mxu0 %v485
    %1721 = vmatpush1.msra.mxu0 %v484
    %1722 = vmatprep.subr.mxu0 %v489
    %1723 = vmatpush1.msra.mxu0 %v488
    %1724 = vmatprep.subr.mxu0 %v493
    %1725 = vmatpush1.msra.mxu0 %v492
    %1726 = vmatprep.subr.mxu0 %v497
    %1727 = vmatpush1.msra.mxu0 %v496
    %1728 = vmatprep.subr.mxu0 %v501
    %1729 = vmatpush1.msra.mxu0 %v500
    %1730 = vmatprep.subr.mxu0 %v505
    %1731 = vmatpush1.msra.mxu0 %v504
    %1732 = vmatprep.subr.mxu0 %v509
    %1733 = vmatpush1.msra.mxu0 %v508
    %1734 = vmatprep.subr.mxu0 %v513
    %1735 = vmatpush1.msra.mxu0 %v512
    %1736 = vmatprep.subr.mxu0 %v517
    %1737 = vmatpush1.msra.mxu0 %v516
    %1738 = vmatprep.subr.mxu0 %v521
    %1739 = vmatpush1.msra.mxu0 %v520
    %1740 = vmatprep.subr.mxu0 %v525
    %1741 = vmatpush1.msra.mxu0 %v524
    %1742 = vmatprep.subr.mxu0 %v529
    %1743 = vmatpush1.msra.mxu0 %v528
    %1744 = vmatprep.subr.mxu0 0.0
    %1745 = vmatpush1.msra.mxu0 0.0
    %1746 = vmatprep.subr.mxu0 0.0
    %1747 = vmatpush1.msra.mxu0 0.0
    %1748 = vmatprep.subr.mxu0 0.0
    %1749 = vmatpush1.msra.mxu0 0.0
    %1750 = vmatprep.subr.mxu0 0.0
    %1751 = vmatpush1.msra.mxu0 0.0
    %1752 = vmatprep.subr.mxu0 0.0
    %1753 = vmatpush1.msra.mxu0 0.0
    %1754 = vmatprep.subr.mxu0 0.0
    %1755 = vmatpush1.msra.mxu0 0.0
    %1756 = vmatprep.subr.mxu0 0.0
    %1757 = vmatpush1.msra.mxu0 0.0
    %1758 = vmatprep.subr.mxu0 0.0
    %1759 = vmatpush1.msra.mxu0 0.0
    %1760 = vmatprep.subr.mxu0 0.0
    %1761 = vmatpush1.msra.mxu0 0.0
    %1762 = vmatprep.subr.mxu0 0.0
    %1763 = vmatpush1.msra.mxu0 0.0
    %1764 = vmatprep.subr.mxu0 0.0
    %1765 = vmatpush1.msra.mxu0 0.0
    %1766 = vmatprep.subr.mxu0 0.0
    %1767 = vmatpush1.msra.mxu0 0.0
    %1768 = vmatprep.subr.mxu0 0.0
    %1769 = vmatpush1.msra.mxu0 0.0
    %1770 = vmatprep.subr.mxu0 0.0
    %1771 = vmatpush1.msra.mxu0 0.0
    %1772 = vmatprep.subr.mxu0 0.0
    %1773 = vmatpush1.msra.mxu0 0.0
    %1774 = vmatprep.subr.mxu0 0.0
    %1775 = vmatpush1.msra.mxu0 0.0
    %1776 = vmatprep.mubr.f32.mxu0 0.0
    %1777 = vmatmul.mubr.f32.gmra.mrb[0].mxu0 %v1542
    %v1778 = vpop.f32.mrb[0].mxu0
    %v1779 = vadd.f32 0.0, %v1778
    %v1780 = vpop.f32.mrb[0].mxu0
    %v1781 = vadd.f32 0.0, %v1780
    %1782 = vdwg.mxu0
    %1783 = vmatprep.subr.mxu0 %v471
    %1784 = vmatpush1.msra.mxu0 %v470
    %1785 = vmatprep.subr.mxu0 %v475
    %1786 = vmatpush1.msra.mxu0 %v474
    %1787 = vmatprep.subr.mxu0 %v479
    %1788 = vmatpush1.msra.mxu0 %v478
    %1789 = vmatprep.subr.mxu0 %v483
    %1790 = vmatpush1.msra.mxu0 %v482
    %1791 = vmatprep.subr.mxu0 %v487
    %1792 = vmatpush1.msra.mxu0 %v486
    %1793 = vmatprep.subr.mxu0 %v491
    %1794 = vmatpush1.msra.mxu0 %v490
    %1795 = vmatprep.subr.mxu0 %v495
    %1796 = vmatpush1.msra.mxu0 %v494
    %1797 = vmatprep.subr.mxu0 %v499
    %1798 = vmatpush1.msra.mxu0 %v498
    %1799 = vmatprep.subr.mxu0 %v503
    %1800 = vmatpush1.msra.mxu0 %v502
    %1801 = vmatprep.subr.mxu0 %v507
    %1802 = vmatpush1.msra.mxu0 %v506
    %1803 = vmatprep.subr.mxu0 %v511
    %1804 = vmatpush1.msra.mxu0 %v510
    %1805 = vmatprep.subr.mxu0 %v515
    %1806 = vmatpush1.msra.mxu0 %v514
    %1807 = vmatprep.subr.mxu0 %v519
    %1808 = vmatpush1.msra.mxu0 %v518
    %1809 = vmatprep.subr.mxu0 %v523
    %1810 = vmatpush1.msra.mxu0 %v522
    %1811 = vmatprep.subr.mxu0 %v527
    %1812 = vmatpush1.msra.mxu0 %v526
    %1813 = vmatprep.subr.mxu0 %v531
    %1814 = vmatpush1.msra.mxu0 %v530
    %1815 = vmatprep.subr.mxu0 0.0
    %1816 = vmatpush1.msra.mxu0 0.0
    %1817 = vmatprep.subr.mxu0 0.0
    %1818 = vmatpush1.msra.mxu0 0.0
    %1819 = vmatprep.subr.mxu0 0.0
    %1820 = vmatpush1.msra.mxu0 0.0
    %1821 = vmatprep.subr.mxu0 0.0
    %1822 = vmatpush1.msra.mxu0 0.0
    %1823 = vmatprep.subr.mxu0 0.0
    %1824 = vmatpush1.msra.mxu0 0.0
    %1825 = vmatprep.subr.mxu0 0.0
    %1826 = vmatpush1.msra.mxu0 0.0
    %1827 = vmatprep.subr.mxu0 0.0
    %1828 = vmatpush1.msra.mxu0 0.0
    %1829 = vmatprep.subr.mxu0 0.0
    %1830 = vmatpush1.msra.mxu0 0.0
    %1831 = vmatprep.subr.mxu0 0.0
    %1832 = vmatpush1.msra.mxu0 0.0
    %1833 = vmatprep.subr.mxu0 0.0
    %1834 = vmatpush1.msra.mxu0 0.0
    %1835 = vmatprep.subr.mxu0 0.0
    %1836 = vmatpush1.msra.mxu0 0.0
    %1837 = vmatprep.subr.mxu0 0.0
    %1838 = vmatpush1.msra.mxu0 0.0
    %1839 = vmatprep.subr.mxu0 0.0
    %1840 = vmatpush1.msra.mxu0 0.0
    %1841 = vmatprep.subr.mxu0 0.0
    %1842 = vmatpush1.msra.mxu0 0.0
    %1843 = vmatprep.subr.mxu0 0.0
    %1844 = vmatpush1.msra.mxu0 0.0
    %1845 = vmatprep.subr.mxu0 0.0
    %1846 = vmatpush1.msra.mxu0 0.0
    %1847 = vmatprep.mubr.f32.mxu0 0.0
    %1848 = vmatmul.mubr.f32.gmra.mrb[0].mxu0 %v1542
    %v1849 = vpop.f32.mrb[0].mxu0
    %v1850 = vadd.f32 0.0, %v1849
    %v1851 = vpop.f32.mrb[0].mxu0
    %v1852 = vadd.f32 0.0, %v1851
    %1853 = vdwg.mxu0
    %v1858 = vrot.slane %v1779, 2
    %v1859 = vrot.slane %v1781, 2
    %v1860 = vrot.slane %v1850, 2
    %v1861 = vrot.slane %v1852, 2
    %v1866 = vadd.f32 %v359, %v1858
    %v1867 = vadd.f32 %v361, %v1859
    %v1868 = vadd.f32 %v436, %v1860
    %v1869 = vadd.f32 %v438, %v1861
    %v1870 = vxor.u32 %v1866, 2147483648
    %v1871 = vxor.u32 %v1867, 2147483648
    %v1872 = vxor.u32 %v1868, 2147483648
    %v1873 = vmul.f32 %v1870, 1.442695
    %v1874 = vpow.pop %v1873
    %v1875 = vmul.f32 %v1871, 1.442695
    %v1876 = vpow.pop %v1875
    %v1877 = vmul.f32 %v1872, 1.442695
    %v1878 = vpow.pop %v1877
    %v1879 = vadd.f32 %v1874, 1.0
    %v1880 = vadd.f32 %v1876, 1.0
    %v1881 = vadd.f32 %v1878, 1.0
    %v1882 = vrcp.pop %v1879
    %v1883 = vmul.f32 1.0, %v1882
    %v1884 = vrcp.pop %v1880
    %v1885 = vmul.f32 1.0, %v1884
    %v1886 = vrcp.pop %v1881
    %v1887 = vmul.f32 1.0, %v1886
    %v1888 = vtanh.pop %v1869
    %v1890 = vrot.slane %v1536, 6
    %v1892 = vmul.f32 %v1885, %v1890
    %v1893 = vmul.f32 %v1883, %v1888
    %v1894 = vadd.f32 %v1892, %v1893
    %v1895 = vtanh.pop %v1894
    %v1896 = vmul.f32 %v1887, %v1895
    %v1898 = vrot.slane %v1711, 2
    %v1900 = vrot.slane %v1896, 6
    %v1901 = vrot.slane %v1898, 6
    %1904 = vmatprep.subr.mxu0 %v703
    %1905 = vmatpush1.msra.mxu0 %v702
    %1906 = vmatprep.subr.mxu0 %v707
    %1907 = vmatpush1.msra.mxu0 %v706
    %1908 = vmatprep.subr.mxu0 %v711
    %1909 = vmatpush1.msra.mxu0 %v710
    %1910 = vmatprep.subr.mxu0 %v715
    %1911 = vmatpush1.msra.mxu0 %v714
    %1912 = vmatprep.subr.mxu0 %v719
    %1913 = vmatpush1.msra.mxu0 %v718
    %1914 = vmatprep.subr.mxu0 %v723
    %1915 = vmatpush1.msra.mxu0 %v722
    %1916 = vmatprep.subr.mxu0 %v727
    %1917 = vmatpush1.msra.mxu0 %v726
    %1918 = vmatprep.subr.mxu0 %v731
    %1919 = vmatpush1.msra.mxu0 %v730
    %1920 = vmatprep.subr.mxu0 %v735
    %1921 = vmatpush1.msra.mxu0 %v734
    %1922 = vmatprep.subr.mxu0 %v739
    %1923 = vmatpush1.msra.mxu0 %v738
    %1924 = vmatprep.subr.mxu0 %v743
    %1925 = vmatpush1.msra.mxu0 %v742
    %1926 = vmatprep.subr.mxu0 %v747
    %1927 = vmatpush1.msra.mxu0 %v746
    %1928 = vmatprep.subr.mxu0 %v751
    %1929 = vmatpush1.msra.mxu0 %v750
    %1930 = vmatprep.subr.mxu0 %v755
    %1931 = vmatpush1.msra.mxu0 %v754
    %1932 = vmatprep.subr.mxu0 %v759
    %1933 = vmatpush1.msra.mxu0 %v758
    %1934 = vmatprep.subr.mxu0 %v763
    %1935 = vmatpush1.msra.mxu0 %v762
    %1936 = vmatprep.subr.mxu0 %v767
    %1937 = vmatpush1.msra.mxu0 %v766
    %1938 = vmatprep.subr.mxu0 %v771
    %1939 = vmatpush1.msra.mxu0 %v770
    %1940 = vmatprep.subr.mxu0 %v775
    %1941 = vmatpush1.msra.mxu0 %v774
    %1942 = vmatprep.subr.mxu0 %v779
    %1943 = vmatpush1.msra.mxu0 %v778
    %1944 = vmatprep.subr.mxu0 %v783
    %1945 = vmatpush1.msra.mxu0 %v782
    %1946 = vmatprep.subr.mxu0 %v787
    %1947 = vmatpush1.msra.mxu0 %v786
    %1948 = vmatprep.subr.mxu0 %v791
    %1949 = vmatpush1.msra.mxu0 %v790
    %1950 = vmatprep.subr.mxu0 %v795
    %1951 = vmatpush1.msra.mxu0 %v794
    %1952 = vmatprep.subr.mxu0 %v799
    %1953 = vmatpush1.msra.mxu0 %v798
    %1954 = vmatprep.subr.mxu0 %v803
    %1955 = vmatpush1.msra.mxu0 %v802
    %1956 = vmatprep.subr.mxu0 %v807
    %1957 = vmatpush1.msra.mxu0 %v806
    %1958 = vmatprep.subr.mxu0 %v811
    %1959 = vmatpush1.msra.mxu0 %v810
    %1960 = vmatprep.subr.mxu0 %v815
    %1961 = vmatpush1.msra.mxu0 %v814
    %1962 = vmatprep.subr.mxu0 %v819
    %1963 = vmatpush1.msra.mxu0 %v818
    %1964 = vmatprep.subr.mxu0 %v823
    %1965 = vmatpush1.msra.mxu0 %v822
    %1966 = vmatprep.subr.mxu0 %v827
    %1967 = vmatpush1.msra.mxu0 %v826
    %1968 = vmatprep.mubr.f32.mxu0 %v1901
    %1969 = vmatmul.mubr.f32.gmra.mrb[0].mxu0 %v1900
    %v1970 = vpop.f32.mrb[0].mxu0
    %v1971 = vadd.f32 %v451, %v1970
    %v1972 = vpop.f32.mrb[0].mxu0
    %v1973 = vadd.f32 %v455, %v1972
    %1974 = vdwg.mxu0
    %1975 = vmatprep.subr.mxu0 %v705
    %1976 = vmatpush1.msra.mxu0 %v704
    %1977 = vmatprep.subr.mxu0 %v709
    %1978 = vmatpush1.msra.mxu0 %v708
    %1979 = vmatprep.subr.mxu0 %v713
    %1980 = vmatpush1.msra.mxu0 %v712
    %1981 = vmatprep.subr.mxu0 %v717
    %1982 = vmatpush1.msra.mxu0 %v716
    %1983 = vmatprep.subr.mxu0 %v721
    %1984 = vmatpush1.msra.mxu0 %v720
    %1985 = vmatprep.subr.mxu0 %v725
    %1986 = vmatpush1.msra.mxu0 %v724
    %1987 = vmatprep.subr.mxu0 %v729
    %1988 = vmatpush1.msra.mxu0 %v728
    %1989 = vmatprep.subr.mxu0 %v733
    %1990 = vmatpush1.msra.mxu0 %v732
    %1991 = vmatprep.subr.mxu0 %v737
    %1992 = vmatpush1.msra.mxu0 %v736
    %1993 = vmatprep.subr.mxu0 %v741
    %1994 = vmatpush1.msra.mxu0 %v740
    %1995 = vmatprep.subr.mxu0 %v745
    %1996 = vmatpush1.msra.mxu0 %v744
    %1997 = vmatprep.subr.mxu0 %v749
    %1998 = vmatpush1.msra.mxu0 %v748
    %1999 = vmatprep.subr.mxu0 %v753
    %2000 = vmatpush1.msra.mxu0 %v752
    %2001 = vmatprep.subr.mxu0 %v757
    %2002 = vmatpush1.msra.mxu0 %v756
    %2003 = vmatprep.subr.mxu0 %v761
    %2004 = vmatpush1.msra.mxu0 %v760
    %2005 = vmatprep.subr.mxu0 %v765
    %2006 = vmatpush1.msra.mxu0 %v764
    %2007 = vmatprep.subr.mxu0 %v769
    %2008 = vmatpush1.msra.mxu0 %v768
    %2009 = vmatprep.subr.mxu0 %v773
    %2010 = vmatpush1.msra.mxu0 %v772
    %2011 = vmatprep.subr.mxu0 %v777
    %2012 = vmatpush1.msra.mxu0 %v776
    %2013 = vmatprep.subr.mxu0 %v781
    %2014 = vmatpush1.msra.mxu0 %v780
    %2015 = vmatprep.subr.mxu0 %v785
    %2016 = vmatpush1.msra.mxu0 %v784
    %2017 = vmatprep.subr.mxu0 %v789
    %2018 = vmatpush1.msra.mxu0 %v788
    %2019 = vmatprep.subr.mxu0 %v793
    %2020 = vmatpush1.msra.mxu0 %v792
    %2021 = vmatprep.subr.mxu0 %v797
    %2022 = vmatpush1.msra.mxu0 %v796
    %2023 = vmatprep.subr.mxu0 %v801
    %2024 = vmatpush1.msra.mxu0 %v800
    %2025 = vmatprep.subr.mxu0 %v805
    %2026 = vmatpush1.msra.mxu0 %v804
    %2027 = vmatprep.subr.mxu0 %v809
    %2028 = vmatpush1.msra.mxu0 %v808
    %2029 = vmatprep.subr.mxu0 %v813
    %2030 = vmatpush1.msra.mxu0 %v812
    %2031 = vmatprep.subr.mxu0 %v817
    %2032 = vmatpush1.msra.mxu0 %v816
    %2033 = vmatprep.subr.mxu0 %v821
    %2034 = vmatpush1.msra.mxu0 %v820
    %2035 = vmatprep.subr.mxu0 %v825
    %2036 = vmatpush1.msra.mxu0 %v824
    %2037 = vmatprep.subr.mxu0 %v829
    %2038 = vmatpush1.msra.mxu0 %v828
    %2039 = vmatprep.mubr.f32.mxu0 %v1901
    %2040 = vmatmul.mubr.f32.gmra.mrb[0].mxu0 %v1900
    %v2041 = vpop.f32.mrb[0].mxu0
    %v2042 = vadd.f32 %v459, %v2041
    %v2043 = vpop.f32.mrb[0].mxu0
    %v2044 = vadd.f32 %v463, %v2043
    %2045 = vdwg.mxu0
    %v2046 = vxor.u32 %v1971, 2147483648
    %v2047 = vxor.u32 %v1973, 2147483648
    %v2048 = vxor.u32 %v2042, 2147483648
    %v2049 = vmul.f32 %v2046, 1.442695
    %v2050 = vpow.pop %v2049
    %v2051 = vmul.f32 %v2047, 1.442695
    %v2052 = vpow.pop %v2051
    %v2053 = vmul.f32 %v2048, 1.442695
    %v2054 = vpow.pop %v2053
    %v2055 = vadd.f32 %v2050, 1.0
    %v2056 = vadd.f32 %v2052, 1.0
    %v2057 = vadd.f32 %v2054, 1.0
    %v2058 = vrcp.pop %v2055
    %v2059 = vmul.f32 1.0, %v2058
    %v2060 = vrcp.pop %v2056
    %v2061 = vmul.f32 1.0, %v2060
    %v2062 = vrcp.pop %v2057
    %v2063 = vmul.f32 1.0, %v2062
    %v2064 = vtanh.pop %v2044
    %v2065 = vmul.f32 %v2061, %v1709
    %v2066 = vmul.f32 %v2059, %v2064
    %v2067 = vadd.f32 %v2065, %v2066
    %v2068 = vtanh.pop %v2067
    %v2069 = vmul.f32 %v2063, %v2068
    %2070 = vmatprep.subr.mxu0 %v469
    %2071 = vmatpush1.msra.mxu0 %v468
    %2072 = vmatprep.subr.mxu0 %v473
    %2073 = vmatpush1.msra.mxu0 %v472
    %2074 = vmatprep.subr.mxu0 %v477
    %2075 = vmatpush1.msra.mxu0 %v476
    %2076 = vmatprep.subr.mxu0 %v481
    %2077 = vmatpush1.msra.mxu0 %v480
    %2078 = vmatprep.subr.mxu0 %v485
    %2079 = vmatpush1.msra.mxu0 %v484
    %2080 = vmatprep.subr.mxu0 %v489
    %2081 = vmatpush1.msra.mxu0 %v488
    %2082 = vmatprep.subr.mxu0 %v493
    %2083 = vmatpush1.msra.mxu0 %v492
    %2084 = vmatprep.subr.mxu0 %v497
    %2085 = vmatpush1.msra.mxu0 %v496
    %2086 = vmatprep.subr.mxu0 %v501
    %2087 = vmatpush1.msra.mxu0 %v500
    %2088 = vmatprep.subr.mxu0 %v505
    %2089 = vmatpush1.msra.mxu0 %v504
    %2090 = vmatprep.subr.mxu0 %v509
    %2091 = vmatpush1.msra.mxu0 %v508
    %2092 = vmatprep.subr.mxu0 %v513
    %2093 = vmatpush1.msra.mxu0 %v512
    %2094 = vmatprep.subr.mxu0 %v517
    %2095 = vmatpush1.msra.mxu0 %v516
    %2096 = vmatprep.subr.mxu0 %v521
    %2097 = vmatpush1.msra.mxu0 %v520
    %2098 = vmatprep.subr.mxu0 %v525
    %2099 = vmatpush1.msra.mxu0 %v524
    %2100 = vmatprep.subr.mxu0 %v529
    %2101 = vmatpush1.msra.mxu0 %v528
    %2102 = vmatprep.subr.mxu0 0.0
    %2103 = vmatpush1.msra.mxu0 0.0
    %2104 = vmatprep.subr.mxu0 0.0
    %2105 = vmatpush1.msra.mxu0 0.0
    %2106 = vmatprep.subr.mxu0 0.0
    %2107 = vmatpush1.msra.mxu0 0.0
    %2108 = vmatprep.subr.mxu0 0.0
    %2109 = vmatpush1.msra.mxu0 0.0
    %2110 = vmatprep.subr.mxu0 0.0
    %2111 = vmatpush1.msra.mxu0 0.0
    %2112 = vmatprep.subr.mxu0 0.0
    %2113 = vmatpush1.msra.mxu0 0.0
    %2114 = vmatprep.subr.mxu0 0.0
    %2115 = vmatpush1.msra.mxu0 0.0
    %2116 = vmatprep.subr.mxu0 0.0
    %2117 = vmatpush1.msra.mxu0 0.0
    %2118 = vmatprep.subr.mxu0 0.0
    %2119 = vmatpush1.msra.mxu0 0.0
    %2120 = vmatprep.subr.mxu0 0.0
    %2121 = vmatpush1.msra.mxu0 0.0
    %2122 = vmatprep.subr.mxu0 0.0
    %2123 = vmatpush1.msra.mxu0 0.0
    %2124 = vmatprep.subr.mxu0 0.0
    %2125 = vmatpush1.msra.mxu0 0.0
    %2126 = vmatprep.subr.mxu0 0.0
    %2127 = vmatpush1.msra.mxu0 0.0
    %2128 = vmatprep.subr.mxu0 0.0
    %2129 = vmatpush1.msra.mxu0 0.0
    %2130 = vmatprep.subr.mxu0 0.0
    %2131 = vmatpush1.msra.mxu0 0.0
    %2132 = vmatprep.subr.mxu0 0.0
    %2133 = vmatpush1.msra.mxu0 0.0
    %2134 = vmatprep.mubr.f32.mxu0 0.0
    %2135 = vmatmul.mubr.f32.gmra.mrb[0].mxu0 %v1900
    %v2136 = vpop.f32.mrb[0].mxu0
    %v2137 = vadd.f32 0.0, %v2136
    %v2138 = vpop.f32.mrb[0].mxu0
    %v2139 = vadd.f32 0.0, %v2138
    %2140 = vdwg.mxu0
    %2141 = vmatprep.subr.mxu0 %v471
    %2142 = vmatpush1.msra.mxu0 %v470
    %2143 = vmatprep.subr.mxu0 %v475
    %2144 = vmatpush1.msra.mxu0 %v474
    %2145 = vmatprep.subr.mxu0 %v479
    %2146 = vmatpush1.msra.mxu0 %v478
    %2147 = vmatprep.subr.mxu0 %v483
    %2148 = vmatpush1.msra.mxu0 %v482
    %2149 = vmatprep.subr.mxu0 %v487
    %2150 = vmatpush1.msra.mxu0 %v486
    %2151 = vmatprep.subr.mxu0 %v491
    %2152 = vmatpush1.msra.mxu0 %v490
    %2153 = vmatprep.subr.mxu0 %v495
    %2154 = vmatpush1.msra.mxu0 %v494
    %2155 = vmatprep.subr.mxu0 %v499
    %2156 = vmatpush1.msra.mxu0 %v498
    %2157 = vmatprep.subr.mxu0 %v503
    %2158 = vmatpush1.msra.mxu0 %v502
    %2159 = vmatprep.subr.mxu0 %v507
    %2160 = vmatpush1.msra.mxu0 %v506
    %2161 = vmatprep.subr.mxu0 %v511
    %2162 = vmatpush1.msra.mxu0 %v510
    %2163 = vmatprep.subr.mxu0 %v515
    %2164 = vmatpush1.msra.mxu0 %v514
    %2165 = vmatprep.subr.mxu0 %v519
    %2166 = vmatpush1.msra.mxu0 %v518
    %2167 = vmatprep.subr.mxu0 %v523
    %2168 = vmatpush1.msra.mxu0 %v522
    %2169 = vmatprep.subr.mxu0 %v527
    %2170 = vmatpush1.msra.mxu0 %v526
    %2171 = vmatprep.subr.mxu0 %v531
    %2172 = vmatpush1.msra.mxu0 %v530
    %2173 = vmatprep.subr.mxu0 0.0
    %2174 = vmatpush1.msra.mxu0 0.0
    %2175 = vmatprep.subr.mxu0 0.0
    %2176 = vmatpush1.msra.mxu0 0.0
    %2177 = vmatprep.subr.mxu0 0.0
    %2178 = vmatpush1.msra.mxu0 0.0
    %2179 = vmatprep.subr.mxu0 0.0
    %2180 = vmatpush1.msra.mxu0 0.0
    %2181 = vmatprep.subr.mxu0 0.0
    %2182 = vmatpush1.msra.mxu0 0.0
    %2183 = vmatprep.subr.mxu0 0.0
    %2184 = vmatpush1.msra.mxu0 0.0
    %2185 = vmatprep.subr.mxu0 0.0
    %2186 = vmatpush1.msra.mxu0 0.0
    %2187 = vmatprep.subr.mxu0 0.0
    %2188 = vmatpush1.msra.mxu0 0.0
    %2189 = vmatprep.subr.mxu0 0.0
    %2190 = vmatpush1.msra.mxu0 0.0
    %2191 = vmatprep.subr.mxu0 0.0
    %2192 = vmatpush1.msra.mxu0 0.0
    %2193 = vmatprep.subr.mxu0 0.0
    %2194 = vmatpush1.msra.mxu0 0.0
    %2195 = vmatprep.subr.mxu0 0.0
    %2196 = vmatpush1.msra.mxu0 0.0
    %2197 = vmatprep.subr.mxu0 0.0
    %2198 = vmatpush1.msra.mxu0 0.0
    %2199 = vmatprep.subr.mxu0 0.0
    %2200 = vmatpush1.msra.mxu0 0.0
    %2201 = vmatprep.subr.mxu0 0.0
    %2202 = vmatpush1.msra.mxu0 0.0
    %2203 = vmatprep.subr.mxu0 0.0
    %2204 = vmatpush1.msra.mxu0 0.0
    %2205 = vmatprep.mubr.f32.mxu0 0.0
    %2206 = vmatmul.mubr.f32.gmra.mrb[0].mxu0 %v1900
    %v2207 = vpop.f32.mrb[0].mxu0
    %v2208 = vadd.f32 0.0, %v2207
    %v2209 = vpop.f32.mrb[0].mxu0
    %v2210 = vadd.f32 0.0, %v2209
    %2211 = vdwg.mxu0
    %v2212 = vadd.f32 %v365, %v2137
    %v2213 = vadd.f32 %v367, %v2139
    %v2214 = vadd.f32 %v442, %v2208
    %v2215 = vadd.f32 %v444, %v2210
    %v2216 = vxor.u32 %v2212, 2147483648
    %v2217 = vxor.u32 %v2213, 2147483648
    %v2218 = vxor.u32 %v2214, 2147483648
    %v2219 = vmul.f32 %v2216, 1.442695
    %v2220 = vpow.pop %v2219
    %v2221 = vmul.f32 %v2217, 1.442695
    %v2222 = vpow.pop %v2221
    %v2223 = vmul.f32 %v2218, 1.442695
    %v2224 = vpow.pop %v2223
    %v2225 = vadd.f32 %v2220, 1.0
    %v2226 = vadd.f32 %v2222, 1.0
    %v2227 = vadd.f32 %v2224, 1.0
    %v2228 = vrcp.pop %v2225
    %v2229 = vmul.f32 1.0, %v2228
    %v2230 = vrcp.pop %v2226
    %v2231 = vmul.f32 1.0, %v2230
    %v2232 = vrcp.pop %v2227
    %v2233 = vmul.f32 1.0, %v2232
    %v2234 = vtanh.pop %v2215
    %v2236 = vrot.slane %v1894, 6
    %v2238 = vmul.f32 %v2231, %v2236
    %v2239 = vmul.f32 %v2229, %v2234
    %v2240 = vadd.f32 %v2238, %v2239
    %v2241 = vtanh.pop %v2240
    %v2242 = vmul.f32 %v2233, %v2241
    %2243 = vmatprep.subr.mxu0 %v703
    %2244 = vmatpush1.msra.mxu0 %v702
    %2245 = vmatprep.subr.mxu0 %v707
    %2246 = vmatpush1.msra.mxu0 %v706
    %2247 = vmatprep.subr.mxu0 %v711
    %2248 = vmatpush1.msra.mxu0 %v710
    %2249 = vmatprep.subr.mxu0 %v715
    %2250 = vmatpush1.msra.mxu0 %v714
    %2251 = vmatprep.subr.mxu0 %v719
    %2252 = vmatpush1.msra.mxu0 %v718
    %2253 = vmatprep.subr.mxu0 %v723
    %2254 = vmatpush1.msra.mxu0 %v722
    %2255 = vmatprep.subr.mxu0 %v727
    %2256 = vmatpush1.msra.mxu0 %v726
    %2257 = vmatprep.subr.mxu0 %v731
    %2258 = vmatpush1.msra.mxu0 %v730
    %2259 = vmatprep.subr.mxu0 %v735
    %2260 = vmatpush1.msra.mxu0 %v734
    %2261 = vmatprep.subr.mxu0 %v739
    %2262 = vmatpush1.msra.mxu0 %v738
    %2263 = vmatprep.subr.mxu0 %v743
    %2264 = vmatpush1.msra.mxu0 %v742
    %2265 = vmatprep.subr.mxu0 %v747
    %2266 = vmatpush1.msra.mxu0 %v746
    %2267 = vmatprep.subr.mxu0 %v751
    %2268 = vmatpush1.msra.mxu0 %v750
    %2269 = vmatprep.subr.mxu0 %v755
    %2270 = vmatpush1.msra.mxu0 %v754
    %2271 = vmatprep.subr.mxu0 %v759
    %2272 = vmatpush1.msra.mxu0 %v758
    %2273 = vmatprep.subr.mxu0 %v763
    %2274 = vmatpush1.msra.mxu0 %v762
    %2275 = vmatprep.subr.mxu0 %v767
    %2276 = vmatpush1.msra.mxu0 %v766
    %2277 = vmatprep.subr.mxu0 %v771
    %2278 = vmatpush1.msra.mxu0 %v770
    %2279 = vmatprep.subr.mxu0 %v775
    %2280 = vmatpush1.msra.mxu0 %v774
    %2281 = vmatprep.subr.mxu0 %v779
    %2282 = vmatpush1.msra.mxu0 %v778
    %2283 = vmatprep.subr.mxu0 %v783
    %2284 = vmatpush1.msra.mxu0 %v782
    %2285 = vmatprep.subr.mxu0 %v787
    %2286 = vmatpush1.msra.mxu0 %v786
    %2287 = vmatprep.subr.mxu0 %v791
    %2288 = vmatpush1.msra.mxu0 %v790
    %2289 = vmatprep.subr.mxu0 %v795
    %2290 = vmatpush1.msra.mxu0 %v794
    %2291 = vmatprep.subr.mxu0 %v799
    %2292 = vmatpush1.msra.mxu0 %v798
    %2293 = vmatprep.subr.mxu0 %v803
    %2294 = vmatpush1.msra.mxu0 %v802
    %2295 = vmatprep.subr.mxu0 %v807
    %2296 = vmatpush1.msra.mxu0 %v806
    %2297 = vmatprep.subr.mxu0 %v811
    %2298 = vmatpush1.msra.mxu0 %v810
    %2299 = vmatprep.subr.mxu0 %v815
    %2300 = vmatpush1.msra.mxu0 %v814
    %2301 = vmatprep.subr.mxu0 %v819
    %2302 = vmatpush1.msra.mxu0 %v818
    %2303 = vmatprep.subr.mxu0 %v823
    %2304 = vmatpush1.msra.mxu0 %v822
    %2305 = vmatprep.subr.mxu0 %v827
    %2306 = vmatpush1.msra.mxu0 %v826
    %2307 = vmatprep.mubr.f32.mxu0 %v2069
    %2308 = vmatmul.mubr.f32.gmra.mrb[0].mxu0 %v2242
    %v2309 = vpop.f32.mrb[0].mxu0
    %v2310 = vadd.f32 %v451, %v2309
    %v2311 = vpop.f32.mrb[0].mxu0
    %v2312 = vadd.f32 %v455, %v2311
    %2313 = vdwg.mxu0
    %2314 = vmatprep.subr.mxu0 %v705
    %2315 = vmatpush1.msra.mxu0 %v704
    %2316 = vmatprep.subr.mxu0 %v709
    %2317 = vmatpush1.msra.mxu0 %v708
    %2318 = vmatprep.subr.mxu0 %v713
    %2319 = vmatpush1.msra.mxu0 %v712
    %2320 = vmatprep.subr.mxu0 %v717
    %2321 = vmatpush1.msra.mxu0 %v716
    %2322 = vmatprep.subr.mxu0 %v721
    %2323 = vmatpush1.msra.mxu0 %v720
    %2324 = vmatprep.subr.mxu0 %v725
    %2325 = vmatpush1.msra.mxu0 %v724
    %2326 = vmatprep.subr.mxu0 %v729
    %2327 = vmatpush1.msra.mxu0 %v728
    %2328 = vmatprep.subr.mxu0 %v733
    %2329 = vmatpush1.msra.mxu0 %v732
    %2330 = vmatprep.subr.mxu0 %v737
    %2331 = vmatpush1.msra.mxu0 %v736
    %2332 = vmatprep.subr.mxu0 %v741
    %2333 = vmatpush1.msra.mxu0 %v740
    %2334 = vmatprep.subr.mxu0 %v745
    %2335 = vmatpush1.msra.mxu0 %v744
    %2336 = vmatprep.subr.mxu0 %v749
    %2337 = vmatpush1.msra.mxu0 %v748
    %2338 = vmatprep.subr.mxu0 %v753
    %2339 = vmatpush1.msra.mxu0 %v752
    %2340 = vmatprep.subr.mxu0 %v757
    %2341 = vmatpush1.msra.mxu0 %v756
    %2342 = vmatprep.subr.mxu0 %v761
    %2343 = vmatpush1.msra.mxu0 %v760
    %2344 = vmatprep.subr.mxu0 %v765
    %2345 = vmatpush1.msra.mxu0 %v764
    %2346 = vmatprep.subr.mxu0 %v769
    %2347 = vmatpush1.msra.mxu0 %v768
    %2348 = vmatprep.subr.mxu0 %v773
    %2349 = vmatpush1.msra.mxu0 %v772
    %2350 = vmatprep.subr.mxu0 %v777
    %2351 = vmatpush1.msra.mxu0 %v776
    %2352 = vmatprep.subr.mxu0 %v781
    %2353 = vmatpush1.msra.mxu0 %v780
    %2354 = vmatprep.subr.mxu0 %v785
    %2355 = vmatpush1.msra.mxu0 %v784
    %2356 = vmatprep.subr.mxu0 %v789
    %2357 = vmatpush1.msra.mxu0 %v788
    %2358 = vmatprep.subr.mxu0 %v793
    %2359 = vmatpush1.msra.mxu0 %v792
    %2360 = vmatprep.subr.mxu0 %v797
    %2361 = vmatpush1.msra.mxu0 %v796
    %2362 = vmatprep.subr.mxu0 %v801
    %2363 = vmatpush1.msra.mxu0 %v800
    %2364 = vmatprep.subr.mxu0 %v805
    %2365 = vmatpush1.msra.mxu0 %v804
    %2366 = vmatprep.subr.mxu0 %v809
    %2367 = vmatpush1.msra.mxu0 %v808
    %2368 = vmatprep.subr.mxu0 %v813
    %2369 = vmatpush1.msra.mxu0 %v812
    %2370 = vmatprep.subr.mxu0 %v817
    %2371 = vmatpush1.msra.mxu0 %v816
    %2372 = vmatprep.subr.mxu0 %v821
    %2373 = vmatpush1.msra.mxu0 %v820
    %2374 = vmatprep.subr.mxu0 %v825
    %2375 = vmatpush1.msra.mxu0 %v824
    %2376 = vmatprep.subr.mxu0 %v829
    %2377 = vmatpush1.msra.mxu0 %v828
    %2378 = vmatprep.mubr.f32.mxu0 %v2069
    %2379 = vmatmul.mubr.f32.gmra.mrb[0].mxu0 %v2242
    %v2380 = vpop.f32.mrb[0].mxu0
    %v2381 = vadd.f32 %v459, %v2380
    %v2382 = vpop.f32.mrb[0].mxu0
    %v2383 = vadd.f32 %v463, %v2382
    %2384 = vdwg.mxu0
    %v2385 = vxor.u32 %v2310, 2147483648
    %v2386 = vxor.u32 %v2312, 2147483648
    %v2387 = vxor.u32 %v2381, 2147483648
    %v2388 = vmul.f32 %v2385, 1.442695
    %v2389 = vpow.pop %v2388
    %v2390 = vmul.f32 %v2386, 1.442695
    %v2391 = vpow.pop %v2390
    %v2392 = vmul.f32 %v2387, 1.442695
    %v2393 = vpow.pop %v2392
    %v2394 = vadd.f32 %v2389, 1.0
    %v2395 = vadd.f32 %v2391, 1.0
    %v2396 = vadd.f32 %v2393, 1.0
    %v2397 = vrcp.pop %v2394
    %v2398 = vmul.f32 1.0, %v2397
    %v2399 = vrcp.pop %v2395
    %v2400 = vmul.f32 1.0, %v2399
    %v2401 = vrcp.pop %v2396
    %v2402 = vmul.f32 1.0, %v2401
    %v2403 = vtanh.pop %v2383
    %v2404 = vmul.f32 %v2400, %v2067
    %v2405 = vmul.f32 %v2398, %v2403
    %v2406 = vadd.f32 %v2404, %v2405
    %v2407 = vtanh.pop %v2406
    %v2408 = vmul.f32 %v2402, %v2407
    %2409 = vmatprep.subr.mxu0 %v469
    %2410 = vmatpush1.msra.mxu0 %v468
    %2411 = vmatprep.subr.mxu0 %v473
    %2412 = vmatpush1.msra.mxu0 %v472
    %2413 = vmatprep.subr.mxu0 %v477
    %2414 = vmatpush1.msra.mxu0 %v476
    %2415 = vmatprep.subr.mxu0 %v481
    %2416 = vmatpush1.msra.mxu0 %v480
    %2417 = vmatprep.subr.mxu0 %v485
    %2418 = vmatpush1.msra.mxu0 %v484
    %2419 = vmatprep.subr.mxu0 %v489
    %2420 = vmatpush1.msra.mxu0 %v488
    %2421 = vmatprep.subr.mxu0 %v493
    %2422 = vmatpush1.msra.mxu0 %v492
    %2423 = vmatprep.subr.mxu0 %v497
    %2424 = vmatpush1.msra.mxu0 %v496
    %2425 = vmatprep.subr.mxu0 %v501
    %2426 = vmatpush1.msra.mxu0 %v500
    %2427 = vmatprep.subr.mxu0 %v505
    %2428 = vmatpush1.msra.mxu0 %v504
    %2429 = vmatprep.subr.mxu0 %v509
    %2430 = vmatpush1.msra.mxu0 %v508
    %2431 = vmatprep.subr.mxu0 %v513
    %2432 = vmatpush1.msra.mxu0 %v512
    %2433 = vmatprep.subr.mxu0 %v517
    %2434 = vmatpush1.msra.mxu0 %v516
    %2435 = vmatprep.subr.mxu0 %v521
    %2436 = vmatpush1.msra.mxu0 %v520
    %2437 = vmatprep.subr.mxu0 %v525
    %2438 = vmatpush1.msra.mxu0 %v524
    %2439 = vmatprep.subr.mxu0 %v529
    %2440 = vmatpush1.msra.mxu0 %v528
    %2441 = vmatprep.subr.mxu0 0.0
    %2442 = vmatpush1.msra.mxu0 0.0
    %2443 = vmatprep.subr.mxu0 0.0
    %2444 = vmatpush1.msra.mxu0 0.0
    %2445 = vmatprep.subr.mxu0 0.0
    %2446 = vmatpush1.msra.mxu0 0.0
    %2447 = vmatprep.subr.mxu0 0.0
    %2448 = vmatpush1.msra.mxu0 0.0
    %2449 = vmatprep.subr.mxu0 0.0
    %2450 = vmatpush1.msra.mxu0 0.0
    %2451 = vmatprep.subr.mxu0 0.0
    %2452 = vmatpush1.msra.mxu0 0.0
    %2453 = vmatprep.subr.mxu0 0.0
    %2454 = vmatpush1.msra.mxu0 0.0
    %2455 = vmatprep.subr.mxu0 0.0
    %2456 = vmatpush1.msra.mxu0 0.0
    %2457 = vmatprep.subr.mxu0 0.0
    %2458 = vmatpush1.msra.mxu0 0.0
    %2459 = vmatprep.subr.mxu0 0.0
    %2460 = vmatpush1.msra.mxu0 0.0
    %2461 = vmatprep.subr.mxu0 0.0
    %2462 = vmatpush1.msra.mxu0 0.0
    %2463 = vmatprep.subr.mxu0 0.0
    %2464 = vmatpush1.msra.mxu0 0.0
    %2465 = vmatprep.subr.mxu0 0.0
    %2466 = vmatpush1.msra.mxu0 0.0
    %2467 = vmatprep.subr.mxu0 0.0
    %2468 = vmatpush1.msra.mxu0 0.0
    %2469 = vmatprep.subr.mxu0 0.0
    %2470 = vmatpush1.msra.mxu0 0.0
    %2471 = vmatprep.subr.mxu0 0.0
    %2472 = vmatpush1.msra.mxu0 0.0
    %2473 = vmatprep.mubr.f32.mxu0 0.0
    %2474 = vmatmul.mubr.f32.gmra.mrb[0].mxu0 %v2242
    %v2475 = vpop.f32.mrb[0].mxu0
    %v2476 = vadd.f32 0.0, %v2475
    %v2477 = vpop.f32.mrb[0].mxu0
    %v2478 = vadd.f32 0.0, %v2477
    %2479 = vdwg.mxu0
    %2480 = vmatprep.subr.mxu0 %v471
    %2481 = vmatpush1.msra.mxu0 %v470
    %2482 = vmatprep.subr.mxu0 %v475
    %2483 = vmatpush1.msra.mxu0 %v474
    %2484 = vmatprep.subr.mxu0 %v479
    %2485 = vmatpush1.msra.mxu0 %v478
    %2486 = vmatprep.subr.mxu0 %v483
    %2487 = vmatpush1.msra.mxu0 %v482
    %2488 = vmatprep.subr.mxu0 %v487
    %2489 = vmatpush1.msra.mxu0 %v486
    %2490 = vmatprep.subr.mxu0 %v491
    %2491 = vmatpush1.msra.mxu0 %v490
    %2492 = vmatprep.subr.mxu0 %v495
    %2493 = vmatpush1.msra.mxu0 %v494
    %2494 = vmatprep.subr.mxu0 %v499
    %2495 = vmatpush1.msra.mxu0 %v498
    %2496 = vmatprep.subr.mxu0 %v503
    %2497 = vmatpush1.msra.mxu0 %v502
    %2498 = vmatprep.subr.mxu0 %v507
    %2499 = vmatpush1.msra.mxu0 %v506
    %2500 = vmatprep.subr.mxu0 %v511
    %2501 = vmatpush1.msra.mxu0 %v510
    %2502 = vmatprep.subr.mxu0 %v515
    %2503 = vmatpush1.msra.mxu0 %v514
    %2504 = vmatprep.subr.mxu0 %v519
    %2505 = vmatpush1.msra.mxu0 %v518
    %2506 = vmatprep.subr.mxu0 %v523
    %2507 = vmatpush1.msra.mxu0 %v522
    %2508 = vmatprep.subr.mxu0 %v527
    %2509 = vmatpush1.msra.mxu0 %v526
    %2510 = vmatprep.subr.mxu0 %v531
    %2511 = vmatpush1.msra.mxu0 %v530
    %2512 = vmatprep.subr.mxu0 0.0
    %2513 = vmatpush1.msra.mxu0 0.0
    %2514 = vmatprep.subr.mxu0 0.0
    %2515 = vmatpush1.msra.mxu0 0.0
    %2516 = vmatprep.subr.mxu0 0.0
    %2517 = vmatpush1.msra.mxu0 0.0
    %2518 = vmatprep.subr.mxu0 0.0
    %2519 = vmatpush1.msra.mxu0 0.0
    %2520 = vmatprep.subr.mxu0 0.0
    %2521 = vmatpush1.msra.mxu0 0.0
    %2522 = vmatprep.subr.mxu0 0.0
    %2523 = vmatpush1.msra.mxu0 0.0
    %2524 = vmatprep.subr.mxu0 0.0
    %2525 = vmatpush1.msra.mxu0 0.0
    %2526 = vmatprep.subr.mxu0 0.0
    %2527 = vmatpush1.msra.mxu0 0.0
    %2528 = vmatprep.subr.mxu0 0.0
    %2529 = vmatpush1.msra.mxu0 0.0
    %2530 = vmatprep.subr.mxu0 0.0
    %2531 = vmatpush1.msra.mxu0 0.0
    %2532 = vmatprep.subr.mxu0 0.0
    %2533 = vmatpush1.msra.mxu0 0.0
    %2534 = vmatprep.subr.mxu0 0.0
    %2535 = vmatpush1.msra.mxu0 0.0
    %2536 = vmatprep.subr.mxu0 0.0
    %2537 = vmatpush1.msra.mxu0 0.0
    %2538 = vmatprep.subr.mxu0 0.0
    %2539 = vmatpush1.msra.mxu0 0.0
    %2540 = vmatprep.subr.mxu0 0.0
    %2541 = vmatpush1.msra.mxu0 0.0
    %2542 = vmatprep.subr.mxu0 0.0
    %2543 = vmatpush1.msra.mxu0 0.0
    %2544 = vmatprep.mubr.f32.mxu0 0.0
    %2545 = vmatmul.mubr.f32.gmra.mrb[0].mxu0 %v2242
    %v2546 = vpop.f32.mrb[0].mxu0
    %v2547 = vadd.f32 0.0, %v2546
    %v2548 = vpop.f32.mrb[0].mxu0
    %v2549 = vadd.f32 0.0, %v2548
    %2550 = vdwg.mxu0
    %v2555 = vrot.slane %v2476, 6
    %v2556 = vrot.slane %v2478, 6
    %v2557 = vrot.slane %v2547, 6
    %v2558 = vrot.slane %v2549, 6
    %v2563 = vadd.f32 %v365, %v2555
    %v2564 = vadd.f32 %v367, %v2556
    %v2565 = vadd.f32 %v442, %v2557
    %v2566 = vadd.f32 %v444, %v2558
    %v2567 = vxor.u32 %v2563, 2147483648
    %v2568 = vxor.u32 %v2564, 2147483648
    %v2569 = vxor.u32 %v2565, 2147483648
    %v2570 = vmul.f32 %v2567, 1.442695
    %v2571 = vpow.pop %v2570
    %v2572 = vmul.f32 %v2568, 1.442695
    %v2573 = vpow.pop %v2572
    %v2574 = vmul.f32 %v2569, 1.442695
    %v2575 = vpow.pop %v2574
    %v2576 = vadd.f32 %v2571, 1.0
    %v2577 = vadd.f32 %v2573, 1.0
    %v2578 = vadd.f32 %v2575, 1.0
    %v2579 = vrcp.pop %v2576
    %v2580 = vmul.f32 1.0, %v2579
    %v2581 = vrcp.pop %v2577
    %v2582 = vmul.f32 1.0, %v2581
    %v2583 = vrcp.pop %v2578
    %v2584 = vmul.f32 1.0, %v2583
    %v2585 = vtanh.pop %v2566
    %v2587 = vrot.slane %v2240, 6
    %v2589 = vmul.f32 %v2582, %v2587
    %v2590 = vmul.f32 %v2580, %v2585
    %v2591 = vadd.f32 %v2589, %v2590
    %v2592 = vtanh.pop %v2591
    %v2593 = vmul.f32 %v2584, %v2592
    %v2595 = vrot.slane %v2408, 6
    %v2597 = vrot.slane %v2593, 2
    %v2598 = vrot.slane %v2595, 2
    %2601 = vmatprep.subr.mxu0 %v703
    %2602 = vmatpush1.msra.mxu0 %v702
    %2603 = vmatprep.subr.mxu0 %v707
    %2604 = vmatpush1.msra.mxu0 %v706
    %2605 = vmatprep.subr.mxu0 %v711
    %2606 = vmatpush1.msra.mxu0 %v710
    %2607 = vmatprep.subr.mxu0 %v715
    %2608 = vmatpush1.msra.mxu0 %v714
    %2609 = vmatprep.subr.mxu0 %v719
    %2610 = vmatpush1.msra.mxu0 %v718
    %2611 = vmatprep.subr.mxu0 %v723
    %2612 = vmatpush1.msra.mxu0 %v722
    %2613 = vmatprep.subr.mxu0 %v727
    %2614 = vmatpush1.msra.mxu0 %v726
    %2615 = vmatprep.subr.mxu0 %v731
    %2616 = vmatpush1.msra.mxu0 %v730
    %2617 = vmatprep.subr.mxu0 %v735
    %2618 = vmatpush1.msra.mxu0 %v734
    %2619 = vmatprep.subr.mxu0 %v739
    %2620 = vmatpush1.msra.mxu0 %v738
    %2621 = vmatprep.subr.mxu0 %v743
    %2622 = vmatpush1.msra.mxu0 %v742
    %2623 = vmatprep.subr.mxu0 %v747
    %2624 = vmatpush1.msra.mxu0 %v746
    %2625 = vmatprep.subr.mxu0 %v751
    %2626 = vmatpush1.msra.mxu0 %v750
    %2627 = vmatprep.subr.mxu0 %v755
    %2628 = vmatpush1.msra.mxu0 %v754
    %2629 = vmatprep.subr.mxu0 %v759
    %2630 = vmatpush1.msra.mxu0 %v758
    %2631 = vmatprep.subr.mxu0 %v763
    %2632 = vmatpush1.msra.mxu0 %v762
    %2633 = vmatprep.subr.mxu0 %v767
    %2634 = vmatpush1.msra.mxu0 %v766
    %2635 = vmatprep.subr.mxu0 %v771
    %2636 = vmatpush1.msra.mxu0 %v770
    %2637 = vmatprep.subr.mxu0 %v775
    %2638 = vmatpush1.msra.mxu0 %v774
    %2639 = vmatprep.subr.mxu0 %v779
    %2640 = vmatpush1.msra.mxu0 %v778
    %2641 = vmatprep.subr.mxu0 %v783
    %2642 = vmatpush1.msra.mxu0 %v782
    %2643 = vmatprep.subr.mxu0 %v787
    %2644 = vmatpush1.msra.mxu0 %v786
    %2645 = vmatprep.subr.mxu0 %v791
    %2646 = vmatpush1.msra.mxu0 %v790
    %2647 = vmatprep.subr.mxu0 %v795
    %2648 = vmatpush1.msra.mxu0 %v794
    %2649 = vmatprep.subr.mxu0 %v799
    %2650 = vmatpush1.msra.mxu0 %v798
    %2651 = vmatprep.subr.mxu0 %v803
    %2652 = vmatpush1.msra.mxu0 %v802
    %2653 = vmatprep.subr.mxu0 %v807
    %2654 = vmatpush1.msra.mxu0 %v806
    %2655 = vmatprep.subr.mxu0 %v811
    %2656 = vmatpush1.msra.mxu0 %v810
    %2657 = vmatprep.subr.mxu0 %v815
    %2658 = vmatpush1.msra.mxu0 %v814
    %2659 = vmatprep.subr.mxu0 %v819
    %2660 = vmatpush1.msra.mxu0 %v818
    %2661 = vmatprep.subr.mxu0 %v823
    %2662 = vmatpush1.msra.mxu0 %v822
    %2663 = vmatprep.subr.mxu0 %v827
    %2664 = vmatpush1.msra.mxu0 %v826
    %2665 = vmatprep.mubr.f32.mxu0 %v2598
    %2666 = vmatmul.mubr.f32.gmra.mrb[0].mxu0 %v2597
    %v2667 = vpop.f32.mrb[0].mxu0
    %v2668 = vadd.f32 %v451, %v2667
    %v2669 = vpop.f32.mrb[0].mxu0
    %v2670 = vadd.f32 %v455, %v2669
    %2671 = vdwg.mxu0
    %2672 = vmatprep.subr.mxu0 %v705
    %2673 = vmatpush1.msra.mxu0 %v704
    %2674 = vmatprep.subr.mxu0 %v709
    %2675 = vmatpush1.msra.mxu0 %v708
    %2676 = vmatprep.subr.mxu0 %v713
    %2677 = vmatpush1.msra.mxu0 %v712
    %2678 = vmatprep.subr.mxu0 %v717
    %2679 = vmatpush1.msra.mxu0 %v716
    %2680 = vmatprep.subr.mxu0 %v721
    %2681 = vmatpush1.msra.mxu0 %v720
    %2682 = vmatprep.subr.mxu0 %v725
    %2683 = vmatpush1.msra.mxu0 %v724
    %2684 = vmatprep.subr.mxu0 %v729
    %2685 = vmatpush1.msra.mxu0 %v728
    %2686 = vmatprep.subr.mxu0 %v733
    %2687 = vmatpush1.msra.mxu0 %v732
    %2688 = vmatprep.subr.mxu0 %v737
    %2689 = vmatpush1.msra.mxu0 %v736
    %2690 = vmatprep.subr.mxu0 %v741
    %2691 = vmatpush1.msra.mxu0 %v740
    %2692 = vmatprep.subr.mxu0 %v745
    %2693 = vmatpush1.msra.mxu0 %v744
    %2694 = vmatprep.subr.mxu0 %v749
    %2695 = vmatpush1.msra.mxu0 %v748
    %2696 = vmatprep.subr.mxu0 %v753
    %2697 = vmatpush1.msra.mxu0 %v752
    %2698 = vmatprep.subr.mxu0 %v757
    %2699 = vmatpush1.msra.mxu0 %v756
    %2700 = vmatprep.subr.mxu0 %v761
    %2701 = vmatpush1.msra.mxu0 %v760
    %2702 = vmatprep.subr.mxu0 %v765
    %2703 = vmatpush1.msra.mxu0 %v764
    %2704 = vmatprep.subr.mxu0 %v769
    %2705 = vmatpush1.msra.mxu0 %v768
    %2706 = vmatprep.subr.mxu0 %v773
    %2707 = vmatpush1.msra.mxu0 %v772
    %2708 = vmatprep.subr.mxu0 %v777
    %2709 = vmatpush1.msra.mxu0 %v776
    %2710 = vmatprep.subr.mxu0 %v781
    %2711 = vmatpush1.msra.mxu0 %v780
    %2712 = vmatprep.subr.mxu0 %v785
    %2713 = vmatpush1.msra.mxu0 %v784
    %2714 = vmatprep.subr.mxu0 %v789
    %2715 = vmatpush1.msra.mxu0 %v788
    %2716 = vmatprep.subr.mxu0 %v793
    %2717 = vmatpush1.msra.mxu0 %v792
    %2718 = vmatprep.subr.mxu0 %v797
    %2719 = vmatpush1.msra.mxu0 %v796
    %2720 = vmatprep.subr.mxu0 %v801
    %2721 = vmatpush1.msra.mxu0 %v800
    %2722 = vmatprep.subr.mxu0 %v805
    %2723 = vmatpush1.msra.mxu0 %v804
    %2724 = vmatprep.subr.mxu0 %v809
    %2725 = vmatpush1.msra.mxu0 %v808
    %2726 = vmatprep.subr.mxu0 %v813
    %2727 = vmatpush1.msra.mxu0 %v812
    %2728 = vmatprep.subr.mxu0 %v817
    %2729 = vmatpush1.msra.mxu0 %v816
    %2730 = vmatprep.subr.mxu0 %v821
    %2731 = vmatpush1.msra.mxu0 %v820
    %2732 = vmatprep.subr.mxu0 %v825
    %2733 = vmatpush1.msra.mxu0 %v824
    %2734 = vmatprep.subr.mxu0 %v829
    %2735 = vmatpush1.msra.mxu0 %v828
    %2736 = vmatprep.mubr.f32.mxu0 %v2598
    %2737 = vmatmul.mubr.f32.gmra.mrb[0].mxu0 %v2597
    %v2738 = vpop.f32.mrb[0].mxu0
    %v2739 = vadd.f32 %v459, %v2738
    %v2740 = vpop.f32.mrb[0].mxu0
    %v2741 = vadd.f32 %v463, %v2740
    %2742 = vdwg.mxu0
    %v2743 = vxor.u32 %v2668, 2147483648
    %v2744 = vxor.u32 %v2670, 2147483648
    %v2745 = vxor.u32 %v2739, 2147483648
    %v2746 = vmul.f32 %v2743, 1.442695
    %v2747 = vpow.pop %v2746
    %v2748 = vmul.f32 %v2744, 1.442695
    %v2749 = vpow.pop %v2748
    %v2750 = vmul.f32 %v2745, 1.442695
    %v2751 = vpow.pop %v2750
    %v2752 = vadd.f32 %v2747, 1.0
    %v2753 = vadd.f32 %v2749, 1.0
    %v2754 = vadd.f32 %v2751, 1.0
    %v2755 = vrcp.pop %v2752
    %v2756 = vmul.f32 1.0, %v2755
    %v2757 = vrcp.pop %v2753
    %v2758 = vmul.f32 1.0, %v2757
    %v2759 = vrcp.pop %v2754
    %v2760 = vmul.f32 1.0, %v2759
    %v2761 = vtanh.pop %v2741
    %v2762 = vmul.f32 %v2758, %v2406
    %v2763 = vmul.f32 %v2756, %v2761
    %v2764 = vadd.f32 %v2762, %v2763
    %v2765 = vtanh.pop %v2764
    %v2766 = vmul.f32 %v2760, %v2765
    %2767 = vmatprep.subr.mxu0 %v469
    %2768 = vmatpush1.msra.mxu0 %v468
    %2769 = vmatprep.subr.mxu0 %v473
    %2770 = vmatpush1.msra.mxu0 %v472
    %2771 = vmatprep.subr.mxu0 %v477
    %2772 = vmatpush1.msra.mxu0 %v476
    %2773 = vmatprep.subr.mxu0 %v481
    %2774 = vmatpush1.msra.mxu0 %v480
    %2775 = vmatprep.subr.mxu0 %v485
    %2776 = vmatpush1.msra.mxu0 %v484
    %2777 = vmatprep.subr.mxu0 %v489
    %2778 = vmatpush1.msra.mxu0 %v488
    %2779 = vmatprep.subr.mxu0 %v493
    %2780 = vmatpush1.msra.mxu0 %v492
    %2781 = vmatprep.subr.mxu0 %v497
    %2782 = vmatpush1.msra.mxu0 %v496
    %2783 = vmatprep.subr.mxu0 %v501
    %2784 = vmatpush1.msra.mxu0 %v500
    %2785 = vmatprep.subr.mxu0 %v505
    %2786 = vmatpush1.msra.mxu0 %v504
    %2787 = vmatprep.subr.mxu0 %v509
    %2788 = vmatpush1.msra.mxu0 %v508
    %2789 = vmatprep.subr.mxu0 %v513
    %2790 = vmatpush1.msra.mxu0 %v512
    %2791 = vmatprep.subr.mxu0 %v517
    %2792 = vmatpush1.msra.mxu0 %v516
    %2793 = vmatprep.subr.mxu0 %v521
    %2794 = vmatpush1.msra.mxu0 %v520
    %2795 = vmatprep.subr.mxu0 %v525
    %2796 = vmatpush1.msra.mxu0 %v524
    %2797 = vmatprep.subr.mxu0 %v529
    %2798 = vmatpush1.msra.mxu0 %v528
    %2799 = vmatprep.subr.mxu0 0.0
    %2800 = vmatpush1.msra.mxu0 0.0
    %2801 = vmatprep.subr.mxu0 0.0
    %2802 = vmatpush1.msra.mxu0 0.0
    %2803 = vmatprep.subr.mxu0 0.0
    %2804 = vmatpush1.msra.mxu0 0.0
    %2805 = vmatprep.subr.mxu0 0.0
    %2806 = vmatpush1.msra.mxu0 0.0
    %2807 = vmatprep.subr.mxu0 0.0
    %2808 = vmatpush1.msra.mxu0 0.0
    %2809 = vmatprep.subr.mxu0 0.0
    %2810 = vmatpush1.msra.mxu0 0.0
    %2811 = vmatprep.subr.mxu0 0.0
    %2812 = vmatpush1.msra.mxu0 0.0
    %2813 = vmatprep.subr.mxu0 0.0
    %2814 = vmatpush1.msra.mxu0 0.0
    %2815 = vmatprep.subr.mxu0 0.0
    %2816 = vmatpush1.msra.mxu0 0.0
    %2817 = vmatprep.subr.mxu0 0.0
    %2818 = vmatpush1.msra.mxu0 0.0
    %2819 = vmatprep.subr.mxu0 0.0
    %2820 = vmatpush1.msra.mxu0 0.0
    %2821 = vmatprep.subr.mxu0 0.0
    %2822 = vmatpush1.msra.mxu0 0.0
    %2823 = vmatprep.subr.mxu0 0.0
    %2824 = vmatpush1.msra.mxu0 0.0
    %2825 = vmatprep.subr.mxu0 0.0
    %2826 = vmatpush1.msra.mxu0 0.0
    %2827 = vmatprep.subr.mxu0 0.0
    %2828 = vmatpush1.msra.mxu0 0.0
    %2829 = vmatprep.subr.mxu0 0.0
    %2830 = vmatpush1.msra.mxu0 0.0
    %2831 = vmatprep.mubr.f32.mxu0 0.0
    %2832 = vmatmul.mubr.f32.gmra.mrb[0].mxu0 %v2597
    %v2833 = vpop.f32.mrb[0].mxu0
    %v2834 = vadd.f32 0.0, %v2833
    %v2835 = vpop.f32.mrb[0].mxu0
    %v2836 = vadd.f32 0.0, %v2835
    %2837 = vdwg.mxu0
    %2838 = vmatprep.subr.mxu0 %v471
    %2839 = vmatpush1.msra.mxu0 %v470
    %2840 = vmatprep.subr.mxu0 %v475
    %2841 = vmatpush1.msra.mxu0 %v474
    %2842 = vmatprep.subr.mxu0 %v479
    %2843 = vmatpush1.msra.mxu0 %v478
    %2844 = vmatprep.subr.mxu0 %v483
    %2845 = vmatpush1.msra.mxu0 %v482
    %2846 = vmatprep.subr.mxu0 %v487
    %2847 = vmatpush1.msra.mxu0 %v486
    %2848 = vmatprep.subr.mxu0 %v491
    %2849 = vmatpush1.msra.mxu0 %v490
    %2850 = vmatprep.subr.mxu0 %v495
    %2851 = vmatpush1.msra.mxu0 %v494
    %2852 = vmatprep.subr.mxu0 %v499
    %2853 = vmatpush1.msra.mxu0 %v498
    %2854 = vmatprep.subr.mxu0 %v503
    %2855 = vmatpush1.msra.mxu0 %v502
    %2856 = vmatprep.subr.mxu0 %v507
    %2857 = vmatpush1.msra.mxu0 %v506
    %2858 = vmatprep.subr.mxu0 %v511
    %2859 = vmatpush1.msra.mxu0 %v510
    %2860 = vmatprep.subr.mxu0 %v515
    %2861 = vmatpush1.msra.mxu0 %v514
    %2862 = vmatprep.subr.mxu0 %v519
    %2863 = vmatpush1.msra.mxu0 %v518
    %2864 = vmatprep.subr.mxu0 %v523
    %2865 = vmatpush1.msra.mxu0 %v522
    %2866 = vmatprep.subr.mxu0 %v527
    %2867 = vmatpush1.msra.mxu0 %v526
    %2868 = vmatprep.subr.mxu0 %v531
    %2869 = vmatpush1.msra.mxu0 %v530
    %2870 = vmatprep.subr.mxu0 0.0
    %2871 = vmatpush1.msra.mxu0 0.0
    %2872 = vmatprep.subr.mxu0 0.0
    %2873 = vmatpush1.msra.mxu0 0.0
    %2874 = vmatprep.subr.mxu0 0.0
    %2875 = vmatpush1.msra.mxu0 0.0
    %2876 = vmatprep.subr.mxu0 0.0
    %2877 = vmatpush1.msra.mxu0 0.0
    %2878 = vmatprep.subr.mxu0 0.0
    %2879 = vmatpush1.msra.mxu0 0.0
    %2880 = vmatprep.subr.mxu0 0.0
    %2881 = vmatpush1.msra.mxu0 0.0
    %2882 = vmatprep.subr.mxu0 0.0
    %2883 = vmatpush1.msra.mxu0 0.0
    %2884 = vmatprep.subr.mxu0 0.0
    %2885 = vmatpush1.msra.mxu0 0.0
    %2886 = vmatprep.subr.mxu0 0.0
    %2887 = vmatpush1.msra.mxu0 0.0
    %2888 = vmatprep.subr.mxu0 0.0
    %2889 = vmatpush1.msra.mxu0 0.0
    %2890 = vmatprep.subr.mxu0 0.0
    %2891 = vmatpush1.msra.mxu0 0.0
    %2892 = vmatprep.subr.mxu0 0.0
    %2893 = vmatpush1.msra.mxu0 0.0
    %2894 = vmatprep.subr.mxu0 0.0
    %2895 = vmatpush1.msra.mxu0 0.0
    %2896 = vmatprep.subr.mxu0 0.0
    %2897 = vmatpush1.msra.mxu0 0.0
    %2898 = vmatprep.subr.mxu0 0.0
    %2899 = vmatpush1.msra.mxu0 0.0
    %2900 = vmatprep.subr.mxu0 0.0
    %2901 = vmatpush1.msra.mxu0 0.0
    %2902 = vmatprep.mubr.f32.mxu0 0.0
    %2903 = vmatmul.mubr.f32.gmra.mrb[0].mxu0 %v2597
    %v2904 = vpop.f32.mrb[0].mxu0
    %v2905 = vadd.f32 0.0, %v2904
    %v2906 = vpop.f32.mrb[0].mxu0
    %v2907 = vadd.f32 0.0, %v2906
    %2908 = vdwg.mxu0
    %v2913 = vrot.slane %v2834, 4
    %v2914 = vrot.slane %v2836, 4
    %v2915 = vrot.slane %v2905, 4
    %v2916 = vrot.slane %v2907, 4
    %v2921 = vadd.f32 %v365, %v2913
    %v2922 = vadd.f32 %v367, %v2914
    %v2923 = vadd.f32 %v442, %v2915
    %v2924 = vadd.f32 %v444, %v2916
    %v2925 = vxor.u32 %v2921, 2147483648
    %v2926 = vxor.u32 %v2922, 2147483648
    %v2927 = vxor.u32 %v2923, 2147483648
    %v2928 = vmul.f32 %v2925, 1.442695
    %v2929 = vpow.pop %v2928
    %v2930 = vmul.f32 %v2926, 1.442695
    %v2931 = vpow.pop %v2930
    %v2932 = vmul.f32 %v2927, 1.442695
    %v2933 = vpow.pop %v2932
    %v2934 = vadd.f32 %v2929, 1.0
    %v2935 = vadd.f32 %v2931, 1.0
    %v2936 = vadd.f32 %v2933, 1.0
    %v2937 = vrcp.pop %v2934
    %v2938 = vmul.f32 1.0, %v2937
    %v2939 = vrcp.pop %v2935
    %v2940 = vmul.f32 1.0, %v2939
    %v2941 = vrcp.pop %v2936
    %v2942 = vmul.f32 1.0, %v2941
    %v2943 = vtanh.pop %v2924
    %v2945 = vrot.slane %v2591, 6
    %v2947 = vmul.f32 %v2940, %v2945
    %v2948 = vmul.f32 %v2938, %v2943
    %v2949 = vadd.f32 %v2947, %v2948
    %v2950 = vtanh.pop %v2949
    %v2951 = vmul.f32 %v2942, %v2950
    %v2953 = vrot.slane %v2766, 4
    %v2955 = vrot.slane %v2951, 4
    %v2956 = vrot.slane %v2953, 4
    %2959 = vmatprep.subr.mxu0 %v703
    %2960 = vmatpush1.msra.mxu0 %v702
    %2961 = vmatprep.subr.mxu0 %v707
    %2962 = vmatpush1.msra.mxu0 %v706
    %2963 = vmatprep.subr.mxu0 %v711
    %2964 = vmatpush1.msra.mxu0 %v710
    %2965 = vmatprep.subr.mxu0 %v715
    %2966 = vmatpush1.msra.mxu0 %v714
    %2967 = vmatprep.subr.mxu0 %v719
    %2968 = vmatpush1.msra.mxu0 %v718
    %2969 = vmatprep.subr.mxu0 %v723
    %2970 = vmatpush1.msra.mxu0 %v722
    %2971 = vmatprep.subr.mxu0 %v727
    %2972 = vmatpush1.msra.mxu0 %v726
    %2973 = vmatprep.subr.mxu0 %v731
    %2974 = vmatpush1.msra.mxu0 %v730
    %2975 = vmatprep.subr.mxu0 %v735
    %2976 = vmatpush1.msra.mxu0 %v734
    %2977 = vmatprep.subr.mxu0 %v739
    %2978 = vmatpush1.msra.mxu0 %v738
    %2979 = vmatprep.subr.mxu0 %v743
    %2980 = vmatpush1.msra.mxu0 %v742
    %2981 = vmatprep.subr.mxu0 %v747
    %2982 = vmatpush1.msra.mxu0 %v746
    %2983 = vmatprep.subr.mxu0 %v751
    %2984 = vmatpush1.msra.mxu0 %v750
    %2985 = vmatprep.subr.mxu0 %v755
    %2986 = vmatpush1.msra.mxu0 %v754
    %2987 = vmatprep.subr.mxu0 %v759
    %2988 = vmatpush1.msra.mxu0 %v758
    %2989 = vmatprep.subr.mxu0 %v763
    %2990 = vmatpush1.msra.mxu0 %v762
    %2991 = vmatprep.subr.mxu0 %v767
    %2992 = vmatpush1.msra.mxu0 %v766
    %2993 = vmatprep.subr.mxu0 %v771
    %2994 = vmatpush1.msra.mxu0 %v770
    %2995 = vmatprep.subr.mxu0 %v775
    %2996 = vmatpush1.msra.mxu0 %v774
    %2997 = vmatprep.subr.mxu0 %v779
    %2998 = vmatpush1.msra.mxu0 %v778
    %2999 = vmatprep.subr.mxu0 %v783
    %3000 = vmatpush1.msra.mxu0 %v782
    %3001 = vmatprep.subr.mxu0 %v787
    %3002 = vmatpush1.msra.mxu0 %v786
    %3003 = vmatprep.subr.mxu0 %v791
    %3004 = vmatpush1.msra.mxu0 %v790
    %3005 = vmatprep.subr.mxu0 %v795
    %3006 = vmatpush1.msra.mxu0 %v794
    %3007 = vmatprep.subr.mxu0 %v799
    %3008 = vmatpush1.msra.mxu0 %v798
    %3009 = vmatprep.subr.mxu0 %v803
    %3010 = vmatpush1.msra.mxu0 %v802
    %3011 = vmatprep.subr.mxu0 %v807
    %3012 = vmatpush1.msra.mxu0 %v806
    %3013 = vmatprep.subr.mxu0 %v811
    %3014 = vmatpush1.msra.mxu0 %v810
    %3015 = vmatprep.subr.mxu0 %v815
    %3016 = vmatpush1.msra.mxu0 %v814
    %3017 = vmatprep.subr.mxu0 %v819
    %3018 = vmatpush1.msra.mxu0 %v818
    %3019 = vmatprep.subr.mxu0 %v823
    %3020 = vmatpush1.msra.mxu0 %v822
    %3021 = vmatprep.subr.mxu0 %v827
    %3022 = vmatpush1.msra.mxu0 %v826
    %3023 = vmatprep.mubr.f32.mxu0 %v2956
    %3024 = vmatmul.mubr.f32.gmra.mrb[0].mxu0 %v2955
    %v3025 = vpop.f32.mrb[0].mxu0
    %v3026 = vadd.f32 %v451, %v3025
    %v3027 = vpop.f32.mrb[0].mxu0
    %v3028 = vadd.f32 %v455, %v3027
    %3029 = vdwg.mxu0
    %3030 = vmatprep.subr.mxu0 %v705
    %3031 = vmatpush1.msra.mxu0 %v704
    %3032 = vmatprep.subr.mxu0 %v709
    %3033 = vmatpush1.msra.mxu0 %v708
    %3034 = vmatprep.subr.mxu0 %v713
    %3035 = vmatpush1.msra.mxu0 %v712
    %3036 = vmatprep.subr.mxu0 %v717
    %3037 = vmatpush1.msra.mxu0 %v716
    %3038 = vmatprep.subr.mxu0 %v721
    %3039 = vmatpush1.msra.mxu0 %v720
    %3040 = vmatprep.subr.mxu0 %v725
    %3041 = vmatpush1.msra.mxu0 %v724
    %3042 = vmatprep.subr.mxu0 %v729
    %3043 = vmatpush1.msra.mxu0 %v728
    %3044 = vmatprep.subr.mxu0 %v733
    %3045 = vmatpush1.msra.mxu0 %v732
    %3046 = vmatprep.subr.mxu0 %v737
    %3047 = vmatpush1.msra.mxu0 %v736
    %3048 = vmatprep.subr.mxu0 %v741
    %3049 = vmatpush1.msra.mxu0 %v740
    %3050 = vmatprep.subr.mxu0 %v745
    %3051 = vmatpush1.msra.mxu0 %v744
    %3052 = vmatprep.subr.mxu0 %v749
    %3053 = vmatpush1.msra.mxu0 %v748
    %3054 = vmatprep.subr.mxu0 %v753
    %3055 = vmatpush1.msra.mxu0 %v752
    %3056 = vmatprep.subr.mxu0 %v757
    %3057 = vmatpush1.msra.mxu0 %v756
    %3058 = vmatprep.subr.mxu0 %v761
    %3059 = vmatpush1.msra.mxu0 %v760
    %3060 = vmatprep.subr.mxu0 %v765
    %3061 = vmatpush1.msra.mxu0 %v764
    %3062 = vmatprep.subr.mxu0 %v769
    %3063 = vmatpush1.msra.mxu0 %v768
    %3064 = vmatprep.subr.mxu0 %v773
    %3065 = vmatpush1.msra.mxu0 %v772
    %3066 = vmatprep.subr.mxu0 %v777
    %3067 = vmatpush1.msra.mxu0 %v776
    %3068 = vmatprep.subr.mxu0 %v781
    %3069 = vmatpush1.msra.mxu0 %v780
    %3070 = vmatprep.subr.mxu0 %v785
    %3071 = vmatpush1.msra.mxu0 %v784
    %3072 = vmatprep.subr.mxu0 %v789
    %3073 = vmatpush1.msra.mxu0 %v788
    %3074 = vmatprep.subr.mxu0 %v793
    %3075 = vmatpush1.msra.mxu0 %v792
    %3076 = vmatprep.subr.mxu0 %v797
    %3077 = vmatpush1.msra.mxu0 %v796
    %3078 = vmatprep.subr.mxu0 %v801
    %3079 = vmatpush1.msra.mxu0 %v800
    %3080 = vmatprep.subr.mxu0 %v805
    %3081 = vmatpush1.msra.mxu0 %v804
    %3082 = vmatprep.subr.mxu0 %v809
    %3083 = vmatpush1.msra.mxu0 %v808
    %3084 = vmatprep.subr.mxu0 %v813
    %3085 = vmatpush1.msra.mxu0 %v812
    %3086 = vmatprep.subr.mxu0 %v817
    %3087 = vmatpush1.msra.mxu0 %v816
    %3088 = vmatprep.subr.mxu0 %v821
    %3089 = vmatpush1.msra.mxu0 %v820
    %3090 = vmatprep.subr.mxu0 %v825
    %3091 = vmatpush1.msra.mxu0 %v824
    %3092 = vmatprep.subr.mxu0 %v829
    %3093 = vmatpush1.msra.mxu0 %v828
    %3094 = vmatprep.mubr.f32.mxu0 %v2956
    %3095 = vmatmul.mubr.f32.gmra.mrb[0].mxu0 %v2955
    %v3096 = vpop.f32.mrb[0].mxu0
    %v3097 = vadd.f32 %v459, %v3096
    %v3098 = vpop.f32.mrb[0].mxu0
    %v3099 = vadd.f32 %v463, %v3098
    %3100 = vdwg.mxu0
    %v3101 = vxor.u32 %v3026, 2147483648
    %v3102 = vxor.u32 %v3028, 2147483648
    %v3103 = vxor.u32 %v3097, 2147483648
    %v3104 = vmul.f32 %v3101, 1.442695
    %v3105 = vpow.pop %v3104
    %v3106 = vmul.f32 %v3102, 1.442695
    %v3107 = vpow.pop %v3106
    %v3108 = vmul.f32 %v3103, 1.442695
    %v3109 = vpow.pop %v3108
    %v3110 = vadd.f32 %v3105, 1.0
    %v3111 = vadd.f32 %v3107, 1.0
    %v3112 = vadd.f32 %v3109, 1.0
    %v3113 = vrcp.pop %v3110
    %v3114 = vmul.f32 1.0, %v3113
    %v3115 = vrcp.pop %v3111
    %v3116 = vmul.f32 1.0, %v3115
    %v3117 = vrcp.pop %v3112
    %v3118 = vmul.f32 1.0, %v3117
    %v3119 = vtanh.pop %v3099
    %v3120 = vmul.f32 %v3116, %v2764
    %v3121 = vmul.f32 %v3114, %v3119
    %v3122 = vadd.f32 %v3120, %v3121
    %v3123 = vtanh.pop %v3122
    %v3124 = vmul.f32 %v3118, %v3123
    %3125 = vmatprep.subr.mxu0 %v469
    %3126 = vmatpush1.msra.mxu0 %v468
    %3127 = vmatprep.subr.mxu0 %v473
    %3128 = vmatpush1.msra.mxu0 %v472
    %3129 = vmatprep.subr.mxu0 %v477
    %3130 = vmatpush1.msra.mxu0 %v476
    %3131 = vmatprep.subr.mxu0 %v481
    %3132 = vmatpush1.msra.mxu0 %v480
    %3133 = vmatprep.subr.mxu0 %v485
    %3134 = vmatpush1.msra.mxu0 %v484
    %3135 = vmatprep.subr.mxu0 %v489
    %3136 = vmatpush1.msra.mxu0 %v488
    %3137 = vmatprep.subr.mxu0 %v493
    %3138 = vmatpush1.msra.mxu0 %v492
    %3139 = vmatprep.subr.mxu0 %v497
    %3140 = vmatpush1.msra.mxu0 %v496
    %3141 = vmatprep.subr.mxu0 %v501
    %3142 = vmatpush1.msra.mxu0 %v500
    %3143 = vmatprep.subr.mxu0 %v505
    %3144 = vmatpush1.msra.mxu0 %v504
    %3145 = vmatprep.subr.mxu0 %v509
    %3146 = vmatpush1.msra.mxu0 %v508
    %3147 = vmatprep.subr.mxu0 %v513
    %3148 = vmatpush1.msra.mxu0 %v512
    %3149 = vmatprep.subr.mxu0 %v517
    %3150 = vmatpush1.msra.mxu0 %v516
    %3151 = vmatprep.subr.mxu0 %v521
    %3152 = vmatpush1.msra.mxu0 %v520
    %3153 = vmatprep.subr.mxu0 %v525
    %3154 = vmatpush1.msra.mxu0 %v524
    %3155 = vmatprep.subr.mxu0 %v529
    %3156 = vmatpush1.msra.mxu0 %v528
    %3157 = vmatprep.subr.mxu0 0.0
    %3158 = vmatpush1.msra.mxu0 0.0
    %3159 = vmatprep.subr.mxu0 0.0
    %3160 = vmatpush1.msra.mxu0 0.0
    %3161 = vmatprep.subr.mxu0 0.0
    %3162 = vmatpush1.msra.mxu0 0.0
    %3163 = vmatprep.subr.mxu0 0.0
    %3164 = vmatpush1.msra.mxu0 0.0
    %3165 = vmatprep.subr.mxu0 0.0
    %3166 = vmatpush1.msra.mxu0 0.0
    %3167 = vmatprep.subr.mxu0 0.0
    %3168 = vmatpush1.msra.mxu0 0.0
    %3169 = vmatprep.subr.mxu0 0.0
    %3170 = vmatpush1.msra.mxu0 0.0
    %3171 = vmatprep.subr.mxu0 0.0
    %3172 = vmatpush1.msra.mxu0 0.0
    %3173 = vmatprep.subr.mxu0 0.0
    %3174 = vmatpush1.msra.mxu0 0.0
    %3175 = vmatprep.subr.mxu0 0.0
    %3176 = vmatpush1.msra.mxu0 0.0
    %3177 = vmatprep.subr.mxu0 0.0
    %3178 = vmatpush1.msra.mxu0 0.0
    %3179 = vmatprep.subr.mxu0 0.0
    %3180 = vmatpush1.msra.mxu0 0.0
    %3181 = vmatprep.subr.mxu0 0.0
    %3182 = vmatpush1.msra.mxu0 0.0
    %3183 = vmatprep.subr.mxu0 0.0
    %3184 = vmatpush1.msra.mxu0 0.0
    %3185 = vmatprep.subr.mxu0 0.0
    %3186 = vmatpush1.msra.mxu0 0.0
    %3187 = vmatprep.subr.mxu0 0.0
    %3188 = vmatpush1.msra.mxu0 0.0
    %3189 = vmatprep.mubr.f32.mxu0 0.0
    %3190 = vmatmul.mubr.f32.gmra.mrb[0].mxu0 %v2955
    %v3191 = vpop.f32.mrb[0].mxu0
    %v3192 = vadd.f32 0.0, %v3191
    %v3193 = vpop.f32.mrb[0].mxu0
    %v3194 = vadd.f32 0.0, %v3193
    %3195 = vdwg.mxu0
    %3196 = vmatprep.subr.mxu0 %v471
    %3197 = vmatpush1.msra.mxu0 %v470
    %3198 = vmatprep.subr.mxu0 %v475
    %3199 = vmatpush1.msra.mxu0 %v474
    %3200 = vmatprep.subr.mxu0 %v479
    %3201 = vmatpush1.msra.mxu0 %v478
    %3202 = vmatprep.subr.mxu0 %v483
    %3203 = vmatpush1.msra.mxu0 %v482
    %3204 = vmatprep.subr.mxu0 %v487
    %3205 = vmatpush1.msra.mxu0 %v486
    %3206 = vmatprep.subr.mxu0 %v491
    %3207 = vmatpush1.msra.mxu0 %v490
    %3208 = vmatprep.subr.mxu0 %v495
    %3209 = vmatpush1.msra.mxu0 %v494
    %3210 = vmatprep.subr.mxu0 %v499
    %3211 = vmatpush1.msra.mxu0 %v498
    %3212 = vmatprep.subr.mxu0 %v503
    %3213 = vmatpush1.msra.mxu0 %v502
    %3214 = vmatprep.subr.mxu0 %v507
    %3215 = vmatpush1.msra.mxu0 %v506
    %3216 = vmatprep.subr.mxu0 %v511
    %3217 = vmatpush1.msra.mxu0 %v510
    %3218 = vmatprep.subr.mxu0 %v515
    %3219 = vmatpush1.msra.mxu0 %v514
    %3220 = vmatprep.subr.mxu0 %v519
    %3221 = vmatpush1.msra.mxu0 %v518
    %3222 = vmatprep.subr.mxu0 %v523
    %3223 = vmatpush1.msra.mxu0 %v522
    %3224 = vmatprep.subr.mxu0 %v527
    %3225 = vmatpush1.msra.mxu0 %v526
    %3226 = vmatprep.subr.mxu0 %v531
    %3227 = vmatpush1.msra.mxu0 %v530
    %3228 = vmatprep.subr.mxu0 0.0
    %3229 = vmatpush1.msra.mxu0 0.0
    %3230 = vmatprep.subr.mxu0 0.0
    %3231 = vmatpush1.msra.mxu0 0.0
    %3232 = vmatprep.subr.mxu0 0.0
    %3233 = vmatpush1.msra.mxu0 0.0
    %3234 = vmatprep.subr.mxu0 0.0
    %3235 = vmatpush1.msra.mxu0 0.0
    %3236 = vmatprep.subr.mxu0 0.0
    %3237 = vmatpush1.msra.mxu0 0.0
    %3238 = vmatprep.subr.mxu0 0.0
    %3239 = vmatpush1.msra.mxu0 0.0
    %3240 = vmatprep.subr.mxu0 0.0
    %3241 = vmatpush1.msra.mxu0 0.0
    %3242 = vmatprep.subr.mxu0 0.0
    %3243 = vmatpush1.msra.mxu0 0.0
    %3244 = vmatprep.subr.mxu0 0.0
    %3245 = vmatpush1.msra.mxu0 0.0
    %3246 = vmatprep.subr.mxu0 0.0
    %3247 = vmatpush1.msra.mxu0 0.0
    %3248 = vmatprep.subr.mxu0 0.0
    %3249 = vmatpush1.msra.mxu0 0.0
    %3250 = vmatprep.subr.mxu0 0.0
    %3251 = vmatpush1.msra.mxu0 0.0
    %3252 = vmatprep.subr.mxu0 0.0
    %3253 = vmatpush1.msra.mxu0 0.0
    %3254 = vmatprep.subr.mxu0 0.0
    %3255 = vmatpush1.msra.mxu0 0.0
    %3256 = vmatprep.subr.mxu0 0.0
    %3257 = vmatpush1.msra.mxu0 0.0
    %3258 = vmatprep.subr.mxu0 0.0
    %3259 = vmatpush1.msra.mxu0 0.0
    %3260 = vmatprep.mubr.f32.mxu0 0.0
    %3261 = vmatmul.mubr.f32.gmra.mrb[0].mxu0 %v2955
    %v3262 = vpop.f32.mrb[0].mxu0
    %v3263 = vadd.f32 0.0, %v3262
    %v3264 = vpop.f32.mrb[0].mxu0
    %v3265 = vadd.f32 0.0, %v3264
    %3266 = vdwg.mxu0
    %v3271 = vrot.slane %v3192, 2
    %v3272 = vrot.slane %v3194, 2
    %v3273 = vrot.slane %v3263, 2
    %v3274 = vrot.slane %v3265, 2
    %v3279 = vadd.f32 %v365, %v3271
    %v3280 = vadd.f32 %v367, %v3272
    %v3281 = vadd.f32 %v442, %v3273
    %v3282 = vadd.f32 %v444, %v3274
    %v3283 = vxor.u32 %v3279, 2147483648
    %v3284 = vxor.u32 %v3280, 2147483648
    %v3285 = vxor.u32 %v3281, 2147483648
    %v3286 = vmul.f32 %v3283, 1.442695
    %v3287 = vpow.pop %v3286
    %v3288 = vmul.f32 %v3284, 1.442695
    %v3289 = vpow.pop %v3288
    %v3290 = vmul.f32 %v3285, 1.442695
    %v3291 = vpow.pop %v3290
    %v3292 = vadd.f32 %v3287, 1.0
    %v3293 = vadd.f32 %v3289, 1.0
    %v3294 = vadd.f32 %v3291, 1.0
    %v3295 = vrcp.pop %v3292
    %v3296 = vmul.f32 1.0, %v3295
    %v3297 = vrcp.pop %v3293
    %v3298 = vmul.f32 1.0, %v3297
    %v3299 = vrcp.pop %v3294
    %v3300 = vmul.f32 1.0, %v3299
    %v3301 = vtanh.pop %v3282
    %v3303 = vrot.slane %v2949, 6
    %v3305 = vmul.f32 %v3298, %v3303
    %v3306 = vmul.f32 %v3296, %v3301
    %v3307 = vadd.f32 %v3305, %v3306
    %v3308 = vtanh.pop %v3307
    %v3309 = vmul.f32 %v3300, %v3308
    %v3311 = vrot.slane %v3124, 2
    %v3313 = vrot.slane %v3309, 6
    %v3314 = vrot.slane %v3311, 6
    %3317 = vmatprep.subr.mxu0 %v703
    %3318 = vmatpush1.msra.mxu0 %v702
    %3319 = vmatprep.subr.mxu0 %v707
    %3320 = vmatpush1.msra.mxu0 %v706
    %3321 = vmatprep.subr.mxu0 %v711
    %3322 = vmatpush1.msra.mxu0 %v710
    %3323 = vmatprep.subr.mxu0 %v715
    %3324 = vmatpush1.msra.mxu0 %v714
    %3325 = vmatprep.subr.mxu0 %v719
    %3326 = vmatpush1.msra.mxu0 %v718
    %3327 = vmatprep.subr.mxu0 %v723
    %3328 = vmatpush1.msra.mxu0 %v722
    %3329 = vmatprep.subr.mxu0 %v727
    %3330 = vmatpush1.msra.mxu0 %v726
    %3331 = vmatprep.subr.mxu0 %v731
    %3332 = vmatpush1.msra.mxu0 %v730
    %3333 = vmatprep.subr.mxu0 %v735
    %3334 = vmatpush1.msra.mxu0 %v734
    %3335 = vmatprep.subr.mxu0 %v739
    %3336 = vmatpush1.msra.mxu0 %v738
    %3337 = vmatprep.subr.mxu0 %v743
    %3338 = vmatpush1.msra.mxu0 %v742
    %3339 = vmatprep.subr.mxu0 %v747
    %3340 = vmatpush1.msra.mxu0 %v746
    %3341 = vmatprep.subr.mxu0 %v751
    %3342 = vmatpush1.msra.mxu0 %v750
    %3343 = vmatprep.subr.mxu0 %v755
    %3344 = vmatpush1.msra.mxu0 %v754
    %3345 = vmatprep.subr.mxu0 %v759
    %3346 = vmatpush1.msra.mxu0 %v758
    %3347 = vmatprep.subr.mxu0 %v763
    %3348 = vmatpush1.msra.mxu0 %v762
    %3349 = vmatprep.subr.mxu0 %v767
    %3350 = vmatpush1.msra.mxu0 %v766
    %3351 = vmatprep.subr.mxu0 %v771
    %3352 = vmatpush1.msra.mxu0 %v770
    %3353 = vmatprep.subr.mxu0 %v775
    %3354 = vmatpush1.msra.mxu0 %v774
    %3355 = vmatprep.subr.mxu0 %v779
    %3356 = vmatpush1.msra.mxu0 %v778
    %3357 = vmatprep.subr.mxu0 %v783
    %3358 = vmatpush1.msra.mxu0 %v782
    %3359 = vmatprep.subr.mxu0 %v787
    %3360 = vmatpush1.msra.mxu0 %v786
    %3361 = vmatprep.subr.mxu0 %v791
    %3362 = vmatpush1.msra.mxu0 %v790
    %3363 = vmatprep.subr.mxu0 %v795
    %3364 = vmatpush1.msra.mxu0 %v794
    %3365 = vmatprep.subr.mxu0 %v799
    %3366 = vmatpush1.msra.mxu0 %v798
    %3367 = vmatprep.subr.mxu0 %v803
    %3368 = vmatpush1.msra.mxu0 %v802
    %3369 = vmatprep.subr.mxu0 %v807
    %3370 = vmatpush1.msra.mxu0 %v806
    %3371 = vmatprep.subr.mxu0 %v811
    %3372 = vmatpush1.msra.mxu0 %v810
    %3373 = vmatprep.subr.mxu0 %v815
    %3374 = vmatpush1.msra.mxu0 %v814
    %3375 = vmatprep.subr.mxu0 %v819
    %3376 = vmatpush1.msra.mxu0 %v818
    %3377 = vmatprep.subr.mxu0 %v823
    %3378 = vmatpush1.msra.mxu0 %v822
    %3379 = vmatprep.subr.mxu0 %v827
    %3380 = vmatpush1.msra.mxu0 %v826
    %3381 = vmatprep.mubr.f32.mxu0 %v3314
    %3382 = vmatmul.mubr.f32.gmra.mrb[0].mxu0 %v3313
    %v3383 = vpop.f32.mrb[0].mxu0
    %v3384 = vadd.f32 %v451, %v3383
    %v3385 = vpop.f32.mrb[0].mxu0
    %v3386 = vadd.f32 %v455, %v3385
    %3387 = vdwg.mxu0
    %3388 = vmatprep.subr.mxu0 %v705
    %3389 = vmatpush1.msra.mxu0 %v704
    %3390 = vmatprep.subr.mxu0 %v709
    %3391 = vmatpush1.msra.mxu0 %v708
    %3392 = vmatprep.subr.mxu0 %v713
    %3393 = vmatpush1.msra.mxu0 %v712
    %3394 = vmatprep.subr.mxu0 %v717
    %3395 = vmatpush1.msra.mxu0 %v716
    %3396 = vmatprep.subr.mxu0 %v721
    %3397 = vmatpush1.msra.mxu0 %v720
    %3398 = vmatprep.subr.mxu0 %v725
    %3399 = vmatpush1.msra.mxu0 %v724
    %3400 = vmatprep.subr.mxu0 %v729
    %3401 = vmatpush1.msra.mxu0 %v728
    %3402 = vmatprep.subr.mxu0 %v733
    %3403 = vmatpush1.msra.mxu0 %v732
    %3404 = vmatprep.subr.mxu0 %v737
    %3405 = vmatpush1.msra.mxu0 %v736
    %3406 = vmatprep.subr.mxu0 %v741
    %3407 = vmatpush1.msra.mxu0 %v740
    %3408 = vmatprep.subr.mxu0 %v745
    %3409 = vmatpush1.msra.mxu0 %v744
    %3410 = vmatprep.subr.mxu0 %v749
    %3411 = vmatpush1.msra.mxu0 %v748
    %3412 = vmatprep.subr.mxu0 %v753
    %3413 = vmatpush1.msra.mxu0 %v752
    %3414 = vmatprep.subr.mxu0 %v757
    %3415 = vmatpush1.msra.mxu0 %v756
    %3416 = vmatprep.subr.mxu0 %v761
    %3417 = vmatpush1.msra.mxu0 %v760
    %3418 = vmatprep.subr.mxu0 %v765
    %3419 = vmatpush1.msra.mxu0 %v764
    %3420 = vmatprep.subr.mxu0 %v769
    %3421 = vmatpush1.msra.mxu0 %v768
    %3422 = vmatprep.subr.mxu0 %v773
    %3423 = vmatpush1.msra.mxu0 %v772
    %3424 = vmatprep.subr.mxu0 %v777
    %3425 = vmatpush1.msra.mxu0 %v776
    %3426 = vmatprep.subr.mxu0 %v781
    %3427 = vmatpush1.msra.mxu0 %v780
    %3428 = vmatprep.subr.mxu0 %v785
    %3429 = vmatpush1.msra.mxu0 %v784
    %3430 = vmatprep.subr.mxu0 %v789
    %3431 = vmatpush1.msra.mxu0 %v788
    %3432 = vmatprep.subr.mxu0 %v793
    %3433 = vmatpush1.msra.mxu0 %v792
    %3434 = vmatprep.subr.mxu0 %v797
    %3435 = vmatpush1.msra.mxu0 %v796
    %3436 = vmatprep.subr.mxu0 %v801
    %3437 = vmatpush1.msra.mxu0 %v800
    %3438 = vmatprep.subr.mxu0 %v805
    %3439 = vmatpush1.msra.mxu0 %v804
    %3440 = vmatprep.subr.mxu0 %v809
    %3441 = vmatpush1.msra.mxu0 %v808
    %3442 = vmatprep.subr.mxu0 %v813
    %3443 = vmatpush1.msra.mxu0 %v812
    %3444 = vmatprep.subr.mxu0 %v817
    %3445 = vmatpush1.msra.mxu0 %v816
    %3446 = vmatprep.subr.mxu0 %v821
    %3447 = vmatpush1.msra.mxu0 %v820
    %3448 = vmatprep.subr.mxu0 %v825
    %3449 = vmatpush1.msra.mxu0 %v824
    %3450 = vmatprep.subr.mxu0 %v829
    %3451 = vmatpush1.msra.mxu0 %v828
    %3452 = vmatprep.mubr.f32.mxu0 %v3314
    %3453 = vmatmul.mubr.f32.gmra.mrb[0].mxu0 %v3313
    %v3454 = vpop.f32.mrb[0].mxu0
    %v3455 = vadd.f32 %v459, %v3454
    %v3456 = vpop.f32.mrb[0].mxu0
    %v3457 = vadd.f32 %v463, %v3456
    %3458 = vdwg.mxu0
    %v3459 = vxor.u32 %v3384, 2147483648
    %v3460 = vxor.u32 %v3386, 2147483648
    %v3461 = vxor.u32 %v3455, 2147483648
    %v3462 = vmul.f32 %v3459, 1.442695
    %v3463 = vpow.pop %v3462
    %v3464 = vmul.f32 %v3460, 1.442695
    %v3465 = vpow.pop %v3464
    %v3466 = vmul.f32 %v3461, 1.442695
    %v3467 = vpow.pop %v3466
    %v3468 = vadd.f32 %v3463, 1.0
    %v3469 = vadd.f32 %v3465, 1.0
    %v3470 = vadd.f32 %v3467, 1.0
    %v3471 = vrcp.pop %v3468
    %v3472 = vmul.f32 1.0, %v3471
    %v3473 = vrcp.pop %v3469
    %v3474 = vmul.f32 1.0, %v3473
    %v3475 = vrcp.pop %v3470
    %v3476 = vmul.f32 1.0, %v3475
    %v3477 = vtanh.pop %v3457
    %v3478 = vmul.f32 %v3474, %v3122
    %v3479 = vmul.f32 %v3472, %v3477
    %v3480 = vadd.f32 %v3478, %v3479
    %v3481 = vtanh.pop %v3480
    %v3482 = vmul.f32 %v3476, %v3481
    %v3483 = vrot.slane %v1353, 6
    %v3485 = vrot.slane %v1711, 4
    %v3488 = vrot.slane %v2069, 2
    %v3490 = vrot.slane %v2766, 6
    %v3492 = vrot.slane %v3124, 4
    %v3495 = vrot.slane %v3482, 2
    %vm3497 = vcmask 1041408
    %v3498 = vsel %vm3497, %v995, %v3483
    %vm3499 = vcmask 1043456
    %v3500 = vsel %vm3499, %v3498, %v3485
    %vm3501 = vcmask 1045504
    %v3502 = vsel %vm3501, %v3500, %v3488
    %v3503 = vsel %vm3497, %v2408, %v3490
    %v3504 = vsel %vm3499, %v3503, %v3492
    %v3505 = vsel %vm3501, %v3504, %v3495
    %v3506 = vld [vmem:[#allocation8] sm:$0xff]
    %v3507 = vld [vmem:[#allocation8 + $0x8] sm:$0xff]
    %v3508 = vld [vmem:[#allocation8 + $0x10] sm:$0xff]
    %v3509 = vld [vmem:[#allocation8 + $0x18] sm:$0xff]
    %v3510 = vld [vmem:[#allocation8 + $0x20] sm:$0xff]
    %v3511 = vld [vmem:[#allocation8 + $0x28] sm:$0xff]
    %v3512 = vld [vmem:[#allocation8 + $0x30] sm:$0xff]
    %v3513 = vld [vmem:[#allocation8 + $0x38] sm:$0xff]
    %v3514 = vld [vmem:[#allocation8 + $0x40] sm:$0xff]
    %v3515 = vld [vmem:[#allocation8 + $0x48] sm:$0xff]
    %v3516 = vld [vmem:[#allocation8 + $0x50] sm:$0xff]
    %v3517 = vld [vmem:[#allocation8 + $0x58] sm:$0xff]
    %v3518 = vld [vmem:[#allocation8 + $0x60] sm:$0xff]
    %v3519 = vld [vmem:[#allocation8 + $0x68] sm:$0xff]
    %v3520 = vld [vmem:[#allocation8 + $0x70] sm:$0xff]
    %v3521 = vld [vmem:[#allocation8 + $0x78] sm:$0xff]
    %v3522 = vld [vmem:[#allocation8 + $0x80] sm:$0xff]
    %v3523 = vld [vmem:[#allocation8 + $0x88] sm:$0xff]
    %v3524 = vld [vmem:[#allocation8 + $0x90] sm:$0xff]
    %v3525 = vld [vmem:[#allocation8 + $0x98] sm:$0xff]
    %v3526 = vld [vmem:[#allocation8 + $0xa0] sm:$0xff]
    %v3527 = vld [vmem:[#allocation8 + $0xa8] sm:$0xff]
    %v3528 = vld [vmem:[#allocation8 + $0xb0] sm:$0xff]
    %v3529 = vld [vmem:[#allocation8 + $0xb8] sm:$0xff]
    %v3530 = vld [vmem:[#allocation8 + $0xc0] sm:$0xff]
    %v3531 = vld [vmem:[#allocation8 + $0xc8] sm:$0xff]
    %v3532 = vld [vmem:[#allocation8 + $0xd0] sm:$0xff]
    %v3533 = vld [vmem:[#allocation8 + $0xd8] sm:$0xff]
    %v3534 = vld [vmem:[#allocation8 + $0xe0] sm:$0xff]
    %v3535 = vld [vmem:[#allocation8 + $0xe8] sm:$0xff]
    %v3536 = vld [vmem:[#allocation8 + $0xf0] sm:$0xff]
    %v3537 = vld [vmem:[#allocation8 + $0xf8] sm:$0xff]
    %v3538 = vld [vmem:[#allocation8 + $0x100] sm:$0xff]
    %v3539 = vld [vmem:[#allocation8 + $0x108] sm:$0xff]
    %v3540 = vld [vmem:[#allocation8 + $0x110] sm:$0xff]
    %v3541 = vld [vmem:[#allocation8 + $0x118] sm:$0xff]
    %v3542 = vld [vmem:[#allocation8 + $0x120] sm:$0xff]
    %v3543 = vld [vmem:[#allocation8 + $0x128] sm:$0xff]
    %v3544 = vld [vmem:[#allocation8 + $0x130] sm:$0xff]
    %v3545 = vld [vmem:[#allocation8 + $0x138] sm:$0xff]
    %v3546 = vld [vmem:[#allocation8 + $0x140] sm:$0xff]
    %v3547 = vld [vmem:[#allocation8 + $0x148] sm:$0xff]
    %v3548 = vld [vmem:[#allocation8 + $0x150] sm:$0xff]
    %v3549 = vld [vmem:[#allocation8 + $0x158] sm:$0xff]
    %v3550 = vld [vmem:[#allocation8 + $0x160] sm:$0xff]
    %v3551 = vld [vmem:[#allocation8 + $0x168] sm:$0xff]
    %v3552 = vld [vmem:[#allocation8 + $0x170] sm:$0xff]
    %v3553 = vld [vmem:[#allocation8 + $0x178] sm:$0xff]
    %v3554 = vld [vmem:[#allocation8 + $0x180] sm:$0xff]
    %v3555 = vld [vmem:[#allocation8 + $0x188] sm:$0xff]
    %v3556 = vld [vmem:[#allocation8 + $0x190] sm:$0xff]
    %v3557 = vld [vmem:[#allocation8 + $0x198] sm:$0xff]
    %v3558 = vld [vmem:[#allocation8 + $0x1a0] sm:$0xff]
    %v3559 = vld [vmem:[#allocation8 + $0x1a8] sm:$0xff]
    %v3560 = vld [vmem:[#allocation8 + $0x1b0] sm:$0xff]
    %v3561 = vld [vmem:[#allocation8 + $0x1b8] sm:$0xff]
    %v3562 = vld [vmem:[#allocation8 + $0x1c0] sm:$0xff]
    %v3563 = vld [vmem:[#allocation8 + $0x1c8] sm:$0xff]
    %v3564 = vld [vmem:[#allocation8 + $0x1d0] sm:$0xff]
    %v3565 = vld [vmem:[#allocation8 + $0x1d8] sm:$0xff]
    %v3566 = vld [vmem:[#allocation8 + $0x1e0] sm:$0xff]
    %v3567 = vld [vmem:[#allocation8 + $0x1e8] sm:$0xff]
    %v3568 = vld [vmem:[#allocation8 + $0x1f0] sm:$0xff]
    %v3569 = vld [vmem:[#allocation8 + $0x1f8] sm:$0xff]
    %v3570 = vld [vmem:[%s8] sm:$0xf]
    %v3572 = vlaneseq
    %v3573 = vshrl.u32 %v3572, 7
    %v3574 = vsub.s32 0, %v3573
    %v3575 = vrot.slane %v3570, %v3574
    %v3576 = vlaneseq
    %v3577 = vshrl.u32 %v3576, 7
    %v3578 = vsub.s32 1, %v3577
    %v3579 = vrot.slane %v3570, %v3578
    %v3580 = vlaneseq
    %v3581 = vshrl.u32 %v3580, 7
    %v3582 = vsub.s32 2, %v3581
    %v3583 = vrot.slane %v3570, %v3582
    %v3584 = vlaneseq
    %v3585 = vshrl.u32 %v3584, 7
    %v3586 = vsub.s32 3, %v3585
    %v3587 = vrot.slane %v3570, %v3586
    %3592 = vmatprep.subr.mxu0 %v3507
    %3593 = vmatpush1.msra.mxu0 %v3506
    %3594 = vmatprep.subr.mxu0 %v3511
    %3595 = vmatpush1.msra.mxu0 %v3510
    %3596 = vmatprep.subr.mxu0 %v3515
    %3597 = vmatpush1.msra.mxu0 %v3514
    %3598 = vmatprep.subr.mxu0 %v3519
    %3599 = vmatpush1.msra.mxu0 %v3518
    %3600 = vmatprep.subr.mxu0 %v3523
    %3601 = vmatpush1.msra.mxu0 %v3522
    %3602 = vmatprep.subr.mxu0 %v3527
    %3603 = vmatpush1.msra.mxu0 %v3526
    %3604 = vmatprep.subr.mxu0 %v3531
    %3605 = vmatpush1.msra.mxu0 %v3530
    %3606 = vmatprep.subr.mxu0 %v3535
    %3607 = vmatpush1.msra.mxu0 %v3534
    %3608 = vmatprep.subr.mxu0 %v3539
    %3609 = vmatpush1.msra.mxu0 %v3538
    %3610 = vmatprep.subr.mxu0 %v3543
    %3611 = vmatpush1.msra.mxu0 %v3542
    %3612 = vmatprep.subr.mxu0 %v3547
    %3613 = vmatpush1.msra.mxu0 %v3546
    %3614 = vmatprep.subr.mxu0 %v3551
    %3615 = vmatpush1.msra.mxu0 %v3550
    %3616 = vmatprep.subr.mxu0 %v3555
    %3617 = vmatpush1.msra.mxu0 %v3554
    %3618 = vmatprep.subr.mxu0 %v3559
    %3619 = vmatpush1.msra.mxu0 %v3558
    %3620 = vmatprep.subr.mxu0 %v3563
    %3621 = vmatpush1.msra.mxu0 %v3562
    %3622 = vmatprep.subr.mxu0 %v3567
    %3623 = vmatpush1.msra.mxu0 %v3566
    %3624 = vmatprep.subr.mxu0 0.0
    %3625 = vmatpush1.msra.mxu0 0.0
    %3626 = vmatprep.subr.mxu0 0.0
    %3627 = vmatpush1.msra.mxu0 0.0
    %3628 = vmatprep.subr.mxu0 0.0
    %3629 = vmatpush1.msra.mxu0 0.0
    %3630 = vmatprep.subr.mxu0 0.0
    %3631 = vmatpush1.msra.mxu0 0.0
    %3632 = vmatprep.subr.mxu0 0.0
    %3633 = vmatpush1.msra.mxu0 0.0
    %3634 = vmatprep.subr.mxu0 0.0
    %3635 = vmatpush1.msra.mxu0 0.0
    %3636 = vmatprep.subr.mxu0 0.0
    %3637 = vmatpush1.msra.mxu0 0.0
    %3638 = vmatprep.subr.mxu0 0.0
    %3639 = vmatpush1.msra.mxu0 0.0
    %3640 = vmatprep.subr.mxu0 0.0
    %3641 = vmatpush1.msra.mxu0 0.0
    %3642 = vmatprep.subr.mxu0 0.0
    %3643 = vmatpush1.msra.mxu0 0.0
    %3644 = vmatprep.subr.mxu0 0.0
    %3645 = vmatpush1.msra.mxu0 0.0
    %3646 = vmatprep.subr.mxu0 0.0
    %3647 = vmatpush1.msra.mxu0 0.0
    %3648 = vmatprep.subr.mxu0 0.0
    %3649 = vmatpush1.msra.mxu0 0.0
    %3650 = vmatprep.subr.mxu0 0.0
    %3651 = vmatpush1.msra.mxu0 0.0
    %3652 = vmatprep.subr.mxu0 0.0
    %3653 = vmatpush1.msra.mxu0 0.0
    %3654 = vmatprep.subr.mxu0 0.0
    %3655 = vmatpush1.msra.mxu0 0.0
    %3656 = vmatprep.mubr.f32.mxu0 0.0
    %3657 = vmatmul.mubr.f32.gmra.mrb[0].mxu0 %v3502
    %v3658 = vpop.f32.mrb[0].mxu0
    %v3659 = vadd.f32 %v3575, %v3658
    %v3660 = vpop.f32.mrb[0].mxu0
    %v3661 = vadd.f32 %v3579, %v3660
    %3662 = vmatprep.mubr.f32.mxu0 0.0
    %3663 = vmatmul.mubr.f32.gmra.mrb[0].mxu0 %v3505
    %v3664 = vpop.f32.mrb[0].mxu0
    %v3665 = vadd.f32 %v3575, %v3664
    %v3666 = vpop.f32.mrb[0].mxu0
    %v3667 = vadd.f32 %v3579, %v3666
    %3668 = vdwg.mxu0
    %3669 = vmatprep.subr.mxu0 %v3509
    %3670 = vmatpush1.msra.mxu0 %v3508
    %3671 = vmatprep.subr.mxu0 %v3513
    %3672 = vmatpush1.msra.mxu0 %v3512
    %3673 = vmatprep.subr.mxu0 %v3517
    %3674 = vmatpush1.msra.mxu0 %v3516
    %3675 = vmatprep.subr.mxu0 %v3521
    %3676 = vmatpush1.msra.mxu0 %v3520
    %3677 = vmatprep.subr.mxu0 %v3525
    %3678 = vmatpush1.msra.mxu0 %v3524
    %3679 = vmatprep.subr.mxu0 %v3529
    %3680 = vmatpush1.msra.mxu0 %v3528
    %3681 = vmatprep.subr.mxu0 %v3533
    %3682 = vmatpush1.msra.mxu0 %v3532
    %3683 = vmatprep.subr.mxu0 %v3537
    %3684 = vmatpush1.msra.mxu0 %v3536
    %3685 = vmatprep.subr.mxu0 %v3541
    %3686 = vmatpush1.msra.mxu0 %v3540
    %3687 = vmatprep.subr.mxu0 %v3545
    %3688 = vmatpush1.msra.mxu0 %v3544
    %3689 = vmatprep.subr.mxu0 %v3549
    %3690 = vmatpush1.msra.mxu0 %v3548
    %3691 = vmatprep.subr.mxu0 %v3553
    %3692 = vmatpush1.msra.mxu0 %v3552
    %3693 = vmatprep.subr.mxu0 %v3557
    %3694 = vmatpush1.msra.mxu0 %v3556
    %3695 = vmatprep.subr.mxu0 %v3561
    %3696 = vmatpush1.msra.mxu0 %v3560
    %3697 = vmatprep.subr.mxu0 %v3565
    %3698 = vmatpush1.msra.mxu0 %v3564
    %3699 = vmatprep.subr.mxu0 %v3569
    %3700 = vmatpush1.msra.mxu0 %v3568
    %3701 = vmatprep.subr.mxu0 0.0
    %3702 = vmatpush1.msra.mxu0 0.0
    %3703 = vmatprep.subr.mxu0 0.0
    %3704 = vmatpush1.msra.mxu0 0.0
    %3705 = vmatprep.subr.mxu0 0.0
    %3706 = vmatpush1.msra.mxu0 0.0
    %3707 = vmatprep.subr.mxu0 0.0
    %3708 = vmatpush1.msra.mxu0 0.0
    %3709 = vmatprep.subr.mxu0 0.0
    %3710 = vmatpush1.msra.mxu0 0.0
    %3711 = vmatprep.subr.mxu0 0.0
    %3712 = vmatpush1.msra.mxu0 0.0
    %3713 = vmatprep.subr.mxu0 0.0
    %3714 = vmatpush1.msra.mxu0 0.0
    %3715 = vmatprep.subr.mxu0 0.0
    %3716 = vmatpush1.msra.mxu0 0.0
    %3717 = vmatprep.subr.mxu0 0.0
    %3718 = vmatpush1.msra.mxu0 0.0
    %3719 = vmatprep.subr.mxu0 0.0
    %3720 = vmatpush1.msra.mxu0 0.0
    %3721 = vmatprep.subr.mxu0 0.0
    %3722 = vmatpush1.msra.mxu0 0.0
    %3723 = vmatprep.subr.mxu0 0.0
    %3724 = vmatpush1.msra.mxu0 0.0
    %3725 = vmatprep.subr.mxu0 0.0
    %3726 = vmatpush1.msra.mxu0 0.0
    %3727 = vmatprep.subr.mxu0 0.0
    %3728 = vmatpush1.msra.mxu0 0.0
    %3729 = vmatprep.subr.mxu0 0.0
    %3730 = vmatpush1.msra.mxu0 0.0
    %3731 = vmatprep.subr.mxu0 0.0
    %3732 = vmatpush1.msra.mxu0 0.0
    %3733 = vmatprep.mubr.f32.mxu0 0.0
    %3734 = vmatmul.mubr.f32.gmra.mrb[0].mxu0 %v3502
    %v3735 = vpop.f32.mrb[0].mxu0
    %v3736 = vadd.f32 %v3583, %v3735
    %v3737 = vpop.f32.mrb[0].mxu0
    %v3738 = vadd.f32 %v3587, %v3737
    %3739 = vmatprep.mubr.f32.mxu0 0.0
    %3740 = vmatmul.mubr.f32.gmra.mrb[0].mxu0 %v3505
    %v3741 = vpop.f32.mrb[0].mxu0
    %v3742 = vadd.f32 %v3583, %v3741
    %v3743 = vpop.f32.mrb[0].mxu0
    %v3744 = vadd.f32 %v3587, %v3743
    %3745 = vdwg.mxu0
    %v3746 = vmax.f32 %v3659, 0.0
    %v3747 = vmax.f32 %v3661, 0.0
    %v3748 = vmax.f32 %v3736, 0.0
    %v3749 = vmax.f32 %v3738, 0.0
    %v3750 = vmax.f32 %v3665, 0.0
    %v3751 = vmax.f32 %v3667, 0.0
    %v3752 = vmax.f32 %v3742, 0.0
    %v3753 = vmax.f32 %v3744, 0.0
    %v3754 = vld [vmem:[#allocation10] sm:$0xff]
    %v3755 = vld [vmem:[#allocation10 + $0x8] sm:$0xff]
    %v3756 = vld [vmem:[#allocation10 + $0x10] sm:$0xff]
    %v3757 = vld [vmem:[#allocation10 + $0x18] sm:$0xff]
    %v3758 = vld [vmem:[#allocation10 + $0x20] sm:$0xff]
    %v3759 = vld [vmem:[#allocation10 + $0x28] sm:$0xff]
    %v3760 = vld [vmem:[#allocation10 + $0x30] sm:$0xff]
    %v3761 = vld [vmem:[#allocation10 + $0x38] sm:$0xff]
    %v3762 = vld [vmem:[#allocation10 + $0x40] sm:$0xff]
    %v3763 = vld [vmem:[#allocation10 + $0x48] sm:$0xff]
    %v3764 = vld [vmem:[#allocation10 + $0x50] sm:$0xff]
    %v3765 = vld [vmem:[#allocation10 + $0x58] sm:$0xff]
    %v3766 = vld [vmem:[#allocation10 + $0x60] sm:$0xff]
    %v3767 = vld [vmem:[#allocation10 + $0x68] sm:$0xff]
    %v3768 = vld [vmem:[#allocation10 + $0x70] sm:$0xff]
    %v3769 = vld [vmem:[#allocation10 + $0x78] sm:$0xff]
    %v3770 = vld [vmem:[#allocation10 + $0x80] sm:$0xff]
    %v3771 = vld [vmem:[#allocation10 + $0x88] sm:$0xff]
    %v3772 = vld [vmem:[#allocation10 + $0x90] sm:$0xff]
    %v3773 = vld [vmem:[#allocation10 + $0x98] sm:$0xff]
    %v3774 = vld [vmem:[#allocation10 + $0xa0] sm:$0xff]
    %v3775 = vld [vmem:[#allocation10 + $0xa8] sm:$0xff]
    %v3776 = vld [vmem:[#allocation10 + $0xb0] sm:$0xff]
    %v3777 = vld [vmem:[#allocation10 + $0xb8] sm:$0xff]
    %v3778 = vld [vmem:[#allocation10 + $0xc0] sm:$0xff]
    %v3779 = vld [vmem:[#allocation10 + $0xc8] sm:$0xff]
    %v3780 = vld [vmem:[#allocation10 + $0xd0] sm:$0xff]
    %v3781 = vld [vmem:[#allocation10 + $0xd8] sm:$0xff]
    %v3782 = vld [vmem:[#allocation10 + $0xe0] sm:$0xff]
    %v3783 = vld [vmem:[#allocation10 + $0xe8] sm:$0xff]
    %v3784 = vld [vmem:[#allocation10 + $0xf0] sm:$0xff]
    %v3785 = vld [vmem:[#allocation10 + $0xf8] sm:$0xff]
    %v3786 = vld [vmem:[#allocation10 + $0x100] sm:$0xff]
    %v3787 = vld [vmem:[#allocation10 + $0x108] sm:$0xff]
    %v3788 = vld [vmem:[#allocation10 + $0x110] sm:$0xff]
    %v3789 = vld [vmem:[#allocation10 + $0x118] sm:$0xff]
    %v3790 = vld [vmem:[#allocation10 + $0x120] sm:$0xff]
    %v3791 = vld [vmem:[#allocation10 + $0x128] sm:$0xff]
    %v3792 = vld [vmem:[#allocation10 + $0x130] sm:$0xff]
    %v3793 = vld [vmem:[#allocation10 + $0x138] sm:$0xff]
    %v3794 = vld [vmem:[#allocation10 + $0x140] sm:$0xff]
    %v3795 = vld [vmem:[#allocation10 + $0x148] sm:$0xff]
    %v3796 = vld [vmem:[#allocation10 + $0x150] sm:$0xff]
    %v3797 = vld [vmem:[#allocation10 + $0x158] sm:$0xff]
    %v3798 = vld [vmem:[#allocation10 + $0x160] sm:$0xff]
    %v3799 = vld [vmem:[#allocation10 + $0x168] sm:$0xff]
    %v3800 = vld [vmem:[#allocation10 + $0x170] sm:$0xff]
    %v3801 = vld [vmem:[#allocation10 + $0x178] sm:$0xff]
    %v3802 = vld [vmem:[#allocation10 + $0x180] sm:$0xff]
    %v3803 = vld [vmem:[#allocation10 + $0x188] sm:$0xff]
    %v3804 = vld [vmem:[#allocation10 + $0x190] sm:$0xff]
    %v3805 = vld [vmem:[#allocation10 + $0x198] sm:$0xff]
    %v3806 = vld [vmem:[#allocation10 + $0x1a0] sm:$0xff]
    %v3807 = vld [vmem:[#allocation10 + $0x1a8] sm:$0xff]
    %v3808 = vld [vmem:[#allocation10 + $0x1b0] sm:$0xff]
    %v3809 = vld [vmem:[#allocation10 + $0x1b8] sm:$0xff]
    %v3810 = vld [vmem:[#allocation10 + $0x1c0] sm:$0xff]
    %v3811 = vld [vmem:[#allocation10 + $0x1c8] sm:$0xff]
    %v3812 = vld [vmem:[#allocation10 + $0x1d0] sm:$0xff]
    %v3813 = vld [vmem:[#allocation10 + $0x1d8] sm:$0xff]
    %v3814 = vld [vmem:[#allocation10 + $0x1e0] sm:$0xff]
    %v3815 = vld [vmem:[#allocation10 + $0x1e8] sm:$0xff]
    %v3816 = vld [vmem:[#allocation10 + $0x1f0] sm:$0xff]
    %v3817 = vld [vmem:[#allocation10 + $0x1f8] sm:$0xff]
    %v3818 = vld [vmem:[#allocation10 + $0x200] sm:$0xff]
    %v3819 = vld [vmem:[#allocation10 + $0x208] sm:$0xff]
    %v3820 = vld [vmem:[#allocation10 + $0x210] sm:$0xff]
    %v3821 = vld [vmem:[#allocation10 + $0x218] sm:$0xff]
    %v3822 = vld [vmem:[#allocation10 + $0x220] sm:$0xff]
    %v3823 = vld [vmem:[#allocation10 + $0x228] sm:$0xff]
    %v3824 = vld [vmem:[#allocation10 + $0x230] sm:$0xff]
    %v3825 = vld [vmem:[#allocation10 + $0x238] sm:$0xff]
    %v3826 = vld [vmem:[#allocation10 + $0x240] sm:$0xff]
    %v3827 = vld [vmem:[#allocation10 + $0x248] sm:$0xff]
    %v3828 = vld [vmem:[#allocation10 + $0x250] sm:$0xff]
    %v3829 = vld [vmem:[#allocation10 + $0x258] sm:$0xff]
    %v3830 = vld [vmem:[#allocation10 + $0x260] sm:$0xff]
    %v3831 = vld [vmem:[#allocation10 + $0x268] sm:$0xff]
    %v3832 = vld [vmem:[#allocation10 + $0x270] sm:$0xff]
    %v3833 = vld [vmem:[#allocation10 + $0x278] sm:$0xff]
    %v3834 = vld [vmem:[#allocation10 + $0x280] sm:$0xff]
    %v3835 = vld [vmem:[#allocation10 + $0x288] sm:$0xff]
    %v3836 = vld [vmem:[#allocation10 + $0x290] sm:$0xff]
    %v3837 = vld [vmem:[#allocation10 + $0x298] sm:$0xff]
    %v3838 = vld [vmem:[#allocation10 + $0x2a0] sm:$0xff]
    %v3839 = vld [vmem:[#allocation10 + $0x2a8] sm:$0xff]
    %v3840 = vld [vmem:[#allocation10 + $0x2b0] sm:$0xff]
    %v3841 = vld [vmem:[#allocation10 + $0x2b8] sm:$0xff]
    %v3842 = vld [vmem:[#allocation10 + $0x2c0] sm:$0xff]
    %v3843 = vld [vmem:[#allocation10 + $0x2c8] sm:$0xff]
    %v3844 = vld [vmem:[#allocation10 + $0x2d0] sm:$0xff]
    %v3845 = vld [vmem:[#allocation10 + $0x2d8] sm:$0xff]
    %v3846 = vld [vmem:[#allocation10 + $0x2e0] sm:$0xff]
    %v3847 = vld [vmem:[#allocation10 + $0x2e8] sm:$0xff]
    %v3848 = vld [vmem:[#allocation10 + $0x2f0] sm:$0xff]
    %v3849 = vld [vmem:[#allocation10 + $0x2f8] sm:$0xff]
    %v3850 = vld [vmem:[#allocation10 + $0x300] sm:$0xff]
    %v3851 = vld [vmem:[#allocation10 + $0x308] sm:$0xff]
    %v3852 = vld [vmem:[#allocation10 + $0x310] sm:$0xff]
    %v3853 = vld [vmem:[#allocation10 + $0x318] sm:$0xff]
    %v3854 = vld [vmem:[#allocation10 + $0x320] sm:$0xff]
    %v3855 = vld [vmem:[#allocation10 + $0x328] sm:$0xff]
    %v3856 = vld [vmem:[#allocation10 + $0x330] sm:$0xff]
    %v3857 = vld [vmem:[#allocation10 + $0x338] sm:$0xff]
    %v3858 = vld [vmem:[#allocation10 + $0x340] sm:$0xff]
    %v3859 = vld [vmem:[#allocation10 + $0x348] sm:$0xff]
    %v3860 = vld [vmem:[#allocation10 + $0x350] sm:$0xff]
    %v3861 = vld [vmem:[#allocation10 + $0x358] sm:$0xff]
    %v3862 = vld [vmem:[#allocation10 + $0x360] sm:$0xff]
    %v3863 = vld [vmem:[#allocation10 + $0x368] sm:$0xff]
    %v3864 = vld [vmem:[#allocation10 + $0x370] sm:$0xff]
    %v3865 = vld [vmem:[#allocation10 + $0x378] sm:$0xff]
    %v3866 = vld [vmem:[#allocation10 + $0x380] sm:$0xff]
    %v3867 = vld [vmem:[#allocation10 + $0x388] sm:$0xff]
    %v3868 = vld [vmem:[#allocation10 + $0x390] sm:$0xff]
    %v3869 = vld [vmem:[#allocation10 + $0x398] sm:$0xff]
    %v3870 = vld [vmem:[#allocation10 + $0x3a0] sm:$0xff]
    %v3871 = vld [vmem:[#allocation10 + $0x3a8] sm:$0xff]
    %v3872 = vld [vmem:[#allocation10 + $0x3b0] sm:$0xff]
    %v3873 = vld [vmem:[#allocation10 + $0x3b8] sm:$0xff]
    %v3874 = vld [vmem:[#allocation10 + $0x3c0] sm:$0xff]
    %v3875 = vld [vmem:[#allocation10 + $0x3c8] sm:$0xff]
    %v3876 = vld [vmem:[#allocation10 + $0x3d0] sm:$0xff]
    %v3877 = vld [vmem:[#allocation10 + $0x3d8] sm:$0xff]
    %v3878 = vld [vmem:[#allocation10 + $0x3e0] sm:$0xff]
    %v3879 = vld [vmem:[#allocation10 + $0x3e8] sm:$0xff]
    %v3880 = vld [vmem:[#allocation10 + $0x3f0] sm:$0xff]
    %v3881 = vld [vmem:[#allocation10 + $0x3f8] sm:$0xff]
    %v3882 = vld [vmem:[%s10] sm:$0x3]
    %v3884 = vlaneseq
    %v3885 = vshrl.u32 %v3884, 7
    %v3886 = vsub.s32 0, %v3885
    %v3887 = vrot.slane %v3882, %v3886
    %v3888 = vlaneseq
    %v3889 = vshrl.u32 %v3888, 7
    %v3890 = vsub.s32 1, %v3889
    %v3891 = vrot.slane %v3882, %v3890
    %3894 = vmatprep.subr.mxu0 %v3755
    %3895 = vmatpush1.msra.mxu0 %v3754
    %3896 = vmatprep.subr.mxu0 %v3757
    %3897 = vmatpush1.msra.mxu0 %v3756
    %3898 = vmatprep.subr.mxu0 %v3759
    %3899 = vmatpush1.msra.mxu0 %v3758
    %3900 = vmatprep.subr.mxu0 %v3761
    %3901 = vmatpush1.msra.mxu0 %v3760
    %3902 = vmatprep.subr.mxu0 %v3763
    %3903 = vmatpush1.msra.mxu0 %v3762
    %3904 = vmatprep.subr.mxu0 %v3765
    %3905 = vmatpush1.msra.mxu0 %v3764
    %3906 = vmatprep.subr.mxu0 %v3767
    %3907 = vmatpush1.msra.mxu0 %v3766
    %3908 = vmatprep.subr.mxu0 %v3769
    %3909 = vmatpush1.msra.mxu0 %v3768
    %3910 = vmatprep.subr.mxu0 %v3771
    %3911 = vmatpush1.msra.mxu0 %v3770
    %3912 = vmatprep.subr.mxu0 %v3773
    %3913 = vmatpush1.msra.mxu0 %v3772
    %3914 = vmatprep.subr.mxu0 %v3775
    %3915 = vmatpush1.msra.mxu0 %v3774
    %3916 = vmatprep.subr.mxu0 %v3777
    %3917 = vmatpush1.msra.mxu0 %v3776
    %3918 = vmatprep.subr.mxu0 %v3779
    %3919 = vmatpush1.msra.mxu0 %v3778
    %3920 = vmatprep.subr.mxu0 %v3781
    %3921 = vmatpush1.msra.mxu0 %v3780
    %3922 = vmatprep.subr.mxu0 %v3783
    %3923 = vmatpush1.msra.mxu0 %v3782
    %3924 = vmatprep.subr.mxu0 %v3785
    %3925 = vmatpush1.msra.mxu0 %v3784
    %3926 = vmatprep.subr.mxu0 %v3787
    %3927 = vmatpush1.msra.mxu0 %v3786
    %3928 = vmatprep.subr.mxu0 %v3789
    %3929 = vmatpush1.msra.mxu0 %v3788
    %3930 = vmatprep.subr.mxu0 %v3791
    %3931 = vmatpush1.msra.mxu0 %v3790
    %3932 = vmatprep.subr.mxu0 %v3793
    %3933 = vmatpush1.msra.mxu0 %v3792
    %3934 = vmatprep.subr.mxu0 %v3795
    %3935 = vmatpush1.msra.mxu0 %v3794
    %3936 = vmatprep.subr.mxu0 %v3797
    %3937 = vmatpush1.msra.mxu0 %v3796
    %3938 = vmatprep.subr.mxu0 %v3799
    %3939 = vmatpush1.msra.mxu0 %v3798
    %3940 = vmatprep.subr.mxu0 %v3801
    %3941 = vmatpush1.msra.mxu0 %v3800
    %3942 = vmatprep.subr.mxu0 %v3803
    %3943 = vmatpush1.msra.mxu0 %v3802
    %3944 = vmatprep.subr.mxu0 %v3805
    %3945 = vmatpush1.msra.mxu0 %v3804
    %3946 = vmatprep.subr.mxu0 %v3807
    %3947 = vmatpush1.msra.mxu0 %v3806
    %3948 = vmatprep.subr.mxu0 %v3809
    %3949 = vmatpush1.msra.mxu0 %v3808
    %3950 = vmatprep.subr.mxu0 %v3811
    %3951 = vmatpush1.msra.mxu0 %v3810
    %3952 = vmatprep.subr.mxu0 %v3813
    %3953 = vmatpush1.msra.mxu0 %v3812
    %3954 = vmatprep.subr.mxu0 %v3815
    %3955 = vmatpush1.msra.mxu0 %v3814
    %3956 = vmatprep.subr.mxu0 %v3817
    %3957 = vmatpush1.msra.mxu0 %v3816
    %3958 = vmatprep.mubr.f32.mxu0 %v3747
    %3959 = vmatmul.mubr.f32.gmra.mrb[0].mxu0 %v3746
    %v3960 = vpop.f32.mrb[0].mxu0
    %v3961 = vadd.f32 %v3887, %v3960
    %v3962 = vpop.f32.mrb[0].mxu0
    %v3963 = vadd.f32 %v3891, %v3962
    %3964 = vmatprep.mubr.f32.mxu0 %v3751
    %3965 = vmatmul.mubr.f32.gmra.mrb[0].mxu0 %v3750
    %v3966 = vpop.f32.mrb[0].mxu0
    %v3967 = vadd.f32 %v3887, %v3966
    %v3968 = vpop.f32.mrb[0].mxu0
    %v3969 = vadd.f32 %v3891, %v3968
    %3970 = vdwg.mxu0
    %3971 = vmatprep.subr.mxu0 %v3819
    %3972 = vmatpush1.msra.mxu0 %v3818
    %3973 = vmatprep.subr.mxu0 %v3821
    %3974 = vmatpush1.msra.mxu0 %v3820
    %3975 = vmatprep.subr.mxu0 %v3823
    %3976 = vmatpush1.msra.mxu0 %v3822
    %3977 = vmatprep.subr.mxu0 %v3825
    %3978 = vmatpush1.msra.mxu0 %v3824
    %3979 = vmatprep.subr.mxu0 %v3827
    %3980 = vmatpush1.msra.mxu0 %v3826
    %3981 = vmatprep.subr.mxu0 %v3829
    %3982 = vmatpush1.msra.mxu0 %v3828
    %3983 = vmatprep.subr.mxu0 %v3831
    %3984 = vmatpush1.msra.mxu0 %v3830
    %3985 = vmatprep.subr.mxu0 %v3833
    %3986 = vmatpush1.msra.mxu0 %v3832
    %3987 = vmatprep.subr.mxu0 %v3835
    %3988 = vmatpush1.msra.mxu0 %v3834
    %3989 = vmatprep.subr.mxu0 %v3837
    %3990 = vmatpush1.msra.mxu0 %v3836
    %3991 = vmatprep.subr.mxu0 %v3839
    %3992 = vmatpush1.msra.mxu0 %v3838
    %3993 = vmatprep.subr.mxu0 %v3841
    %3994 = vmatpush1.msra.mxu0 %v3840
    %3995 = vmatprep.subr.mxu0 %v3843
    %3996 = vmatpush1.msra.mxu0 %v3842
    %3997 = vmatprep.subr.mxu0 %v3845
    %3998 = vmatpush1.msra.mxu0 %v3844
    %3999 = vmatprep.subr.mxu0 %v3847
    %4000 = vmatpush1.msra.mxu0 %v3846
    %4001 = vmatprep.subr.mxu0 %v3849
    %4002 = vmatpush1.msra.mxu0 %v3848
    %4003 = vmatprep.subr.mxu0 %v3851
    %4004 = vmatpush1.msra.mxu0 %v3850
    %4005 = vmatprep.subr.mxu0 %v3853
    %4006 = vmatpush1.msra.mxu0 %v3852
    %4007 = vmatprep.subr.mxu0 %v3855
    %4008 = vmatpush1.msra.mxu0 %v3854
    %4009 = vmatprep.subr.mxu0 %v3857
    %4010 = vmatpush1.msra.mxu0 %v3856
    %4011 = vmatprep.subr.mxu0 %v3859
    %4012 = vmatpush1.msra.mxu0 %v3858
    %4013 = vmatprep.subr.mxu0 %v3861
    %4014 = vmatpush1.msra.mxu0 %v3860
    %4015 = vmatprep.subr.mxu0 %v3863
    %4016 = vmatpush1.msra.mxu0 %v3862
    %4017 = vmatprep.subr.mxu0 %v3865
    %4018 = vmatpush1.msra.mxu0 %v3864
    %4019 = vmatprep.subr.mxu0 %v3867
    %4020 = vmatpush1.msra.mxu0 %v3866
    %4021 = vmatprep.subr.mxu0 %v3869
    %4022 = vmatpush1.msra.mxu0 %v3868
    %4023 = vmatprep.subr.mxu0 %v3871
    %4024 = vmatpush1.msra.mxu0 %v3870
    %4025 = vmatprep.subr.mxu0 %v3873
    %4026 = vmatpush1.msra.mxu0 %v3872
    %4027 = vmatprep.subr.mxu0 %v3875
    %4028 = vmatpush1.msra.mxu0 %v3874
    %4029 = vmatprep.subr.mxu0 %v3877
    %4030 = vmatpush1.msra.mxu0 %v3876
    %4031 = vmatprep.subr.mxu0 %v3879
    %4032 = vmatpush1.msra.mxu0 %v3878
    %4033 = vmatprep.subr.mxu0 %v3881
    %4034 = vmatpush1.msra.mxu0 %v3880
    %4035 = vmatprep.mubr.f32.mxu0 %v3749
    %4036 = vmatmul.mubr.f32.gmra.mrb[0].mxu0 %v3748
    %v4037 = vpop.f32.mrb[0].mxu0
    %v4038 = vadd.f32 %v3961, %v4037
    %v4039 = vpop.f32.mrb[0].mxu0
    %v4040 = vadd.f32 %v3963, %v4039
    %4041 = vmatprep.mubr.f32.mxu0 %v3753
    %4042 = vmatmul.mubr.f32.gmra.mrb[0].mxu0 %v3752
    %v4043 = vpop.f32.mrb[0].mxu0
    %v4044 = vadd.f32 %v3967, %v4043
    %v4045 = vpop.f32.mrb[0].mxu0
    %v4046 = vadd.f32 %v3969, %v4045
    %4047 = vdwg.mxu0
    %4048 = vst [vmem:[%s21] sm:$0xff] %v4038
    %4049 = vst [vmem:[%s21 + $0x8] sm:$0xff] %v4040
    %4050 = vst [vmem:[%s21 + $0x10] sm:$0xff] %v4044
    %4051 = vst [vmem:[%s21 + $0x18] sm:$0xff] %v4046
    %v4052 = vld [vmem:[%s1] sm:$0xff]
    %v4053 = vld [vmem:[%s1 + $0x8] sm:$0xff]
    %v4054 = vmul.f32 %v4040, 0.5
    %v4055 = vmul.f32 %v4046, 0.5
    %v4056 = vmul.f32 %v4054, 1.442695
    %v4057 = vpow.pop %v4056
    %v4058 = vmul.f32 %v4055, 1.442695
    %v4059 = vpow.pop %v4058
    %v4060 = vmul.f32 %v4052, %v4057
    %v4061 = vmul.f32 %v4053, %v4059
    %v4062 = vadd.f32 %v4038, %v4060
    %v4063 = vadd.f32 %v4044, %v4061
    %v4064 = vld [vmem:[#allocation11] sm:$0xff]
    %v4065 = vld [vmem:[#allocation11 + $0x8] sm:$0xff]
    %v4066 = vld [vmem:[#allocation11 + $0x10] sm:$0xff]
    %v4067 = vld [vmem:[#allocation11 + $0x18] sm:$0xff]
    %v4068 = vld [vmem:[#allocation11 + $0x20] sm:$0xff]
    %v4069 = vld [vmem:[#allocation11 + $0x28] sm:$0xff]
    %v4070 = vld [vmem:[#allocation11 + $0x30] sm:$0xff]
    %v4071 = vld [vmem:[#allocation11 + $0x38] sm:$0xff]
    %v4072 = vld [vmem:[#allocation11 + $0x40] sm:$0xff]
    %v4073 = vld [vmem:[#allocation11 + $0x48] sm:$0xff]
    %v4074 = vld [vmem:[#allocation11 + $0x50] sm:$0xff]
    %v4075 = vld [vmem:[#allocation11 + $0x58] sm:$0xff]
    %v4076 = vld [vmem:[#allocation11 + $0x60] sm:$0xff]
    %v4077 = vld [vmem:[#allocation11 + $0x68] sm:$0xff]
    %v4078 = vld [vmem:[#allocation11 + $0x70] sm:$0xff]
    %v4079 = vld [vmem:[#allocation11 + $0x78] sm:$0xff]
    %v4080 = vld [vmem:[#allocation11 + $0x80] sm:$0xff]
    %v4081 = vld [vmem:[#allocation11 + $0x88] sm:$0xff]
    %v4082 = vld [vmem:[#allocation11 + $0x90] sm:$0xff]
    %v4083 = vld [vmem:[#allocation11 + $0x98] sm:$0xff]
    %v4084 = vld [vmem:[#allocation11 + $0xa0] sm:$0xff]
    %v4085 = vld [vmem:[#allocation11 + $0xa8] sm:$0xff]
    %v4086 = vld [vmem:[#allocation11 + $0xb0] sm:$0xff]
    %v4087 = vld [vmem:[#allocation11 + $0xb8] sm:$0xff]
    %v4088 = vld [vmem:[#allocation11 + $0xc0] sm:$0xff]
    %v4089 = vld [vmem:[#allocation11 + $0xc8] sm:$0xff]
    %v4090 = vld [vmem:[#allocation11 + $0xd0] sm:$0xff]
    %v4091 = vld [vmem:[#allocation11 + $0xd8] sm:$0xff]
    %v4092 = vld [vmem:[#allocation11 + $0xe0] sm:$0xff]
    %v4093 = vld [vmem:[#allocation11 + $0xe8] sm:$0xff]
    %v4094 = vld [vmem:[#allocation11 + $0xf0] sm:$0xff]
    %v4095 = vld [vmem:[#allocation11 + $0xf8] sm:$0xff]
    %v4096 = vld [vmem:[#allocation11 + $0x100] sm:$0xff]
    %v4097 = vld [vmem:[#allocation11 + $0x108] sm:$0xff]
    %v4098 = vld [vmem:[#allocation11 + $0x110] sm:$0xff]
    %v4099 = vld [vmem:[#allocation11 + $0x118] sm:$0xff]
    %v4100 = vld [vmem:[#allocation11 + $0x120] sm:$0xff]
    %v4101 = vld [vmem:[#allocation11 + $0x128] sm:$0xff]
    %v4102 = vld [vmem:[#allocation11 + $0x130] sm:$0xff]
    %v4103 = vld [vmem:[#allocation11 + $0x138] sm:$0xff]
    %v4104 = vld [vmem:[#allocation11 + $0x140] sm:$0xff]
    %v4105 = vld [vmem:[#allocation11 + $0x148] sm:$0xff]
    %v4106 = vld [vmem:[#allocation11 + $0x150] sm:$0xff]
    %v4107 = vld [vmem:[#allocation11 + $0x158] sm:$0xff]
    %v4108 = vld [vmem:[#allocation11 + $0x160] sm:$0xff]
    %v4109 = vld [vmem:[#allocation11 + $0x168] sm:$0xff]
    %v4110 = vld [vmem:[#allocation11 + $0x170] sm:$0xff]
    %v4111 = vld [vmem:[#allocation11 + $0x178] sm:$0xff]
    %v4112 = vld [vmem:[#allocation11 + $0x180] sm:$0xff]
    %v4113 = vld [vmem:[#allocation11 + $0x188] sm:$0xff]
    %v4114 = vld [vmem:[#allocation11 + $0x190] sm:$0xff]
    %v4115 = vld [vmem:[#allocation11 + $0x198] sm:$0xff]
    %v4116 = vld [vmem:[#allocation11 + $0x1a0] sm:$0xff]
    %v4117 = vld [vmem:[#allocation11 + $0x1a8] sm:$0xff]
    %v4118 = vld [vmem:[#allocation11 + $0x1b0] sm:$0xff]
    %v4119 = vld [vmem:[#allocation11 + $0x1b8] sm:$0xff]
    %v4120 = vld [vmem:[#allocation11 + $0x1c0] sm:$0xff]
    %v4121 = vld [vmem:[#allocation11 + $0x1c8] sm:$0xff]
    %v4122 = vld [vmem:[#allocation11 + $0x1d0] sm:$0xff]
    %v4123 = vld [vmem:[#allocation11 + $0x1d8] sm:$0xff]
    %v4124 = vld [vmem:[#allocation11 + $0x1e0] sm:$0xff]
    %v4125 = vld [vmem:[#allocation11 + $0x1e8] sm:$0xff]
    %v4126 = vld [vmem:[#allocation11 + $0x1f0] sm:$0xff]
    %v4127 = vld [vmem:[#allocation11 + $0x1f8] sm:$0xff]
    %v4128 = vld [vmem:[%s12] sm:$0xf]
    %v4130 = vlaneseq
    %v4131 = vshrl.u32 %v4130, 7
    %v4132 = vsub.s32 0, %v4131
    %v4133 = vrot.slane %v4128, %v4132
    %v4134 = vlaneseq
    %v4135 = vshrl.u32 %v4134, 7
    %v4136 = vsub.s32 1, %v4135
    %v4137 = vrot.slane %v4128, %v4136
    %v4138 = vlaneseq
    %v4139 = vshrl.u32 %v4138, 7
    %v4140 = vsub.s32 2, %v4139
    %v4141 = vrot.slane %v4128, %v4140
    %v4142 = vlaneseq
    %v4143 = vshrl.u32 %v4142, 7
    %v4144 = vsub.s32 3, %v4143
    %v4145 = vrot.slane %v4128, %v4144
    %4150 = vmatprep.subr.mxu0 %v4065
    %4151 = vmatpush1.msra.mxu0 %v4064
    %4152 = vmatprep.subr.mxu0 %v4069
    %4153 = vmatpush1.msra.mxu0 %v4068
    %4154 = vmatprep.subr.mxu0 %v4073
    %4155 = vmatpush1.msra.mxu0 %v4072
    %4156 = vmatprep.subr.mxu0 %v4077
    %4157 = vmatpush1.msra.mxu0 %v4076
    %4158 = vmatprep.subr.mxu0 %v4081
    %4159 = vmatpush1.msra.mxu0 %v4080
    %4160 = vmatprep.subr.mxu0 %v4085
    %4161 = vmatpush1.msra.mxu0 %v4084
    %4162 = vmatprep.subr.mxu0 %v4089
    %4163 = vmatpush1.msra.mxu0 %v4088
    %4164 = vmatprep.subr.mxu0 %v4093
    %4165 = vmatpush1.msra.mxu0 %v4092
    %4166 = vmatprep.subr.mxu0 %v4097
    %4167 = vmatpush1.msra.mxu0 %v4096
    %4168 = vmatprep.subr.mxu0 %v4101
    %4169 = vmatpush1.msra.mxu0 %v4100
    %4170 = vmatprep.subr.mxu0 %v4105
    %4171 = vmatpush1.msra.mxu0 %v4104
    %4172 = vmatprep.subr.mxu0 %v4109
    %4173 = vmatpush1.msra.mxu0 %v4108
    %4174 = vmatprep.subr.mxu0 %v4113
    %4175 = vmatpush1.msra.mxu0 %v4112
    %4176 = vmatprep.subr.mxu0 %v4117
    %4177 = vmatpush1.msra.mxu0 %v4116
    %4178 = vmatprep.subr.mxu0 %v4121
    %4179 = vmatpush1.msra.mxu0 %v4120
    %4180 = vmatprep.subr.mxu0 %v4125
    %4181 = vmatpush1.msra.mxu0 %v4124
    %4182 = vmatprep.subr.mxu0 0.0
    %4183 = vmatpush1.msra.mxu0 0.0
    %4184 = vmatprep.subr.mxu0 0.0
    %4185 = vmatpush1.msra.mxu0 0.0
    %4186 = vmatprep.subr.mxu0 0.0
    %4187 = vmatpush1.msra.mxu0 0.0
    %4188 = vmatprep.subr.mxu0 0.0
    %4189 = vmatpush1.msra.mxu0 0.0
    %4190 = vmatprep.subr.mxu0 0.0
    %4191 = vmatpush1.msra.mxu0 0.0
    %4192 = vmatprep.subr.mxu0 0.0
    %4193 = vmatpush1.msra.mxu0 0.0
    %4194 = vmatprep.subr.mxu0 0.0
    %4195 = vmatpush1.msra.mxu0 0.0
    %4196 = vmatprep.subr.mxu0 0.0
    %4197 = vmatpush1.msra.mxu0 0.0
    %4198 = vmatprep.subr.mxu0 0.0
    %4199 = vmatpush1.msra.mxu0 0.0
    %4200 = vmatprep.subr.mxu0 0.0
    %4201 = vmatpush1.msra.mxu0 0.0
    %4202 = vmatprep.subr.mxu0 0.0
    %4203 = vmatpush1.msra.mxu0 0.0
    %4204 = vmatprep.subr.mxu0 0.0
    %4205 = vmatpush1.msra.mxu0 0.0
    %4206 = vmatprep.subr.mxu0 0.0
    %4207 = vmatpush1.msra.mxu0 0.0
    %4208 = vmatprep.subr.mxu0 0.0
    %4209 = vmatpush1.msra.mxu0 0.0
    %4210 = vmatprep.subr.mxu0 0.0
    %4211 = vmatpush1.msra.mxu0 0.0
    %4212 = vmatprep.subr.mxu0 0.0
    %4213 = vmatpush1.msra.mxu0 0.0
    %4214 = vmatprep.mubr.f32.mxu0 0.0
    %4215 = vmatmul.mubr.f32.gmra.mrb[0].mxu0 %v4062
    %v4216 = vpop.f32.mrb[0].mxu0
    %v4217 = vadd.f32 %v4133, %v4216
    %v4218 = vpop.f32.mrb[0].mxu0
    %v4219 = vadd.f32 %v4137, %v4218
    %4220 = vmatprep.mubr.f32.mxu0 0.0
    %4221 = vmatmul.mubr.f32.gmra.mrb[0].mxu0 %v4063
    %v4222 = vpop.f32.mrb[0].mxu0
    %v4223 = vadd.f32 %v4133, %v4222
    %v4224 = vpop.f32.mrb[0].mxu0
    %v4225 = vadd.f32 %v4137, %v4224
    %4226 = vdwg.mxu0
    %4227 = vmatprep.subr.mxu0 %v4067
    %4228 = vmatpush1.msra.mxu0 %v4066
    %4229 = vmatprep.subr.mxu0 %v4071
    %4230 = vmatpush1.msra.mxu0 %v4070
    %4231 = vmatprep.subr.mxu0 %v4075
    %4232 = vmatpush1.msra.mxu0 %v4074
    %4233 = vmatprep.subr.mxu0 %v4079
    %4234 = vmatpush1.msra.mxu0 %v4078
    %4235 = vmatprep.subr.mxu0 %v4083
    %4236 = vmatpush1.msra.mxu0 %v4082
    %4237 = vmatprep.subr.mxu0 %v4087
    %4238 = vmatpush1.msra.mxu0 %v4086
    %4239 = vmatprep.subr.mxu0 %v4091
    %4240 = vmatpush1.msra.mxu0 %v4090
    %4241 = vmatprep.subr.mxu0 %v4095
    %4242 = vmatpush1.msra.mxu0 %v4094
    %4243 = vmatprep.subr.mxu0 %v4099
    %4244 = vmatpush1.msra.mxu0 %v4098
    %4245 = vmatprep.subr.mxu0 %v4103
    %4246 = vmatpush1.msra.mxu0 %v4102
    %4247 = vmatprep.subr.mxu0 %v4107
    %4248 = vmatpush1.msra.mxu0 %v4106
    %4249 = vmatprep.subr.mxu0 %v4111
    %4250 = vmatpush1.msra.mxu0 %v4110
    %4251 = vmatprep.subr.mxu0 %v4115
    %4252 = vmatpush1.msra.mxu0 %v4114
    %4253 = vmatprep.subr.mxu0 %v4119
    %4254 = vmatpush1.msra.mxu0 %v4118
    %4255 = vmatprep.subr.mxu0 %v4123
    %4256 = vmatpush1.msra.mxu0 %v4122
    %4257 = vmatprep.subr.mxu0 %v4127
    %4258 = vmatpush1.msra.mxu0 %v4126
    %4259 = vmatprep.subr.mxu0 0.0
    %4260 = vmatpush1.msra.mxu0 0.0
    %4261 = vmatprep.subr.mxu0 0.0
    %4262 = vmatpush1.msra.mxu0 0.0
    %4263 = vmatprep.subr.mxu0 0.0
    %4264 = vmatpush1.msra.mxu0 0.0
    %4265 = vmatprep.subr.mxu0 0.0
    %4266 = vmatpush1.msra.mxu0 0.0
    %4267 = vmatprep.subr.mxu0 0.0
    %4268 = vmatpush1.msra.mxu0 0.0
    %4269 = vmatprep.subr.mxu0 0.0
    %4270 = vmatpush1.msra.mxu0 0.0
    %4271 = vmatprep.subr.mxu0 0.0
    %4272 = vmatpush1.msra.mxu0 0.0
    %4273 = vmatprep.subr.mxu0 0.0
    %4274 = vmatpush1.msra.mxu0 0.0
    %4275 = vmatprep.subr.mxu0 0.0
    %4276 = vmatpush1.msra.mxu0 0.0
    %4277 = vmatprep.subr.mxu0 0.0
    %4278 = vmatpush1.msra.mxu0 0.0
    %4279 = vmatprep.subr.mxu0 0.0
    %4280 = vmatpush1.msra.mxu0 0.0
    %4281 = vmatprep.subr.mxu0 0.0
    %4282 = vmatpush1.msra.mxu0 0.0
    %4283 = vmatprep.subr.mxu0 0.0
    %4284 = vmatpush1.msra.mxu0 0.0
    %4285 = vmatprep.subr.mxu0 0.0
    %4286 = vmatpush1.msra.mxu0 0.0
    %4287 = vmatprep.subr.mxu0 0.0
    %4288 = vmatpush1.msra.mxu0 0.0
    %4289 = vmatprep.subr.mxu0 0.0
    %4290 = vmatpush1.msra.mxu0 0.0
    %4291 = vmatprep.mubr.f32.mxu0 0.0
    %4292 = vmatmul.mubr.f32.gmra.mrb[0].mxu0 %v4062
    %v4293 = vpop.f32.mrb[0].mxu0
    %v4294 = vadd.f32 %v4141, %v4293
    %v4295 = vpop.f32.mrb[0].mxu0
    %v4296 = vadd.f32 %v4145, %v4295
    %4297 = vmatprep.mubr.f32.mxu0 0.0
    %4298 = vmatmul.mubr.f32.gmra.mrb[0].mxu0 %v4063
    %v4299 = vpop.f32.mrb[0].mxu0
    %v4300 = vadd.f32 %v4141, %v4299
    %v4301 = vpop.f32.mrb[0].mxu0
    %v4302 = vadd.f32 %v4145, %v4301
    %4303 = vdwg.mxu0
    %v4304 = vmax.f32 %v4217, 0.0
    %v4305 = vmax.f32 %v4219, 0.0
    %v4306 = vmax.f32 %v4294, 0.0
    %v4307 = vmax.f32 %v4296, 0.0
    %v4308 = vmax.f32 %v4223, 0.0
    %v4309 = vmax.f32 %v4225, 0.0
    %v4310 = vmax.f32 %v4300, 0.0
    %v4311 = vmax.f32 %v4302, 0.0
    %v4312 = vld [vmem:[#allocation13] sm:$0xff]
    %v4313 = vld [vmem:[#allocation13 + $0x8] sm:$0xff]
    %v4314 = vld [vmem:[#allocation13 + $0x10] sm:$0xff]
    %v4315 = vld [vmem:[#allocation13 + $0x18] sm:$0xff]
    %v4316 = vld [vmem:[#allocation13 + $0x20] sm:$0xff]
    %v4317 = vld [vmem:[#allocation13 + $0x28] sm:$0xff]
    %v4318 = vld [vmem:[#allocation13 + $0x30] sm:$0xff]
    %v4319 = vld [vmem:[#allocation13 + $0x38] sm:$0xff]
    %v4320 = vld [vmem:[#allocation13 + $0x40] sm:$0xff]
    %v4321 = vld [vmem:[#allocation13 + $0x48] sm:$0xff]
    %v4322 = vld [vmem:[#allocation13 + $0x50] sm:$0xff]
    %v4323 = vld [vmem:[#allocation13 + $0x58] sm:$0xff]
    %v4324 = vld [vmem:[#allocation13 + $0x60] sm:$0xff]
    %v4325 = vld [vmem:[#allocation13 + $0x68] sm:$0xff]
    %v4326 = vld [vmem:[#allocation13 + $0x70] sm:$0xff]
    %v4327 = vld [vmem:[#allocation13 + $0x78] sm:$0xff]
    %v4328 = vld [vmem:[#allocation13 + $0x80] sm:$0xff]
    %v4329 = vld [vmem:[#allocation13 + $0x88] sm:$0xff]
    %v4330 = vld [vmem:[#allocation13 + $0x90] sm:$0xff]
    %v4331 = vld [vmem:[#allocation13 + $0x98] sm:$0xff]
    %v4332 = vld [vmem:[#allocation13 + $0xa0] sm:$0xff]
    %v4333 = vld [vmem:[#allocation13 + $0xa8] sm:$0xff]
    %v4334 = vld [vmem:[#allocation13 + $0xb0] sm:$0xff]
    %v4335 = vld [vmem:[#allocation13 + $0xb8] sm:$0xff]
    %v4336 = vld [vmem:[#allocation13 + $0xc0] sm:$0xff]
    %v4337 = vld [vmem:[#allocation13 + $0xc8] sm:$0xff]
    %v4338 = vld [vmem:[#allocation13 + $0xd0] sm:$0xff]
    %v4339 = vld [vmem:[#allocation13 + $0xd8] sm:$0xff]
    %v4340 = vld [vmem:[#allocation13 + $0xe0] sm:$0xff]
    %v4341 = vld [vmem:[#allocation13 + $0xe8] sm:$0xff]
    %v4342 = vld [vmem:[#allocation13 + $0xf0] sm:$0xff]
    %v4343 = vld [vmem:[#allocation13 + $0xf8] sm:$0xff]
    %v4344 = vld [vmem:[#allocation13 + $0x100] sm:$0xff]
    %v4345 = vld [vmem:[#allocation13 + $0x108] sm:$0xff]
    %v4346 = vld [vmem:[#allocation13 + $0x110] sm:$0xff]
    %v4347 = vld [vmem:[#allocation13 + $0x118] sm:$0xff]
    %v4348 = vld [vmem:[#allocation13 + $0x120] sm:$0xff]
    %v4349 = vld [vmem:[#allocation13 + $0x128] sm:$0xff]
    %v4350 = vld [vmem:[#allocation13 + $0x130] sm:$0xff]
    %v4351 = vld [vmem:[#allocation13 + $0x138] sm:$0xff]
    %v4352 = vld [vmem:[#allocation13 + $0x140] sm:$0xff]
    %v4353 = vld [vmem:[#allocation13 + $0x148] sm:$0xff]
    %v4354 = vld [vmem:[#allocation13 + $0x150] sm:$0xff]
    %v4355 = vld [vmem:[#allocation13 + $0x158] sm:$0xff]
    %v4356 = vld [vmem:[#allocation13 + $0x160] sm:$0xff]
    %v4357 = vld [vmem:[#allocation13 + $0x168] sm:$0xff]
    %v4358 = vld [vmem:[#allocation13 + $0x170] sm:$0xff]
    %v4359 = vld [vmem:[#allocation13 + $0x178] sm:$0xff]
    %v4360 = vld [vmem:[#allocation13 + $0x180] sm:$0xff]
    %v4361 = vld [vmem:[#allocation13 + $0x188] sm:$0xff]
    %v4362 = vld [vmem:[#allocation13 + $0x190] sm:$0xff]
    %v4363 = vld [vmem:[#allocation13 + $0x198] sm:$0xff]
    %v4364 = vld [vmem:[#allocation13 + $0x1a0] sm:$0xff]
    %v4365 = vld [vmem:[#allocation13 + $0x1a8] sm:$0xff]
    %v4366 = vld [vmem:[#allocation13 + $0x1b0] sm:$0xff]
    %v4367 = vld [vmem:[#allocation13 + $0x1b8] sm:$0xff]
    %v4368 = vld [vmem:[#allocation13 + $0x1c0] sm:$0xff]
    %v4369 = vld [vmem:[#allocation13 + $0x1c8] sm:$0xff]
    %v4370 = vld [vmem:[#allocation13 + $0x1d0] sm:$0xff]
    %v4371 = vld [vmem:[#allocation13 + $0x1d8] sm:$0xff]
    %v4372 = vld [vmem:[#allocation13 + $0x1e0] sm:$0xff]
    %v4373 = vld [vmem:[#allocation13 + $0x1e8] sm:$0xff]
    %v4374 = vld [vmem:[#allocation13 + $0x1f0] sm:$0xff]
    %v4375 = vld [vmem:[#allocation13 + $0x1f8] sm:$0xff]
    %v4376 = vld [vmem:[%s14] sm:$0x1]
    %v4378 = vlaneseq
    %v4379 = vshrl.u32 %v4378, 7
    %v4380 = vsub.s32 0, %v4379
    %v4381 = vrot.slane %v4376, %v4380
    %4383 = vmatprep.subr.mxu0 0.0
    %4384 = vmatpush1.msra.mxu0 %v4312
    %4385 = vmatprep.subr.mxu0 0.0
    %4386 = vmatpush1.msra.mxu0 %v4313
    %4387 = vmatprep.subr.mxu0 0.0
    %4388 = vmatpush1.msra.mxu0 %v4314
    %4389 = vmatprep.subr.mxu0 0.0
    %4390 = vmatpush1.msra.mxu0 %v4315
    %4391 = vmatprep.subr.mxu0 0.0
    %4392 = vmatpush1.msra.mxu0 %v4316
    %4393 = vmatprep.subr.mxu0 0.0
    %4394 = vmatpush1.msra.mxu0 %v4317
    %4395 = vmatprep.subr.mxu0 0.0
    %4396 = vmatpush1.msra.mxu0 %v4318
    %4397 = vmatprep.subr.mxu0 0.0
    %4398 = vmatpush1.msra.mxu0 %v4319
    %4399 = vmatprep.subr.mxu0 0.0
    %4400 = vmatpush1.msra.mxu0 %v4320
    %4401 = vmatprep.subr.mxu0 0.0
    %4402 = vmatpush1.msra.mxu0 %v4321
    %4403 = vmatprep.subr.mxu0 0.0
    %4404 = vmatpush1.msra.mxu0 %v4322
    %4405 = vmatprep.subr.mxu0 0.0
    %4406 = vmatpush1.msra.mxu0 %v4323
    %4407 = vmatprep.subr.mxu0 0.0
    %4408 = vmatpush1.msra.mxu0 %v4324
    %4409 = vmatprep.subr.mxu0 0.0
    %4410 = vmatpush1.msra.mxu0 %v4325
    %4411 = vmatprep.subr.mxu0 0.0
    %4412 = vmatpush1.msra.mxu0 %v4326
    %4413 = vmatprep.subr.mxu0 0.0
    %4414 = vmatpush1.msra.mxu0 %v4327
    %4415 = vmatprep.subr.mxu0 0.0
    %4416 = vmatpush1.msra.mxu0 %v4328
    %4417 = vmatprep.subr.mxu0 0.0
    %4418 = vmatpush1.msra.mxu0 %v4329
    %4419 = vmatprep.subr.mxu0 0.0
    %4420 = vmatpush1.msra.mxu0 %v4330
    %4421 = vmatprep.subr.mxu0 0.0
    %4422 = vmatpush1.msra.mxu0 %v4331
    %4423 = vmatprep.subr.mxu0 0.0
    %4424 = vmatpush1.msra.mxu0 %v4332
    %4425 = vmatprep.subr.mxu0 0.0
    %4426 = vmatpush1.msra.mxu0 %v4333
    %4427 = vmatprep.subr.mxu0 0.0
    %4428 = vmatpush1.msra.mxu0 %v4334
    %4429 = vmatprep.subr.mxu0 0.0
    %4430 = vmatpush1.msra.mxu0 %v4335
    %4431 = vmatprep.subr.mxu0 0.0
    %4432 = vmatpush1.msra.mxu0 %v4336
    %4433 = vmatprep.subr.mxu0 0.0
    %4434 = vmatpush1.msra.mxu0 %v4337
    %4435 = vmatprep.subr.mxu0 0.0
    %4436 = vmatpush1.msra.mxu0 %v4338
    %4437 = vmatprep.subr.mxu0 0.0
    %4438 = vmatpush1.msra.mxu0 %v4339
    %4439 = vmatprep.subr.mxu0 0.0
    %4440 = vmatpush1.msra.mxu0 %v4340
    %4441 = vmatprep.subr.mxu0 0.0
    %4442 = vmatpush1.msra.mxu0 %v4341
    %4443 = vmatprep.subr.mxu0 0.0
    %4444 = vmatpush1.msra.mxu0 %v4342
    %4445 = vmatprep.subr.mxu0 0.0
    %4446 = vmatpush1.msra.mxu0 %v4343
    %4447 = vmatprep.mubr.f32.mxu0 %v4305
    %4448 = vmatmul.mubr.f32.gmra.mrb[0].mxu0 %v4304
    %v4449 = vpop.f32.mrb[0].mxu0
    %v4450 = vadd.f32 %v4381, %v4449
    %v4451 = vpop.f32.mrb[0].mxu0
    %4452 = vmatprep.mubr.f32.mxu0 %v4309
    %4453 = vmatmul.mubr.f32.gmra.mrb[0].mxu0 %v4308
    %v4454 = vpop.f32.mrb[0].mxu0
    %v4455 = vadd.f32 %v4381, %v4454
    %v4456 = vpop.f32.mrb[0].mxu0
    %4457 = vdwg.mxu0
    %4458 = vmatprep.subr.mxu0 0.0
    %4459 = vmatpush1.msra.mxu0 %v4344
    %4460 = vmatprep.subr.mxu0 0.0
    %4461 = vmatpush1.msra.mxu0 %v4345
    %4462 = vmatprep.subr.mxu0 0.0
    %4463 = vmatpush1.msra.mxu0 %v4346
    %4464 = vmatprep.subr.mxu0 0.0
    %4465 = vmatpush1.msra.mxu0 %v4347
    %4466 = vmatprep.subr.mxu0 0.0
    %4467 = vmatpush1.msra.mxu0 %v4348
    %4468 = vmatprep.subr.mxu0 0.0
    %4469 = vmatpush1.msra.mxu0 %v4349
    %4470 = vmatprep.subr.mxu0 0.0
    %4471 = vmatpush1.msra.mxu0 %v4350
    %4472 = vmatprep.subr.mxu0 0.0
    %4473 = vmatpush1.msra.mxu0 %v4351
    %4474 = vmatprep.subr.mxu0 0.0
    %4475 = vmatpush1.msra.mxu0 %v4352
    %4476 = vmatprep.subr.mxu0 0.0
    %4477 = vmatpush1.msra.mxu0 %v4353
    %4478 = vmatprep.subr.mxu0 0.0
    %4479 = vmatpush1.msra.mxu0 %v4354
    %4480 = vmatprep.subr.mxu0 0.0
    %4481 = vmatpush1.msra.mxu0 %v4355
    %4482 = vmatprep.subr.mxu0 0.0
    %4483 = vmatpush1.msra.mxu0 %v4356
    %4484 = vmatprep.subr.mxu0 0.0
    %4485 = vmatpush1.msra.mxu0 %v4357
    %4486 = vmatprep.subr.mxu0 0.0
    %4487 = vmatpush1.msra.mxu0 %v4358
    %4488 = vmatprep.subr.mxu0 0.0
    %4489 = vmatpush1.msra.mxu0 %v4359
    %4490 = vmatprep.subr.mxu0 0.0
    %4491 = vmatpush1.msra.mxu0 %v4360
    %4492 = vmatprep.subr.mxu0 0.0
    %4493 = vmatpush1.msra.mxu0 %v4361
    %4494 = vmatprep.subr.mxu0 0.0
    %4495 = vmatpush1.msra.mxu0 %v4362
    %4496 = vmatprep.subr.mxu0 0.0
    %4497 = vmatpush1.msra.mxu0 %v4363
    %4498 = vmatprep.subr.mxu0 0.0
    %4499 = vmatpush1.msra.mxu0 %v4364
    %4500 = vmatprep.subr.mxu0 0.0
    %4501 = vmatpush1.msra.mxu0 %v4365
    %4502 = vmatprep.subr.mxu0 0.0
    %4503 = vmatpush1.msra.mxu0 %v4366
    %4504 = vmatprep.subr.mxu0 0.0
    %4505 = vmatpush1.msra.mxu0 %v4367
    %4506 = vmatprep.subr.mxu0 0.0
    %4507 = vmatpush1.msra.mxu0 %v4368
    %4508 = vmatprep.subr.mxu0 0.0
    %4509 = vmatpush1.msra.mxu0 %v4369
    %4510 = vmatprep.subr.mxu0 0.0
    %4511 = vmatpush1.msra.mxu0 %v4370
    %4512 = vmatprep.subr.mxu0 0.0
    %4513 = vmatpush1.msra.mxu0 %v4371
    %4514 = vmatprep.subr.mxu0 0.0
    %4515 = vmatpush1.msra.mxu0 %v4372
    %4516 = vmatprep.subr.mxu0 0.0
    %4517 = vmatpush1.msra.mxu0 %v4373
    %4518 = vmatprep.subr.mxu0 0.0
    %4519 = vmatpush1.msra.mxu0 %v4374
    %4520 = vmatprep.subr.mxu0 0.0
    %4521 = vmatpush1.msra.mxu0 %v4375
    %4522 = vmatprep.mubr.f32.mxu0 %v4307
    %4523 = vmatmul.mubr.f32.gmra.mrb[0].mxu0 %v4306
    %v4524 = vpop.f32.mrb[0].mxu0
    %v4525 = vadd.f32 %v4450, %v4524
    %v4526 = vpop.f32.mrb[0].mxu0
    %4527 = vmatprep.mubr.f32.mxu0 %v4311
    %4528 = vmatmul.mubr.f32.gmra.mrb[0].mxu0 %v4310
    %v4529 = vpop.f32.mrb[0].mxu0
    %v4530 = vadd.f32 %v4455, %v4529
    %v4531 = vpop.f32.mrb[0].mxu0
    %4532 = vdwg.mxu0
    %v4533 = vxor.u32 %v4525, 2147483648
    %v4534 = vxor.u32 %v4530, 2147483648
    %v4535 = vmul.f32 %v4533, 1.442695
    %v4536 = vpow.pop %v4535
    %v4537 = vmul.f32 %v4534, 1.442695
    %v4538 = vpow.pop %v4537
    %v4539 = vadd.f32 %v4536, 1.0
    %v4540 = vadd.f32 %v4538, 1.0
    %v4541 = vrcp.pop %v4539
    %v4542 = vmul.f32 1.0, %v4541
    %v4543 = vrcp.pop %v4540
    %v4544 = vmul.f32 1.0, %v4543
    %v4545 = vld [vmem:[#allocation14] sm:$0xff]
    %v4546 = vld [vmem:[#allocation14 + $0x8] sm:$0xff]
    %v4547 = vld [vmem:[#allocation14 + $0x10] sm:$0xff]
    %v4548 = vld [vmem:[#allocation14 + $0x18] sm:$0xff]
    %v4549 = vld [vmem:[#allocation14 + $0x20] sm:$0xff]
    %v4550 = vld [vmem:[#allocation14 + $0x28] sm:$0xff]
    %v4551 = vld [vmem:[#allocation14 + $0x30] sm:$0xff]
    %v4552 = vld [vmem:[#allocation14 + $0x38] sm:$0xff]
    %v4553 = vld [vmem:[#allocation14 + $0x40] sm:$0xff]
    %v4554 = vld [vmem:[#allocation14 + $0x48] sm:$0xff]
    %v4555 = vld [vmem:[#allocation14 + $0x50] sm:$0xff]
    %v4556 = vld [vmem:[#allocation14 + $0x58] sm:$0xff]
    %v4557 = vld [vmem:[#allocation14 + $0x60] sm:$0xff]
    %v4558 = vld [vmem:[#allocation14 + $0x68] sm:$0xff]
    %v4559 = vld [vmem:[#allocation14 + $0x70] sm:$0xff]
    %v4560 = vld [vmem:[#allocation14 + $0x78] sm:$0xff]
    %v4561 = vld [vmem:[#allocation14 + $0x80] sm:$0xff]
    %v4562 = vld [vmem:[#allocation14 + $0x88] sm:$0xff]
    %v4563 = vld [vmem:[#allocation14 + $0x90] sm:$0xff]
    %v4564 = vld [vmem:[#allocation14 + $0x98] sm:$0xff]
    %v4565 = vld [vmem:[#allocation14 + $0xa0] sm:$0xff]
    %v4566 = vld [vmem:[#allocation14 + $0xa8] sm:$0xff]
    %v4567 = vld [vmem:[#allocation14 + $0xb0] sm:$0xff]
    %v4568 = vld [vmem:[#allocation14 + $0xb8] sm:$0xff]
    %v4569 = vld [vmem:[#allocation14 + $0xc0] sm:$0xff]
    %v4570 = vld [vmem:[#allocation14 + $0xc8] sm:$0xff]
    %v4571 = vld [vmem:[#allocation14 + $0xd0] sm:$0xff]
    %v4572 = vld [vmem:[#allocation14 + $0xd8] sm:$0xff]
    %v4573 = vld [vmem:[#allocation14 + $0xe0] sm:$0xff]
    %v4574 = vld [vmem:[#allocation14 + $0xe8] sm:$0xff]
    %v4575 = vld [vmem:[#allocation14 + $0xf0] sm:$0xff]
    %v4576 = vld [vmem:[#allocation14 + $0xf8] sm:$0xff]
    %v4577 = vld [vmem:[#allocation14 + $0x100] sm:$0xff]
    %v4578 = vld [vmem:[#allocation14 + $0x108] sm:$0xff]
    %v4579 = vld [vmem:[#allocation14 + $0x110] sm:$0xff]
    %v4580 = vld [vmem:[#allocation14 + $0x118] sm:$0xff]
    %v4581 = vld [vmem:[#allocation14 + $0x120] sm:$0xff]
    %v4582 = vld [vmem:[#allocation14 + $0x128] sm:$0xff]
    %v4583 = vld [vmem:[#allocation14 + $0x130] sm:$0xff]
    %v4584 = vld [vmem:[#allocation14 + $0x138] sm:$0xff]
    %v4585 = vld [vmem:[#allocation14 + $0x140] sm:$0xff]
    %v4586 = vld [vmem:[#allocation14 + $0x148] sm:$0xff]
    %v4587 = vld [vmem:[#allocation14 + $0x150] sm:$0xff]
    %v4588 = vld [vmem:[#allocation14 + $0x158] sm:$0xff]
    %v4589 = vld [vmem:[#allocation14 + $0x160] sm:$0xff]
    %v4590 = vld [vmem:[#allocation14 + $0x168] sm:$0xff]
    %v4591 = vld [vmem:[#allocation14 + $0x170] sm:$0xff]
    %v4592 = vld [vmem:[#allocation14 + $0x178] sm:$0xff]
    %v4593 = vld [vmem:[#allocation14 + $0x180] sm:$0xff]
    %v4594 = vld [vmem:[#allocation14 + $0x188] sm:$0xff]
    %v4595 = vld [vmem:[#allocation14 + $0x190] sm:$0xff]
    %v4596 = vld [vmem:[#allocation14 + $0x198] sm:$0xff]
    %v4597 = vld [vmem:[#allocation14 + $0x1a0] sm:$0xff]
    %v4598 = vld [vmem:[#allocation14 + $0x1a8] sm:$0xff]
    %v4599 = vld [vmem:[#allocation14 + $0x1b0] sm:$0xff]
    %v4600 = vld [vmem:[#allocation14 + $0x1b8] sm:$0xff]
    %v4601 = vld [vmem:[#allocation14 + $0x1c0] sm:$0xff]
    %v4602 = vld [vmem:[#allocation14 + $0x1c8] sm:$0xff]
    %v4603 = vld [vmem:[#allocation14 + $0x1d0] sm:$0xff]
    %v4604 = vld [vmem:[#allocation14 + $0x1d8] sm:$0xff]
    %v4605 = vld [vmem:[#allocation14 + $0x1e0] sm:$0xff]
    %v4606 = vld [vmem:[#allocation14 + $0x1e8] sm:$0xff]
    %v4607 = vld [vmem:[#allocation14 + $0x1f0] sm:$0xff]
    %v4608 = vld [vmem:[#allocation14 + $0x1f8] sm:$0xff]
    %v4609 = vld [vmem:[%s16] sm:$0xf]
    %v4611 = vlaneseq
    %v4612 = vshrl.u32 %v4611, 7
    %v4613 = vsub.s32 0, %v4612
    %v4614 = vrot.slane %v4609, %v4613
    %v4615 = vlaneseq
    %v4616 = vshrl.u32 %v4615, 7
    %v4617 = vsub.s32 1, %v4616
    %v4618 = vrot.slane %v4609, %v4617
    %v4619 = vlaneseq
    %v4620 = vshrl.u32 %v4619, 7
    %v4621 = vsub.s32 2, %v4620
    %v4622 = vrot.slane %v4609, %v4621
    %v4623 = vlaneseq
    %v4624 = vshrl.u32 %v4623, 7
    %v4625 = vsub.s32 3, %v4624
    %v4626 = vrot.slane %v4609, %v4625
    %4631 = vmatprep.subr.mxu0 %v4546
    %4632 = vmatpush1.msra.mxu0 %v4545
    %4633 = vmatprep.subr.mxu0 %v4550
    %4634 = vmatpush1.msra.mxu0 %v4549
    %4635 = vmatprep.subr.mxu0 %v4554
    %4636 = vmatpush1.msra.mxu0 %v4553
    %4637 = vmatprep.subr.mxu0 %v4558
    %4638 = vmatpush1.msra.mxu0 %v4557
    %4639 = vmatprep.subr.mxu0 %v4562
    %4640 = vmatpush1.msra.mxu0 %v4561
    %4641 = vmatprep.subr.mxu0 %v4566
    %4642 = vmatpush1.msra.mxu0 %v4565
    %4643 = vmatprep.subr.mxu0 %v4570
    %4644 = vmatpush1.msra.mxu0 %v4569
    %4645 = vmatprep.subr.mxu0 %v4574
    %4646 = vmatpush1.msra.mxu0 %v4573
    %4647 = vmatprep.subr.mxu0 %v4578
    %4648 = vmatpush1.msra.mxu0 %v4577
    %4649 = vmatprep.subr.mxu0 %v4582
    %4650 = vmatpush1.msra.mxu0 %v4581
    %4651 = vmatprep.subr.mxu0 %v4586
    %4652 = vmatpush1.msra.mxu0 %v4585
    %4653 = vmatprep.subr.mxu0 %v4590
    %4654 = vmatpush1.msra.mxu0 %v4589
    %4655 = vmatprep.subr.mxu0 %v4594
    %4656 = vmatpush1.msra.mxu0 %v4593
    %4657 = vmatprep.subr.mxu0 %v4598
    %4658 = vmatpush1.msra.mxu0 %v4597
    %4659 = vmatprep.subr.mxu0 %v4602
    %4660 = vmatpush1.msra.mxu0 %v4601
    %4661 = vmatprep.subr.mxu0 %v4606
    %4662 = vmatpush1.msra.mxu0 %v4605
    %4663 = vmatprep.subr.mxu0 0.0
    %4664 = vmatpush1.msra.mxu0 0.0
    %4665 = vmatprep.subr.mxu0 0.0
    %4666 = vmatpush1.msra.mxu0 0.0
    %4667 = vmatprep.subr.mxu0 0.0
    %4668 = vmatpush1.msra.mxu0 0.0
    %4669 = vmatprep.subr.mxu0 0.0
    %4670 = vmatpush1.msra.mxu0 0.0
    %4671 = vmatprep.subr.mxu0 0.0
    %4672 = vmatpush1.msra.mxu0 0.0
    %4673 = vmatprep.subr.mxu0 0.0
    %4674 = vmatpush1.msra.mxu0 0.0
    %4675 = vmatprep.subr.mxu0 0.0
    %4676 = vmatpush1.msra.mxu0 0.0
    %4677 = vmatprep.subr.mxu0 0.0
    %4678 = vmatpush1.msra.mxu0 0.0
    %4679 = vmatprep.subr.mxu0 0.0
    %4680 = vmatpush1.msra.mxu0 0.0
    %4681 = vmatprep.subr.mxu0 0.0
    %4682 = vmatpush1.msra.mxu0 0.0
    %4683 = vmatprep.subr.mxu0 0.0
    %4684 = vmatpush1.msra.mxu0 0.0
    %4685 = vmatprep.subr.mxu0 0.0
    %4686 = vmatpush1.msra.mxu0 0.0
    %4687 = vmatprep.subr.mxu0 0.0
    %4688 = vmatpush1.msra.mxu0 0.0
    %4689 = vmatprep.subr.mxu0 0.0
    %4690 = vmatpush1.msra.mxu0 0.0
    %4691 = vmatprep.subr.mxu0 0.0
    %4692 = vmatpush1.msra.mxu0 0.0
    %4693 = vmatprep.subr.mxu0 0.0
    %4694 = vmatpush1.msra.mxu0 0.0
    %4695 = vmatprep.mubr.f32.mxu0 0.0
    %4696 = vmatmul.mubr.f32.gmra.mrb[0].mxu0 %v4542
    %v4697 = vpop.f32.mrb[0].mxu0
    %v4698 = vadd.f32 %v4614, %v4697
    %v4699 = vpop.f32.mrb[0].mxu0
    %v4700 = vadd.f32 %v4618, %v4699
    %4701 = vmatprep.mubr.f32.mxu0 0.0
    %4702 = vmatmul.mubr.f32.gmra.mrb[0].mxu0 %v4544
    %v4703 = vpop.f32.mrb[0].mxu0
    %v4704 = vadd.f32 %v4614, %v4703
    %v4705 = vpop.f32.mrb[0].mxu0
    %v4706 = vadd.f32 %v4618, %v4705
    %4707 = vdwg.mxu0
    %4708 = vmatprep.subr.mxu0 %v4548
    %4709 = vmatpush1.msra.mxu0 %v4547
    %4710 = vmatprep.subr.mxu0 %v4552
    %4711 = vmatpush1.msra.mxu0 %v4551
    %4712 = vmatprep.subr.mxu0 %v4556
    %4713 = vmatpush1.msra.mxu0 %v4555
    %4714 = vmatprep.subr.mxu0 %v4560
    %4715 = vmatpush1.msra.mxu0 %v4559
    %4716 = vmatprep.subr.mxu0 %v4564
    %4717 = vmatpush1.msra.mxu0 %v4563
    %4718 = vmatprep.subr.mxu0 %v4568
    %4719 = vmatpush1.msra.mxu0 %v4567
    %4720 = vmatprep.subr.mxu0 %v4572
    %4721 = vmatpush1.msra.mxu0 %v4571
    %4722 = vmatprep.subr.mxu0 %v4576
    %4723 = vmatpush1.msra.mxu0 %v4575
    %4724 = vmatprep.subr.mxu0 %v4580
    %4725 = vmatpush1.msra.mxu0 %v4579
    %4726 = vmatprep.subr.mxu0 %v4584
    %4727 = vmatpush1.msra.mxu0 %v4583
    %4728 = vmatprep.subr.mxu0 %v4588
    %4729 = vmatpush1.msra.mxu0 %v4587
    %4730 = vmatprep.subr.mxu0 %v4592
    %4731 = vmatpush1.msra.mxu0 %v4591
    %4732 = vmatprep.subr.mxu0 %v4596
    %4733 = vmatpush1.msra.mxu0 %v4595
    %4734 = vmatprep.subr.mxu0 %v4600
    %4735 = vmatpush1.msra.mxu0 %v4599
    %4736 = vmatprep.subr.mxu0 %v4604
    %4737 = vmatpush1.msra.mxu0 %v4603
    %4738 = vmatprep.subr.mxu0 %v4608
    %4739 = vmatpush1.msra.mxu0 %v4607
    %4740 = vmatprep.subr.mxu0 0.0
    %4741 = vmatpush1.msra.mxu0 0.0
    %4742 = vmatprep.subr.mxu0 0.0
    %4743 = vmatpush1.msra.mxu0 0.0
    %4744 = vmatprep.subr.mxu0 0.0
    %4745 = vmatpush1.msra.mxu0 0.0
    %4746 = vmatprep.subr.mxu0 0.0
    %4747 = vmatpush1.msra.mxu0 0.0
    %4748 = vmatprep.subr.mxu0 0.0
    %4749 = vmatpush1.msra.mxu0 0.0
    %4750 = vmatprep.subr.mxu0 0.0
    %4751 = vmatpush1.msra.mxu0 0.0
    %4752 = vmatprep.subr.mxu0 0.0
    %4753 = vmatpush1.msra.mxu0 0.0
    %4754 = vmatprep.subr.mxu0 0.0
    %4755 = vmatpush1.msra.mxu0 0.0
    %4756 = vmatprep.subr.mxu0 0.0
    %4757 = vmatpush1.msra.mxu0 0.0
    %4758 = vmatprep.subr.mxu0 0.0
    %4759 = vmatpush1.msra.mxu0 0.0
    %4760 = vmatprep.subr.mxu0 0.0
    %4761 = vmatpush1.msra.mxu0 0.0
    %4762 = vmatprep.subr.mxu0 0.0
    %4763 = vmatpush1.msra.mxu0 0.0
    %4764 = vmatprep.subr.mxu0 0.0
    %4765 = vmatpush1.msra.mxu0 0.0
    %4766 = vmatprep.subr.mxu0 0.0
    %4767 = vmatpush1.msra.mxu0 0.0
    %4768 = vmatprep.subr.mxu0 0.0
    %4769 = vmatpush1.msra.mxu0 0.0
    %4770 = vmatprep.subr.mxu0 0.0
    %4771 = vmatpush1.msra.mxu0 0.0
    %4772 = vmatprep.mubr.f32.mxu0 0.0
    %4773 = vmatmul.mubr.f32.gmra.mrb[0].mxu0 %v4542
    %v4774 = vpop.f32.mrb[0].mxu0
    %v4775 = vadd.f32 %v4622, %v4774
    %v4776 = vpop.f32.mrb[0].mxu0
    %v4777 = vadd.f32 %v4626, %v4776
    %4778 = vmatprep.mubr.f32.mxu0 0.0
    %4779 = vmatmul.mubr.f32.gmra.mrb[0].mxu0 %v4544
    %v4780 = vpop.f32.mrb[0].mxu0
    %v4781 = vadd.f32 %v4622, %v4780
    %v4782 = vpop.f32.mrb[0].mxu0
    %v4783 = vadd.f32 %v4626, %v4782
    %4784 = vdwg.mxu0
    %v4785 = vld [vmem:[%s19] sm:$0xf]
    %v4787 = vlaneseq
    %v4788 = vshrl.u32 %v4787, 7
    %v4789 = vsub.s32 0, %v4788
    %v4790 = vrot.slane %v4785, %v4789
    %v4791 = vlaneseq
    %v4792 = vshrl.u32 %v4791, 7
    %v4793 = vsub.s32 1, %v4792
    %v4794 = vrot.slane %v4785, %v4793
    %v4795 = vlaneseq
    %v4796 = vshrl.u32 %v4795, 7
    %v4797 = vsub.s32 2, %v4796
    %v4798 = vrot.slane %v4785, %v4797
    %v4799 = vlaneseq
    %v4800 = vshrl.u32 %v4799, 7
    %v4801 = vsub.s32 3, %v4800
    %v4802 = vrot.slane %v4785, %v4801
    %v4807 = vld [vmem:[#allocation16] sm:$0xff]
    %v4808 = vld [vmem:[#allocation16 + $0x8] sm:$0xff]
    %v4809 = vld [vmem:[#allocation16 + $0x10] sm:$0xff]
    %v4810 = vld [vmem:[#allocation16 + $0x18] sm:$0xff]
    %v4811 = vld [vmem:[#allocation16 + $0x20] sm:$0xff]
    %v4812 = vld [vmem:[#allocation16 + $0x28] sm:$0xff]
    %v4813 = vld [vmem:[#allocation16 + $0x30] sm:$0xff]
    %v4814 = vld [vmem:[#allocation16 + $0x38] sm:$0xff]
    %v4815 = vld [vmem:[#allocation16 + $0x40] sm:$0xff]
    %v4816 = vld [vmem:[#allocation16 + $0x48] sm:$0xff]
    %v4817 = vld [vmem:[#allocation16 + $0x50] sm:$0xff]
    %v4818 = vld [vmem:[#allocation16 + $0x58] sm:$0xff]
    %v4819 = vld [vmem:[#allocation16 + $0x60] sm:$0xff]
    %v4820 = vld [vmem:[#allocation16 + $0x68] sm:$0xff]
    %v4821 = vld [vmem:[#allocation16 + $0x70] sm:$0xff]
    %v4822 = vld [vmem:[#allocation16 + $0x78] sm:$0xff]
    %v4823 = vld [vmem:[#allocation16 + $0x80] sm:$0xff]
    %v4824 = vld [vmem:[#allocation16 + $0x88] sm:$0xff]
    %v4825 = vld [vmem:[#allocation16 + $0x90] sm:$0xff]
    %v4826 = vld [vmem:[#allocation16 + $0x98] sm:$0xff]
    %v4827 = vld [vmem:[#allocation16 + $0xa0] sm:$0xff]
    %v4828 = vld [vmem:[#allocation16 + $0xa8] sm:$0xff]
    %v4829 = vld [vmem:[#allocation16 + $0xb0] sm:$0xff]
    %v4830 = vld [vmem:[#allocation16 + $0xb8] sm:$0xff]
    %v4831 = vld [vmem:[#allocation16 + $0xc0] sm:$0xff]
    %v4832 = vld [vmem:[#allocation16 + $0xc8] sm:$0xff]
    %v4833 = vld [vmem:[#allocation16 + $0xd0] sm:$0xff]
    %v4834 = vld [vmem:[#allocation16 + $0xd8] sm:$0xff]
    %v4835 = vld [vmem:[#allocation16 + $0xe0] sm:$0xff]
    %v4836 = vld [vmem:[#allocation16 + $0xe8] sm:$0xff]
    %v4837 = vld [vmem:[#allocation16 + $0xf0] sm:$0xff]
    %v4838 = vld [vmem:[#allocation16 + $0xf8] sm:$0xff]
    %v4839 = vld [vmem:[#allocation16 + $0x100] sm:$0xff]
    %v4840 = vld [vmem:[#allocation16 + $0x108] sm:$0xff]
    %v4841 = vld [vmem:[#allocation16 + $0x110] sm:$0xff]
    %v4842 = vld [vmem:[#allocation16 + $0x118] sm:$0xff]
    %v4843 = vld [vmem:[#allocation16 + $0x120] sm:$0xff]
    %v4844 = vld [vmem:[#allocation16 + $0x128] sm:$0xff]
    %v4845 = vld [vmem:[#allocation16 + $0x130] sm:$0xff]
    %v4846 = vld [vmem:[#allocation16 + $0x138] sm:$0xff]
    %v4847 = vld [vmem:[#allocation16 + $0x140] sm:$0xff]
    %v4848 = vld [vmem:[#allocation16 + $0x148] sm:$0xff]
    %v4849 = vld [vmem:[#allocation16 + $0x150] sm:$0xff]
    %v4850 = vld [vmem:[#allocation16 + $0x158] sm:$0xff]
    %v4851 = vld [vmem:[#allocation16 + $0x160] sm:$0xff]
    %v4852 = vld [vmem:[#allocation16 + $0x168] sm:$0xff]
    %v4853 = vld [vmem:[#allocation16 + $0x170] sm:$0xff]
    %v4854 = vld [vmem:[#allocation16 + $0x178] sm:$0xff]
    %v4855 = vld [vmem:[#allocation16 + $0x180] sm:$0xff]
    %v4856 = vld [vmem:[#allocation16 + $0x188] sm:$0xff]
    %v4857 = vld [vmem:[#allocation16 + $0x190] sm:$0xff]
    %v4858 = vld [vmem:[#allocation16 + $0x198] sm:$0xff]
    %v4859 = vld [vmem:[#allocation16 + $0x1a0] sm:$0xff]
    %v4860 = vld [vmem:[#allocation16 + $0x1a8] sm:$0xff]
    %v4861 = vld [vmem:[#allocation16 + $0x1b0] sm:$0xff]
    %v4862 = vld [vmem:[#allocation16 + $0x1b8] sm:$0xff]
    %v4863 = vld [vmem:[#allocation16 + $0x1c0] sm:$0xff]
    %v4864 = vld [vmem:[#allocation16 + $0x1c8] sm:$0xff]
    %v4865 = vld [vmem:[#allocation16 + $0x1d0] sm:$0xff]
    %v4866 = vld [vmem:[#allocation16 + $0x1d8] sm:$0xff]
    %v4867 = vld [vmem:[#allocation16 + $0x1e0] sm:$0xff]
    %v4868 = vld [vmem:[#allocation16 + $0x1e8] sm:$0xff]
    %v4869 = vld [vmem:[#allocation16 + $0x1f0] sm:$0xff]
    %v4870 = vld [vmem:[#allocation16 + $0x1f8] sm:$0xff]
    %4871 = vmatprep.subr.mxu0 %v4808
    %4872 = vmatpush1.msra.mxu0 %v4807
    %4873 = vmatprep.subr.mxu0 %v4812
    %4874 = vmatpush1.msra.mxu0 %v4811
    %4875 = vmatprep.subr.mxu0 %v4816
    %4876 = vmatpush1.msra.mxu0 %v4815
    %4877 = vmatprep.subr.mxu0 %v4820
    %4878 = vmatpush1.msra.mxu0 %v4819
    %4879 = vmatprep.subr.mxu0 %v4824
    %4880 = vmatpush1.msra.mxu0 %v4823
    %4881 = vmatprep.subr.mxu0 %v4828
    %4882 = vmatpush1.msra.mxu0 %v4827
    %4883 = vmatprep.subr.mxu0 %v4832
    %4884 = vmatpush1.msra.mxu0 %v4831
    %4885 = vmatprep.subr.mxu0 %v4836
    %4886 = vmatpush1.msra.mxu0 %v4835
    %4887 = vmatprep.subr.mxu0 %v4840
    %4888 = vmatpush1.msra.mxu0 %v4839
    %4889 = vmatprep.subr.mxu0 %v4844
    %4890 = vmatpush1.msra.mxu0 %v4843
    %4891 = vmatprep.subr.mxu0 %v4848
    %4892 = vmatpush1.msra.mxu0 %v4847
    %4893 = vmatprep.subr.mxu0 %v4852
    %4894 = vmatpush1.msra.mxu0 %v4851
    %4895 = vmatprep.subr.mxu0 %v4856
    %4896 = vmatpush1.msra.mxu0 %v4855
    %4897 = vmatprep.subr.mxu0 %v4860
    %4898 = vmatpush1.msra.mxu0 %v4859
    %4899 = vmatprep.subr.mxu0 %v4864
    %4900 = vmatpush1.msra.mxu0 %v4863
    %4901 = vmatprep.subr.mxu0 %v4868
    %4902 = vmatpush1.msra.mxu0 %v4867
    %4903 = vmatprep.subr.mxu0 0.0
    %4904 = vmatpush1.msra.mxu0 0.0
    %4905 = vmatprep.subr.mxu0 0.0
    %4906 = vmatpush1.msra.mxu0 0.0
    %4907 = vmatprep.subr.mxu0 0.0
    %4908 = vmatpush1.msra.mxu0 0.0
    %4909 = vmatprep.subr.mxu0 0.0
    %4910 = vmatpush1.msra.mxu0 0.0
    %4911 = vmatprep.subr.mxu0 0.0
    %4912 = vmatpush1.msra.mxu0 0.0
    %4913 = vmatprep.subr.mxu0 0.0
    %4914 = vmatpush1.msra.mxu0 0.0
    %4915 = vmatprep.subr.mxu0 0.0
    %4916 = vmatpush1.msra.mxu0 0.0
    %4917 = vmatprep.subr.mxu0 0.0
    %4918 = vmatpush1.msra.mxu0 0.0
    %4919 = vmatprep.subr.mxu0 0.0
    %4920 = vmatpush1.msra.mxu0 0.0
    %4921 = vmatprep.subr.mxu0 0.0
    %4922 = vmatpush1.msra.mxu0 0.0
    %4923 = vmatprep.subr.mxu0 0.0
    %4924 = vmatpush1.msra.mxu0 0.0
    %4925 = vmatprep.subr.mxu0 0.0
    %4926 = vmatpush1.msra.mxu0 0.0
    %4927 = vmatprep.subr.mxu0 0.0
    %4928 = vmatpush1.msra.mxu0 0.0
    %4929 = vmatprep.subr.mxu0 0.0
    %4930 = vmatpush1.msra.mxu0 0.0
    %4931 = vmatprep.subr.mxu0 0.0
    %4932 = vmatpush1.msra.mxu0 0.0
    %4933 = vmatprep.subr.mxu0 0.0
    %4934 = vmatpush1.msra.mxu0 0.0
    %4935 = vmatprep.mubr.f32.mxu0 0.0
    %4936 = vmatmul.mubr.f32.gmra.mrb[0].mxu0 %v3482
    %v4937 = vpop.f32.mrb[0].mxu0
    %v4938 = vadd.f32 0.0, %v4937
    %v4939 = vpop.f32.mrb[0].mxu0
    %v4940 = vadd.f32 0.0, %v4939
    %4941 = vdwg.mxu0
    %4942 = vmatprep.subr.mxu0 %v4810
    %4943 = vmatpush1.msra.mxu0 %v4809
    %4944 = vmatprep.subr.mxu0 %v4814
    %4945 = vmatpush1.msra.mxu0 %v4813
    %4946 = vmatprep.subr.mxu0 %v4818
    %4947 = vmatpush1.msra.mxu0 %v4817
    %4948 = vmatprep.subr.mxu0 %v4822
    %4949 = vmatpush1.msra.mxu0 %v4821
    %4950 = vmatprep.subr.mxu0 %v4826
    %4951 = vmatpush1.msra.mxu0 %v4825
    %4952 = vmatprep.subr.mxu0 %v4830
    %4953 = vmatpush1.msra.mxu0 %v4829
    %4954 = vmatprep.subr.mxu0 %v4834
    %4955 = vmatpush1.msra.mxu0 %v4833
    %4956 = vmatprep.subr.mxu0 %v4838
    %4957 = vmatpush1.msra.mxu0 %v4837
    %4958 = vmatprep.subr.mxu0 %v4842
    %4959 = vmatpush1.msra.mxu0 %v4841
    %4960 = vmatprep.subr.mxu0 %v4846
    %4961 = vmatpush1.msra.mxu0 %v4845
    %4962 = vmatprep.subr.mxu0 %v4850
    %4963 = vmatpush1.msra.mxu0 %v4849
    %4964 = vmatprep.subr.mxu0 %v4854
    %4965 = vmatpush1.msra.mxu0 %v4853
    %4966 = vmatprep.subr.mxu0 %v4858
    %4967 = vmatpush1.msra.mxu0 %v4857
    %4968 = vmatprep.subr.mxu0 %v4862
    %4969 = vmatpush1.msra.mxu0 %v4861
    %4970 = vmatprep.subr.mxu0 %v4866
    %4971 = vmatpush1.msra.mxu0 %v4865
    %4972 = vmatprep.subr.mxu0 %v4870
    %4973 = vmatpush1.msra.mxu0 %v4869
    %4974 = vmatprep.subr.mxu0 0.0
    %4975 = vmatpush1.msra.mxu0 0.0
    %4976 = vmatprep.subr.mxu0 0.0
    %4977 = vmatpush1.msra.mxu0 0.0
    %4978 = vmatprep.subr.mxu0 0.0
    %4979 = vmatpush1.msra.mxu0 0.0
    %4980 = vmatprep.subr.mxu0 0.0
    %4981 = vmatpush1.msra.mxu0 0.0
    %4982 = vmatprep.subr.mxu0 0.0
    %4983 = vmatpush1.msra.mxu0 0.0
    %4984 = vmatprep.subr.mxu0 0.0
    %4985 = vmatpush1.msra.mxu0 0.0
    %4986 = vmatprep.subr.mxu0 0.0
    %4987 = vmatpush1.msra.mxu0 0.0
    %4988 = vmatprep.subr.mxu0 0.0
    %4989 = vmatpush1.msra.mxu0 0.0
    %4990 = vmatprep.subr.mxu0 0.0
    %4991 = vmatpush1.msra.mxu0 0.0
    %4992 = vmatprep.subr.mxu0 0.0
    %4993 = vmatpush1.msra.mxu0 0.0
    %4994 = vmatprep.subr.mxu0 0.0
    %4995 = vmatpush1.msra.mxu0 0.0
    %4996 = vmatprep.subr.mxu0 0.0
    %4997 = vmatpush1.msra.mxu0 0.0
    %4998 = vmatprep.subr.mxu0 0.0
    %4999 = vmatpush1.msra.mxu0 0.0
    %5000 = vmatprep.subr.mxu0 0.0
    %5001 = vmatpush1.msra.mxu0 0.0
    %5002 = vmatprep.subr.mxu0 0.0
    %5003 = vmatpush1.msra.mxu0 0.0
    %5004 = vmatprep.subr.mxu0 0.0
    %5005 = vmatpush1.msra.mxu0 0.0
    %5006 = vmatprep.mubr.f32.mxu0 0.0
    %5007 = vmatmul.mubr.f32.gmra.mrb[0].mxu0 %v3482
    %v5008 = vpop.f32.mrb[0].mxu0
    %v5009 = vadd.f32 0.0, %v5008
    %v5010 = vpop.f32.mrb[0].mxu0
    %v5011 = vadd.f32 0.0, %v5010
    %5012 = vdwg.mxu0
    %v5013 = vadd.f32 %v4698, %v4938
    %v5014 = vadd.f32 %v4700, %v4940
    %v5015 = vadd.f32 %v4775, %v5009
    %v5016 = vadd.f32 %v4777, %v5011
    %v5017 = vxor.u32 %v5013, 2147483648
    %v5018 = vxor.u32 %v5014, 2147483648
    %v5019 = vxor.u32 %v5015, 2147483648
    %v5020 = vmul.f32 %v5017, 1.442695
    %v5021 = vpow.pop %v5020
    %v5022 = vmul.f32 %v5018, 1.442695
    %v5023 = vpow.pop %v5022
    %v5024 = vmul.f32 %v5019, 1.442695
    %v5025 = vpow.pop %v5024
    %v5026 = vadd.f32 %v5021, 1.0
    %v5027 = vadd.f32 %v5023, 1.0
    %v5028 = vadd.f32 %v5025, 1.0
    %v5029 = vrcp.pop %v5026
    %v5030 = vmul.f32 1.0, %v5029
    %v5031 = vrcp.pop %v5027
    %v5032 = vmul.f32 1.0, %v5031
    %v5033 = vrcp.pop %v5028
    %v5034 = vmul.f32 1.0, %v5033
    %v5035 = vtanh.pop %v5016
    %v5036 = vmul.f32 %v5032, 0.0
    %v5037 = vmul.f32 %v5030, %v5035
    %v5038 = vadd.f32 %v5036, %v5037
    %v5039 = vtanh.pop %v5038
    %v5040 = vmul.f32 %v5034, %v5039
    %v5041 = vld [vmem:[#allocation17] sm:$0xff]
    %v5042 = vld [vmem:[#allocation17 + $0x8] sm:$0xff]
    %v5043 = vld [vmem:[#allocation17 + $0x10] sm:$0xff]
    %v5044 = vld [vmem:[#allocation17 + $0x18] sm:$0xff]
    %v5045 = vld [vmem:[#allocation17 + $0x20] sm:$0xff]
    %v5046 = vld [vmem:[#allocation17 + $0x28] sm:$0xff]
    %v5047 = vld [vmem:[#allocation17 + $0x30] sm:$0xff]
    %v5048 = vld [vmem:[#allocation17 + $0x38] sm:$0xff]
    %v5049 = vld [vmem:[#allocation17 + $0x40] sm:$0xff]
    %v5050 = vld [vmem:[#allocation17 + $0x48] sm:$0xff]
    %v5051 = vld [vmem:[#allocation17 + $0x50] sm:$0xff]
    %v5052 = vld [vmem:[#allocation17 + $0x58] sm:$0xff]
    %v5053 = vld [vmem:[#allocation17 + $0x60] sm:$0xff]
    %v5054 = vld [vmem:[#allocation17 + $0x68] sm:$0xff]
    %v5055 = vld [vmem:[#allocation17 + $0x70] sm:$0xff]
    %v5056 = vld [vmem:[#allocation17 + $0x78] sm:$0xff]
    %v5057 = vld [vmem:[#allocation17 + $0x80] sm:$0xff]
    %v5058 = vld [vmem:[#allocation17 + $0x88] sm:$0xff]
    %v5059 = vld [vmem:[#allocation17 + $0x90] sm:$0xff]
    %v5060 = vld [vmem:[#allocation17 + $0x98] sm:$0xff]
    %v5061 = vld [vmem:[#allocation17 + $0xa0] sm:$0xff]
    %v5062 = vld [vmem:[#allocation17 + $0xa8] sm:$0xff]
    %v5063 = vld [vmem:[#allocation17 + $0xb0] sm:$0xff]
    %v5064 = vld [vmem:[#allocation17 + $0xb8] sm:$0xff]
    %v5065 = vld [vmem:[#allocation17 + $0xc0] sm:$0xff]
    %v5066 = vld [vmem:[#allocation17 + $0xc8] sm:$0xff]
    %v5067 = vld [vmem:[#allocation17 + $0xd0] sm:$0xff]
    %v5068 = vld [vmem:[#allocation17 + $0xd8] sm:$0xff]
    %v5069 = vld [vmem:[#allocation17 + $0xe0] sm:$0xff]
    %v5070 = vld [vmem:[#allocation17 + $0xe8] sm:$0xff]
    %v5071 = vld [vmem:[#allocation17 + $0xf0] sm:$0xff]
    %v5072 = vld [vmem:[#allocation17 + $0xf8] sm:$0xff]
    %v5073 = vld [vmem:[#allocation17 + $0x100] sm:$0xff]
    %v5074 = vld [vmem:[#allocation17 + $0x108] sm:$0xff]
    %v5075 = vld [vmem:[#allocation17 + $0x110] sm:$0xff]
    %v5076 = vld [vmem:[#allocation17 + $0x118] sm:$0xff]
    %v5077 = vld [vmem:[#allocation17 + $0x120] sm:$0xff]
    %v5078 = vld [vmem:[#allocation17 + $0x128] sm:$0xff]
    %v5079 = vld [vmem:[#allocation17 + $0x130] sm:$0xff]
    %v5080 = vld [vmem:[#allocation17 + $0x138] sm:$0xff]
    %v5081 = vld [vmem:[#allocation17 + $0x140] sm:$0xff]
    %v5082 = vld [vmem:[#allocation17 + $0x148] sm:$0xff]
    %v5083 = vld [vmem:[#allocation17 + $0x150] sm:$0xff]
    %v5084 = vld [vmem:[#allocation17 + $0x158] sm:$0xff]
    %v5085 = vld [vmem:[#allocation17 + $0x160] sm:$0xff]
    %v5086 = vld [vmem:[#allocation17 + $0x168] sm:$0xff]
    %v5087 = vld [vmem:[#allocation17 + $0x170] sm:$0xff]
    %v5088 = vld [vmem:[#allocation17 + $0x178] sm:$0xff]
    %v5089 = vld [vmem:[#allocation17 + $0x180] sm:$0xff]
    %v5090 = vld [vmem:[#allocation17 + $0x188] sm:$0xff]
    %v5091 = vld [vmem:[#allocation17 + $0x190] sm:$0xff]
    %v5092 = vld [vmem:[#allocation17 + $0x198] sm:$0xff]
    %v5093 = vld [vmem:[#allocation17 + $0x1a0] sm:$0xff]
    %v5094 = vld [vmem:[#allocation17 + $0x1a8] sm:$0xff]
    %v5095 = vld [vmem:[#allocation17 + $0x1b0] sm:$0xff]
    %v5096 = vld [vmem:[#allocation17 + $0x1b8] sm:$0xff]
    %v5097 = vld [vmem:[#allocation17 + $0x1c0] sm:$0xff]
    %v5098 = vld [vmem:[#allocation17 + $0x1c8] sm:$0xff]
    %v5099 = vld [vmem:[#allocation17 + $0x1d0] sm:$0xff]
    %v5100 = vld [vmem:[#allocation17 + $0x1d8] sm:$0xff]
    %v5101 = vld [vmem:[#allocation17 + $0x1e0] sm:$0xff]
    %v5102 = vld [vmem:[#allocation17 + $0x1e8] sm:$0xff]
    %v5103 = vld [vmem:[#allocation17 + $0x1f0] sm:$0xff]
    %v5104 = vld [vmem:[#allocation17 + $0x1f8] sm:$0xff]
    %v5105 = vld [vmem:[#allocation17 + $0x200] sm:$0xff]
    %v5106 = vld [vmem:[#allocation17 + $0x208] sm:$0xff]
    %v5107 = vld [vmem:[#allocation17 + $0x210] sm:$0xff]
    %v5108 = vld [vmem:[#allocation17 + $0x218] sm:$0xff]
    %v5109 = vld [vmem:[#allocation17 + $0x220] sm:$0xff]
    %v5110 = vld [vmem:[#allocation17 + $0x228] sm:$0xff]
    %v5111 = vld [vmem:[#allocation17 + $0x230] sm:$0xff]
    %v5112 = vld [vmem:[#allocation17 + $0x238] sm:$0xff]
    %v5113 = vld [vmem:[#allocation17 + $0x240] sm:$0xff]
    %v5114 = vld [vmem:[#allocation17 + $0x248] sm:$0xff]
    %v5115 = vld [vmem:[#allocation17 + $0x250] sm:$0xff]
    %v5116 = vld [vmem:[#allocation17 + $0x258] sm:$0xff]
    %v5117 = vld [vmem:[#allocation17 + $0x260] sm:$0xff]
    %v5118 = vld [vmem:[#allocation17 + $0x268] sm:$0xff]
    %v5119 = vld [vmem:[#allocation17 + $0x270] sm:$0xff]
    %v5120 = vld [vmem:[#allocation17 + $0x278] sm:$0xff]
    %v5121 = vld [vmem:[#allocation17 + $0x280] sm:$0xff]
    %v5122 = vld [vmem:[#allocation17 + $0x288] sm:$0xff]
    %v5123 = vld [vmem:[#allocation17 + $0x290] sm:$0xff]
    %v5124 = vld [vmem:[#allocation17 + $0x298] sm:$0xff]
    %v5125 = vld [vmem:[#allocation17 + $0x2a0] sm:$0xff]
    %v5126 = vld [vmem:[#allocation17 + $0x2a8] sm:$0xff]
    %v5127 = vld [vmem:[#allocation17 + $0x2b0] sm:$0xff]
    %v5128 = vld [vmem:[#allocation17 + $0x2b8] sm:$0xff]
    %v5129 = vld [vmem:[#allocation17 + $0x2c0] sm:$0xff]
    %v5130 = vld [vmem:[#allocation17 + $0x2c8] sm:$0xff]
    %v5131 = vld [vmem:[#allocation17 + $0x2d0] sm:$0xff]
    %v5132 = vld [vmem:[#allocation17 + $0x2d8] sm:$0xff]
    %v5133 = vld [vmem:[#allocation17 + $0x2e0] sm:$0xff]
    %v5134 = vld [vmem:[#allocation17 + $0x2e8] sm:$0xff]
    %v5135 = vld [vmem:[#allocation17 + $0x2f0] sm:$0xff]
    %v5136 = vld [vmem:[#allocation17 + $0x2f8] sm:$0xff]
    %v5137 = vld [vmem:[#allocation17 + $0x300] sm:$0xff]
    %v5138 = vld [vmem:[#allocation17 + $0x308] sm:$0xff]
    %v5139 = vld [vmem:[#allocation17 + $0x310] sm:$0xff]
    %v5140 = vld [vmem:[#allocation17 + $0x318] sm:$0xff]
    %v5141 = vld [vmem:[#allocation17 + $0x320] sm:$0xff]
    %v5142 = vld [vmem:[#allocation17 + $0x328] sm:$0xff]
    %v5143 = vld [vmem:[#allocation17 + $0x330] sm:$0xff]
    %v5144 = vld [vmem:[#allocation17 + $0x338] sm:$0xff]
    %v5145 = vld [vmem:[#allocation17 + $0x340] sm:$0xff]
    %v5146 = vld [vmem:[#allocation17 + $0x348] sm:$0xff]
    %v5147 = vld [vmem:[#allocation17 + $0x350] sm:$0xff]
    %v5148 = vld [vmem:[#allocation17 + $0x358] sm:$0xff]
    %v5149 = vld [vmem:[#allocation17 + $0x360] sm:$0xff]
    %v5150 = vld [vmem:[#allocation17 + $0x368] sm:$0xff]
    %v5151 = vld [vmem:[#allocation17 + $0x370] sm:$0xff]
    %v5152 = vld [vmem:[#allocation17 + $0x378] sm:$0xff]
    %v5153 = vld [vmem:[#allocation17 + $0x380] sm:$0xff]
    %v5154 = vld [vmem:[#allocation17 + $0x388] sm:$0xff]
    %v5155 = vld [vmem:[#allocation17 + $0x390] sm:$0xff]
    %v5156 = vld [vmem:[#allocation17 + $0x398] sm:$0xff]
    %v5157 = vld [vmem:[#allocation17 + $0x3a0] sm:$0xff]
    %v5158 = vld [vmem:[#allocation17 + $0x3a8] sm:$0xff]
    %v5159 = vld [vmem:[#allocation17 + $0x3b0] sm:$0xff]
    %v5160 = vld [vmem:[#allocation17 + $0x3b8] sm:$0xff]
    %v5161 = vld [vmem:[#allocation17 + $0x3c0] sm:$0xff]
    %v5162 = vld [vmem:[#allocation17 + $0x3c8] sm:$0xff]
    %v5163 = vld [vmem:[#allocation17 + $0x3d0] sm:$0xff]
    %v5164 = vld [vmem:[#allocation17 + $0x3d8] sm:$0xff]
    %v5165 = vld [vmem:[#allocation17 + $0x3e0] sm:$0xff]
    %v5166 = vld [vmem:[#allocation17 + $0x3e8] sm:$0xff]
    %v5167 = vld [vmem:[#allocation17 + $0x3f0] sm:$0xff]
    %v5168 = vld [vmem:[#allocation17 + $0x3f8] sm:$0xff]
    %5169 = vmatprep.subr.mxu0 %v5042
    %5170 = vmatpush1.msra.mxu0 %v5041
    %5171 = vmatprep.subr.mxu0 %v5046
    %5172 = vmatpush1.msra.mxu0 %v5045
    %5173 = vmatprep.subr.mxu0 %v5050
    %5174 = vmatpush1.msra.mxu0 %v5049
    %5175 = vmatprep.subr.mxu0 %v5054
    %5176 = vmatpush1.msra.mxu0 %v5053
    %5177 = vmatprep.subr.mxu0 %v5058
    %5178 = vmatpush1.msra.mxu0 %v5057
    %5179 = vmatprep.subr.mxu0 %v5062
    %5180 = vmatpush1.msra.mxu0 %v5061
    %5181 = vmatprep.subr.mxu0 %v5066
    %5182 = vmatpush1.msra.mxu0 %v5065
    %5183 = vmatprep.subr.mxu0 %v5070
    %5184 = vmatpush1.msra.mxu0 %v5069
    %5185 = vmatprep.subr.mxu0 %v5074
    %5186 = vmatpush1.msra.mxu0 %v5073
    %5187 = vmatprep.subr.mxu0 %v5078
    %5188 = vmatpush1.msra.mxu0 %v5077
    %5189 = vmatprep.subr.mxu0 %v5082
    %5190 = vmatpush1.msra.mxu0 %v5081
    %5191 = vmatprep.subr.mxu0 %v5086
    %5192 = vmatpush1.msra.mxu0 %v5085
    %5193 = vmatprep.subr.mxu0 %v5090
    %5194 = vmatpush1.msra.mxu0 %v5089
    %5195 = vmatprep.subr.mxu0 %v5094
    %5196 = vmatpush1.msra.mxu0 %v5093
    %5197 = vmatprep.subr.mxu0 %v5098
    %5198 = vmatpush1.msra.mxu0 %v5097
    %5199 = vmatprep.subr.mxu0 %v5102
    %5200 = vmatpush1.msra.mxu0 %v5101
    %5201 = vmatprep.subr.mxu0 %v5106
    %5202 = vmatpush1.msra.mxu0 %v5105
    %5203 = vmatprep.subr.mxu0 %v5110
    %5204 = vmatpush1.msra.mxu0 %v5109
    %5205 = vmatprep.subr.mxu0 %v5114
    %5206 = vmatpush1.msra.mxu0 %v5113
    %5207 = vmatprep.subr.mxu0 %v5118
    %5208 = vmatpush1.msra.mxu0 %v5117
    %5209 = vmatprep.subr.mxu0 %v5122
    %5210 = vmatpush1.msra.mxu0 %v5121
    %5211 = vmatprep.subr.mxu0 %v5126
    %5212 = vmatpush1.msra.mxu0 %v5125
    %5213 = vmatprep.subr.mxu0 %v5130
    %5214 = vmatpush1.msra.mxu0 %v5129
    %5215 = vmatprep.subr.mxu0 %v5134
    %5216 = vmatpush1.msra.mxu0 %v5133
    %5217 = vmatprep.subr.mxu0 %v5138
    %5218 = vmatpush1.msra.mxu0 %v5137
    %5219 = vmatprep.subr.mxu0 %v5142
    %5220 = vmatpush1.msra.mxu0 %v5141
    %5221 = vmatprep.subr.mxu0 %v5146
    %5222 = vmatpush1.msra.mxu0 %v5145
    %5223 = vmatprep.subr.mxu0 %v5150
    %5224 = vmatpush1.msra.mxu0 %v5149
    %5225 = vmatprep.subr.mxu0 %v5154
    %5226 = vmatpush1.msra.mxu0 %v5153
    %5227 = vmatprep.subr.mxu0 %v5158
    %5228 = vmatpush1.msra.mxu0 %v5157
    %5229 = vmatprep.subr.mxu0 %v5162
    %5230 = vmatpush1.msra.mxu0 %v5161
    %5231 = vmatprep.subr.mxu0 %v5166
    %5232 = vmatpush1.msra.mxu0 %v5165
    %5233 = vmatprep.mubr.f32.mxu0 %v3482
    %5234 = vmatmul.mubr.f32.gmra.mrb[0].mxu0 %v5040
    %v5235 = vpop.f32.mrb[0].mxu0
    %v5236 = vadd.f32 %v4790, %v5235
    %v5237 = vpop.f32.mrb[0].mxu0
    %v5238 = vadd.f32 %v4794, %v5237
    %5239 = vdwg.mxu0
    %5240 = vmatprep.subr.mxu0 %v5044
    %5241 = vmatpush1.msra.mxu0 %v5043
    %5242 = vmatprep.subr.mxu0 %v5048
    %5243 = vmatpush1.msra.mxu0 %v5047
    %5244 = vmatprep.subr.mxu0 %v5052
    %5245 = vmatpush1.msra.mxu0 %v5051
    %5246 = vmatprep.subr.mxu0 %v5056
    %5247 = vmatpush1.msra.mxu0 %v5055
    %5248 = vmatprep.subr.mxu0 %v5060
    %5249 = vmatpush1.msra.mxu0 %v5059
    %5250 = vmatprep.subr.mxu0 %v5064
    %5251 = vmatpush1.msra.mxu0 %v5063
    %5252 = vmatprep.subr.mxu0 %v5068
    %5253 = vmatpush1.msra.mxu0 %v5067
    %5254 = vmatprep.subr.mxu0 %v5072
    %5255 = vmatpush1.msra.mxu0 %v5071
    %5256 = vmatprep.subr.mxu0 %v5076
    %5257 = vmatpush1.msra.mxu0 %v5075
    %5258 = vmatprep.subr.mxu0 %v5080
    %5259 = vmatpush1.msra.mxu0 %v5079
    %5260 = vmatprep.subr.mxu0 %v5084
    %5261 = vmatpush1.msra.mxu0 %v5083
    %5262 = vmatprep.subr.mxu0 %v5088
    %5263 = vmatpush1.msra.mxu0 %v5087
    %5264 = vmatprep.subr.mxu0 %v5092
    %5265 = vmatpush1.msra.mxu0 %v5091
    %5266 = vmatprep.subr.mxu0 %v5096
    %5267 = vmatpush1.msra.mxu0 %v5095
    %5268 = vmatprep.subr.mxu0 %v5100
    %5269 = vmatpush1.msra.mxu0 %v5099
    %5270 = vmatprep.subr.mxu0 %v5104
    %5271 = vmatpush1.msra.mxu0 %v5103
    %5272 = vmatprep.subr.mxu0 %v5108
    %5273 = vmatpush1.msra.mxu0 %v5107
    %5274 = vmatprep.subr.mxu0 %v5112
    %5275 = vmatpush1.msra.mxu0 %v5111
    %5276 = vmatprep.subr.mxu0 %v5116
    %5277 = vmatpush1.msra.mxu0 %v5115
    %5278 = vmatprep.subr.mxu0 %v5120
    %5279 = vmatpush1.msra.mxu0 %v5119
    %5280 = vmatprep.subr.mxu0 %v5124
    %5281 = vmatpush1.msra.mxu0 %v5123
    %5282 = vmatprep.subr.mxu0 %v5128
    %5283 = vmatpush1.msra.mxu0 %v5127
    %5284 = vmatprep.subr.mxu0 %v5132
    %5285 = vmatpush1.msra.mxu0 %v5131
    %5286 = vmatprep.subr.mxu0 %v5136
    %5287 = vmatpush1.msra.mxu0 %v5135
    %5288 = vmatprep.subr.mxu0 %v5140
    %5289 = vmatpush1.msra.mxu0 %v5139
    %5290 = vmatprep.subr.mxu0 %v5144
    %5291 = vmatpush1.msra.mxu0 %v5143
    %5292 = vmatprep.subr.mxu0 %v5148
    %5293 = vmatpush1.msra.mxu0 %v5147
    %5294 = vmatprep.subr.mxu0 %v5152
    %5295 = vmatpush1.msra.mxu0 %v5151
    %5296 = vmatprep.subr.mxu0 %v5156
    %5297 = vmatpush1.msra.mxu0 %v5155
    %5298 = vmatprep.subr.mxu0 %v5160
    %5299 = vmatpush1.msra.mxu0 %v5159
    %5300 = vmatprep.subr.mxu0 %v5164
    %5301 = vmatpush1.msra.mxu0 %v5163
    %5302 = vmatprep.subr.mxu0 %v5168
    %5303 = vmatpush1.msra.mxu0 %v5167
    %5304 = vmatprep.mubr.f32.mxu0 %v3482
    %5305 = vmatmul.mubr.f32.gmra.mrb[0].mxu0 %v5040
    %v5306 = vpop.f32.mrb[0].mxu0
    %v5307 = vadd.f32 %v4798, %v5306
    %v5308 = vpop.f32.mrb[0].mxu0
    %v5309 = vadd.f32 %v4802, %v5308
    %5310 = vdwg.mxu0
    %v5311 = vxor.u32 %v5236, 2147483648
    %v5312 = vxor.u32 %v5238, 2147483648
    %v5313 = vxor.u32 %v5307, 2147483648
    %v5314 = vmul.f32 %v5311, 1.442695
    %v5315 = vpow.pop %v5314
    %v5316 = vmul.f32 %v5312, 1.442695
    %v5317 = vpow.pop %v5316
    %v5318 = vmul.f32 %v5313, 1.442695
    %v5319 = vpow.pop %v5318
    %v5320 = vadd.f32 %v5315, 1.0
    %v5321 = vadd.f32 %v5317, 1.0
    %v5322 = vadd.f32 %v5319, 1.0
    %v5323 = vrcp.pop %v5320
    %v5324 = vmul.f32 1.0, %v5323
    %v5325 = vrcp.pop %v5321
    %v5326 = vmul.f32 1.0, %v5325
    %v5327 = vrcp.pop %v5322
    %v5328 = vmul.f32 1.0, %v5327
    %v5329 = vtanh.pop %v5309
    %v5330 = vmul.f32 %v5326, 0.0
    %v5331 = vmul.f32 %v5324, %v5329
    %v5332 = vadd.f32 %v5330, %v5331
    %v5333 = vtanh.pop %v5332
    %v5334 = vmul.f32 %v5328, %v5333
    %5335 = vmatprep.subr.mxu0 %v4808
    %5336 = vmatpush1.msra.mxu0 %v4807
    %5337 = vmatprep.subr.mxu0 %v4812
    %5338 = vmatpush1.msra.mxu0 %v4811
    %5339 = vmatprep.subr.mxu0 %v4816
    %5340 = vmatpush1.msra.mxu0 %v4815
    %5341 = vmatprep.subr.mxu0 %v4820
    %5342 = vmatpush1.msra.mxu0 %v4819
    %5343 = vmatprep.subr.mxu0 %v4824
    %5344 = vmatpush1.msra.mxu0 %v4823
    %5345 = vmatprep.subr.mxu0 %v4828
    %5346 = vmatpush1.msra.mxu0 %v4827
    %5347 = vmatprep.subr.mxu0 %v4832
    %5348 = vmatpush1.msra.mxu0 %v4831
    %5349 = vmatprep.subr.mxu0 %v4836
    %5350 = vmatpush1.msra.mxu0 %v4835
    %5351 = vmatprep.subr.mxu0 %v4840
    %5352 = vmatpush1.msra.mxu0 %v4839
    %5353 = vmatprep.subr.mxu0 %v4844
    %5354 = vmatpush1.msra.mxu0 %v4843
    %5355 = vmatprep.subr.mxu0 %v4848
    %5356 = vmatpush1.msra.mxu0 %v4847
    %5357 = vmatprep.subr.mxu0 %v4852
    %5358 = vmatpush1.msra.mxu0 %v4851
    %5359 = vmatprep.subr.mxu0 %v4856
    %5360 = vmatpush1.msra.mxu0 %v4855
    %5361 = vmatprep.subr.mxu0 %v4860
    %5362 = vmatpush1.msra.mxu0 %v4859
    %5363 = vmatprep.subr.mxu0 %v4864
    %5364 = vmatpush1.msra.mxu0 %v4863
    %5365 = vmatprep.subr.mxu0 %v4868
    %5366 = vmatpush1.msra.mxu0 %v4867
    %5367 = vmatprep.subr.mxu0 0.0
    %5368 = vmatpush1.msra.mxu0 0.0
    %5369 = vmatprep.subr.mxu0 0.0
    %5370 = vmatpush1.msra.mxu0 0.0
    %5371 = vmatprep.subr.mxu0 0.0
    %5372 = vmatpush1.msra.mxu0 0.0
    %5373 = vmatprep.subr.mxu0 0.0
    %5374 = vmatpush1.msra.mxu0 0.0
    %5375 = vmatprep.subr.mxu0 0.0
    %5376 = vmatpush1.msra.mxu0 0.0
    %5377 = vmatprep.subr.mxu0 0.0
    %5378 = vmatpush1.msra.mxu0 0.0
    %5379 = vmatprep.subr.mxu0 0.0
    %5380 = vmatpush1.msra.mxu0 0.0
    %5381 = vmatprep.subr.mxu0 0.0
    %5382 = vmatpush1.msra.mxu0 0.0
    %5383 = vmatprep.subr.mxu0 0.0
    %5384 = vmatpush1.msra.mxu0 0.0
    %5385 = vmatprep.subr.mxu0 0.0
    %5386 = vmatpush1.msra.mxu0 0.0
    %5387 = vmatprep.subr.mxu0 0.0
    %5388 = vmatpush1.msra.mxu0 0.0
    %5389 = vmatprep.subr.mxu0 0.0
    %5390 = vmatpush1.msra.mxu0 0.0
    %5391 = vmatprep.subr.mxu0 0.0
    %5392 = vmatpush1.msra.mxu0 0.0
    %5393 = vmatprep.subr.mxu0 0.0
    %5394 = vmatpush1.msra.mxu0 0.0
    %5395 = vmatprep.subr.mxu0 0.0
    %5396 = vmatpush1.msra.mxu0 0.0
    %5397 = vmatprep.subr.mxu0 0.0
    %5398 = vmatpush1.msra.mxu0 0.0
    %5399 = vmatprep.mubr.f32.mxu0 0.0
    %5400 = vmatmul.mubr.f32.gmra.mrb[0].mxu0 %v5040
    %v5401 = vpop.f32.mrb[0].mxu0
    %v5402 = vadd.f32 0.0, %v5401
    %v5403 = vpop.f32.mrb[0].mxu0
    %v5404 = vadd.f32 0.0, %v5403
    %5405 = vdwg.mxu0
    %5406 = vmatprep.subr.mxu0 %v4810
    %5407 = vmatpush1.msra.mxu0 %v4809
    %5408 = vmatprep.subr.mxu0 %v4814
    %5409 = vmatpush1.msra.mxu0 %v4813
    %5410 = vmatprep.subr.mxu0 %v4818
    %5411 = vmatpush1.msra.mxu0 %v4817
    %5412 = vmatprep.subr.mxu0 %v4822
    %5413 = vmatpush1.msra.mxu0 %v4821
    %5414 = vmatprep.subr.mxu0 %v4826
    %5415 = vmatpush1.msra.mxu0 %v4825
    %5416 = vmatprep.subr.mxu0 %v4830
    %5417 = vmatpush1.msra.mxu0 %v4829
    %5418 = vmatprep.subr.mxu0 %v4834
    %5419 = vmatpush1.msra.mxu0 %v4833
    %5420 = vmatprep.subr.mxu0 %v4838
    %5421 = vmatpush1.msra.mxu0 %v4837
    %5422 = vmatprep.subr.mxu0 %v4842
    %5423 = vmatpush1.msra.mxu0 %v4841
    %5424 = vmatprep.subr.mxu0 %v4846
    %5425 = vmatpush1.msra.mxu0 %v4845
    %5426 = vmatprep.subr.mxu0 %v4850
    %5427 = vmatpush1.msra.mxu0 %v4849
    %5428 = vmatprep.subr.mxu0 %v4854
    %5429 = vmatpush1.msra.mxu0 %v4853
    %5430 = vmatprep.subr.mxu0 %v4858
    %5431 = vmatpush1.msra.mxu0 %v4857
    %5432 = vmatprep.subr.mxu0 %v4862
    %5433 = vmatpush1.msra.mxu0 %v4861
    %5434 = vmatprep.subr.mxu0 %v4866
    %5435 = vmatpush1.msra.mxu0 %v4865
    %5436 = vmatprep.subr.mxu0 %v4870
    %5437 = vmatpush1.msra.mxu0 %v4869
    %5438 = vmatprep.subr.mxu0 0.0
    %5439 = vmatpush1.msra.mxu0 0.0
    %5440 = vmatprep.subr.mxu0 0.0
    %5441 = vmatpush1.msra.mxu0 0.0
    %5442 = vmatprep.subr.mxu0 0.0
    %5443 = vmatpush1.msra.mxu0 0.0
    %5444 = vmatprep.subr.mxu0 0.0
    %5445 = vmatpush1.msra.mxu0 0.0
    %5446 = vmatprep.subr.mxu0 0.0
    %5447 = vmatpush1.msra.mxu0 0.0
    %5448 = vmatprep.subr.mxu0 0.0
    %5449 = vmatpush1.msra.mxu0 0.0
    %5450 = vmatprep.subr.mxu0 0.0
    %5451 = vmatpush1.msra.mxu0 0.0
    %5452 = vmatprep.subr.mxu0 0.0
    %5453 = vmatpush1.msra.mxu0 0.0
    %5454 = vmatprep.subr.mxu0 0.0
    %5455 = vmatpush1.msra.mxu0 0.0
    %5456 = vmatprep.subr.mxu0 0.0
    %5457 = vmatpush1.msra.mxu0 0.0
    %5458 = vmatprep.subr.mxu0 0.0
    %5459 = vmatpush1.msra.mxu0 0.0
    %5460 = vmatprep.subr.mxu0 0.0
    %5461 = vmatpush1.msra.mxu0 0.0
    %5462 = vmatprep.subr.mxu0 0.0
    %5463 = vmatpush1.msra.mxu0 0.0
    %5464 = vmatprep.subr.mxu0 0.0
    %5465 = vmatpush1.msra.mxu0 0.0
    %5466 = vmatprep.subr.mxu0 0.0
    %5467 = vmatpush1.msra.mxu0 0.0
    %5468 = vmatprep.subr.mxu0 0.0
    %5469 = vmatpush1.msra.mxu0 0.0
    %5470 = vmatprep.mubr.f32.mxu0 0.0
    %5471 = vmatmul.mubr.f32.gmra.mrb[0].mxu0 %v5040
    %v5472 = vpop.f32.mrb[0].mxu0
    %v5473 = vadd.f32 0.0, %v5472
    %v5474 = vpop.f32.mrb[0].mxu0
    %v5475 = vadd.f32 0.0, %v5474
    %5476 = vdwg.mxu0
    %v5481 = vrot.slane %v5402, 6
    %v5482 = vrot.slane %v5404, 6
    %v5483 = vrot.slane %v5473, 6
    %v5484 = vrot.slane %v5475, 6
    %v5489 = vadd.f32 %v4698, %v5481
    %v5490 = vadd.f32 %v4700, %v5482
    %v5491 = vadd.f32 %v4775, %v5483
    %v5492 = vadd.f32 %v4777, %v5484
    %v5493 = vxor.u32 %v5489, 2147483648
    %v5494 = vxor.u32 %v5490, 2147483648
    %v5495 = vxor.u32 %v5491, 2147483648
    %v5496 = vmul.f32 %v5493, 1.442695
    %v5497 = vpow.pop %v5496
    %v5498 = vmul.f32 %v5494, 1.442695
    %v5499 = vpow.pop %v5498
    %v5500 = vmul.f32 %v5495, 1.442695
    %v5501 = vpow.pop %v5500
    %v5502 = vadd.f32 %v5497, 1.0
    %v5503 = vadd.f32 %v5499, 1.0
    %v5504 = vadd.f32 %v5501, 1.0
    %v5505 = vrcp.pop %v5502
    %v5506 = vmul.f32 1.0, %v5505
    %v5507 = vrcp.pop %v5503
    %v5508 = vmul.f32 1.0, %v5507
    %v5509 = vrcp.pop %v5504
    %v5510 = vmul.f32 1.0, %v5509
    %v5511 = vtanh.pop %v5492
    %v5513 = vrot.slane %v5038, 6
    %v5515 = vmul.f32 %v5508, %v5513
    %v5516 = vmul.f32 %v5506, %v5511
    %v5517 = vadd.f32 %v5515, %v5516
    %v5518 = vtanh.pop %v5517
    %v5519 = vmul.f32 %v5510, %v5518
    %v5521 = vrot.slane %v5334, 6
    %v5523 = vrot.slane %v5519, 2
    %v5524 = vrot.slane %v5521, 2
    %5527 = vmatprep.subr.mxu0 %v5042
    %5528 = vmatpush1.msra.mxu0 %v5041
    %5529 = vmatprep.subr.mxu0 %v5046
    %5530 = vmatpush1.msra.mxu0 %v5045
    %5531 = vmatprep.subr.mxu0 %v5050
    %5532 = vmatpush1.msra.mxu0 %v5049
    %5533 = vmatprep.subr.mxu0 %v5054
    %5534 = vmatpush1.msra.mxu0 %v5053
    %5535 = vmatprep.subr.mxu0 %v5058
    %5536 = vmatpush1.msra.mxu0 %v5057
    %5537 = vmatprep.subr.mxu0 %v5062
    %5538 = vmatpush1.msra.mxu0 %v5061
    %5539 = vmatprep.subr.mxu0 %v5066
    %5540 = vmatpush1.msra.mxu0 %v5065
    %5541 = vmatprep.subr.mxu0 %v5070
    %5542 = vmatpush1.msra.mxu0 %v5069
    %5543 = vmatprep.subr.mxu0 %v5074
    %5544 = vmatpush1.msra.mxu0 %v5073
    %5545 = vmatprep.subr.mxu0 %v5078
    %5546 = vmatpush1.msra.mxu0 %v5077
    %5547 = vmatprep.subr.mxu0 %v5082
    %5548 = vmatpush1.msra.mxu0 %v5081
    %5549 = vmatprep.subr.mxu0 %v5086
    %5550 = vmatpush1.msra.mxu0 %v5085
    %5551 = vmatprep.subr.mxu0 %v5090
    %5552 = vmatpush1.msra.mxu0 %v5089
    %5553 = vmatprep.subr.mxu0 %v5094
    %5554 = vmatpush1.msra.mxu0 %v5093
    %5555 = vmatprep.subr.mxu0 %v5098
    %5556 = vmatpush1.msra.mxu0 %v5097
    %5557 = vmatprep.subr.mxu0 %v5102
    %5558 = vmatpush1.msra.mxu0 %v5101
    %5559 = vmatprep.subr.mxu0 %v5106
    %5560 = vmatpush1.msra.mxu0 %v5105
    %5561 = vmatprep.subr.mxu0 %v5110
    %5562 = vmatpush1.msra.mxu0 %v5109
    %5563 = vmatprep.subr.mxu0 %v5114
    %5564 = vmatpush1.msra.mxu0 %v5113
    %5565 = vmatprep.subr.mxu0 %v5118
    %5566 = vmatpush1.msra.mxu0 %v5117
    %5567 = vmatprep.subr.mxu0 %v5122
    %5568 = vmatpush1.msra.mxu0 %v5121
    %5569 = vmatprep.subr.mxu0 %v5126
    %5570 = vmatpush1.msra.mxu0 %v5125
    %5571 = vmatprep.subr.mxu0 %v5130
    %5572 = vmatpush1.msra.mxu0 %v5129
    %5573 = vmatprep.subr.mxu0 %v5134
    %5574 = vmatpush1.msra.mxu0 %v5133
    %5575 = vmatprep.subr.mxu0 %v5138
    %5576 = vmatpush1.msra.mxu0 %v5137
    %5577 = vmatprep.subr.mxu0 %v5142
    %5578 = vmatpush1.msra.mxu0 %v5141
    %5579 = vmatprep.subr.mxu0 %v5146
    %5580 = vmatpush1.msra.mxu0 %v5145
    %5581 = vmatprep.subr.mxu0 %v5150
    %5582 = vmatpush1.msra.mxu0 %v5149
    %5583 = vmatprep.subr.mxu0 %v5154
    %5584 = vmatpush1.msra.mxu0 %v5153
    %5585 = vmatprep.subr.mxu0 %v5158
    %5586 = vmatpush1.msra.mxu0 %v5157
    %5587 = vmatprep.subr.mxu0 %v5162
    %5588 = vmatpush1.msra.mxu0 %v5161
    %5589 = vmatprep.subr.mxu0 %v5166
    %5590 = vmatpush1.msra.mxu0 %v5165
    %5591 = vmatprep.mubr.f32.mxu0 %v5524
    %5592 = vmatmul.mubr.f32.gmra.mrb[0].mxu0 %v5523
    %v5593 = vpop.f32.mrb[0].mxu0
    %v5594 = vadd.f32 %v4790, %v5593
    %v5595 = vpop.f32.mrb[0].mxu0
    %v5596 = vadd.f32 %v4794, %v5595
    %5597 = vdwg.mxu0
    %5598 = vmatprep.subr.mxu0 %v5044
    %5599 = vmatpush1.msra.mxu0 %v5043
    %5600 = vmatprep.subr.mxu0 %v5048
    %5601 = vmatpush1.msra.mxu0 %v5047
    %5602 = vmatprep.subr.mxu0 %v5052
    %5603 = vmatpush1.msra.mxu0 %v5051
    %5604 = vmatprep.subr.mxu0 %v5056
    %5605 = vmatpush1.msra.mxu0 %v5055
    %5606 = vmatprep.subr.mxu0 %v5060
    %5607 = vmatpush1.msra.mxu0 %v5059
    %5608 = vmatprep.subr.mxu0 %v5064
    %5609 = vmatpush1.msra.mxu0 %v5063
    %5610 = vmatprep.subr.mxu0 %v5068
    %5611 = vmatpush1.msra.mxu0 %v5067
    %5612 = vmatprep.subr.mxu0 %v5072
    %5613 = vmatpush1.msra.mxu0 %v5071
    %5614 = vmatprep.subr.mxu0 %v5076
    %5615 = vmatpush1.msra.mxu0 %v5075
    %5616 = vmatprep.subr.mxu0 %v5080
    %5617 = vmatpush1.msra.mxu0 %v5079
    %5618 = vmatprep.subr.mxu0 %v5084
    %5619 = vmatpush1.msra.mxu0 %v5083
    %5620 = vmatprep.subr.mxu0 %v5088
    %5621 = vmatpush1.msra.mxu0 %v5087
    %5622 = vmatprep.subr.mxu0 %v5092
    %5623 = vmatpush1.msra.mxu0 %v5091
    %5624 = vmatprep.subr.mxu0 %v5096
    %5625 = vmatpush1.msra.mxu0 %v5095
    %5626 = vmatprep.subr.mxu0 %v5100
    %5627 = vmatpush1.msra.mxu0 %v5099
    %5628 = vmatprep.subr.mxu0 %v5104
    %5629 = vmatpush1.msra.mxu0 %v5103
    %5630 = vmatprep.subr.mxu0 %v5108
    %5631 = vmatpush1.msra.mxu0 %v5107
    %5632 = vmatprep.subr.mxu0 %v5112
    %5633 = vmatpush1.msra.mxu0 %v5111
    %5634 = vmatprep.subr.mxu0 %v5116
    %5635 = vmatpush1.msra.mxu0 %v5115
    %5636 = vmatprep.subr.mxu0 %v5120
    %5637 = vmatpush1.msra.mxu0 %v5119
    %5638 = vmatprep.subr.mxu0 %v5124
    %5639 = vmatpush1.msra.mxu0 %v5123
    %5640 = vmatprep.subr.mxu0 %v5128
    %5641 = vmatpush1.msra.mxu0 %v5127
    %5642 = vmatprep.subr.mxu0 %v5132
    %5643 = vmatpush1.msra.mxu0 %v5131
    %5644 = vmatprep.subr.mxu0 %v5136
    %5645 = vmatpush1.msra.mxu0 %v5135
    %5646 = vmatprep.subr.mxu0 %v5140
    %5647 = vmatpush1.msra.mxu0 %v5139
    %5648 = vmatprep.subr.mxu0 %v5144
    %5649 = vmatpush1.msra.mxu0 %v5143
    %5650 = vmatprep.subr.mxu0 %v5148
    %5651 = vmatpush1.msra.mxu0 %v5147
    %5652 = vmatprep.subr.mxu0 %v5152
    %5653 = vmatpush1.msra.mxu0 %v5151
    %5654 = vmatprep.subr.mxu0 %v5156
    %5655 = vmatpush1.msra.mxu0 %v5155
    %5656 = vmatprep.subr.mxu0 %v5160
    %5657 = vmatpush1.msra.mxu0 %v5159
    %5658 = vmatprep.subr.mxu0 %v5164
    %5659 = vmatpush1.msra.mxu0 %v5163
    %5660 = vmatprep.subr.mxu0 %v5168
    %5661 = vmatpush1.msra.mxu0 %v5167
    %5662 = vmatprep.mubr.f32.mxu0 %v5524
    %5663 = vmatmul.mubr.f32.gmra.mrb[0].mxu0 %v5523
    %v5664 = vpop.f32.mrb[0].mxu0
    %v5665 = vadd.f32 %v4798, %v5664
    %v5666 = vpop.f32.mrb[0].mxu0
    %v5667 = vadd.f32 %v4802, %v5666
    %5668 = vdwg.mxu0
    %v5669 = vxor.u32 %v5594, 2147483648
    %v5670 = vxor.u32 %v5596, 2147483648
    %v5671 = vxor.u32 %v5665, 2147483648
    %v5672 = vmul.f32 %v5669, 1.442695
    %v5673 = vpow.pop %v5672
    %v5674 = vmul.f32 %v5670, 1.442695
    %v5675 = vpow.pop %v5674
    %v5676 = vmul.f32 %v5671, 1.442695
    %v5677 = vpow.pop %v5676
    %v5678 = vadd.f32 %v5673, 1.0
    %v5679 = vadd.f32 %v5675, 1.0
    %v5680 = vadd.f32 %v5677, 1.0
    %v5681 = vrcp.pop %v5678
    %v5682 = vmul.f32 1.0, %v5681
    %v5683 = vrcp.pop %v5679
    %v5684 = vmul.f32 1.0, %v5683
    %v5685 = vrcp.pop %v5680
    %v5686 = vmul.f32 1.0, %v5685
    %v5687 = vtanh.pop %v5667
    %v5688 = vmul.f32 %v5684, %v5332
    %v5689 = vmul.f32 %v5682, %v5687
    %v5690 = vadd.f32 %v5688, %v5689
    %v5691 = vtanh.pop %v5690
    %v5692 = vmul.f32 %v5686, %v5691
    %5693 = vmatprep.subr.mxu0 %v4808
    %5694 = vmatpush1.msra.mxu0 %v4807
    %5695 = vmatprep.subr.mxu0 %v4812
    %5696 = vmatpush1.msra.mxu0 %v4811
    %5697 = vmatprep.subr.mxu0 %v4816
    %5698 = vmatpush1.msra.mxu0 %v4815
    %5699 = vmatprep.subr.mxu0 %v4820
    %5700 = vmatpush1.msra.mxu0 %v4819
    %5701 = vmatprep.subr.mxu0 %v4824
    %5702 = vmatpush1.msra.mxu0 %v4823
    %5703 = vmatprep.subr.mxu0 %v4828
    %5704 = vmatpush1.msra.mxu0 %v4827
    %5705 = vmatprep.subr.mxu0 %v4832
    %5706 = vmatpush1.msra.mxu0 %v4831
    %5707 = vmatprep.subr.mxu0 %v4836
    %5708 = vmatpush1.msra.mxu0 %v4835
    %5709 = vmatprep.subr.mxu0 %v4840
    %5710 = vmatpush1.msra.mxu0 %v4839
    %5711 = vmatprep.subr.mxu0 %v4844
    %5712 = vmatpush1.msra.mxu0 %v4843
    %5713 = vmatprep.subr.mxu0 %v4848
    %5714 = vmatpush1.msra.mxu0 %v4847
    %5715 = vmatprep.subr.mxu0 %v4852
    %5716 = vmatpush1.msra.mxu0 %v4851
    %5717 = vmatprep.subr.mxu0 %v4856
    %5718 = vmatpush1.msra.mxu0 %v4855
    %5719 = vmatprep.subr.mxu0 %v4860
    %5720 = vmatpush1.msra.mxu0 %v4859
    %5721 = vmatprep.subr.mxu0 %v4864
    %5722 = vmatpush1.msra.mxu0 %v4863
    %5723 = vmatprep.subr.mxu0 %v4868
    %5724 = vmatpush1.msra.mxu0 %v4867
    %5725 = vmatprep.subr.mxu0 0.0
    %5726 = vmatpush1.msra.mxu0 0.0
    %5727 = vmatprep.subr.mxu0 0.0
    %5728 = vmatpush1.msra.mxu0 0.0
    %5729 = vmatprep.subr.mxu0 0.0
    %5730 = vmatpush1.msra.mxu0 0.0
    %5731 = vmatprep.subr.mxu0 0.0
    %5732 = vmatpush1.msra.mxu0 0.0
    %5733 = vmatprep.subr.mxu0 0.0
    %5734 = vmatpush1.msra.mxu0 0.0
    %5735 = vmatprep.subr.mxu0 0.0
    %5736 = vmatpush1.msra.mxu0 0.0
    %5737 = vmatprep.subr.mxu0 0.0
    %5738 = vmatpush1.msra.mxu0 0.0
    %5739 = vmatprep.subr.mxu0 0.0
    %5740 = vmatpush1.msra.mxu0 0.0
    %5741 = vmatprep.subr.mxu0 0.0
    %5742 = vmatpush1.msra.mxu0 0.0
    %5743 = vmatprep.subr.mxu0 0.0
    %5744 = vmatpush1.msra.mxu0 0.0
    %5745 = vmatprep.subr.mxu0 0.0
    %5746 = vmatpush1.msra.mxu0 0.0
    %5747 = vmatprep.subr.mxu0 0.0
    %5748 = vmatpush1.msra.mxu0 0.0
    %5749 = vmatprep.subr.mxu0 0.0
    %5750 = vmatpush1.msra.mxu0 0.0
    %5751 = vmatprep.subr.mxu0 0.0
    %5752 = vmatpush1.msra.mxu0 0.0
    %5753 = vmatprep.subr.mxu0 0.0
    %5754 = vmatpush1.msra.mxu0 0.0
    %5755 = vmatprep.subr.mxu0 0.0
    %5756 = vmatpush1.msra.mxu0 0.0
    %5757 = vmatprep.mubr.f32.mxu0 0.0
    %5758 = vmatmul.mubr.f32.gmra.mrb[0].mxu0 %v5523
    %v5759 = vpop.f32.mrb[0].mxu0
    %v5760 = vadd.f32 0.0, %v5759
    %v5761 = vpop.f32.mrb[0].mxu0
    %v5762 = vadd.f32 0.0, %v5761
    %5763 = vdwg.mxu0
    %5764 = vmatprep.subr.mxu0 %v4810
    %5765 = vmatpush1.msra.mxu0 %v4809
    %5766 = vmatprep.subr.mxu0 %v4814
    %5767 = vmatpush1.msra.mxu0 %v4813
    %5768 = vmatprep.subr.mxu0 %v4818
    %5769 = vmatpush1.msra.mxu0 %v4817
    %5770 = vmatprep.subr.mxu0 %v4822
    %5771 = vmatpush1.msra.mxu0 %v4821
    %5772 = vmatprep.subr.mxu0 %v4826
    %5773 = vmatpush1.msra.mxu0 %v4825
    %5774 = vmatprep.subr.mxu0 %v4830
    %5775 = vmatpush1.msra.mxu0 %v4829
    %5776 = vmatprep.subr.mxu0 %v4834
    %5777 = vmatpush1.msra.mxu0 %v4833
    %5778 = vmatprep.subr.mxu0 %v4838
    %5779 = vmatpush1.msra.mxu0 %v4837
    %5780 = vmatprep.subr.mxu0 %v4842
    %5781 = vmatpush1.msra.mxu0 %v4841
    %5782 = vmatprep.subr.mxu0 %v4846
    %5783 = vmatpush1.msra.mxu0 %v4845
    %5784 = vmatprep.subr.mxu0 %v4850
    %5785 = vmatpush1.msra.mxu0 %v4849
    %5786 = vmatprep.subr.mxu0 %v4854
    %5787 = vmatpush1.msra.mxu0 %v4853
    %5788 = vmatprep.subr.mxu0 %v4858
    %5789 = vmatpush1.msra.mxu0 %v4857
    %5790 = vmatprep.subr.mxu0 %v4862
    %5791 = vmatpush1.msra.mxu0 %v4861
    %5792 = vmatprep.subr.mxu0 %v4866
    %5793 = vmatpush1.msra.mxu0 %v4865
    %5794 = vmatprep.subr.mxu0 %v4870
    %5795 = vmatpush1.msra.mxu0 %v4869
    %5796 = vmatprep.subr.mxu0 0.0
    %5797 = vmatpush1.msra.mxu0 0.0
    %5798 = vmatprep.subr.mxu0 0.0
    %5799 = vmatpush1.msra.mxu0 0.0
    %5800 = vmatprep.subr.mxu0 0.0
    %5801 = vmatpush1.msra.mxu0 0.0
    %5802 = vmatprep.subr.mxu0 0.0
    %5803 = vmatpush1.msra.mxu0 0.0
    %5804 = vmatprep.subr.mxu0 0.0
    %5805 = vmatpush1.msra.mxu0 0.0
    %5806 = vmatprep.subr.mxu0 0.0
    %5807 = vmatpush1.msra.mxu0 0.0
    %5808 = vmatprep.subr.mxu0 0.0
    %5809 = vmatpush1.msra.mxu0 0.0
    %5810 = vmatprep.subr.mxu0 0.0
    %5811 = vmatpush1.msra.mxu0 0.0
    %5812 = vmatprep.subr.mxu0 0.0
    %5813 = vmatpush1.msra.mxu0 0.0
    %5814 = vmatprep.subr.mxu0 0.0
    %5815 = vmatpush1.msra.mxu0 0.0
    %5816 = vmatprep.subr.mxu0 0.0
    %5817 = vmatpush1.msra.mxu0 0.0
    %5818 = vmatprep.subr.mxu0 0.0
    %5819 = vmatpush1.msra.mxu0 0.0
    %5820 = vmatprep.subr.mxu0 0.0
    %5821 = vmatpush1.msra.mxu0 0.0
    %5822 = vmatprep.subr.mxu0 0.0
    %5823 = vmatpush1.msra.mxu0 0.0
    %5824 = vmatprep.subr.mxu0 0.0
    %5825 = vmatpush1.msra.mxu0 0.0
    %5826 = vmatprep.subr.mxu0 0.0
    %5827 = vmatpush1.msra.mxu0 0.0
    %5828 = vmatprep.mubr.f32.mxu0 0.0
    %5829 = vmatmul.mubr.f32.gmra.mrb[0].mxu0 %v5523
    %v5830 = vpop.f32.mrb[0].mxu0
    %v5831 = vadd.f32 0.0, %v5830
    %v5832 = vpop.f32.mrb[0].mxu0
    %v5833 = vadd.f32 0.0, %v5832
    %5834 = vdwg.mxu0
    %v5839 = vrot.slane %v5760, 4
    %v5840 = vrot.slane %v5762, 4
    %v5841 = vrot.slane %v5831, 4
    %v5842 = vrot.slane %v5833, 4
    %v5847 = vadd.f32 %v4698, %v5839
    %v5848 = vadd.f32 %v4700, %v5840
    %v5849 = vadd.f32 %v4775, %v5841
    %v5850 = vadd.f32 %v4777, %v5842
    %v5851 = vxor.u32 %v5847, 2147483648
    %v5852 = vxor.u32 %v5848, 2147483648
    %v5853 = vxor.u32 %v5849, 2147483648
    %v5854 = vmul.f32 %v5851, 1.442695
    %v5855 = vpow.pop %v5854
    %v5856 = vmul.f32 %v5852, 1.442695
    %v5857 = vpow.pop %v5856
    %v5858 = vmul.f32 %v5853, 1.442695
    %v5859 = vpow.pop %v5858
    %v5860 = vadd.f32 %v5855, 1.0
    %v5861 = vadd.f32 %v5857, 1.0
    %v5862 = vadd.f32 %v5859, 1.0
    %v5863 = vrcp.pop %v5860
    %v5864 = vmul.f32 1.0, %v5863
    %v5865 = vrcp.pop %v5861
    %v5866 = vmul.f32 1.0, %v5865
    %v5867 = vrcp.pop %v5862
    %v5868 = vmul.f32 1.0, %v5867
    %v5869 = vtanh.pop %v5850
    %v5871 = vrot.slane %v5517, 6
    %v5873 = vmul.f32 %v5866, %v5871
    %v5874 = vmul.f32 %v5864, %v5869
    %v5875 = vadd.f32 %v5873, %v5874
    %v5876 = vtanh.pop %v5875
    %v5877 = vmul.f32 %v5868, %v5876
    %v5879 = vrot.slane %v5692, 4
    %v5881 = vrot.slane %v5877, 4
    %v5882 = vrot.slane %v5879, 4
    %5885 = vmatprep.subr.mxu0 %v5042
    %5886 = vmatpush1.msra.mxu0 %v5041
    %5887 = vmatprep.subr.mxu0 %v5046
    %5888 = vmatpush1.msra.mxu0 %v5045
    %5889 = vmatprep.subr.mxu0 %v5050
    %5890 = vmatpush1.msra.mxu0 %v5049
    %5891 = vmatprep.subr.mxu0 %v5054
    %5892 = vmatpush1.msra.mxu0 %v5053
    %5893 = vmatprep.subr.mxu0 %v5058
    %5894 = vmatpush1.msra.mxu0 %v5057
    %5895 = vmatprep.subr.mxu0 %v5062
    %5896 = vmatpush1.msra.mxu0 %v5061
    %5897 = vmatprep.subr.mxu0 %v5066
    %5898 = vmatpush1.msra.mxu0 %v5065
    %5899 = vmatprep.subr.mxu0 %v5070
    %5900 = vmatpush1.msra.mxu0 %v5069
    %5901 = vmatprep.subr.mxu0 %v5074
    %5902 = vmatpush1.msra.mxu0 %v5073
    %5903 = vmatprep.subr.mxu0 %v5078
    %5904 = vmatpush1.msra.mxu0 %v5077
    %5905 = vmatprep.subr.mxu0 %v5082
    %5906 = vmatpush1.msra.mxu0 %v5081
    %5907 = vmatprep.subr.mxu0 %v5086
    %5908 = vmatpush1.msra.mxu0 %v5085
    %5909 = vmatprep.subr.mxu0 %v5090
    %5910 = vmatpush1.msra.mxu0 %v5089
    %5911 = vmatprep.subr.mxu0 %v5094
    %5912 = vmatpush1.msra.mxu0 %v5093
    %5913 = vmatprep.subr.mxu0 %v5098
    %5914 = vmatpush1.msra.mxu0 %v5097
    %5915 = vmatprep.subr.mxu0 %v5102
    %5916 = vmatpush1.msra.mxu0 %v5101
    %5917 = vmatprep.subr.mxu0 %v5106
    %5918 = vmatpush1.msra.mxu0 %v5105
    %5919 = vmatprep.subr.mxu0 %v5110
    %5920 = vmatpush1.msra.mxu0 %v5109
    %5921 = vmatprep.subr.mxu0 %v5114
    %5922 = vmatpush1.msra.mxu0 %v5113
    %5923 = vmatprep.subr.mxu0 %v5118
    %5924 = vmatpush1.msra.mxu0 %v5117
    %5925 = vmatprep.subr.mxu0 %v5122
    %5926 = vmatpush1.msra.mxu0 %v5121
    %5927 = vmatprep.subr.mxu0 %v5126
    %5928 = vmatpush1.msra.mxu0 %v5125
    %5929 = vmatprep.subr.mxu0 %v5130
    %5930 = vmatpush1.msra.mxu0 %v5129
    %5931 = vmatprep.subr.mxu0 %v5134
    %5932 = vmatpush1.msra.mxu0 %v5133
    %5933 = vmatprep.subr.mxu0 %v5138
    %5934 = vmatpush1.msra.mxu0 %v5137
    %5935 = vmatprep.subr.mxu0 %v5142
    %5936 = vmatpush1.msra.mxu0 %v5141
    %5937 = vmatprep.subr.mxu0 %v5146
    %5938 = vmatpush1.msra.mxu0 %v5145
    %5939 = vmatprep.subr.mxu0 %v5150
    %5940 = vmatpush1.msra.mxu0 %v5149
    %5941 = vmatprep.subr.mxu0 %v5154
    %5942 = vmatpush1.msra.mxu0 %v5153
    %5943 = vmatprep.subr.mxu0 %v5158
    %5944 = vmatpush1.msra.mxu0 %v5157
    %5945 = vmatprep.subr.mxu0 %v5162
    %5946 = vmatpush1.msra.mxu0 %v5161
    %5947 = vmatprep.subr.mxu0 %v5166
    %5948 = vmatpush1.msra.mxu0 %v5165
    %5949 = vmatprep.mubr.f32.mxu0 %v5882
    %5950 = vmatmul.mubr.f32.gmra.mrb[0].mxu0 %v5881
    %v5951 = vpop.f32.mrb[0].mxu0
    %v5952 = vadd.f32 %v4790, %v5951
    %v5953 = vpop.f32.mrb[0].mxu0
    %v5954 = vadd.f32 %v4794, %v5953
    %5955 = vdwg.mxu0
    %5956 = vmatprep.subr.mxu0 %v5044
    %5957 = vmatpush1.msra.mxu0 %v5043
    %5958 = vmatprep.subr.mxu0 %v5048
    %5959 = vmatpush1.msra.mxu0 %v5047
    %5960 = vmatprep.subr.mxu0 %v5052
    %5961 = vmatpush1.msra.mxu0 %v5051
    %5962 = vmatprep.subr.mxu0 %v5056
    %5963 = vmatpush1.msra.mxu0 %v5055
    %5964 = vmatprep.subr.mxu0 %v5060
    %5965 = vmatpush1.msra.mxu0 %v5059
    %5966 = vmatprep.subr.mxu0 %v5064
    %5967 = vmatpush1.msra.mxu0 %v5063
    %5968 = vmatprep.subr.mxu0 %v5068
    %5969 = vmatpush1.msra.mxu0 %v5067
    %5970 = vmatprep.subr.mxu0 %v5072
    %5971 = vmatpush1.msra.mxu0 %v5071
    %5972 = vmatprep.subr.mxu0 %v5076
    %5973 = vmatpush1.msra.mxu0 %v5075
    %5974 = vmatprep.subr.mxu0 %v5080
    %5975 = vmatpush1.msra.mxu0 %v5079
    %5976 = vmatprep.subr.mxu0 %v5084
    %5977 = vmatpush1.msra.mxu0 %v5083
    %5978 = vmatprep.subr.mxu0 %v5088
    %5979 = vmatpush1.msra.mxu0 %v5087
    %5980 = vmatprep.subr.mxu0 %v5092
    %5981 = vmatpush1.msra.mxu0 %v5091
    %5982 = vmatprep.subr.mxu0 %v5096
    %5983 = vmatpush1.msra.mxu0 %v5095
    %5984 = vmatprep.subr.mxu0 %v5100
    %5985 = vmatpush1.msra.mxu0 %v5099
    %5986 = vmatprep.subr.mxu0 %v5104
    %5987 = vmatpush1.msra.mxu0 %v5103
    %5988 = vmatprep.subr.mxu0 %v5108
    %5989 = vmatpush1.msra.mxu0 %v5107
    %5990 = vmatprep.subr.mxu0 %v5112
    %5991 = vmatpush1.msra.mxu0 %v5111
    %5992 = vmatprep.subr.mxu0 %v5116
    %5993 = vmatpush1.msra.mxu0 %v5115
    %5994 = vmatprep.subr.mxu0 %v5120
    %5995 = vmatpush1.msra.mxu0 %v5119
    %5996 = vmatprep.subr.mxu0 %v5124
    %5997 = vmatpush1.msra.mxu0 %v5123
    %5998 = vmatprep.subr.mxu0 %v5128
    %5999 = vmatpush1.msra.mxu0 %v5127
    %6000 = vmatprep.subr.mxu0 %v5132
    %6001 = vmatpush1.msra.mxu0 %v5131
    %6002 = vmatprep.subr.mxu0 %v5136
    %6003 = vmatpush1.msra.mxu0 %v5135
    %6004 = vmatprep.subr.mxu0 %v5140
    %6005 = vmatpush1.msra.mxu0 %v5139
    %6006 = vmatprep.subr.mxu0 %v5144
    %6007 = vmatpush1.msra.mxu0 %v5143
    %6008 = vmatprep.subr.mxu0 %v5148
    %6009 = vmatpush1.msra.mxu0 %v5147
    %6010 = vmatprep.subr.mxu0 %v5152
    %6011 = vmatpush1.msra.mxu0 %v5151
    %6012 = vmatprep.subr.mxu0 %v5156
    %6013 = vmatpush1.msra.mxu0 %v5155
    %6014 = vmatprep.subr.mxu0 %v5160
    %6015 = vmatpush1.msra.mxu0 %v5159
    %6016 = vmatprep.subr.mxu0 %v5164
    %6017 = vmatpush1.msra.mxu0 %v5163
    %6018 = vmatprep.subr.mxu0 %v5168
    %6019 = vmatpush1.msra.mxu0 %v5167
    %6020 = vmatprep.mubr.f32.mxu0 %v5882
    %6021 = vmatmul.mubr.f32.gmra.mrb[0].mxu0 %v5881
    %v6022 = vpop.f32.mrb[0].mxu0
    %v6023 = vadd.f32 %v4798, %v6022
    %v6024 = vpop.f32.mrb[0].mxu0
    %v6025 = vadd.f32 %v4802, %v6024
    %6026 = vdwg.mxu0
    %v6027 = vxor.u32 %v5952, 2147483648
    %v6028 = vxor.u32 %v5954, 2147483648
    %v6029 = vxor.u32 %v6023, 2147483648
    %v6030 = vmul.f32 %v6027, 1.442695
    %v6031 = vpow.pop %v6030
    %v6032 = vmul.f32 %v6028, 1.442695
    %v6033 = vpow.pop %v6032
    %v6034 = vmul.f32 %v6029, 1.442695
    %v6035 = vpow.pop %v6034
    %v6036 = vadd.f32 %v6031, 1.0
    %v6037 = vadd.f32 %v6033, 1.0
    %v6038 = vadd.f32 %v6035, 1.0
    %v6039 = vrcp.pop %v6036
    %v6040 = vmul.f32 1.0, %v6039
    %v6041 = vrcp.pop %v6037
    %v6042 = vmul.f32 1.0, %v6041
    %v6043 = vrcp.pop %v6038
    %v6044 = vmul.f32 1.0, %v6043
    %v6045 = vtanh.pop %v6025
    %v6046 = vmul.f32 %v6042, %v5690
    %v6047 = vmul.f32 %v6040, %v6045
    %v6048 = vadd.f32 %v6046, %v6047
    %v6049 = vtanh.pop %v6048
    %v6050 = vmul.f32 %v6044, %v6049
    %6051 = vmatprep.subr.mxu0 %v4808
    %6052 = vmatpush1.msra.mxu0 %v4807
    %6053 = vmatprep.subr.mxu0 %v4812
    %6054 = vmatpush1.msra.mxu0 %v4811
    %6055 = vmatprep.subr.mxu0 %v4816
    %6056 = vmatpush1.msra.mxu0 %v4815
    %6057 = vmatprep.subr.mxu0 %v4820
    %6058 = vmatpush1.msra.mxu0 %v4819
    %6059 = vmatprep.subr.mxu0 %v4824
    %6060 = vmatpush1.msra.mxu0 %v4823
    %6061 = vmatprep.subr.mxu0 %v4828
    %6062 = vmatpush1.msra.mxu0 %v4827
    %6063 = vmatprep.subr.mxu0 %v4832
    %6064 = vmatpush1.msra.mxu0 %v4831
    %6065 = vmatprep.subr.mxu0 %v4836
    %6066 = vmatpush1.msra.mxu0 %v4835
    %6067 = vmatprep.subr.mxu0 %v4840
    %6068 = vmatpush1.msra.mxu0 %v4839
    %6069 = vmatprep.subr.mxu0 %v4844
    %6070 = vmatpush1.msra.mxu0 %v4843
    %6071 = vmatprep.subr.mxu0 %v4848
    %6072 = vmatpush1.msra.mxu0 %v4847
    %6073 = vmatprep.subr.mxu0 %v4852
    %6074 = vmatpush1.msra.mxu0 %v4851
    %6075 = vmatprep.subr.mxu0 %v4856
    %6076 = vmatpush1.msra.mxu0 %v4855
    %6077 = vmatprep.subr.mxu0 %v4860
    %6078 = vmatpush1.msra.mxu0 %v4859
    %6079 = vmatprep.subr.mxu0 %v4864
    %6080 = vmatpush1.msra.mxu0 %v4863
    %6081 = vmatprep.subr.mxu0 %v4868
    %6082 = vmatpush1.msra.mxu0 %v4867
    %6083 = vmatprep.subr.mxu0 0.0
    %6084 = vmatpush1.msra.mxu0 0.0
    %6085 = vmatprep.subr.mxu0 0.0
    %6086 = vmatpush1.msra.mxu0 0.0
    %6087 = vmatprep.subr.mxu0 0.0
    %6088 = vmatpush1.msra.mxu0 0.0
    %6089 = vmatprep.subr.mxu0 0.0
    %6090 = vmatpush1.msra.mxu0 0.0
    %6091 = vmatprep.subr.mxu0 0.0
    %6092 = vmatpush1.msra.mxu0 0.0
    %6093 = vmatprep.subr.mxu0 0.0
    %6094 = vmatpush1.msra.mxu0 0.0
    %6095 = vmatprep.subr.mxu0 0.0
    %6096 = vmatpush1.msra.mxu0 0.0
    %6097 = vmatprep.subr.mxu0 0.0
    %6098 = vmatpush1.msra.mxu0 0.0
    %6099 = vmatprep.subr.mxu0 0.0
    %6100 = vmatpush1.msra.mxu0 0.0
    %6101 = vmatprep.subr.mxu0 0.0
    %6102 = vmatpush1.msra.mxu0 0.0
    %6103 = vmatprep.subr.mxu0 0.0
    %6104 = vmatpush1.msra.mxu0 0.0
    %6105 = vmatprep.subr.mxu0 0.0
    %6106 = vmatpush1.msra.mxu0 0.0
    %6107 = vmatprep.subr.mxu0 0.0
    %6108 = vmatpush1.msra.mxu0 0.0
    %6109 = vmatprep.subr.mxu0 0.0
    %6110 = vmatpush1.msra.mxu0 0.0
    %6111 = vmatprep.subr.mxu0 0.0
    %6112 = vmatpush1.msra.mxu0 0.0
    %6113 = vmatprep.subr.mxu0 0.0
    %6114 = vmatpush1.msra.mxu0 0.0
    %6115 = vmatprep.mubr.f32.mxu0 0.0
    %6116 = vmatmul.mubr.f32.gmra.mrb[0].mxu0 %v5881
    %v6117 = vpop.f32.mrb[0].mxu0
    %v6118 = vadd.f32 0.0, %v6117
    %v6119 = vpop.f32.mrb[0].mxu0
    %v6120 = vadd.f32 0.0, %v6119
    %6121 = vdwg.mxu0
    %6122 = vmatprep.subr.mxu0 %v4810
    %6123 = vmatpush1.msra.mxu0 %v4809
    %6124 = vmatprep.subr.mxu0 %v4814
    %6125 = vmatpush1.msra.mxu0 %v4813
    %6126 = vmatprep.subr.mxu0 %v4818
    %6127 = vmatpush1.msra.mxu0 %v4817
    %6128 = vmatprep.subr.mxu0 %v4822
    %6129 = vmatpush1.msra.mxu0 %v4821
    %6130 = vmatprep.subr.mxu0 %v4826
    %6131 = vmatpush1.msra.mxu0 %v4825
    %6132 = vmatprep.subr.mxu0 %v4830
    %6133 = vmatpush1.msra.mxu0 %v4829
    %6134 = vmatprep.subr.mxu0 %v4834
    %6135 = vmatpush1.msra.mxu0 %v4833
    %6136 = vmatprep.subr.mxu0 %v4838
    %6137 = vmatpush1.msra.mxu0 %v4837
    %6138 = vmatprep.subr.mxu0 %v4842
    %6139 = vmatpush1.msra.mxu0 %v4841
    %6140 = vmatprep.subr.mxu0 %v4846
    %6141 = vmatpush1.msra.mxu0 %v4845
    %6142 = vmatprep.subr.mxu0 %v4850
    %6143 = vmatpush1.msra.mxu0 %v4849
    %6144 = vmatprep.subr.mxu0 %v4854
    %6145 = vmatpush1.msra.mxu0 %v4853
    %6146 = vmatprep.subr.mxu0 %v4858
    %6147 = vmatpush1.msra.mxu0 %v4857
    %6148 = vmatprep.subr.mxu0 %v4862
    %6149 = vmatpush1.msra.mxu0 %v4861
    %6150 = vmatprep.subr.mxu0 %v4866
    %6151 = vmatpush1.msra.mxu0 %v4865
    %6152 = vmatprep.subr.mxu0 %v4870
    %6153 = vmatpush1.msra.mxu0 %v4869
    %6154 = vmatprep.subr.mxu0 0.0
    %6155 = vmatpush1.msra.mxu0 0.0
    %6156 = vmatprep.subr.mxu0 0.0
    %6157 = vmatpush1.msra.mxu0 0.0
    %6158 = vmatprep.subr.mxu0 0.0
    %6159 = vmatpush1.msra.mxu0 0.0
    %6160 = vmatprep.subr.mxu0 0.0
    %6161 = vmatpush1.msra.mxu0 0.0
    %6162 = vmatprep.subr.mxu0 0.0
    %6163 = vmatpush1.msra.mxu0 0.0
    %6164 = vmatprep.subr.mxu0 0.0
    %6165 = vmatpush1.msra.mxu0 0.0
    %6166 = vmatprep.subr.mxu0 0.0
    %6167 = vmatpush1.msra.mxu0 0.0
    %6168 = vmatprep.subr.mxu0 0.0
    %6169 = vmatpush1.msra.mxu0 0.0
    %6170 = vmatprep.subr.mxu0 0.0
    %6171 = vmatpush1.msra.mxu0 0.0
    %6172 = vmatprep.subr.mxu0 0.0
    %6173 = vmatpush1.msra.mxu0 0.0
    %6174 = vmatprep.subr.mxu0 0.0
    %6175 = vmatpush1.msra.mxu0 0.0
    %6176 = vmatprep.subr.mxu0 0.0
    %6177 = vmatpush1.msra.mxu0 0.0
    %6178 = vmatprep.subr.mxu0 0.0
    %6179 = vmatpush1.msra.mxu0 0.0
    %6180 = vmatprep.subr.mxu0 0.0
    %6181 = vmatpush1.msra.mxu0 0.0
    %6182 = vmatprep.subr.mxu0 0.0
    %6183 = vmatpush1.msra.mxu0 0.0
    %6184 = vmatprep.subr.mxu0 0.0
    %6185 = vmatpush1.msra.mxu0 0.0
    %6186 = vmatprep.mubr.f32.mxu0 0.0
    %6187 = vmatmul.mubr.f32.gmra.mrb[0].mxu0 %v5881
    %v6188 = vpop.f32.mrb[0].mxu0
    %v6189 = vadd.f32 0.0, %v6188
    %v6190 = vpop.f32.mrb[0].mxu0
    %v6191 = vadd.f32 0.0, %v6190
    %6192 = vdwg.mxu0
    %v6197 = vrot.slane %v6118, 2
    %v6198 = vrot.slane %v6120, 2
    %v6199 = vrot.slane %v6189, 2
    %v6200 = vrot.slane %v6191, 2
    %v6205 = vadd.f32 %v4698, %v6197
    %v6206 = vadd.f32 %v4700, %v6198
    %v6207 = vadd.f32 %v4775, %v6199
    %v6208 = vadd.f32 %v4777, %v6200
    %v6209 = vxor.u32 %v6205, 2147483648
    %v6210 = vxor.u32 %v6206, 2147483648
    %v6211 = vxor.u32 %v6207, 2147483648
    %v6212 = vmul.f32 %v6209, 1.442695
    %v6213 = vpow.pop %v6212
    %v6214 = vmul.f32 %v6210, 1.442695
    %v6215 = vpow.pop %v6214
    %v6216 = vmul.f32 %v6211, 1.442695
    %v6217 = vpow.pop %v6216
    %v6218 = vadd.f32 %v6213, 1.0
    %v6219 = vadd.f32 %v6215, 1.0
    %v6220 = vadd.f32 %v6217, 1.0
    %v6221 = vrcp.pop %v6218
    %v6222 = vmul.f32 1.0, %v6221
    %v6223 = vrcp.pop %v6219
    %v6224 = vmul.f32 1.0, %v6223
    %v6225 = vrcp.pop %v6220
    %v6226 = vmul.f32 1.0, %v6225
    %v6227 = vtanh.pop %v6208
    %v6229 = vrot.slane %v5875, 6
    %v6231 = vmul.f32 %v6224, %v6229
    %v6232 = vmul.f32 %v6222, %v6227
    %v6233 = vadd.f32 %v6231, %v6232
    %v6234 = vtanh.pop %v6233
    %v6235 = vmul.f32 %v6226, %v6234
    %v6237 = vrot.slane %v6050, 2
    %v6239 = vrot.slane %v6235, 6
    %v6240 = vrot.slane %v6237, 6
    %6243 = vmatprep.subr.mxu0 %v5042
    %6244 = vmatpush1.msra.mxu0 %v5041
    %6245 = vmatprep.subr.mxu0 %v5046
    %6246 = vmatpush1.msra.mxu0 %v5045
    %6247 = vmatprep.subr.mxu0 %v5050
    %6248 = vmatpush1.msra.mxu0 %v5049
    %6249 = vmatprep.subr.mxu0 %v5054
    %6250 = vmatpush1.msra.mxu0 %v5053
    %6251 = vmatprep.subr.mxu0 %v5058
    %6252 = vmatpush1.msra.mxu0 %v5057
    %6253 = vmatprep.subr.mxu0 %v5062
    %6254 = vmatpush1.msra.mxu0 %v5061
    %6255 = vmatprep.subr.mxu0 %v5066
    %6256 = vmatpush1.msra.mxu0 %v5065
    %6257 = vmatprep.subr.mxu0 %v5070
    %6258 = vmatpush1.msra.mxu0 %v5069
    %6259 = vmatprep.subr.mxu0 %v5074
    %6260 = vmatpush1.msra.mxu0 %v5073
    %6261 = vmatprep.subr.mxu0 %v5078
    %6262 = vmatpush1.msra.mxu0 %v5077
    %6263 = vmatprep.subr.mxu0 %v5082
    %6264 = vmatpush1.msra.mxu0 %v5081
    %6265 = vmatprep.subr.mxu0 %v5086
    %6266 = vmatpush1.msra.mxu0 %v5085
    %6267 = vmatprep.subr.mxu0 %v5090
    %6268 = vmatpush1.msra.mxu0 %v5089
    %6269 = vmatprep.subr.mxu0 %v5094
    %6270 = vmatpush1.msra.mxu0 %v5093
    %6271 = vmatprep.subr.mxu0 %v5098
    %6272 = vmatpush1.msra.mxu0 %v5097
    %6273 = vmatprep.subr.mxu0 %v5102
    %6274 = vmatpush1.msra.mxu0 %v5101
    %6275 = vmatprep.subr.mxu0 %v5106
    %6276 = vmatpush1.msra.mxu0 %v5105
    %6277 = vmatprep.subr.mxu0 %v5110
    %6278 = vmatpush1.msra.mxu0 %v5109
    %6279 = vmatprep.subr.mxu0 %v5114
    %6280 = vmatpush1.msra.mxu0 %v5113
    %6281 = vmatprep.subr.mxu0 %v5118
    %6282 = vmatpush1.msra.mxu0 %v5117
    %6283 = vmatprep.subr.mxu0 %v5122
    %6284 = vmatpush1.msra.mxu0 %v5121
    %6285 = vmatprep.subr.mxu0 %v5126
    %6286 = vmatpush1.msra.mxu0 %v5125
    %6287 = vmatprep.subr.mxu0 %v5130
    %6288 = vmatpush1.msra.mxu0 %v5129
    %6289 = vmatprep.subr.mxu0 %v5134
    %6290 = vmatpush1.msra.mxu0 %v5133
    %6291 = vmatprep.subr.mxu0 %v5138
    %6292 = vmatpush1.msra.mxu0 %v5137
    %6293 = vmatprep.subr.mxu0 %v5142
    %6294 = vmatpush1.msra.mxu0 %v5141
    %6295 = vmatprep.subr.mxu0 %v5146
    %6296 = vmatpush1.msra.mxu0 %v5145
    %6297 = vmatprep.subr.mxu0 %v5150
    %6298 = vmatpush1.msra.mxu0 %v5149
    %6299 = vmatprep.subr.mxu0 %v5154
    %6300 = vmatpush1.msra.mxu0 %v5153
    %6301 = vmatprep.subr.mxu0 %v5158
    %6302 = vmatpush1.msra.mxu0 %v5157
    %6303 = vmatprep.subr.mxu0 %v5162
    %6304 = vmatpush1.msra.mxu0 %v5161
    %6305 = vmatprep.subr.mxu0 %v5166
    %6306 = vmatpush1.msra.mxu0 %v5165
    %6307 = vmatprep.mubr.f32.mxu0 %v6240
    %6308 = vmatmul.mubr.f32.gmra.mrb[0].mxu0 %v6239
    %v6309 = vpop.f32.mrb[0].mxu0
    %v6310 = vadd.f32 %v4790, %v6309
    %v6311 = vpop.f32.mrb[0].mxu0
    %v6312 = vadd.f32 %v4794, %v6311
    %6313 = vdwg.mxu0
    %6314 = vmatprep.subr.mxu0 %v5044
    %6315 = vmatpush1.msra.mxu0 %v5043
    %6316 = vmatprep.subr.mxu0 %v5048
    %6317 = vmatpush1.msra.mxu0 %v5047
    %6318 = vmatprep.subr.mxu0 %v5052
    %6319 = vmatpush1.msra.mxu0 %v5051
    %6320 = vmatprep.subr.mxu0 %v5056
    %6321 = vmatpush1.msra.mxu0 %v5055
    %6322 = vmatprep.subr.mxu0 %v5060
    %6323 = vmatpush1.msra.mxu0 %v5059
    %6324 = vmatprep.subr.mxu0 %v5064
    %6325 = vmatpush1.msra.mxu0 %v5063
    %6326 = vmatprep.subr.mxu0 %v5068
    %6327 = vmatpush1.msra.mxu0 %v5067
    %6328 = vmatprep.subr.mxu0 %v5072
    %6329 = vmatpush1.msra.mxu0 %v5071
    %6330 = vmatprep.subr.mxu0 %v5076
    %6331 = vmatpush1.msra.mxu0 %v5075
    %6332 = vmatprep.subr.mxu0 %v5080
    %6333 = vmatpush1.msra.mxu0 %v5079
    %6334 = vmatprep.subr.mxu0 %v5084
    %6335 = vmatpush1.msra.mxu0 %v5083
    %6336 = vmatprep.subr.mxu0 %v5088
    %6337 = vmatpush1.msra.mxu0 %v5087
    %6338 = vmatprep.subr.mxu0 %v5092
    %6339 = vmatpush1.msra.mxu0 %v5091
    %6340 = vmatprep.subr.mxu0 %v5096
    %6341 = vmatpush1.msra.mxu0 %v5095
    %6342 = vmatprep.subr.mxu0 %v5100
    %6343 = vmatpush1.msra.mxu0 %v5099
    %6344 = vmatprep.subr.mxu0 %v5104
    %6345 = vmatpush1.msra.mxu0 %v5103
    %6346 = vmatprep.subr.mxu0 %v5108
    %6347 = vmatpush1.msra.mxu0 %v5107
    %6348 = vmatprep.subr.mxu0 %v5112
    %6349 = vmatpush1.msra.mxu0 %v5111
    %6350 = vmatprep.subr.mxu0 %v5116
    %6351 = vmatpush1.msra.mxu0 %v5115
    %6352 = vmatprep.subr.mxu0 %v5120
    %6353 = vmatpush1.msra.mxu0 %v5119
    %6354 = vmatprep.subr.mxu0 %v5124
    %6355 = vmatpush1.msra.mxu0 %v5123
    %6356 = vmatprep.subr.mxu0 %v5128
    %6357 = vmatpush1.msra.mxu0 %v5127
    %6358 = vmatprep.subr.mxu0 %v5132
    %6359 = vmatpush1.msra.mxu0 %v5131
    %6360 = vmatprep.subr.mxu0 %v5136
    %6361 = vmatpush1.msra.mxu0 %v5135
    %6362 = vmatprep.subr.mxu0 %v5140
    %6363 = vmatpush1.msra.mxu0 %v5139
    %6364 = vmatprep.subr.mxu0 %v5144
    %6365 = vmatpush1.msra.mxu0 %v5143
    %6366 = vmatprep.subr.mxu0 %v5148
    %6367 = vmatpush1.msra.mxu0 %v5147
    %6368 = vmatprep.subr.mxu0 %v5152
    %6369 = vmatpush1.msra.mxu0 %v5151
    %6370 = vmatprep.subr.mxu0 %v5156
    %6371 = vmatpush1.msra.mxu0 %v5155
    %6372 = vmatprep.subr.mxu0 %v5160
    %6373 = vmatpush1.msra.mxu0 %v5159
    %6374 = vmatprep.subr.mxu0 %v5164
    %6375 = vmatpush1.msra.mxu0 %v5163
    %6376 = vmatprep.subr.mxu0 %v5168
    %6377 = vmatpush1.msra.mxu0 %v5167
    %6378 = vmatprep.mubr.f32.mxu0 %v6240
    %6379 = vmatmul.mubr.f32.gmra.mrb[0].mxu0 %v6239
    %v6380 = vpop.f32.mrb[0].mxu0
    %v6381 = vadd.f32 %v4798, %v6380
    %v6382 = vpop.f32.mrb[0].mxu0
    %v6383 = vadd.f32 %v4802, %v6382
    %6384 = vdwg.mxu0
    %v6385 = vxor.u32 %v6310, 2147483648
    %v6386 = vxor.u32 %v6312, 2147483648
    %v6387 = vxor.u32 %v6381, 2147483648
    %v6388 = vmul.f32 %v6385, 1.442695
    %v6389 = vpow.pop %v6388
    %v6390 = vmul.f32 %v6386, 1.442695
    %v6391 = vpow.pop %v6390
    %v6392 = vmul.f32 %v6387, 1.442695
    %v6393 = vpow.pop %v6392
    %v6394 = vadd.f32 %v6389, 1.0
    %v6395 = vadd.f32 %v6391, 1.0
    %v6396 = vadd.f32 %v6393, 1.0
    %v6397 = vrcp.pop %v6394
    %v6398 = vmul.f32 1.0, %v6397
    %v6399 = vrcp.pop %v6395
    %v6400 = vmul.f32 1.0, %v6399
    %v6401 = vrcp.pop %v6396
    %v6402 = vmul.f32 1.0, %v6401
    %v6403 = vtanh.pop %v6383
    %v6404 = vmul.f32 %v6400, %v6048
    %v6405 = vmul.f32 %v6398, %v6403
    %v6406 = vadd.f32 %v6404, %v6405
    %v6407 = vtanh.pop %v6406
    %v6408 = vmul.f32 %v6402, %v6407
    %6409 = vmatprep.subr.mxu0 %v4808
    %6410 = vmatpush1.msra.mxu0 %v4807
    %6411 = vmatprep.subr.mxu0 %v4812
    %6412 = vmatpush1.msra.mxu0 %v4811
    %6413 = vmatprep.subr.mxu0 %v4816
    %6414 = vmatpush1.msra.mxu0 %v4815
    %6415 = vmatprep.subr.mxu0 %v4820
    %6416 = vmatpush1.msra.mxu0 %v4819
    %6417 = vmatprep.subr.mxu0 %v4824
    %6418 = vmatpush1.msra.mxu0 %v4823
    %6419 = vmatprep.subr.mxu0 %v4828
    %6420 = vmatpush1.msra.mxu0 %v4827
    %6421 = vmatprep.subr.mxu0 %v4832
    %6422 = vmatpush1.msra.mxu0 %v4831
    %6423 = vmatprep.subr.mxu0 %v4836
    %6424 = vmatpush1.msra.mxu0 %v4835
    %6425 = vmatprep.subr.mxu0 %v4840
    %6426 = vmatpush1.msra.mxu0 %v4839
    %6427 = vmatprep.subr.mxu0 %v4844
    %6428 = vmatpush1.msra.mxu0 %v4843
    %6429 = vmatprep.subr.mxu0 %v4848
    %6430 = vmatpush1.msra.mxu0 %v4847
    %6431 = vmatprep.subr.mxu0 %v4852
    %6432 = vmatpush1.msra.mxu0 %v4851
    %6433 = vmatprep.subr.mxu0 %v4856
    %6434 = vmatpush1.msra.mxu0 %v4855
    %6435 = vmatprep.subr.mxu0 %v4860
    %6436 = vmatpush1.msra.mxu0 %v4859
    %6437 = vmatprep.subr.mxu0 %v4864
    %6438 = vmatpush1.msra.mxu0 %v4863
    %6439 = vmatprep.subr.mxu0 %v4868
    %6440 = vmatpush1.msra.mxu0 %v4867
    %6441 = vmatprep.subr.mxu0 0.0
    %6442 = vmatpush1.msra.mxu0 0.0
    %6443 = vmatprep.subr.mxu0 0.0
    %6444 = vmatpush1.msra.mxu0 0.0
    %6445 = vmatprep.subr.mxu0 0.0
    %6446 = vmatpush1.msra.mxu0 0.0
    %6447 = vmatprep.subr.mxu0 0.0
    %6448 = vmatpush1.msra.mxu0 0.0
    %6449 = vmatprep.subr.mxu0 0.0
    %6450 = vmatpush1.msra.mxu0 0.0
    %6451 = vmatprep.subr.mxu0 0.0
    %6452 = vmatpush1.msra.mxu0 0.0
    %6453 = vmatprep.subr.mxu0 0.0
    %6454 = vmatpush1.msra.mxu0 0.0
    %6455 = vmatprep.subr.mxu0 0.0
    %6456 = vmatpush1.msra.mxu0 0.0
    %6457 = vmatprep.subr.mxu0 0.0
    %6458 = vmatpush1.msra.mxu0 0.0
    %6459 = vmatprep.subr.mxu0 0.0
    %6460 = vmatpush1.msra.mxu0 0.0
    %6461 = vmatprep.subr.mxu0 0.0
    %6462 = vmatpush1.msra.mxu0 0.0
    %6463 = vmatprep.subr.mxu0 0.0
    %6464 = vmatpush1.msra.mxu0 0.0
    %6465 = vmatprep.subr.mxu0 0.0
    %6466 = vmatpush1.msra.mxu0 0.0
    %6467 = vmatprep.subr.mxu0 0.0
    %6468 = vmatpush1.msra.mxu0 0.0
    %6469 = vmatprep.subr.mxu0 0.0
    %6470 = vmatpush1.msra.mxu0 0.0
    %6471 = vmatprep.subr.mxu0 0.0
    %6472 = vmatpush1.msra.mxu0 0.0
    %6473 = vmatprep.mubr.f32.mxu0 0.0
    %6474 = vmatmul.mubr.f32.gmra.mrb[0].mxu0 %v6239
    %v6475 = vpop.f32.mrb[0].mxu0
    %v6476 = vadd.f32 0.0, %v6475
    %v6477 = vpop.f32.mrb[0].mxu0
    %v6478 = vadd.f32 0.0, %v6477
    %6479 = vdwg.mxu0
    %6480 = vmatprep.subr.mxu0 %v4810
    %6481 = vmatpush1.msra.mxu0 %v4809
    %6482 = vmatprep.subr.mxu0 %v4814
    %6483 = vmatpush1.msra.mxu0 %v4813
    %6484 = vmatprep.subr.mxu0 %v4818
    %6485 = vmatpush1.msra.mxu0 %v4817
    %6486 = vmatprep.subr.mxu0 %v4822
    %6487 = vmatpush1.msra.mxu0 %v4821
    %6488 = vmatprep.subr.mxu0 %v4826
    %6489 = vmatpush1.msra.mxu0 %v4825
    %6490 = vmatprep.subr.mxu0 %v4830
    %6491 = vmatpush1.msra.mxu0 %v4829
    %6492 = vmatprep.subr.mxu0 %v4834
    %6493 = vmatpush1.msra.mxu0 %v4833
    %6494 = vmatprep.subr.mxu0 %v4838
    %6495 = vmatpush1.msra.mxu0 %v4837
    %6496 = vmatprep.subr.mxu0 %v4842
    %6497 = vmatpush1.msra.mxu0 %v4841
    %6498 = vmatprep.subr.mxu0 %v4846
    %6499 = vmatpush1.msra.mxu0 %v4845
    %6500 = vmatprep.subr.mxu0 %v4850
    %6501 = vmatpush1.msra.mxu0 %v4849
    %6502 = vmatprep.subr.mxu0 %v4854
    %6503 = vmatpush1.msra.mxu0 %v4853
    %6504 = vmatprep.subr.mxu0 %v4858
    %6505 = vmatpush1.msra.mxu0 %v4857
    %6506 = vmatprep.subr.mxu0 %v4862
    %6507 = vmatpush1.msra.mxu0 %v4861
    %6508 = vmatprep.subr.mxu0 %v4866
    %6509 = vmatpush1.msra.mxu0 %v4865
    %6510 = vmatprep.subr.mxu0 %v4870
    %6511 = vmatpush1.msra.mxu0 %v4869
    %6512 = vmatprep.subr.mxu0 0.0
    %6513 = vmatpush1.msra.mxu0 0.0
    %6514 = vmatprep.subr.mxu0 0.0
    %6515 = vmatpush1.msra.mxu0 0.0
    %6516 = vmatprep.subr.mxu0 0.0
    %6517 = vmatpush1.msra.mxu0 0.0
    %6518 = vmatprep.subr.mxu0 0.0
    %6519 = vmatpush1.msra.mxu0 0.0
    %6520 = vmatprep.subr.mxu0 0.0
    %6521 = vmatpush1.msra.mxu0 0.0
    %6522 = vmatprep.subr.mxu0 0.0
    %6523 = vmatpush1.msra.mxu0 0.0
    %6524 = vmatprep.subr.mxu0 0.0
    %6525 = vmatpush1.msra.mxu0 0.0
    %6526 = vmatprep.subr.mxu0 0.0
    %6527 = vmatpush1.msra.mxu0 0.0
    %6528 = vmatprep.subr.mxu0 0.0
    %6529 = vmatpush1.msra.mxu0 0.0
    %6530 = vmatprep.subr.mxu0 0.0
    %6531 = vmatpush1.msra.mxu0 0.0
    %6532 = vmatprep.subr.mxu0 0.0
    %6533 = vmatpush1.msra.mxu0 0.0
    %6534 = vmatprep.subr.mxu0 0.0
    %6535 = vmatpush1.msra.mxu0 0.0
    %6536 = vmatprep.subr.mxu0 0.0
    %6537 = vmatpush1.msra.mxu0 0.0
    %6538 = vmatprep.subr.mxu0 0.0
    %6539 = vmatpush1.msra.mxu0 0.0
    %6540 = vmatprep.subr.mxu0 0.0
    %6541 = vmatpush1.msra.mxu0 0.0
    %6542 = vmatprep.subr.mxu0 0.0
    %6543 = vmatpush1.msra.mxu0 0.0
    %6544 = vmatprep.mubr.f32.mxu0 0.0
    %6545 = vmatmul.mubr.f32.gmra.mrb[0].mxu0 %v6239
    %v6546 = vpop.f32.mrb[0].mxu0
    %v6547 = vadd.f32 0.0, %v6546
    %v6548 = vpop.f32.mrb[0].mxu0
    %v6549 = vadd.f32 0.0, %v6548
    %6550 = vdwg.mxu0
    %v6551 = vadd.f32 %v4704, %v6476
    %v6552 = vadd.f32 %v4706, %v6478
    %v6553 = vadd.f32 %v4781, %v6547
    %v6554 = vadd.f32 %v4783, %v6549
    %v6555 = vxor.u32 %v6551, 2147483648
    %v6556 = vxor.u32 %v6552, 2147483648
    %v6557 = vxor.u32 %v6553, 2147483648
    %v6558 = vmul.f32 %v6555, 1.442695
    %v6559 = vpow.pop %v6558
    %v6560 = vmul.f32 %v6556, 1.442695
    %v6561 = vpow.pop %v6560
    %v6562 = vmul.f32 %v6557, 1.442695
    %v6563 = vpow.pop %v6562
    %v6564 = vadd.f32 %v6559, 1.0
    %v6565 = vadd.f32 %v6561, 1.0
    %v6566 = vadd.f32 %v6563, 1.0
    %v6567 = vrcp.pop %v6564
    %v6568 = vmul.f32 1.0, %v6567
    %v6569 = vrcp.pop %v6565
    %v6570 = vmul.f32 1.0, %v6569
    %v6571 = vrcp.pop %v6566
    %v6572 = vmul.f32 1.0, %v6571
    %v6573 = vtanh.pop %v6554
    %v6575 = vrot.slane %v6233, 6
    %v6577 = vmul.f32 %v6570, %v6575
    %v6578 = vmul.f32 %v6568, %v6573
    %v6579 = vadd.f32 %v6577, %v6578
    %v6580 = vtanh.pop %v6579
    %v6581 = vmul.f32 %v6572, %v6580
    %6582 = vmatprep.subr.mxu0 %v5042
    %6583 = vmatpush1.msra.mxu0 %v5041
    %6584 = vmatprep.subr.mxu0 %v5046
    %6585 = vmatpush1.msra.mxu0 %v5045
    %6586 = vmatprep.subr.mxu0 %v5050
    %6587 = vmatpush1.msra.mxu0 %v5049
    %6588 = vmatprep.subr.mxu0 %v5054
    %6589 = vmatpush1.msra.mxu0 %v5053
    %6590 = vmatprep.subr.mxu0 %v5058
    %6591 = vmatpush1.msra.mxu0 %v5057
    %6592 = vmatprep.subr.mxu0 %v5062
    %6593 = vmatpush1.msra.mxu0 %v5061
    %6594 = vmatprep.subr.mxu0 %v5066
    %6595 = vmatpush1.msra.mxu0 %v5065
    %6596 = vmatprep.subr.mxu0 %v5070
    %6597 = vmatpush1.msra.mxu0 %v5069
    %6598 = vmatprep.subr.mxu0 %v5074
    %6599 = vmatpush1.msra.mxu0 %v5073
    %6600 = vmatprep.subr.mxu0 %v5078
    %6601 = vmatpush1.msra.mxu0 %v5077
    %6602 = vmatprep.subr.mxu0 %v5082
    %6603 = vmatpush1.msra.mxu0 %v5081
    %6604 = vmatprep.subr.mxu0 %v5086
    %6605 = vmatpush1.msra.mxu0 %v5085
    %6606 = vmatprep.subr.mxu0 %v5090
    %6607 = vmatpush1.msra.mxu0 %v5089
    %6608 = vmatprep.subr.mxu0 %v5094
    %6609 = vmatpush1.msra.mxu0 %v5093
    %6610 = vmatprep.subr.mxu0 %v5098
    %6611 = vmatpush1.msra.mxu0 %v5097
    %6612 = vmatprep.subr.mxu0 %v5102
    %6613 = vmatpush1.msra.mxu0 %v5101
    %6614 = vmatprep.subr.mxu0 %v5106
    %6615 = vmatpush1.msra.mxu0 %v5105
    %6616 = vmatprep.subr.mxu0 %v5110
    %6617 = vmatpush1.msra.mxu0 %v5109
    %6618 = vmatprep.subr.mxu0 %v5114
    %6619 = vmatpush1.msra.mxu0 %v5113
    %6620 = vmatprep.subr.mxu0 %v5118
    %6621 = vmatpush1.msra.mxu0 %v5117
    %6622 = vmatprep.subr.mxu0 %v5122
    %6623 = vmatpush1.msra.mxu0 %v5121
    %6624 = vmatprep.subr.mxu0 %v5126
    %6625 = vmatpush1.msra.mxu0 %v5125
    %6626 = vmatprep.subr.mxu0 %v5130
    %6627 = vmatpush1.msra.mxu0 %v5129
    %6628 = vmatprep.subr.mxu0 %v5134
    %6629 = vmatpush1.msra.mxu0 %v5133
    %6630 = vmatprep.subr.mxu0 %v5138
    %6631 = vmatpush1.msra.mxu0 %v5137
    %6632 = vmatprep.subr.mxu0 %v5142
    %6633 = vmatpush1.msra.mxu0 %v5141
    %6634 = vmatprep.subr.mxu0 %v5146
    %6635 = vmatpush1.msra.mxu0 %v5145
    %6636 = vmatprep.subr.mxu0 %v5150
    %6637 = vmatpush1.msra.mxu0 %v5149
    %6638 = vmatprep.subr.mxu0 %v5154
    %6639 = vmatpush1.msra.mxu0 %v5153
    %6640 = vmatprep.subr.mxu0 %v5158
    %6641 = vmatpush1.msra.mxu0 %v5157
    %6642 = vmatprep.subr.mxu0 %v5162
    %6643 = vmatpush1.msra.mxu0 %v5161
    %6644 = vmatprep.subr.mxu0 %v5166
    %6645 = vmatpush1.msra.mxu0 %v5165
    %6646 = vmatprep.mubr.f32.mxu0 %v6408
    %6647 = vmatmul.mubr.f32.gmra.mrb[0].mxu0 %v6581
    %v6648 = vpop.f32.mrb[0].mxu0
    %v6649 = vadd.f32 %v4790, %v6648
    %v6650 = vpop.f32.mrb[0].mxu0
    %v6651 = vadd.f32 %v4794, %v6650
    %6652 = vdwg.mxu0
    %6653 = vmatprep.subr.mxu0 %v5044
    %6654 = vmatpush1.msra.mxu0 %v5043
    %6655 = vmatprep.subr.mxu0 %v5048
    %6656 = vmatpush1.msra.mxu0 %v5047
    %6657 = vmatprep.subr.mxu0 %v5052
    %6658 = vmatpush1.msra.mxu0 %v5051
    %6659 = vmatprep.subr.mxu0 %v5056
    %6660 = vmatpush1.msra.mxu0 %v5055
    %6661 = vmatprep.subr.mxu0 %v5060
    %6662 = vmatpush1.msra.mxu0 %v5059
    %6663 = vmatprep.subr.mxu0 %v5064
    %6664 = vmatpush1.msra.mxu0 %v5063
    %6665 = vmatprep.subr.mxu0 %v5068
    %6666 = vmatpush1.msra.mxu0 %v5067
    %6667 = vmatprep.subr.mxu0 %v5072
    %6668 = vmatpush1.msra.mxu0 %v5071
    %6669 = vmatprep.subr.mxu0 %v5076
    %6670 = vmatpush1.msra.mxu0 %v5075
    %6671 = vmatprep.subr.mxu0 %v5080
    %6672 = vmatpush1.msra.mxu0 %v5079
    %6673 = vmatprep.subr.mxu0 %v5084
    %6674 = vmatpush1.msra.mxu0 %v5083
    %6675 = vmatprep.subr.mxu0 %v5088
    %6676 = vmatpush1.msra.mxu0 %v5087
    %6677 = vmatprep.subr.mxu0 %v5092
    %6678 = vmatpush1.msra.mxu0 %v5091
    %6679 = vmatprep.subr.mxu0 %v5096
    %6680 = vmatpush1.msra.mxu0 %v5095
    %6681 = vmatprep.subr.mxu0 %v5100
    %6682 = vmatpush1.msra.mxu0 %v5099
    %6683 = vmatprep.subr.mxu0 %v5104
    %6684 = vmatpush1.msra.mxu0 %v5103
    %6685 = vmatprep.subr.mxu0 %v5108
    %6686 = vmatpush1.msra.mxu0 %v5107
    %6687 = vmatprep.subr.mxu0 %v5112
    %6688 = vmatpush1.msra.mxu0 %v5111
    %6689 = vmatprep.subr.mxu0 %v5116
    %6690 = vmatpush1.msra.mxu0 %v5115
    %6691 = vmatprep.subr.mxu0 %v5120
    %6692 = vmatpush1.msra.mxu0 %v5119
    %6693 = vmatprep.subr.mxu0 %v5124
    %6694 = vmatpush1.msra.mxu0 %v5123
    %6695 = vmatprep.subr.mxu0 %v5128
    %6696 = vmatpush1.msra.mxu0 %v5127
    %6697 = vmatprep.subr.mxu0 %v5132
    %6698 = vmatpush1.msra.mxu0 %v5131
    %6699 = vmatprep.subr.mxu0 %v5136
    %6700 = vmatpush1.msra.mxu0 %v5135
    %6701 = vmatprep.subr.mxu0 %v5140
    %6702 = vmatpush1.msra.mxu0 %v5139
    %6703 = vmatprep.subr.mxu0 %v5144
    %6704 = vmatpush1.msra.mxu0 %v5143
    %6705 = vmatprep.subr.mxu0 %v5148
    %6706 = vmatpush1.msra.mxu0 %v5147
    %6707 = vmatprep.subr.mxu0 %v5152
    %6708 = vmatpush1.msra.mxu0 %v5151
    %6709 = vmatprep.subr.mxu0 %v5156
    %6710 = vmatpush1.msra.mxu0 %v5155
    %6711 = vmatprep.subr.mxu0 %v5160
    %6712 = vmatpush1.msra.mxu0 %v5159
    %6713 = vmatprep.subr.mxu0 %v5164
    %6714 = vmatpush1.msra.mxu0 %v5163
    %6715 = vmatprep.subr.mxu0 %v5168
    %6716 = vmatpush1.msra.mxu0 %v5167
    %6717 = vmatprep.mubr.f32.mxu0 %v6408
    %6718 = vmatmul.mubr.f32.gmra.mrb[0].mxu0 %v6581
    %v6719 = vpop.f32.mrb[0].mxu0
    %v6720 = vadd.f32 %v4798, %v6719
    %v6721 = vpop.f32.mrb[0].mxu0
    %v6722 = vadd.f32 %v4802, %v6721
    %6723 = vdwg.mxu0
    %v6724 = vxor.u32 %v6649, 2147483648
    %v6725 = vxor.u32 %v6651, 2147483648
    %v6726 = vxor.u32 %v6720, 2147483648
    %v6727 = vmul.f32 %v6724, 1.442695
    %v6728 = vpow.pop %v6727
    %v6729 = vmul.f32 %v6725, 1.442695
    %v6730 = vpow.pop %v6729
    %v6731 = vmul.f32 %v6726, 1.442695
    %v6732 = vpow.pop %v6731
    %v6733 = vadd.f32 %v6728, 1.0
    %v6734 = vadd.f32 %v6730, 1.0
    %v6735 = vadd.f32 %v6732, 1.0
    %v6736 = vrcp.pop %v6733
    %v6737 = vmul.f32 1.0, %v6736
    %v6738 = vrcp.pop %v6734
    %v6739 = vmul.f32 1.0, %v6738
    %v6740 = vrcp.pop %v6735
    %v6741 = vmul.f32 1.0, %v6740
    %v6742 = vtanh.pop %v6722
    %v6743 = vmul.f32 %v6739, %v6406
    %v6744 = vmul.f32 %v6737, %v6742
    %v6745 = vadd.f32 %v6743, %v6744
    %v6746 = vtanh.pop %v6745
    %v6747 = vmul.f32 %v6741, %v6746
    %6748 = vmatprep.subr.mxu0 %v4808
    %6749 = vmatpush1.msra.mxu0 %v4807
    %6750 = vmatprep.subr.mxu0 %v4812
    %6751 = vmatpush1.msra.mxu0 %v4811
    %6752 = vmatprep.subr.mxu0 %v4816
    %6753 = vmatpush1.msra.mxu0 %v4815
    %6754 = vmatprep.subr.mxu0 %v4820
    %6755 = vmatpush1.msra.mxu0 %v4819
    %6756 = vmatprep.subr.mxu0 %v4824
    %6757 = vmatpush1.msra.mxu0 %v4823
    %6758 = vmatprep.subr.mxu0 %v4828
    %6759 = vmatpush1.msra.mxu0 %v4827
    %6760 = vmatprep.subr.mxu0 %v4832
    %6761 = vmatpush1.msra.mxu0 %v4831
    %6762 = vmatprep.subr.mxu0 %v4836
    %6763 = vmatpush1.msra.mxu0 %v4835
    %6764 = vmatprep.subr.mxu0 %v4840
    %6765 = vmatpush1.msra.mxu0 %v4839
    %6766 = vmatprep.subr.mxu0 %v4844
    %6767 = vmatpush1.msra.mxu0 %v4843
    %6768 = vmatprep.subr.mxu0 %v4848
    %6769 = vmatpush1.msra.mxu0 %v4847
    %6770 = vmatprep.subr.mxu0 %v4852
    %6771 = vmatpush1.msra.mxu0 %v4851
    %6772 = vmatprep.subr.mxu0 %v4856
    %6773 = vmatpush1.msra.mxu0 %v4855
    %6774 = vmatprep.subr.mxu0 %v4860
    %6775 = vmatpush1.msra.mxu0 %v4859
    %6776 = vmatprep.subr.mxu0 %v4864
    %6777 = vmatpush1.msra.mxu0 %v4863
    %6778 = vmatprep.subr.mxu0 %v4868
    %6779 = vmatpush1.msra.mxu0 %v4867
    %6780 = vmatprep.subr.mxu0 0.0
    %6781 = vmatpush1.msra.mxu0 0.0
    %6782 = vmatprep.subr.mxu0 0.0
    %6783 = vmatpush1.msra.mxu0 0.0
    %6784 = vmatprep.subr.mxu0 0.0
    %6785 = vmatpush1.msra.mxu0 0.0
    %6786 = vmatprep.subr.mxu0 0.0
    %6787 = vmatpush1.msra.mxu0 0.0
    %6788 = vmatprep.subr.mxu0 0.0
    %6789 = vmatpush1.msra.mxu0 0.0
    %6790 = vmatprep.subr.mxu0 0.0
    %6791 = vmatpush1.msra.mxu0 0.0
    %6792 = vmatprep.subr.mxu0 0.0
    %6793 = vmatpush1.msra.mxu0 0.0
    %6794 = vmatprep.subr.mxu0 0.0
    %6795 = vmatpush1.msra.mxu0 0.0
    %6796 = vmatprep.subr.mxu0 0.0
    %6797 = vmatpush1.msra.mxu0 0.0
    %6798 = vmatprep.subr.mxu0 0.0
    %6799 = vmatpush1.msra.mxu0 0.0
    %6800 = vmatprep.subr.mxu0 0.0
    %6801 = vmatpush1.msra.mxu0 0.0
    %6802 = vmatprep.subr.mxu0 0.0
    %6803 = vmatpush1.msra.mxu0 0.0
    %6804 = vmatprep.subr.mxu0 0.0
    %6805 = vmatpush1.msra.mxu0 0.0
    %6806 = vmatprep.subr.mxu0 0.0
    %6807 = vmatpush1.msra.mxu0 0.0
    %6808 = vmatprep.subr.mxu0 0.0
    %6809 = vmatpush1.msra.mxu0 0.0
    %6810 = vmatprep.subr.mxu0 0.0
    %6811 = vmatpush1.msra.mxu0 0.0
    %6812 = vmatprep.mubr.f32.mxu0 0.0
    %6813 = vmatmul.mubr.f32.gmra.mrb[0].mxu0 %v6581
    %v6814 = vpop.f32.mrb[0].mxu0
    %v6815 = vadd.f32 0.0, %v6814
    %v6816 = vpop.f32.mrb[0].mxu0
    %v6817 = vadd.f32 0.0, %v6816
    %6818 = vdwg.mxu0
    %6819 = vmatprep.subr.mxu0 %v4810
    %6820 = vmatpush1.msra.mxu0 %v4809
    %6821 = vmatprep.subr.mxu0 %v4814
    %6822 = vmatpush1.msra.mxu0 %v4813
    %6823 = vmatprep.subr.mxu0 %v4818
    %6824 = vmatpush1.msra.mxu0 %v4817
    %6825 = vmatprep.subr.mxu0 %v4822
    %6826 = vmatpush1.msra.mxu0 %v4821
    %6827 = vmatprep.subr.mxu0 %v4826
    %6828 = vmatpush1.msra.mxu0 %v4825
    %6829 = vmatprep.subr.mxu0 %v4830
    %6830 = vmatpush1.msra.mxu0 %v4829
    %6831 = vmatprep.subr.mxu0 %v4834
    %6832 = vmatpush1.msra.mxu0 %v4833
    %6833 = vmatprep.subr.mxu0 %v4838
    %6834 = vmatpush1.msra.mxu0 %v4837
    %6835 = vmatprep.subr.mxu0 %v4842
    %6836 = vmatpush1.msra.mxu0 %v4841
    %6837 = vmatprep.subr.mxu0 %v4846
    %6838 = vmatpush1.msra.mxu0 %v4845
    %6839 = vmatprep.subr.mxu0 %v4850
    %6840 = vmatpush1.msra.mxu0 %v4849
    %6841 = vmatprep.subr.mxu0 %v4854
    %6842 = vmatpush1.msra.mxu0 %v4853
    %6843 = vmatprep.subr.mxu0 %v4858
    %6844 = vmatpush1.msra.mxu0 %v4857
    %6845 = vmatprep.subr.mxu0 %v4862
    %6846 = vmatpush1.msra.mxu0 %v4861
    %6847 = vmatprep.subr.mxu0 %v4866
    %6848 = vmatpush1.msra.mxu0 %v4865
    %6849 = vmatprep.subr.mxu0 %v4870
    %6850 = vmatpush1.msra.mxu0 %v4869
    %6851 = vmatprep.subr.mxu0 0.0
    %6852 = vmatpush1.msra.mxu0 0.0
    %6853 = vmatprep.subr.mxu0 0.0
    %6854 = vmatpush1.msra.mxu0 0.0
    %6855 = vmatprep.subr.mxu0 0.0
    %6856 = vmatpush1.msra.mxu0 0.0
    %6857 = vmatprep.subr.mxu0 0.0
    %6858 = vmatpush1.msra.mxu0 0.0
    %6859 = vmatprep.subr.mxu0 0.0
    %6860 = vmatpush1.msra.mxu0 0.0
    %6861 = vmatprep.subr.mxu0 0.0
    %6862 = vmatpush1.msra.mxu0 0.0
    %6863 = vmatprep.subr.mxu0 0.0
    %6864 = vmatpush1.msra.mxu0 0.0
    %6865 = vmatprep.subr.mxu0 0.0
    %6866 = vmatpush1.msra.mxu0 0.0
    %6867 = vmatprep.subr.mxu0 0.0
    %6868 = vmatpush1.msra.mxu0 0.0
    %6869 = vmatprep.subr.mxu0 0.0
    %6870 = vmatpush1.msra.mxu0 0.0
    %6871 = vmatprep.subr.mxu0 0.0
    %6872 = vmatpush1.msra.mxu0 0.0
    %6873 = vmatprep.subr.mxu0 0.0
    %6874 = vmatpush1.msra.mxu0 0.0
    %6875 = vmatprep.subr.mxu0 0.0
    %6876 = vmatpush1.msra.mxu0 0.0
    %6877 = vmatprep.subr.mxu0 0.0
    %6878 = vmatpush1.msra.mxu0 0.0
    %6879 = vmatprep.subr.mxu0 0.0
    %6880 = vmatpush1.msra.mxu0 0.0
    %6881 = vmatprep.subr.mxu0 0.0
    %6882 = vmatpush1.msra.mxu0 0.0
    %6883 = vmatprep.mubr.f32.mxu0 0.0
    %6884 = vmatmul.mubr.f32.gmra.mrb[0].mxu0 %v6581
    %v6885 = vpop.f32.mrb[0].mxu0
    %v6886 = vadd.f32 0.0, %v6885
    %v6887 = vpop.f32.mrb[0].mxu0
    %v6888 = vadd.f32 0.0, %v6887
    %6889 = vdwg.mxu0
    %v6894 = vrot.slane %v6815, 6
    %v6895 = vrot.slane %v6817, 6
    %v6896 = vrot.slane %v6886, 6
    %v6897 = vrot.slane %v6888, 6
    %v6902 = vadd.f32 %v4704, %v6894
    %v6903 = vadd.f32 %v4706, %v6895
    %v6904 = vadd.f32 %v4781, %v6896
    %v6905 = vadd.f32 %v4783, %v6897
    %v6906 = vxor.u32 %v6902, 2147483648
    %v6907 = vxor.u32 %v6903, 2147483648
    %v6908 = vxor.u32 %v6904, 2147483648
    %v6909 = vmul.f32 %v6906, 1.442695
    %v6910 = vpow.pop %v6909
    %v6911 = vmul.f32 %v6907, 1.442695
    %v6912 = vpow.pop %v6911
    %v6913 = vmul.f32 %v6908, 1.442695
    %v6914 = vpow.pop %v6913
    %v6915 = vadd.f32 %v6910, 1.0
    %v6916 = vadd.f32 %v6912, 1.0
    %v6917 = vadd.f32 %v6914, 1.0
    %v6918 = vrcp.pop %v6915
    %v6919 = vmul.f32 1.0, %v6918
    %v6920 = vrcp.pop %v6916
    %v6921 = vmul.f32 1.0, %v6920
    %v6922 = vrcp.pop %v6917
    %v6923 = vmul.f32 1.0, %v6922
    %v6924 = vtanh.pop %v6905
    %v6926 = vrot.slane %v6579, 6
    %v6928 = vmul.f32 %v6921, %v6926
    %v6929 = vmul.f32 %v6919, %v6924
    %v6930 = vadd.f32 %v6928, %v6929
    %v6931 = vtanh.pop %v6930
    %v6932 = vmul.f32 %v6923, %v6931
    %v6934 = vrot.slane %v6747, 6
    %v6936 = vrot.slane %v6932, 2
    %v6937 = vrot.slane %v6934, 2
    %6940 = vmatprep.subr.mxu0 %v5042
    %6941 = vmatpush1.msra.mxu0 %v5041
    %6942 = vmatprep.subr.mxu0 %v5046
    %6943 = vmatpush1.msra.mxu0 %v5045
    %6944 = vmatprep.subr.mxu0 %v5050
    %6945 = vmatpush1.msra.mxu0 %v5049
    %6946 = vmatprep.subr.mxu0 %v5054
    %6947 = vmatpush1.msra.mxu0 %v5053
    %6948 = vmatprep.subr.mxu0 %v5058
    %6949 = vmatpush1.msra.mxu0 %v5057
    %6950 = vmatprep.subr.mxu0 %v5062
    %6951 = vmatpush1.msra.mxu0 %v5061
    %6952 = vmatprep.subr.mxu0 %v5066
    %6953 = vmatpush1.msra.mxu0 %v5065
    %6954 = vmatprep.subr.mxu0 %v5070
    %6955 = vmatpush1.msra.mxu0 %v5069
    %6956 = vmatprep.subr.mxu0 %v5074
    %6957 = vmatpush1.msra.mxu0 %v5073
    %6958 = vmatprep.subr.mxu0 %v5078
    %6959 = vmatpush1.msra.mxu0 %v5077
    %6960 = vmatprep.subr.mxu0 %v5082
    %6961 = vmatpush1.msra.mxu0 %v5081
    %6962 = vmatprep.subr.mxu0 %v5086
    %6963 = vmatpush1.msra.mxu0 %v5085
    %6964 = vmatprep.subr.mxu0 %v5090
    %6965 = vmatpush1.msra.mxu0 %v5089
    %6966 = vmatprep.subr.mxu0 %v5094
    %6967 = vmatpush1.msra.mxu0 %v5093
    %6968 = vmatprep.subr.mxu0 %v5098
    %6969 = vmatpush1.msra.mxu0 %v5097
    %6970 = vmatprep.subr.mxu0 %v5102
    %6971 = vmatpush1.msra.mxu0 %v5101
    %6972 = vmatprep.subr.mxu0 %v5106
    %6973 = vmatpush1.msra.mxu0 %v5105
    %6974 = vmatprep.subr.mxu0 %v5110
    %6975 = vmatpush1.msra.mxu0 %v5109
    %6976 = vmatprep.subr.mxu0 %v5114
    %6977 = vmatpush1.msra.mxu0 %v5113
    %6978 = vmatprep.subr.mxu0 %v5118
    %6979 = vmatpush1.msra.mxu0 %v5117
    %6980 = vmatprep.subr.mxu0 %v5122
    %6981 = vmatpush1.msra.mxu0 %v5121
    %6982 = vmatprep.subr.mxu0 %v5126
    %6983 = vmatpush1.msra.mxu0 %v5125
    %6984 = vmatprep.subr.mxu0 %v5130
    %6985 = vmatpush1.msra.mxu0 %v5129
    %6986 = vmatprep.subr.mxu0 %v5134
    %6987 = vmatpush1.msra.mxu0 %v5133
    %6988 = vmatprep.subr.mxu0 %v5138
    %6989 = vmatpush1.msra.mxu0 %v5137
    %6990 = vmatprep.subr.mxu0 %v5142
    %6991 = vmatpush1.msra.mxu0 %v5141
    %6992 = vmatprep.subr.mxu0 %v5146
    %6993 = vmatpush1.msra.mxu0 %v5145
    %6994 = vmatprep.subr.mxu0 %v5150
    %6995 = vmatpush1.msra.mxu0 %v5149
    %6996 = vmatprep.subr.mxu0 %v5154
    %6997 = vmatpush1.msra.mxu0 %v5153
    %6998 = vmatprep.subr.mxu0 %v5158
    %6999 = vmatpush1.msra.mxu0 %v5157
    %7000 = vmatprep.subr.mxu0 %v5162
    %7001 = vmatpush1.msra.mxu0 %v5161
    %7002 = vmatprep.subr.mxu0 %v5166
    %7003 = vmatpush1.msra.mxu0 %v5165
    %7004 = vmatprep.mubr.f32.mxu0 %v6937
    %7005 = vmatmul.mubr.f32.gmra.mrb[0].mxu0 %v6936
    %v7006 = vpop.f32.mrb[0].mxu0
    %v7007 = vadd.f32 %v4790, %v7006
    %v7008 = vpop.f32.mrb[0].mxu0
    %v7009 = vadd.f32 %v4794, %v7008
    %7010 = vdwg.mxu0
    %7011 = vmatprep.subr.mxu0 %v5044
    %7012 = vmatpush1.msra.mxu0 %v5043
    %7013 = vmatprep.subr.mxu0 %v5048
    %7014 = vmatpush1.msra.mxu0 %v5047
    %7015 = vmatprep.subr.mxu0 %v5052
    %7016 = vmatpush1.msra.mxu0 %v5051
    %7017 = vmatprep.subr.mxu0 %v5056
    %7018 = vmatpush1.msra.mxu0 %v5055
    %7019 = vmatprep.subr.mxu0 %v5060
    %7020 = vmatpush1.msra.mxu0 %v5059
    %7021 = vmatprep.subr.mxu0 %v5064
    %7022 = vmatpush1.msra.mxu0 %v5063
    %7023 = vmatprep.subr.mxu0 %v5068
    %7024 = vmatpush1.msra.mxu0 %v5067
    %7025 = vmatprep.subr.mxu0 %v5072
    %7026 = vmatpush1.msra.mxu0 %v5071
    %7027 = vmatprep.subr.mxu0 %v5076
    %7028 = vmatpush1.msra.mxu0 %v5075
    %7029 = vmatprep.subr.mxu0 %v5080
    %7030 = vmatpush1.msra.mxu0 %v5079
    %7031 = vmatprep.subr.mxu0 %v5084
    %7032 = vmatpush1.msra.mxu0 %v5083
    %7033 = vmatprep.subr.mxu0 %v5088
    %7034 = vmatpush1.msra.mxu0 %v5087
    %7035 = vmatprep.subr.mxu0 %v5092
    %7036 = vmatpush1.msra.mxu0 %v5091
    %7037 = vmatprep.subr.mxu0 %v5096
    %7038 = vmatpush1.msra.mxu0 %v5095
    %7039 = vmatprep.subr.mxu0 %v5100
    %7040 = vmatpush1.msra.mxu0 %v5099
    %7041 = vmatprep.subr.mxu0 %v5104
    %7042 = vmatpush1.msra.mxu0 %v5103
    %7043 = vmatprep.subr.mxu0 %v5108
    %7044 = vmatpush1.msra.mxu0 %v5107
    %7045 = vmatprep.subr.mxu0 %v5112
    %7046 = vmatpush1.msra.mxu0 %v5111
    %7047 = vmatprep.subr.mxu0 %v5116
    %7048 = vmatpush1.msra.mxu0 %v5115
    %7049 = vmatprep.subr.mxu0 %v5120
    %7050 = vmatpush1.msra.mxu0 %v5119
    %7051 = vmatprep.subr.mxu0 %v5124
    %7052 = vmatpush1.msra.mxu0 %v5123
    %7053 = vmatprep.subr.mxu0 %v5128
    %7054 = vmatpush1.msra.mxu0 %v5127
    %7055 = vmatprep.subr.mxu0 %v5132
    %7056 = vmatpush1.msra.mxu0 %v5131
    %7057 = vmatprep.subr.mxu0 %v5136
    %7058 = vmatpush1.msra.mxu0 %v5135
    %7059 = vmatprep.subr.mxu0 %v5140
    %7060 = vmatpush1.msra.mxu0 %v5139
    %7061 = vmatprep.subr.mxu0 %v5144
    %7062 = vmatpush1.msra.mxu0 %v5143
    %7063 = vmatprep.subr.mxu0 %v5148
    %7064 = vmatpush1.msra.mxu0 %v5147
    %7065 = vmatprep.subr.mxu0 %v5152
    %7066 = vmatpush1.msra.mxu0 %v5151
    %7067 = vmatprep.subr.mxu0 %v5156
    %7068 = vmatpush1.msra.mxu0 %v5155
    %7069 = vmatprep.subr.mxu0 %v5160
    %7070 = vmatpush1.msra.mxu0 %v5159
    %7071 = vmatprep.subr.mxu0 %v5164
    %7072 = vmatpush1.msra.mxu0 %v5163
    %7073 = vmatprep.subr.mxu0 %v5168
    %7074 = vmatpush1.msra.mxu0 %v5167
    %7075 = vmatprep.mubr.f32.mxu0 %v6937
    %7076 = vmatmul.mubr.f32.gmra.mrb[0].mxu0 %v6936
    %v7077 = vpop.f32.mrb[0].mxu0
    %v7078 = vadd.f32 %v4798, %v7077
    %v7079 = vpop.f32.mrb[0].mxu0
    %v7080 = vadd.f32 %v4802, %v7079
    %7081 = vdwg.mxu0
    %v7082 = vxor.u32 %v7007, 2147483648
    %v7083 = vxor.u32 %v7009, 2147483648
    %v7084 = vxor.u32 %v7078, 2147483648
    %v7085 = vmul.f32 %v7082, 1.442695
    %v7086 = vpow.pop %v7085
    %v7087 = vmul.f32 %v7083, 1.442695
    %v7088 = vpow.pop %v7087
    %v7089 = vmul.f32 %v7084, 1.442695
    %v7090 = vpow.pop %v7089
    %v7091 = vadd.f32 %v7086, 1.0
    %v7092 = vadd.f32 %v7088, 1.0
    %v7093 = vadd.f32 %v7090, 1.0
    %v7094 = vrcp.pop %v7091
    %v7095 = vmul.f32 1.0, %v7094
    %v7096 = vrcp.pop %v7092
    %v7097 = vmul.f32 1.0, %v7096
    %v7098 = vrcp.pop %v7093
    %v7099 = vmul.f32 1.0, %v7098
    %v7100 = vtanh.pop %v7080
    %v7101 = vmul.f32 %v7097, %v6745
    %v7102 = vmul.f32 %v7095, %v7100
    %v7103 = vadd.f32 %v7101, %v7102
    %v7104 = vtanh.pop %v7103
    %v7105 = vmul.f32 %v7099, %v7104
    %7106 = vmatprep.subr.mxu0 %v4808
    %7107 = vmatpush1.msra.mxu0 %v4807
    %7108 = vmatprep.subr.mxu0 %v4812
    %7109 = vmatpush1.msra.mxu0 %v4811
    %7110 = vmatprep.subr.mxu0 %v4816
    %7111 = vmatpush1.msra.mxu0 %v4815
    %7112 = vmatprep.subr.mxu0 %v4820
    %7113 = vmatpush1.msra.mxu0 %v4819
    %7114 = vmatprep.subr.mxu0 %v4824
    %7115 = vmatpush1.msra.mxu0 %v4823
    %7116 = vmatprep.subr.mxu0 %v4828
    %7117 = vmatpush1.msra.mxu0 %v4827
    %7118 = vmatprep.subr.mxu0 %v4832
    %7119 = vmatpush1.msra.mxu0 %v4831
    %7120 = vmatprep.subr.mxu0 %v4836
    %7121 = vmatpush1.msra.mxu0 %v4835
    %7122 = vmatprep.subr.mxu0 %v4840
    %7123 = vmatpush1.msra.mxu0 %v4839
    %7124 = vmatprep.subr.mxu0 %v4844
    %7125 = vmatpush1.msra.mxu0 %v4843
    %7126 = vmatprep.subr.mxu0 %v4848
    %7127 = vmatpush1.msra.mxu0 %v4847
    %7128 = vmatprep.subr.mxu0 %v4852
    %7129 = vmatpush1.msra.mxu0 %v4851
    %7130 = vmatprep.subr.mxu0 %v4856
    %7131 = vmatpush1.msra.mxu0 %v4855
    %7132 = vmatprep.subr.mxu0 %v4860
    %7133 = vmatpush1.msra.mxu0 %v4859
    %7134 = vmatprep.subr.mxu0 %v4864
    %7135 = vmatpush1.msra.mxu0 %v4863
    %7136 = vmatprep.subr.mxu0 %v4868
    %7137 = vmatpush1.msra.mxu0 %v4867
    %7138 = vmatprep.subr.mxu0 0.0
    %7139 = vmatpush1.msra.mxu0 0.0
    %7140 = vmatprep.subr.mxu0 0.0
    %7141 = vmatpush1.msra.mxu0 0.0
    %7142 = vmatprep.subr.mxu0 0.0
    %7143 = vmatpush1.msra.mxu0 0.0
    %7144 = vmatprep.subr.mxu0 0.0
    %7145 = vmatpush1.msra.mxu0 0.0
    %7146 = vmatprep.subr.mxu0 0.0
    %7147 = vmatpush1.msra.mxu0 0.0
    %7148 = vmatprep.subr.mxu0 0.0
    %7149 = vmatpush1.msra.mxu0 0.0
    %7150 = vmatprep.subr.mxu0 0.0
    %7151 = vmatpush1.msra.mxu0 0.0
    %7152 = vmatprep.subr.mxu0 0.0
    %7153 = vmatpush1.msra.mxu0 0.0
    %7154 = vmatprep.subr.mxu0 0.0
    %7155 = vmatpush1.msra.mxu0 0.0
    %7156 = vmatprep.subr.mxu0 0.0
    %7157 = vmatpush1.msra.mxu0 0.0
    %7158 = vmatprep.subr.mxu0 0.0
    %7159 = vmatpush1.msra.mxu0 0.0
    %7160 = vmatprep.subr.mxu0 0.0
    %7161 = vmatpush1.msra.mxu0 0.0
    %7162 = vmatprep.subr.mxu0 0.0
    %7163 = vmatpush1.msra.mxu0 0.0
    %7164 = vmatprep.subr.mxu0 0.0
    %7165 = vmatpush1.msra.mxu0 0.0
    %7166 = vmatprep.subr.mxu0 0.0
    %7167 = vmatpush1.msra.mxu0 0.0
    %7168 = vmatprep.subr.mxu0 0.0
    %7169 = vmatpush1.msra.mxu0 0.0
    %7170 = vmatprep.mubr.f32.mxu0 0.0
    %7171 = vmatmul.mubr.f32.gmra.mrb[0].mxu0 %v6936
    %v7172 = vpop.f32.mrb[0].mxu0
    %v7173 = vadd.f32 0.0, %v7172
    %v7174 = vpop.f32.mrb[0].mxu0
    %v7175 = vadd.f32 0.0, %v7174
    %7176 = vdwg.mxu0
    %7177 = vmatprep.subr.mxu0 %v4810
    %7178 = vmatpush1.msra.mxu0 %v4809
    %7179 = vmatprep.subr.mxu0 %v4814
    %7180 = vmatpush1.msra.mxu0 %v4813
    %7181 = vmatprep.subr.mxu0 %v4818
    %7182 = vmatpush1.msra.mxu0 %v4817
    %7183 = vmatprep.subr.mxu0 %v4822
    %7184 = vmatpush1.msra.mxu0 %v4821
    %7185 = vmatprep.subr.mxu0 %v4826
    %7186 = vmatpush1.msra.mxu0 %v4825
    %7187 = vmatprep.subr.mxu0 %v4830
    %7188 = vmatpush1.msra.mxu0 %v4829
    %7189 = vmatprep.subr.mxu0 %v4834
    %7190 = vmatpush1.msra.mxu0 %v4833
    %7191 = vmatprep.subr.mxu0 %v4838
    %7192 = vmatpush1.msra.mxu0 %v4837
    %7193 = vmatprep.subr.mxu0 %v4842
    %7194 = vmatpush1.msra.mxu0 %v4841
    %7195 = vmatprep.subr.mxu0 %v4846
    %7196 = vmatpush1.msra.mxu0 %v4845
    %7197 = vmatprep.subr.mxu0 %v4850
    %7198 = vmatpush1.msra.mxu0 %v4849
    %7199 = vmatprep.subr.mxu0 %v4854
    %7200 = vmatpush1.msra.mxu0 %v4853
    %7201 = vmatprep.subr.mxu0 %v4858
    %7202 = vmatpush1.msra.mxu0 %v4857
    %7203 = vmatprep.subr.mxu0 %v4862
    %7204 = vmatpush1.msra.mxu0 %v4861
    %7205 = vmatprep.subr.mxu0 %v4866
    %7206 = vmatpush1.msra.mxu0 %v4865
    %7207 = vmatprep.subr.mxu0 %v4870
    %7208 = vmatpush1.msra.mxu0 %v4869
    %7209 = vmatprep.subr.mxu0 0.0
    %7210 = vmatpush1.msra.mxu0 0.0
    %7211 = vmatprep.subr.mxu0 0.0
    %7212 = vmatpush1.msra.mxu0 0.0
    %7213 = vmatprep.subr.mxu0 0.0
    %7214 = vmatpush1.msra.mxu0 0.0
    %7215 = vmatprep.subr.mxu0 0.0
    %7216 = vmatpush1.msra.mxu0 0.0
    %7217 = vmatprep.subr.mxu0 0.0
    %7218 = vmatpush1.msra.mxu0 0.0
    %7219 = vmatprep.subr.mxu0 0.0
    %7220 = vmatpush1.msra.mxu0 0.0
    %7221 = vmatprep.subr.mxu0 0.0
    %7222 = vmatpush1.msra.mxu0 0.0
    %7223 = vmatprep.subr.mxu0 0.0
    %7224 = vmatpush1.msra.mxu0 0.0
    %7225 = vmatprep.subr.mxu0 0.0
    %7226 = vmatpush1.msra.mxu0 0.0
    %7227 = vmatprep.subr.mxu0 0.0
    %7228 = vmatpush1.msra.mxu0 0.0
    %7229 = vmatprep.subr.mxu0 0.0
    %7230 = vmatpush1.msra.mxu0 0.0
    %7231 = vmatprep.subr.mxu0 0.0
    %7232 = vmatpush1.msra.mxu0 0.0
    %7233 = vmatprep.subr.mxu0 0.0
    %7234 = vmatpush1.msra.mxu0 0.0
    %7235 = vmatprep.subr.mxu0 0.0
    %7236 = vmatpush1.msra.mxu0 0.0
    %7237 = vmatprep.subr.mxu0 0.0
    %7238 = vmatpush1.msra.mxu0 0.0
    %7239 = vmatprep.subr.mxu0 0.0
    %7240 = vmatpush1.msra.mxu0 0.0
    %7241 = vmatprep.mubr.f32.mxu0 0.0
    %7242 = vmatmul.mubr.f32.gmra.mrb[0].mxu0 %v6936
    %v7243 = vpop.f32.mrb[0].mxu0
    %v7244 = vadd.f32 0.0, %v7243
    %v7245 = vpop.f32.mrb[0].mxu0
    %v7246 = vadd.f32 0.0, %v7245
    %7247 = vdwg.mxu0
    %v7252 = vrot.slane %v7173, 4
    %v7253 = vrot.slane %v7175, 4
    %v7254 = vrot.slane %v7244, 4
    %v7255 = vrot.slane %v7246, 4
    %v7260 = vadd.f32 %v4704, %v7252
    %v7261 = vadd.f32 %v4706, %v7253
    %v7262 = vadd.f32 %v4781, %v7254
    %v7263 = vadd.f32 %v4783, %v7255
    %v7264 = vxor.u32 %v7260, 2147483648
    %v7265 = vxor.u32 %v7261, 2147483648
    %v7266 = vxor.u32 %v7262, 2147483648
    %v7267 = vmul.f32 %v7264, 1.442695
    %v7268 = vpow.pop %v7267
    %v7269 = vmul.f32 %v7265, 1.442695
    %v7270 = vpow.pop %v7269
    %v7271 = vmul.f32 %v7266, 1.442695
    %v7272 = vpow.pop %v7271
    %v7273 = vadd.f32 %v7268, 1.0
    %v7274 = vadd.f32 %v7270, 1.0
    %v7275 = vadd.f32 %v7272, 1.0
    %v7276 = vrcp.pop %v7273
    %v7277 = vmul.f32 1.0, %v7276
    %v7278 = vrcp.pop %v7274
    %v7279 = vmul.f32 1.0, %v7278
    %v7280 = vrcp.pop %v7275
    %v7281 = vmul.f32 1.0, %v7280
    %v7282 = vtanh.pop %v7263
    %v7284 = vrot.slane %v6930, 6
    %v7286 = vmul.f32 %v7279, %v7284
    %v7287 = vmul.f32 %v7277, %v7282
    %v7288 = vadd.f32 %v7286, %v7287
    %v7289 = vtanh.pop %v7288
    %v7290 = vmul.f32 %v7281, %v7289
    %v7292 = vrot.slane %v7105, 4
    %v7294 = vrot.slane %v7290, 4
    %v7295 = vrot.slane %v7292, 4
    %7298 = vmatprep.subr.mxu0 %v5042
    %7299 = vmatpush1.msra.mxu0 %v5041
    %7300 = vmatprep.subr.mxu0 %v5046
    %7301 = vmatpush1.msra.mxu0 %v5045
    %7302 = vmatprep.subr.mxu0 %v5050
    %7303 = vmatpush1.msra.mxu0 %v5049
    %7304 = vmatprep.subr.mxu0 %v5054
    %7305 = vmatpush1.msra.mxu0 %v5053
    %7306 = vmatprep.subr.mxu0 %v5058
    %7307 = vmatpush1.msra.mxu0 %v5057
    %7308 = vmatprep.subr.mxu0 %v5062
    %7309 = vmatpush1.msra.mxu0 %v5061
    %7310 = vmatprep.subr.mxu0 %v5066
    %7311 = vmatpush1.msra.mxu0 %v5065
    %7312 = vmatprep.subr.mxu0 %v5070
    %7313 = vmatpush1.msra.mxu0 %v5069
    %7314 = vmatprep.subr.mxu0 %v5074
    %7315 = vmatpush1.msra.mxu0 %v5073
    %7316 = vmatprep.subr.mxu0 %v5078
    %7317 = vmatpush1.msra.mxu0 %v5077
    %7318 = vmatprep.subr.mxu0 %v5082
    %7319 = vmatpush1.msra.mxu0 %v5081
    %7320 = vmatprep.subr.mxu0 %v5086
    %7321 = vmatpush1.msra.mxu0 %v5085
    %7322 = vmatprep.subr.mxu0 %v5090
    %7323 = vmatpush1.msra.mxu0 %v5089
    %7324 = vmatprep.subr.mxu0 %v5094
    %7325 = vmatpush1.msra.mxu0 %v5093
    %7326 = vmatprep.subr.mxu0 %v5098
    %7327 = vmatpush1.msra.mxu0 %v5097
    %7328 = vmatprep.subr.mxu0 %v5102
    %7329 = vmatpush1.msra.mxu0 %v5101
    %7330 = vmatprep.subr.mxu0 %v5106
    %7331 = vmatpush1.msra.mxu0 %v5105
    %7332 = vmatprep.subr.mxu0 %v5110
    %7333 = vmatpush1.msra.mxu0 %v5109
    %7334 = vmatprep.subr.mxu0 %v5114
    %7335 = vmatpush1.msra.mxu0 %v5113
    %7336 = vmatprep.subr.mxu0 %v5118
    %7337 = vmatpush1.msra.mxu0 %v5117
    %7338 = vmatprep.subr.mxu0 %v5122
    %7339 = vmatpush1.msra.mxu0 %v5121
    %7340 = vmatprep.subr.mxu0 %v5126
    %7341 = vmatpush1.msra.mxu0 %v5125
    %7342 = vmatprep.subr.mxu0 %v5130
    %7343 = vmatpush1.msra.mxu0 %v5129
    %7344 = vmatprep.subr.mxu0 %v5134
    %7345 = vmatpush1.msra.mxu0 %v5133
    %7346 = vmatprep.subr.mxu0 %v5138
    %7347 = vmatpush1.msra.mxu0 %v5137
    %7348 = vmatprep.subr.mxu0 %v5142
    %7349 = vmatpush1.msra.mxu0 %v5141
    %7350 = vmatprep.subr.mxu0 %v5146
    %7351 = vmatpush1.msra.mxu0 %v5145
    %7352 = vmatprep.subr.mxu0 %v5150
    %7353 = vmatpush1.msra.mxu0 %v5149
    %7354 = vmatprep.subr.mxu0 %v5154
    %7355 = vmatpush1.msra.mxu0 %v5153
    %7356 = vmatprep.subr.mxu0 %v5158
    %7357 = vmatpush1.msra.mxu0 %v5157
    %7358 = vmatprep.subr.mxu0 %v5162
    %7359 = vmatpush1.msra.mxu0 %v5161
    %7360 = vmatprep.subr.mxu0 %v5166
    %7361 = vmatpush1.msra.mxu0 %v5165
    %7362 = vmatprep.mubr.f32.mxu0 %v7295
    %7363 = vmatmul.mubr.f32.gmra.mrb[0].mxu0 %v7294
    %v7364 = vpop.f32.mrb[0].mxu0
    %v7365 = vadd.f32 %v4790, %v7364
    %v7366 = vpop.f32.mrb[0].mxu0
    %v7367 = vadd.f32 %v4794, %v7366
    %7368 = vdwg.mxu0
    %7369 = vmatprep.subr.mxu0 %v5044
    %7370 = vmatpush1.msra.mxu0 %v5043
    %7371 = vmatprep.subr.mxu0 %v5048
    %7372 = vmatpush1.msra.mxu0 %v5047
    %7373 = vmatprep.subr.mxu0 %v5052
    %7374 = vmatpush1.msra.mxu0 %v5051
    %7375 = vmatprep.subr.mxu0 %v5056
    %7376 = vmatpush1.msra.mxu0 %v5055
    %7377 = vmatprep.subr.mxu0 %v5060
    %7378 = vmatpush1.msra.mxu0 %v5059
    %7379 = vmatprep.subr.mxu0 %v5064
    %7380 = vmatpush1.msra.mxu0 %v5063
    %7381 = vmatprep.subr.mxu0 %v5068
    %7382 = vmatpush1.msra.mxu0 %v5067
    %7383 = vmatprep.subr.mxu0 %v5072
    %7384 = vmatpush1.msra.mxu0 %v5071
    %7385 = vmatprep.subr.mxu0 %v5076
    %7386 = vmatpush1.msra.mxu0 %v5075
    %7387 = vmatprep.subr.mxu0 %v5080
    %7388 = vmatpush1.msra.mxu0 %v5079
    %7389 = vmatprep.subr.mxu0 %v5084
    %7390 = vmatpush1.msra.mxu0 %v5083
    %7391 = vmatprep.subr.mxu0 %v5088
    %7392 = vmatpush1.msra.mxu0 %v5087
    %7393 = vmatprep.subr.mxu0 %v5092
    %7394 = vmatpush1.msra.mxu0 %v5091
    %7395 = vmatprep.subr.mxu0 %v5096
    %7396 = vmatpush1.msra.mxu0 %v5095
    %7397 = vmatprep.subr.mxu0 %v5100
    %7398 = vmatpush1.msra.mxu0 %v5099
    %7399 = vmatprep.subr.mxu0 %v5104
    %7400 = vmatpush1.msra.mxu0 %v5103
    %7401 = vmatprep.subr.mxu0 %v5108
    %7402 = vmatpush1.msra.mxu0 %v5107
    %7403 = vmatprep.subr.mxu0 %v5112
    %7404 = vmatpush1.msra.mxu0 %v5111
    %7405 = vmatprep.subr.mxu0 %v5116
    %7406 = vmatpush1.msra.mxu0 %v5115
    %7407 = vmatprep.subr.mxu0 %v5120
    %7408 = vmatpush1.msra.mxu0 %v5119
    %7409 = vmatprep.subr.mxu0 %v5124
    %7410 = vmatpush1.msra.mxu0 %v5123
    %7411 = vmatprep.subr.mxu0 %v5128
    %7412 = vmatpush1.msra.mxu0 %v5127
    %7413 = vmatprep.subr.mxu0 %v5132
    %7414 = vmatpush1.msra.mxu0 %v5131
    %7415 = vmatprep.subr.mxu0 %v5136
    %7416 = vmatpush1.msra.mxu0 %v5135
    %7417 = vmatprep.subr.mxu0 %v5140
    %7418 = vmatpush1.msra.mxu0 %v5139
    %7419 = vmatprep.subr.mxu0 %v5144
    %7420 = vmatpush1.msra.mxu0 %v5143
    %7421 = vmatprep.subr.mxu0 %v5148
    %7422 = vmatpush1.msra.mxu0 %v5147
    %7423 = vmatprep.subr.mxu0 %v5152
    %7424 = vmatpush1.msra.mxu0 %v5151
    %7425 = vmatprep.subr.mxu0 %v5156
    %7426 = vmatpush1.msra.mxu0 %v5155
    %7427 = vmatprep.subr.mxu0 %v5160
    %7428 = vmatpush1.msra.mxu0 %v5159
    %7429 = vmatprep.subr.mxu0 %v5164
    %7430 = vmatpush1.msra.mxu0 %v5163
    %7431 = vmatprep.subr.mxu0 %v5168
    %7432 = vmatpush1.msra.mxu0 %v5167
    %7433 = vmatprep.mubr.f32.mxu0 %v7295
    %7434 = vmatmul.mubr.f32.gmra.mrb[0].mxu0 %v7294
    %v7435 = vpop.f32.mrb[0].mxu0
    %v7436 = vadd.f32 %v4798, %v7435
    %v7437 = vpop.f32.mrb[0].mxu0
    %v7438 = vadd.f32 %v4802, %v7437
    %7439 = vdwg.mxu0
    %v7440 = vxor.u32 %v7365, 2147483648
    %v7441 = vxor.u32 %v7367, 2147483648
    %v7442 = vxor.u32 %v7436, 2147483648
    %v7443 = vmul.f32 %v7440, 1.442695
    %v7444 = vpow.pop %v7443
    %v7445 = vmul.f32 %v7441, 1.442695
    %v7446 = vpow.pop %v7445
    %v7447 = vmul.f32 %v7442, 1.442695
    %v7448 = vpow.pop %v7447
    %v7449 = vadd.f32 %v7444, 1.0
    %v7450 = vadd.f32 %v7446, 1.0
    %v7451 = vadd.f32 %v7448, 1.0
    %v7452 = vrcp.pop %v7449
    %v7453 = vmul.f32 1.0, %v7452
    %v7454 = vrcp.pop %v7450
    %v7455 = vmul.f32 1.0, %v7454
    %v7456 = vrcp.pop %v7451
    %v7457 = vmul.f32 1.0, %v7456
    %v7458 = vtanh.pop %v7438
    %v7459 = vmul.f32 %v7455, %v7103
    %v7460 = vmul.f32 %v7453, %v7458
    %v7461 = vadd.f32 %v7459, %v7460
    %v7462 = vtanh.pop %v7461
    %v7463 = vmul.f32 %v7457, %v7462
    %7464 = vmatprep.subr.mxu0 %v4808
    %7465 = vmatpush1.msra.mxu0 %v4807
    %7466 = vmatprep.subr.mxu0 %v4812
    %7467 = vmatpush1.msra.mxu0 %v4811
    %7468 = vmatprep.subr.mxu0 %v4816
    %7469 = vmatpush1.msra.mxu0 %v4815
    %7470 = vmatprep.subr.mxu0 %v4820
    %7471 = vmatpush1.msra.mxu0 %v4819
    %7472 = vmatprep.subr.mxu0 %v4824
    %7473 = vmatpush1.msra.mxu0 %v4823
    %7474 = vmatprep.subr.mxu0 %v4828
    %7475 = vmatpush1.msra.mxu0 %v4827
    %7476 = vmatprep.subr.mxu0 %v4832
    %7477 = vmatpush1.msra.mxu0 %v4831
    %7478 = vmatprep.subr.mxu0 %v4836
    %7479 = vmatpush1.msra.mxu0 %v4835
    %7480 = vmatprep.subr.mxu0 %v4840
    %7481 = vmatpush1.msra.mxu0 %v4839
    %7482 = vmatprep.subr.mxu0 %v4844
    %7483 = vmatpush1.msra.mxu0 %v4843
    %7484 = vmatprep.subr.mxu0 %v4848
    %7485 = vmatpush1.msra.mxu0 %v4847
    %7486 = vmatprep.subr.mxu0 %v4852
    %7487 = vmatpush1.msra.mxu0 %v4851
    %7488 = vmatprep.subr.mxu0 %v4856
    %7489 = vmatpush1.msra.mxu0 %v4855
    %7490 = vmatprep.subr.mxu0 %v4860
    %7491 = vmatpush1.msra.mxu0 %v4859
    %7492 = vmatprep.subr.mxu0 %v4864
    %7493 = vmatpush1.msra.mxu0 %v4863
    %7494 = vmatprep.subr.mxu0 %v4868
    %7495 = vmatpush1.msra.mxu0 %v4867
    %7496 = vmatprep.subr.mxu0 0.0
    %7497 = vmatpush1.msra.mxu0 0.0
    %7498 = vmatprep.subr.mxu0 0.0
    %7499 = vmatpush1.msra.mxu0 0.0
    %7500 = vmatprep.subr.mxu0 0.0
    %7501 = vmatpush1.msra.mxu0 0.0
    %7502 = vmatprep.subr.mxu0 0.0
    %7503 = vmatpush1.msra.mxu0 0.0
    %7504 = vmatprep.subr.mxu0 0.0
    %7505 = vmatpush1.msra.mxu0 0.0
    %7506 = vmatprep.subr.mxu0 0.0
    %7507 = vmatpush1.msra.mxu0 0.0
    %7508 = vmatprep.subr.mxu0 0.0
    %7509 = vmatpush1.msra.mxu0 0.0
    %7510 = vmatprep.subr.mxu0 0.0
    %7511 = vmatpush1.msra.mxu0 0.0
    %7512 = vmatprep.subr.mxu0 0.0
    %7513 = vmatpush1.msra.mxu0 0.0
    %7514 = vmatprep.subr.mxu0 0.0
    %7515 = vmatpush1.msra.mxu0 0.0
    %7516 = vmatprep.subr.mxu0 0.0
    %7517 = vmatpush1.msra.mxu0 0.0
    %7518 = vmatprep.subr.mxu0 0.0
    %7519 = vmatpush1.msra.mxu0 0.0
    %7520 = vmatprep.subr.mxu0 0.0
    %7521 = vmatpush1.msra.mxu0 0.0
    %7522 = vmatprep.subr.mxu0 0.0
    %7523 = vmatpush1.msra.mxu0 0.0
    %7524 = vmatprep.subr.mxu0 0.0
    %7525 = vmatpush1.msra.mxu0 0.0
    %7526 = vmatprep.subr.mxu0 0.0
    %7527 = vmatpush1.msra.mxu0 0.0
    %7528 = vmatprep.mubr.f32.mxu0 0.0
    %7529 = vmatmul.mubr.f32.gmra.mrb[0].mxu0 %v7294
    %v7530 = vpop.f32.mrb[0].mxu0
    %v7531 = vadd.f32 0.0, %v7530
    %v7532 = vpop.f32.mrb[0].mxu0
    %v7533 = vadd.f32 0.0, %v7532
    %7534 = vdwg.mxu0
    %7535 = vmatprep.subr.mxu0 %v4810
    %7536 = vmatpush1.msra.mxu0 %v4809
    %7537 = vmatprep.subr.mxu0 %v4814
    %7538 = vmatpush1.msra.mxu0 %v4813
    %7539 = vmatprep.subr.mxu0 %v4818
    %7540 = vmatpush1.msra.mxu0 %v4817
    %7541 = vmatprep.subr.mxu0 %v4822
    %7542 = vmatpush1.msra.mxu0 %v4821
    %7543 = vmatprep.subr.mxu0 %v4826
    %7544 = vmatpush1.msra.mxu0 %v4825
    %7545 = vmatprep.subr.mxu0 %v4830
    %7546 = vmatpush1.msra.mxu0 %v4829
    %7547 = vmatprep.subr.mxu0 %v4834
    %7548 = vmatpush1.msra.mxu0 %v4833
    %7549 = vmatprep.subr.mxu0 %v4838
    %7550 = vmatpush1.msra.mxu0 %v4837
    %7551 = vmatprep.subr.mxu0 %v4842
    %7552 = vmatpush1.msra.mxu0 %v4841
    %7553 = vmatprep.subr.mxu0 %v4846
    %7554 = vmatpush1.msra.mxu0 %v4845
    %7555 = vmatprep.subr.mxu0 %v4850
    %7556 = vmatpush1.msra.mxu0 %v4849
    %7557 = vmatprep.subr.mxu0 %v4854
    %7558 = vmatpush1.msra.mxu0 %v4853
    %7559 = vmatprep.subr.mxu0 %v4858
    %7560 = vmatpush1.msra.mxu0 %v4857
    %7561 = vmatprep.subr.mxu0 %v4862
    %7562 = vmatpush1.msra.mxu0 %v4861
    %7563 = vmatprep.subr.mxu0 %v4866
    %7564 = vmatpush1.msra.mxu0 %v4865
    %7565 = vmatprep.subr.mxu0 %v4870
    %7566 = vmatpush1.msra.mxu0 %v4869
    %7567 = vmatprep.subr.mxu0 0.0
    %7568 = vmatpush1.msra.mxu0 0.0
    %7569 = vmatprep.subr.mxu0 0.0
    %7570 = vmatpush1.msra.mxu0 0.0
    %7571 = vmatprep.subr.mxu0 0.0
    %7572 = vmatpush1.msra.mxu0 0.0
    %7573 = vmatprep.subr.mxu0 0.0
    %7574 = vmatpush1.msra.mxu0 0.0
    %7575 = vmatprep.subr.mxu0 0.0
    %7576 = vmatpush1.msra.mxu0 0.0
    %7577 = vmatprep.subr.mxu0 0.0
    %7578 = vmatpush1.msra.mxu0 0.0
    %7579 = vmatprep.subr.mxu0 0.0
    %7580 = vmatpush1.msra.mxu0 0.0
    %7581 = vmatprep.subr.mxu0 0.0
    %7582 = vmatpush1.msra.mxu0 0.0
    %7583 = vmatprep.subr.mxu0 0.0
    %7584 = vmatpush1.msra.mxu0 0.0
    %7585 = vmatprep.subr.mxu0 0.0
    %7586 = vmatpush1.msra.mxu0 0.0
    %7587 = vmatprep.subr.mxu0 0.0
    %7588 = vmatpush1.msra.mxu0 0.0
    %7589 = vmatprep.subr.mxu0 0.0
    %7590 = vmatpush1.msra.mxu0 0.0
    %7591 = vmatprep.subr.mxu0 0.0
    %7592 = vmatpush1.msra.mxu0 0.0
    %7593 = vmatprep.subr.mxu0 0.0
    %7594 = vmatpush1.msra.mxu0 0.0
    %7595 = vmatprep.subr.mxu0 0.0
    %7596 = vmatpush1.msra.mxu0 0.0
    %7597 = vmatprep.subr.mxu0 0.0
    %7598 = vmatpush1.msra.mxu0 0.0
    %7599 = vmatprep.mubr.f32.mxu0 0.0
    %7600 = vmatmul.mubr.f32.gmra.mrb[0].mxu0 %v7294
    %v7601 = vpop.f32.mrb[0].mxu0
    %v7602 = vadd.f32 0.0, %v7601
    %v7603 = vpop.f32.mrb[0].mxu0
    %v7604 = vadd.f32 0.0, %v7603
    %7605 = vdwg.mxu0
    %v7610 = vrot.slane %v7531, 2
    %v7611 = vrot.slane %v7533, 2
    %v7612 = vrot.slane %v7602, 2
    %v7613 = vrot.slane %v7604, 2
    %v7618 = vadd.f32 %v4704, %v7610
    %v7619 = vadd.f32 %v4706, %v7611
    %v7620 = vadd.f32 %v4781, %v7612
    %v7621 = vadd.f32 %v4783, %v7613
    %v7622 = vxor.u32 %v7618, 2147483648
    %v7623 = vxor.u32 %v7619, 2147483648
    %v7624 = vxor.u32 %v7620, 2147483648
    %v7625 = vmul.f32 %v7622, 1.442695
    %v7626 = vpow.pop %v7625
    %v7627 = vmul.f32 %v7623, 1.442695
    %v7628 = vpow.pop %v7627
    %v7629 = vmul.f32 %v7624, 1.442695
    %v7630 = vpow.pop %v7629
    %v7631 = vadd.f32 %v7626, 1.0
    %v7632 = vadd.f32 %v7628, 1.0
    %v7633 = vadd.f32 %v7630, 1.0
    %v7634 = vrcp.pop %v7631
    %v7635 = vmul.f32 1.0, %v7634
    %v7636 = vrcp.pop %v7632
    %v7637 = vmul.f32 1.0, %v7636
    %v7638 = vrcp.pop %v7633
    %v7639 = vmul.f32 1.0, %v7638
    %v7640 = vtanh.pop %v7621
    %v7642 = vrot.slane %v7288, 6
    %v7644 = vmul.f32 %v7637, %v7642
    %v7645 = vmul.f32 %v7635, %v7640
    %v7646 = vadd.f32 %v7644, %v7645
    %v7647 = vtanh.pop %v7646
    %v7648 = vmul.f32 %v7639, %v7647
    %v7650 = vrot.slane %v7463, 2
    %v7652 = vrot.slane %v7648, 6
    %v7653 = vrot.slane %v7650, 6
    %7656 = vmatprep.subr.mxu0 %v5042
    %7657 = vmatpush1.msra.mxu0 %v5041
    %7658 = vmatprep.subr.mxu0 %v5046
    %7659 = vmatpush1.msra.mxu0 %v5045
    %7660 = vmatprep.subr.mxu0 %v5050
    %7661 = vmatpush1.msra.mxu0 %v5049
    %7662 = vmatprep.subr.mxu0 %v5054
    %7663 = vmatpush1.msra.mxu0 %v5053
    %7664 = vmatprep.subr.mxu0 %v5058
    %7665 = vmatpush1.msra.mxu0 %v5057
    %7666 = vmatprep.subr.mxu0 %v5062
    %7667 = vmatpush1.msra.mxu0 %v5061
    %7668 = vmatprep.subr.mxu0 %v5066
    %7669 = vmatpush1.msra.mxu0 %v5065
    %7670 = vmatprep.subr.mxu0 %v5070
    %7671 = vmatpush1.msra.mxu0 %v5069
    %7672 = vmatprep.subr.mxu0 %v5074
    %7673 = vmatpush1.msra.mxu0 %v5073
    %7674 = vmatprep.subr.mxu0 %v5078
    %7675 = vmatpush1.msra.mxu0 %v5077
    %7676 = vmatprep.subr.mxu0 %v5082
    %7677 = vmatpush1.msra.mxu0 %v5081
    %7678 = vmatprep.subr.mxu0 %v5086
    %7679 = vmatpush1.msra.mxu0 %v5085
    %7680 = vmatprep.subr.mxu0 %v5090
    %7681 = vmatpush1.msra.mxu0 %v5089
    %7682 = vmatprep.subr.mxu0 %v5094
    %7683 = vmatpush1.msra.mxu0 %v5093
    %7684 = vmatprep.subr.mxu0 %v5098
    %7685 = vmatpush1.msra.mxu0 %v5097
    %7686 = vmatprep.subr.mxu0 %v5102
    %7687 = vmatpush1.msra.mxu0 %v5101
    %7688 = vmatprep.subr.mxu0 %v5106
    %7689 = vmatpush1.msra.mxu0 %v5105
    %7690 = vmatprep.subr.mxu0 %v5110
    %7691 = vmatpush1.msra.mxu0 %v5109
    %7692 = vmatprep.subr.mxu0 %v5114
    %7693 = vmatpush1.msra.mxu0 %v5113
    %7694 = vmatprep.subr.mxu0 %v5118
    %7695 = vmatpush1.msra.mxu0 %v5117
    %7696 = vmatprep.subr.mxu0 %v5122
    %7697 = vmatpush1.msra.mxu0 %v5121
    %7698 = vmatprep.subr.mxu0 %v5126
    %7699 = vmatpush1.msra.mxu0 %v5125
    %7700 = vmatprep.subr.mxu0 %v5130
    %7701 = vmatpush1.msra.mxu0 %v5129
    %7702 = vmatprep.subr.mxu0 %v5134
    %7703 = vmatpush1.msra.mxu0 %v5133
    %7704 = vmatprep.subr.mxu0 %v5138
    %7705 = vmatpush1.msra.mxu0 %v5137
    %7706 = vmatprep.subr.mxu0 %v5142
    %7707 = vmatpush1.msra.mxu0 %v5141
    %7708 = vmatprep.subr.mxu0 %v5146
    %7709 = vmatpush1.msra.mxu0 %v5145
    %7710 = vmatprep.subr.mxu0 %v5150
    %7711 = vmatpush1.msra.mxu0 %v5149
    %7712 = vmatprep.subr.mxu0 %v5154
    %7713 = vmatpush1.msra.mxu0 %v5153
    %7714 = vmatprep.subr.mxu0 %v5158
    %7715 = vmatpush1.msra.mxu0 %v5157
    %7716 = vmatprep.subr.mxu0 %v5162
    %7717 = vmatpush1.msra.mxu0 %v5161
    %7718 = vmatprep.subr.mxu0 %v5166
    %7719 = vmatpush1.msra.mxu0 %v5165
    %7720 = vmatprep.mubr.f32.mxu0 %v7653
    %7721 = vmatmul.mubr.f32.gmra.mrb[0].mxu0 %v7652
    %v7722 = vpop.f32.mrb[0].mxu0
    %v7723 = vadd.f32 %v4790, %v7722
    %v7724 = vpop.f32.mrb[0].mxu0
    %v7725 = vadd.f32 %v4794, %v7724
    %7726 = vdwg.mxu0
    %7727 = vmatprep.subr.mxu0 %v5044
    %7728 = vmatpush1.msra.mxu0 %v5043
    %7729 = vmatprep.subr.mxu0 %v5048
    %7730 = vmatpush1.msra.mxu0 %v5047
    %7731 = vmatprep.subr.mxu0 %v5052
    %7732 = vmatpush1.msra.mxu0 %v5051
    %7733 = vmatprep.subr.mxu0 %v5056
    %7734 = vmatpush1.msra.mxu0 %v5055
    %7735 = vmatprep.subr.mxu0 %v5060
    %7736 = vmatpush1.msra.mxu0 %v5059
    %7737 = vmatprep.subr.mxu0 %v5064
    %7738 = vmatpush1.msra.mxu0 %v5063
    %7739 = vmatprep.subr.mxu0 %v5068
    %7740 = vmatpush1.msra.mxu0 %v5067
    %7741 = vmatprep.subr.mxu0 %v5072
    %7742 = vmatpush1.msra.mxu0 %v5071
    %7743 = vmatprep.subr.mxu0 %v5076
    %7744 = vmatpush1.msra.mxu0 %v5075
    %7745 = vmatprep.subr.mxu0 %v5080
    %7746 = vmatpush1.msra.mxu0 %v5079
    %7747 = vmatprep.subr.mxu0 %v5084
    %7748 = vmatpush1.msra.mxu0 %v5083
    %7749 = vmatprep.subr.mxu0 %v5088
    %7750 = vmatpush1.msra.mxu0 %v5087
    %7751 = vmatprep.subr.mxu0 %v5092
    %7752 = vmatpush1.msra.mxu0 %v5091
    %7753 = vmatprep.subr.mxu0 %v5096
    %7754 = vmatpush1.msra.mxu0 %v5095
    %7755 = vmatprep.subr.mxu0 %v5100
    %7756 = vmatpush1.msra.mxu0 %v5099
    %7757 = vmatprep.subr.mxu0 %v5104
    %7758 = vmatpush1.msra.mxu0 %v5103
    %7759 = vmatprep.subr.mxu0 %v5108
    %7760 = vmatpush1.msra.mxu0 %v5107
    %7761 = vmatprep.subr.mxu0 %v5112
    %7762 = vmatpush1.msra.mxu0 %v5111
    %7763 = vmatprep.subr.mxu0 %v5116
    %7764 = vmatpush1.msra.mxu0 %v5115
    %7765 = vmatprep.subr.mxu0 %v5120
    %7766 = vmatpush1.msra.mxu0 %v5119
    %7767 = vmatprep.subr.mxu0 %v5124
    %7768 = vmatpush1.msra.mxu0 %v5123
    %7769 = vmatprep.subr.mxu0 %v5128
    %7770 = vmatpush1.msra.mxu0 %v5127
    %7771 = vmatprep.subr.mxu0 %v5132
    %7772 = vmatpush1.msra.mxu0 %v5131
    %7773 = vmatprep.subr.mxu0 %v5136
    %7774 = vmatpush1.msra.mxu0 %v5135
    %7775 = vmatprep.subr.mxu0 %v5140
    %7776 = vmatpush1.msra.mxu0 %v5139
    %7777 = vmatprep.subr.mxu0 %v5144
    %7778 = vmatpush1.msra.mxu0 %v5143
    %7779 = vmatprep.subr.mxu0 %v5148
    %7780 = vmatpush1.msra.mxu0 %v5147
    %7781 = vmatprep.subr.mxu0 %v5152
    %7782 = vmatpush1.msra.mxu0 %v5151
    %7783 = vmatprep.subr.mxu0 %v5156
    %7784 = vmatpush1.msra.mxu0 %v5155
    %7785 = vmatprep.subr.mxu0 %v5160
    %7786 = vmatpush1.msra.mxu0 %v5159
    %7787 = vmatprep.subr.mxu0 %v5164
    %7788 = vmatpush1.msra.mxu0 %v5163
    %7789 = vmatprep.subr.mxu0 %v5168
    %7790 = vmatpush1.msra.mxu0 %v5167
    %7791 = vmatprep.mubr.f32.mxu0 %v7653
    %7792 = vmatmul.mubr.f32.gmra.mrb[0].mxu0 %v7652
    %v7793 = vpop.f32.mrb[0].mxu0
    %v7794 = vadd.f32 %v4798, %v7793
    %v7795 = vpop.f32.mrb[0].mxu0
    %v7796 = vadd.f32 %v4802, %v7795
    %7797 = vdwg.mxu0
    %v7798 = vxor.u32 %v7723, 2147483648
    %v7799 = vxor.u32 %v7725, 2147483648
    %v7800 = vxor.u32 %v7794, 2147483648
    %v7801 = vmul.f32 %v7798, 1.442695
    %v7802 = vpow.pop %v7801
    %v7803 = vmul.f32 %v7799, 1.442695
    %v7804 = vpow.pop %v7803
    %v7805 = vmul.f32 %v7800, 1.442695
    %v7806 = vpow.pop %v7805
    %v7807 = vadd.f32 %v7802, 1.0
    %v7808 = vadd.f32 %v7804, 1.0
    %v7809 = vadd.f32 %v7806, 1.0
    %v7810 = vrcp.pop %v7807
    %v7811 = vmul.f32 1.0, %v7810
    %v7812 = vrcp.pop %v7808
    %v7813 = vmul.f32 1.0, %v7812
    %v7814 = vrcp.pop %v7809
    %v7815 = vmul.f32 1.0, %v7814
    %v7816 = vtanh.pop %v7796
    %v7817 = vmul.f32 %v7813, %v7461
    %v7818 = vmul.f32 %v7811, %v7816
    %v7819 = vadd.f32 %v7817, %v7818
    %v7820 = vtanh.pop %v7819
    %v7821 = vmul.f32 %v7815, %v7820
    %v7822 = vrot.slane %v5692, 6
    %v7824 = vrot.slane %v6050, 4
    %v7827 = vrot.slane %v6408, 2
    %v7829 = vrot.slane %v7105, 6
    %v7831 = vrot.slane %v7463, 4
    %v7834 = vrot.slane %v7821, 2
    %v7836 = vsel %vm3497, %v5334, %v7822
    %v7837 = vsel %vm3499, %v7836, %v7824
    %v7838 = vsel %vm3501, %v7837, %v7827
    %v7839 = vsel %vm3497, %v6747, %v7829
    %v7840 = vsel %vm3499, %v7839, %v7831
    %v7841 = vsel %vm3501, %v7840, %v7834
    %7842 = vst [vmem:[#allocation19] sm:$0xff] %v7838
    %7843 = vst [vmem:[#allocation19 + $0x8] sm:$0xff] %v7841
    // Predicated region
    $region122: #{rnn_autoencoder_forward.1} parent=1 // pred_check
      _
    $region123: #{rnn_autoencoder_forward.1} parent=1 // pred_check_branch
      %7845 = sbr.rel (0) target = $region125
    $region124: #{rnn_autoencoder_forward.1} parent=1 // pred_region
      %s7847 = ssub.s32 256, 256
      %7848 = vsyncadd [#allocation4], %s7847
      %s7849 = sshll.u32 [#allocation19], 4
      %s7850 = int_to_ptr.vmem [resolvable:$true] %s7849
      %7855 = dma.vmem_to_hbm [thread:$0]  %s7850, 256, %s20, [#allocation4], 128, 128, 8
    $region125: #{rnn_autoencoder_forward.1} parent=1 // pred_fallthru
      _
    // Predicated region
    $region126: #{rnn_autoencoder_forward.1} parent=1 // pred_check
      _
    $region127: #{rnn_autoencoder_forward.1} parent=1 // pred_check_branch
      %7857 = sbr.rel (0) target = $region129
    $region128: #{rnn_autoencoder_forward.1} parent=1 // pred_region
      _
    $region129: #{rnn_autoencoder_forward.1} parent=1 // pred_fallthru
      _
    // Predicated region
    $region130: #{rnn_autoencoder_forward.1} parent=1 // pred_check
      _
    $region131: #{rnn_autoencoder_forward.1} parent=1 // pred_check_branch
      %7859 = sbr.rel (0) target = $region133
    $region132: #{rnn_autoencoder_forward.1} parent=1 // pred_region
      %7860 = dma.done [#allocation4], 256
    $region133: #{rnn_autoencoder_forward.1} parent=1 // pred_fallthru
      _
    // Predicated region
    $region134: #{rnn_autoencoder_forward.1} parent=1 // pred_check
      _
    $region135: #{rnn_autoencoder_forward.1} parent=1 // pred_check_branch
      %7862 = sbr.rel (0) target = $region137
    $region136: #{rnn_autoencoder_forward.1} parent=1 // pred_region
      _
    $region137: #{rnn_autoencoder_forward.1} parent=1 // pred_fallthru
      _
    %7863 = vsyncpa [#allocation3], 1
    %7864 = vsyncpa [#allocation6], 1
    %7865 = vsyncpa [#allocation9], 1
    %7866 = vsyncpa [#allocation12], 1
    %7867 = vsyncpa [#allocation15], 1
    %7868 = vsyncpa [#allocation18], 1
    %7869 = vsyncpa [#allocation4], 1

</llo_original>
